<compile_context>
chip_gen: v6e
topology: v6e:2x2x1
jax: 0.10.0
libtpu: 0.0.40
codegen_flags: <defaults>
</compile_context>

<pallas_src>
import functools

import numpy as np
import jax
import jax.numpy as jnp
from jax.experimental import pallas as pl
from jax.experimental.pallas import tpu as pltpu


def _ln_relu(h, gamma, beta, eps=1e-5):
    """One-pass LayerNorm (biased variance, matching torch.nn.LayerNorm) + ReLU."""
    c = h.shape[-1]
    inv_c = 1.0 / c
    mean = jnp.sum(h, axis=-1, keepdims=True) * inv_c
    msq = jnp.sum(h * h, axis=-1, keepdims=True) * inv_c
    var = msq - mean * mean
    y = (h - mean) * jax.lax.rsqrt(var + eps) * gamma + beta
    return jnp.maximum(y, 0.0)


def _stage1_kernel(x_ref,
                   w1_ref, p1_ref,
                   w2_ref, p2_ref,
                   w3_ref, p3_ref,
                   out_ref, *, n_total, tn):
    n = pl.program_id(1)

    x = x_ref[...]                                            # [TN, k] f32
    ragged = (n_total % tn) != 0                              # static Python bool
    if ragged:
        row_id = jax.lax.broadcasted_iota(jnp.int32, (tn, 1), 0)
        valid = row_id < (n_total - n * tn)                   # [TN, 1]
        x = jnp.where(valid, x, 0.0)                          # keep padded rows finite

    # conv1: k -> 64
    h = jnp.dot(x.astype(jnp.bfloat16), w1_ref[...],
                preferred_element_type=jnp.float32) + p1_ref[0:1, :]
    h = _ln_relu(h, p1_ref[1:2, :], p1_ref[2:3, :])           # [TN, 64]
    # conv2: 64 -> 128
    h = jnp.dot(h.astype(jnp.bfloat16), w2_ref[...],
                preferred_element_type=jnp.float32) + p2_ref[0:1, :]
    h = _ln_relu(h, p2_ref[1:2, :], p2_ref[2:3, :])           # [TN, 128]
    # conv3: 128 -> 1024
    h = jnp.dot(h.astype(jnp.bfloat16), w3_ref[...],
                preferred_element_type=jnp.float32) + p3_ref[0:1, :]
    h = _ln_relu(h, p3_ref[1:2, :], p3_ref[2:3, :])           # [TN, 1024]

    if ragged:
        h = jnp.where(valid, h, -jnp.inf)                     # exclude padded rows
    tile_max = jnp.max(h, axis=0, keepdims=True)              # [1, 1024]

    @pl.when(n == 0)
    def _():
        out_ref[...] = tile_max

    @pl.when(n > 0)
    def _():
        out_ref[...] = jnp.maximum(out_ref[...], tile_max)


def _stage2_kernel(p_ref,
                   w4_ref, p4_ref,
                   w5_ref, p5_ref,
                   w6_ref, b6_ref,
                   out_ref):
    # fc1: 1024 -> 512
    h = jnp.dot(p_ref[...].astype(jnp.bfloat16), w4_ref[...],
                preferred_element_type=jnp.float32) + p4_ref[0:1, :]
    h = _ln_relu(h, p4_ref[1:2, :], p4_ref[2:3, :])           # [B, 512]
    # fc2: 512 -> 256
    h = jnp.dot(h.astype(jnp.bfloat16), w5_ref[...],
                preferred_element_type=jnp.float32) + p5_ref[0:1, :]
    h = _ln_relu(h, p5_ref[1:2, :], p5_ref[2:3, :])           # [B, 256]
    # fc3: 256 -> k*k   (bias + flattened identity folded into b6_ref)
    h = jnp.dot(h.astype(jnp.bfloat16), w6_ref[...],
                preferred_element_type=jnp.float32)
    out_ref[...] = h + b6_ref[...]                            # [B, k*k]


def stnkd_pallas(x, params, k, *, tn=512):
    """Forward pass of STNkd. x: [B, N, k] -> [B, k, k]."""
    (w1, b1, g1, be1,
     w2, b2, g2, be2,
     w3, b3, g3, be3,
     w4, b4, g4, be4,
     w5, b5, g5, be5,
     w6, b6) = params

    B, N, k_in = x.shape
    assert k_in == k

    # Shrink the tile if N is small; keep it a multiple of 8 (sublane alignment).
    tn = min(tn, max(8, ((N + 7) // 8) * 8))
    n_tiles = pl.cdiv(N, tn)

    bf = lambda w: w.astype(jnp.bfloat16)                     # MXU-native operands
    pack = lambda b, g, be: jnp.stack([b, g, be], axis=0)     # one [3, C] block / layer

    p1 = pack(b1, g1, be1)
    p2 = pack(b2, g2, be2)
    p3 = pack(b3, g3, be3)
    p4 = pack(b4, g4, be4)
    p5 = pack(b5, g5, be5)
    kk = k * k
    b6_iden = (b6 + jnp.eye(k, dtype=jnp.float32).reshape(-1)).reshape(1, kk)

    const2 = lambda b, n: (0, 0)   # resident (loaded-once) weight / param blocks
    const1 = lambda i: (0, 0)

    # ---- stage 1: per-point MLP + max pool over N (accumulated across grid axis 1) ----
    stage1 = functools.partial(_stage1_kernel, n_total=N, tn=tn)
    pooled = pl.pallas_call(
        stage1,
        out_shape=jax.ShapeDtypeStruct((B, 1, 1024), jnp.float32),
        grid_spec=pltpu.PrefetchScalarGridSpec(
            num_scalar_prefetch=0,
            grid=(B, n_tiles),
            in_specs=[
                pl.BlockSpec((None, tn, k_in), lambda b, n: (b, n, 0)),
                pl.BlockSpec((k_in, 64), const2), pl.BlockSpec((3, 64), const2),
                pl.BlockSpec((64, 128), const2), pl.BlockSpec((3, 128), const2),
                pl.BlockSpec((128, 1024), const2), pl.BlockSpec((3, 1024), const2),
            ],
            out_specs=pl.BlockSpec((None, 1, 1024), lambda b, n: (b, 0, 0)),
        ),
        compiler_params=pltpu.CompilerParams(
            dimension_semantics=("parallel", "arbitrary"),
            vmem_limit_bytes=32 * 1024 * 1024),
    )(x, bf(w1), p1, bf(w2), p2, bf(w3), p3)

    pooled = pooled.reshape(B, 1024)

    # ---- stage 2: FC head on the pooled features, whole batch in one step ----
    head = pl.pallas_call(
        _stage2_kernel,
        out_shape=jax.ShapeDtypeStruct((B, kk), jnp.float32),
        grid_spec=pltpu.PrefetchScalarGridSpec(
            num_scalar_prefetch=0,
            grid=(1,),
            in_specs=[
                pl.BlockSpec((B, 1024), const1),
                pl.BlockSpec((1024, 512), const1), pl.BlockSpec((3, 512), const1),
                pl.BlockSpec((512, 256), const1), pl.BlockSpec((3, 256), const1),
                pl.BlockSpec((256, kk), const1), pl.BlockSpec((1, kk), const1),
            ],
            out_specs=pl.BlockSpec((B, kk), const1),
        ),
        compiler_params=pltpu.CompilerParams(
            dimension_semantics=("arbitrary",),
            vmem_limit_bytes=32 * 1024 * 1024),
    )(pooled, bf(w4), p4, bf(w5), p5, bf(w6), b6_iden)

    return head.reshape(B, k, k)


def stnkd_ref(x, params, k):
    """Pure-JAX reference mirroring the PyTorch forward exactly (full-f32 matmuls)."""
    (w1, b1, g1, be1,
     w2, b2, g2, be2,
     w3, b3, g3, be3,
     w4, b4, g4, be4,
     w5, b5, g5, be5,
     w6, b6) = params

    mm = lambda a, w: jnp.matmul(a, w, precision=jax.lax.Precision.HIGHEST)

    def ln(h, g, b, eps=1e-5):
        m = jnp.mean(h, axis=-1, keepdims=True)
        v = jnp.mean(jnp.square(h - m), axis=-1, keepdims=True)
        return (h - m) / jnp.sqrt(v + eps) * g + b

    h = jax.nn.relu(ln(mm(x, w1) + b1, g1, be1))
    h = jax.nn.relu(ln(mm(h, w2) + b2, g2, be2))
    h = jax.nn.relu(ln(mm(h, w3) + b3, g3, be3))
    h = jnp.max(h, axis=-2, keepdims=True)            # torch.max(x, -2, keepdim=True)[0]
    h = jax.nn.relu(ln(mm(h, w4) + b4, g4, be4))
    h = jax.nn.relu(ln(mm(h, w5) + b5, g5, be5))
    h = mm(h, w6) + b6                                # [B, 1, k*k]
    B = x.shape[0]
    return h.reshape(B, k, k) + jnp.eye(k, dtype=h.dtype)


if __name__ == "__main__":
    k = 16          # STNkd(k=16); hidden dims (64/128/1024/512/256) fixed by the module
    B, N = 2, 520   # ragged vs. TN=512 -> exercises 2 N-tiles + in-kernel tail masking

    dims = [(k, 64), (64, 128), (128, 1024), (1024, 512), (512, 256), (256, k * k)]
    keys = jax.random.split(jax.random.PRNGKey(0), 2 * len(dims) + 1)

    def linear_init(key, fan_in, fan_out):
        kw, kb = jax.random.split(key)
        bound = 1.0 / np.sqrt(fan_in)
        w = jax.random.uniform(kw, (fan_in, fan_out), jnp.float32, -bound, bound)
        b = jax.random.uniform(kb, (fan_out,), jnp.float32, -bound, bound)
        return w, b

    def ln_init(key, dim):
        kg, kb = jax.random.split(key)
        g = 1.0 + 0.05 * jax.random.normal(kg, (dim,), jnp.float32)
        b = 0.05 * jax.random.normal(kb, (dim,), jnp.float32)
        return g, b

    params = []
    for i, (fi, fo) in enumerate(dims):
        w, b = linear_init(keys[2 * i], fi, fo)
        params += [w, b]
        if i < 5:                         # LayerNorm after every layer except fc3
            g, be = ln_init(keys[2 * i + 1], fo)
            params += [g, be]
    params = tuple(params)

    x = jax.random.uniform(keys[-1], (B, N, k), jnp.float32, -1.0, 1.0)

    out = stnkd_pallas(x, params, k)
    out = jax.block_until_ready(out)

    ref = stnkd_ref(x, params, k)
    assert out.shape == (B, k, k)
    # bf16 MXU operands (f32 accumulation) vs. full-f32 reference -> loosened tolerance.
    np.testing.assert_allclose(np.asarray(out), np.asarray(ref), rtol=5e-2, atol=5e-2)
    print("KERNEL_OK")
</pallas_src>

<mosaic_0001>
module attributes {stable_mosaic.version = 11 : i64} {
  func.func @_stage1_kernel(%arg0: i32, %arg1: i32, %arg2: memref<1x512x16xf32, #tpu.memory_space<vmem>>, %arg3: memref<16x64xbf16, #tpu.memory_space<vmem>>, %arg4: memref<3x64xf32, #tpu.memory_space<vmem>>, %arg5: memref<64x128xbf16, #tpu.memory_space<vmem>>, %arg6: memref<3x128xf32, #tpu.memory_space<vmem>>, %arg7: memref<128x1024xbf16, #tpu.memory_space<vmem>>, %arg8: memref<3x1024xf32, #tpu.memory_space<vmem>>, %arg9: memref<1x1x1024xf32, #tpu.memory_space<vmem>>) attributes {dimension_semantics = [#tpu.dimension_semantics<parallel>, #tpu.dimension_semantics<arbitrary>], iteration_bounds = array<i64: 2, 2>, scalar_prefetch = 0 : i64, scratch_operands = 0 : i64, tpu.core_type = #tpu.core_type<tc>, window_params = [{transform_indices = @transform_0, window_bounds = array<i64: 1, 512, 16>}, {pipeline_mode = #tpu.pipeline_mode<synchronous>, transform_indices = @transform_1, window_bounds = array<i64: 16, 64>}, {pipeline_mode = #tpu.pipeline_mode<synchronous>, transform_indices = @transform_2, window_bounds = array<i64: 3, 64>}, {pipeline_mode = #tpu.pipeline_mode<synchronous>, transform_indices = @transform_3, window_bounds = array<i64: 64, 128>}, {pipeline_mode = #tpu.pipeline_mode<synchronous>, transform_indices = @transform_4, window_bounds = array<i64: 3, 128>}, {pipeline_mode = #tpu.pipeline_mode<synchronous>, transform_indices = @transform_5, window_bounds = array<i64: 128, 1024>}, {pipeline_mode = #tpu.pipeline_mode<synchronous>, transform_indices = @transform_6, window_bounds = array<i64: 3, 1024>}, {transform_indices = @transform_7, window_bounds = array<i64: 1, 1, 1024>}]} {
    %c0 = arith.constant 0 : index
    %c0_0 = arith.constant 0 : index
    %c0_1 = arith.constant 0 : index
    %0 = vector.load %arg2[%c0, %c0_0, %c0_1] : memref<1x512x16xf32, #tpu.memory_space<vmem>>, vector<1x512x16xf32>
    %1 = vector.shape_cast %0 : vector<1x512x16xf32> to vector<512x16xf32>
    %2 = tpu.iota {dimensions = array<i32: 0>} : vector<512x1xi32>
    %c512_i32 = arith.constant 512 : i32
    %3 = arith.muli %arg1, %c512_i32 : i32
    %c520_i32 = arith.constant 520 : i32
    %4 = arith.subi %c520_i32, %3 : i32
    %5 = vector.broadcast %4 : i32 to vector<512x1xi32>
    %6 = arith.cmpi slt, %2, %5 : vector<512x1xi32>
    %cst = arith.constant 0.000000e+00 : f32
    %7 = vector.shape_cast %6 : vector<512x1xi1> to vector<512x1xi1>
    %8 = vector.broadcast %7 : vector<512x1xi1> to vector<512x16xi1>
    %9 = vector.broadcast %cst : f32 to vector<512x16xf32>
    %10 = arith.select %8, %1, %9 : vector<512x16xi1>, vector<512x16xf32>
    %11 = arith.truncf %10 : vector<512x16xf32> to vector<512x16xbf16>
    %c0_2 = arith.constant 0 : index
    %c0_3 = arith.constant 0 : index
    %12 = vector.load %arg3[%c0_2, %c0_3] : memref<16x64xbf16, #tpu.memory_space<vmem>>, vector<16x64xbf16>
    %cst_4 = arith.constant dense<0.000000e+00> : vector<512x64xf32>
    %13 = tpu.matmul %11, %12, %cst_4 {dimension_numbers = #tpu.dot_dimension_numbers<[1], [0], [0], [1], [0, 0, 1, 1], [], []>} : vector<512x16xbf16>, vector<16x64xbf16>, vector<512x64xf32> -> vector<512x64xf32>
    %c0_5 = arith.constant 0 : index
    %c0_6 = arith.constant 0 : index
    %14 = vector.load %arg4[%c0_5, %c0_6] : memref<3x64xf32, #tpu.memory_space<vmem>>, vector<1x64xf32>
    %15 = vector.broadcast %14 : vector<1x64xf32> to vector<512x64xf32>
    %16 = arith.addf %13, %15 : vector<512x64xf32>
    %c1 = arith.constant 1 : index
    %c0_7 = arith.constant 0 : index
    %17 = vector.load %arg4[%c1, %c0_7] : memref<3x64xf32, #tpu.memory_space<vmem>>, vector<1x64xf32>
    %c2 = arith.constant 2 : index
    %c0_8 = arith.constant 0 : index
    %18 = vector.load %arg4[%c2, %c0_8] : memref<3x64xf32, #tpu.memory_space<vmem>>, vector<1x64xf32>
    %cst_9 = arith.constant dense<0.000000e+00> : vector<512xf32>
    %19 = vector.multi_reduction <add>, %16, %cst_9 [1] : vector<512x64xf32> to vector<512xf32>
    %20 = vector.shape_cast %19 : vector<512xf32> to vector<512x1xf32>
    %cst_10 = arith.constant 1.562500e-02 : f32
    %21 = vector.broadcast %cst_10 : f32 to vector<512x1xf32>
    %22 = arith.mulf %20, %21 : vector<512x1xf32>
    %23 = arith.mulf %16, %16 : vector<512x64xf32>
    %cst_11 = arith.constant dense<0.000000e+00> : vector<512xf32>
    %24 = vector.multi_reduction <add>, %23, %cst_11 [1] : vector<512x64xf32> to vector<512xf32>
    %25 = vector.shape_cast %24 : vector<512xf32> to vector<512x1xf32>
    %cst_12 = arith.constant 1.562500e-02 : f32
    %26 = vector.broadcast %cst_12 : f32 to vector<512x1xf32>
    %27 = arith.mulf %25, %26 : vector<512x1xf32>
    %28 = arith.mulf %22, %22 : vector<512x1xf32>
    %29 = arith.subf %27, %28 : vector<512x1xf32>
    %30 = vector.broadcast %22 : vector<512x1xf32> to vector<512x64xf32>
    %31 = arith.subf %16, %30 : vector<512x64xf32>
    %cst_13 = arith.constant 9.99999974E-6 : f32
    %32 = vector.broadcast %cst_13 : f32 to vector<512x1xf32>
    %33 = arith.addf %29, %32 : vector<512x1xf32>
    %34 = math.rsqrt %33 : vector<512x1xf32>
    %35 = vector.broadcast %34 : vector<512x1xf32> to vector<512x64xf32>
    %36 = arith.mulf %31, %35 : vector<512x64xf32>
    %37 = vector.broadcast %17 : vector<1x64xf32> to vector<512x64xf32>
    %38 = arith.mulf %36, %37 : vector<512x64xf32>
    %39 = vector.broadcast %18 : vector<1x64xf32> to vector<512x64xf32>
    %40 = arith.addf %38, %39 : vector<512x64xf32>
    %cst_14 = arith.constant 0.000000e+00 : f32
    %41 = vector.broadcast %cst_14 : f32 to vector<512x64xf32>
    %42 = arith.maximumf %40, %41 : vector<512x64xf32>
    %43 = arith.truncf %42 : vector<512x64xf32> to vector<512x64xbf16>
    %c0_15 = arith.constant 0 : index
    %c0_16 = arith.constant 0 : index
    %44 = vector.load %arg5[%c0_15, %c0_16] : memref<64x128xbf16, #tpu.memory_space<vmem>>, vector<64x128xbf16>
    %cst_17 = arith.constant dense<0.000000e+00> : vector<512x128xf32>
    %45 = tpu.matmul %43, %44, %cst_17 {dimension_numbers = #tpu.dot_dimension_numbers<[1], [0], [0], [1], [0, 0, 1, 1], [], []>} : vector<512x64xbf16>, vector<64x128xbf16>, vector<512x128xf32> -> vector<512x128xf32>
    %c0_18 = arith.constant 0 : index
    %c0_19 = arith.constant 0 : index
    %46 = vector.load %arg6[%c0_18, %c0_19] : memref<3x128xf32, #tpu.memory_space<vmem>>, vector<1x128xf32>
    %47 = vector.broadcast %46 : vector<1x128xf32> to vector<512x128xf32>
    %48 = arith.addf %45, %47 : vector<512x128xf32>
    %c1_20 = arith.constant 1 : index
    %c0_21 = arith.constant 0 : index
    %49 = vector.load %arg6[%c1_20, %c0_21] : memref<3x128xf32, #tpu.memory_space<vmem>>, vector<1x128xf32>
    %c2_22 = arith.constant 2 : index
    %c0_23 = arith.constant 0 : index
    %50 = vector.load %arg6[%c2_22, %c0_23] : memref<3x128xf32, #tpu.memory_space<vmem>>, vector<1x128xf32>
    %cst_24 = arith.constant dense<0.000000e+00> : vector<512xf32>
    %51 = vector.multi_reduction <add>, %48, %cst_24 [1] : vector<512x128xf32> to vector<512xf32>
    %52 = vector.shape_cast %51 : vector<512xf32> to vector<512x1xf32>
    %cst_25 = arith.constant 7.812500e-03 : f32
    %53 = vector.broadcast %cst_25 : f32 to vector<512x1xf32>
    %54 = arith.mulf %52, %53 : vector<512x1xf32>
    %55 = arith.mulf %48, %48 : vector<512x128xf32>
    %cst_26 = arith.constant dense<0.000000e+00> : vector<512xf32>
    %56 = vector.multi_reduction <add>, %55, %cst_26 [1] : vector<512x128xf32> to vector<512xf32>
    %57 = vector.shape_cast %56 : vector<512xf32> to vector<512x1xf32>
    %cst_27 = arith.constant 7.812500e-03 : f32
    %58 = vector.broadcast %cst_27 : f32 to vector<512x1xf32>
    %59 = arith.mulf %57, %58 : vector<512x1xf32>
    %60 = arith.mulf %54, %54 : vector<512x1xf32>
    %61 = arith.subf %59, %60 : vector<512x1xf32>
    %62 = vector.broadcast %54 : vector<512x1xf32> to vector<512x128xf32>
    %63 = arith.subf %48, %62 : vector<512x128xf32>
    %cst_28 = arith.constant 9.99999974E-6 : f32
    %64 = vector.broadcast %cst_28 : f32 to vector<512x1xf32>
    %65 = arith.addf %61, %64 : vector<512x1xf32>
    %66 = math.rsqrt %65 : vector<512x1xf32>
    %67 = vector.broadcast %66 : vector<512x1xf32> to vector<512x128xf32>
    %68 = arith.mulf %63, %67 : vector<512x128xf32>
    %69 = vector.broadcast %49 : vector<1x128xf32> to vector<512x128xf32>
    %70 = arith.mulf %68, %69 : vector<512x128xf32>
    %71 = vector.broadcast %50 : vector<1x128xf32> to vector<512x128xf32>
    %72 = arith.addf %70, %71 : vector<512x128xf32>
    %cst_29 = arith.constant 0.000000e+00 : f32
    %73 = vector.broadcast %cst_29 : f32 to vector<512x128xf32>
    %74 = arith.maximumf %72, %73 : vector<512x128xf32>
    %75 = arith.truncf %74 : vector<512x128xf32> to vector<512x128xbf16>
    %c0_30 = arith.constant 0 : index
    %c0_31 = arith.constant 0 : index
    %76 = vector.load %arg7[%c0_30, %c0_31] : memref<128x1024xbf16, #tpu.memory_space<vmem>>, vector<128x1024xbf16>
    %cst_32 = arith.constant dense<0.000000e+00> : vector<512x1024xf32>
    %77 = tpu.matmul %75, %76, %cst_32 {dimension_numbers = #tpu.dot_dimension_numbers<[1], [0], [0], [1], [0, 0, 1, 1], [], []>} : vector<512x128xbf16>, vector<128x1024xbf16>, vector<512x1024xf32> -> vector<512x1024xf32>
    %c0_33 = arith.constant 0 : index
    %c0_34 = arith.constant 0 : index
    %78 = vector.load %arg8[%c0_33, %c0_34] : memref<3x1024xf32, #tpu.memory_space<vmem>>, vector<1x1024xf32>
    %79 = vector.broadcast %78 : vector<1x1024xf32> to vector<512x1024xf32>
    %80 = arith.addf %77, %79 : vector<512x1024xf32>
    %c1_35 = arith.constant 1 : index
    %c0_36 = arith.constant 0 : index
    %81 = vector.load %arg8[%c1_35, %c0_36] : memref<3x1024xf32, #tpu.memory_space<vmem>>, vector<1x1024xf32>
    %c2_37 = arith.constant 2 : index
    %c0_38 = arith.constant 0 : index
    %82 = vector.load %arg8[%c2_37, %c0_38] : memref<3x1024xf32, #tpu.memory_space<vmem>>, vector<1x1024xf32>
    %cst_39 = arith.constant dense<0.000000e+00> : vector<512xf32>
    %83 = vector.multi_reduction <add>, %80, %cst_39 [1] : vector<512x1024xf32> to vector<512xf32>
    %84 = vector.shape_cast %83 : vector<512xf32> to vector<512x1xf32>
    %cst_40 = arith.constant 9.765625E-4 : f32
    %85 = vector.broadcast %cst_40 : f32 to vector<512x1xf32>
    %86 = arith.mulf %84, %85 : vector<512x1xf32>
    %87 = arith.mulf %80, %80 : vector<512x1024xf32>
    %cst_41 = arith.constant dense<0.000000e+00> : vector<512xf32>
    %88 = vector.multi_reduction <add>, %87, %cst_41 [1] : vector<512x1024xf32> to vector<512xf32>
    %89 = vector.shape_cast %88 : vector<512xf32> to vector<512x1xf32>
    %cst_42 = arith.constant 9.765625E-4 : f32
    %90 = vector.broadcast %cst_42 : f32 to vector<512x1xf32>
    %91 = arith.mulf %89, %90 : vector<512x1xf32>
    %92 = arith.mulf %86, %86 : vector<512x1xf32>
    %93 = arith.subf %91, %92 : vector<512x1xf32>
    %94 = vector.broadcast %86 : vector<512x1xf32> to vector<512x1024xf32>
    %95 = arith.subf %80, %94 : vector<512x1024xf32>
    %cst_43 = arith.constant 9.99999974E-6 : f32
    %96 = vector.broadcast %cst_43 : f32 to vector<512x1xf32>
    %97 = arith.addf %93, %96 : vector<512x1xf32>
    %98 = math.rsqrt %97 : vector<512x1xf32>
    %99 = vector.broadcast %98 : vector<512x1xf32> to vector<512x1024xf32>
    %100 = arith.mulf %95, %99 : vector<512x1024xf32>
    %101 = vector.broadcast %81 : vector<1x1024xf32> to vector<512x1024xf32>
    %102 = arith.mulf %100, %101 : vector<512x1024xf32>
    %103 = vector.broadcast %82 : vector<1x1024xf32> to vector<512x1024xf32>
    %104 = arith.addf %102, %103 : vector<512x1024xf32>
    %cst_44 = arith.constant 0.000000e+00 : f32
    %105 = vector.broadcast %cst_44 : f32 to vector<512x1024xf32>
    %106 = arith.maximumf %104, %105 : vector<512x1024xf32>
    %cst_45 = arith.constant 0xFF800000 : f32
    %107 = vector.shape_cast %6 : vector<512x1xi1> to vector<512x1xi1>
    %108 = vector.broadcast %107 : vector<512x1xi1> to vector<512x1024xi1>
    %109 = vector.broadcast %cst_45 : f32 to vector<512x1024xf32>
    %110 = arith.select %108, %106, %109 : vector<512x1024xi1>, vector<512x1024xf32>
    %cst_46 = arith.constant dense<0xFF800000> : vector<1024xf32>
    %111 = vector.multi_reduction <maximumf>, %110, %cst_46 [0] : vector<512x1024xf32> to vector<1024xf32>
    %112 = vector.shape_cast %111 : vector<1024xf32> to vector<1x1024xf32>
    %c0_i32 = arith.constant 0 : i32
    %113 = arith.cmpi eq, %arg1, %c0_i32 : i32
    %114 = arith.extui %113 : i1 to i32
    %c0_i32_47 = arith.constant 0 : i32
    %115 = arith.cmpi ne, %114, %c0_i32_47 : i32
    scf.if %115 {
      %c0_50 = arith.constant 0 : index
      %c0_51 = arith.constant 0 : index
      %c0_52 = arith.constant 0 : index
      %119 = vector.load %arg9[%c0_50, %c0_51, %c0_52] : memref<1x1x1024xf32, #tpu.memory_space<vmem>>, vector<1x1x1024xf32>
      %120 = vector.shape_cast %119 : vector<1x1x1024xf32> to vector<1x1024xf32>
      %121 = vector.shape_cast %112 : vector<1x1024xf32> to vector<1x1x1024xf32>
      tpu.vector_store %arg9[%c0_50, %c0_51, %c0_52], %121 {strides = array<i32>} : memref<1x1x1024xf32, #tpu.memory_space<vmem>>, vector<1x1x1024xf32>,
    } else {
    }
    %c0_i32_48 = arith.constant 0 : i32
    %116 = arith.cmpi sgt, %arg1, %c0_i32_48 : i32
    %117 = arith.extui %116 : i1 to i32
    %c0_i32_49 = arith.constant 0 : i32
    %118 = arith.cmpi ne, %117, %c0_i32_49 : i32
    scf.if %118 {
      %c0_50 = arith.constant 0 : index
      %c0_51 = arith.constant 0 : index
      %c0_52 = arith.constant 0 : index
      %119 = vector.load %arg9[%c0_50, %c0_51, %c0_52] : memref<1x1x1024xf32, #tpu.memory_space<vmem>>, vector<1x1x1024xf32>
      %120 = vector.shape_cast %119 : vector<1x1x1024xf32> to vector<1x1024xf32>
      %121 = arith.maximumf %120, %112 : vector<1x1024xf32>
      %c0_53 = arith.constant 0 : index
      %c0_54 = arith.constant 0 : index
      %c0_55 = arith.constant 0 : index
      %122 = vector.load %arg9[%c0_53, %c0_54, %c0_55] : memref<1x1x1024xf32, #tpu.memory_space<vmem>>, vector<1x1x1024xf32>
      %123 = vector.shape_cast %122 : vector<1x1x1024xf32> to vector<1x1024xf32>
      %124 = vector.shape_cast %121 : vector<1x1024xf32> to vector<1x1x1024xf32>
      tpu.vector_store %arg9[%c0_53, %c0_54, %c0_55], %124 {strides = array<i32>} : memref<1x1x1024xf32, #tpu.memory_space<vmem>>, vector<1x1x1024xf32>,
    } else {
    }
    return
  }
  func.func @transform_0(%arg0: i32, %arg1: i32) -> (i32, i32, i32) {
    %c0_i32 = arith.constant 0 : i32
    %c0_i32_0 = arith.constant 0 : i32
    return %arg0, %arg1, %c0_i32 : i32, i32, i32
  }
  func.func @transform_1(%arg0: i32, %arg1: i32) -> (i32, i32) {
    %c0_i32 = arith.constant 0 : i32
    %c0_i32_0 = arith.constant 0 : i32
    %c0_i32_1 = arith.constant 0 : i32
    return %c0_i32, %c0_i32_0 : i32, i32
  }
  func.func @transform_2(%arg0: i32, %arg1: i32) -> (i32, i32) {
    %c0_i32 = arith.constant 0 : i32
    %c0_i32_0 = arith.constant 0 : i32
    %c0_i32_1 = arith.constant 0 : i32
    return %c0_i32, %c0_i32_0 : i32, i32
  }
  func.func @transform_3(%arg0: i32, %arg1: i32) -> (i32, i32) {
    %c0_i32 = arith.constant 0 : i32
    %c0_i32_0 = arith.constant 0 : i32
    %c0_i32_1 = arith.constant 0 : i32
    return %c0_i32, %c0_i32_0 : i32, i32
  }
  func.func @transform_4(%arg0: i32, %arg1: i32) -> (i32, i32) {
    %c0_i32 = arith.constant 0 : i32
    %c0_i32_0 = arith.constant 0 : i32
    %c0_i32_1 = arith.constant 0 : i32
    return %c0_i32, %c0_i32_0 : i32, i32
  }
  func.func @transform_5(%arg0: i32, %arg1: i32) -> (i32, i32) {
    %c0_i32 = arith.constant 0 : i32
    %c0_i32_0 = arith.constant 0 : i32
    %c0_i32_1 = arith.constant 0 : i32
    return %c0_i32, %c0_i32_0 : i32, i32
  }
  func.func @transform_6(%arg0: i32, %arg1: i32) -> (i32, i32) {
    %c0_i32 = arith.constant 0 : i32
    %c0_i32_0 = arith.constant 0 : i32
    %c0_i32_1 = arith.constant 0 : i32
    return %c0_i32, %c0_i32_0 : i32, i32
  }
  func.func @transform_7(%arg0: i32, %arg1: i32) -> (i32, i32, i32) {
    %c0_i32 = arith.constant 0 : i32
    %c0_i32_0 = arith.constant 0 : i32
    %c0_i32_1 = arith.constant 0 : i32
    return %arg0, %c0_i32, %c0_i32_0 : i32, i32, i32
  }
}

</mosaic_0001>

<llo_original>
// kernel: tpu_custom_call.1
$region0: #{tpu_custom_call.1}
  #allocation0 [shape = 'u32[]', space=smem, size = 0x4, offset = 0x4, fixed_abs, tag = 'smem constant byte address 0x4 - core index']
  #allocation1 [shape = 'u32[144,128]{1,0:T(1,128)}', space=vmem, size = 0x12000, scoped, tag = 'internal scratch']
  %s0 = inlined_call_operand.vmem [shape: f32[2,520,16], index: 0, kind: input, shape index: {}]
  %s1 = inlined_call_operand.vmem [shape: bf16[16,64], index: 1, kind: input, shape index: {}]
  %s2 = inlined_call_operand.vmem [shape: f32[3,64], index: 2, kind: input, shape index: {}]
  %s3 = inlined_call_operand.vmem [shape: bf16[64,128], index: 3, kind: input, shape index: {}]
  %s4 = inlined_call_operand.vmem [shape: f32[3,128], index: 4, kind: input, shape index: {}]
  %s5 = inlined_call_operand.vmem [shape: bf16[128,1024], index: 5, kind: input, shape index: {}]
  %s6 = inlined_call_operand.vmem [shape: f32[3,1024], index: 6, kind: input, shape index: {}]
  %s7 = inlined_call_operand.hbm [shape: f32[2,1,1024], index: 7, kind: output, shape index: {}]
  %s8 = sld [smem:[#allocation0]]
  $region69: #{tpu_custom_call.1} parent=0
    _
  %s10 = ssub.s32 1, %s8
  %s11 = scalar_select 0, %s10, %s8
  $region1: #{tpu_custom_call.1} parent=0
    #allocation2 [shape = 'u8[8192]{0}', space=vmem, size = 0x2000, scoped, tag = 'output window, operand 0']
    #allocation3 [shape = 's32[2]{0}', space=sflag, size = 0x8, scoped, tag = 'scoped memory for tpu_custom_call.1']
    %12 = vsyncpa [#allocation3], 0
    %s13 = scalar_lea.sflag [#allocation3], 1
    %14 = vsyncpa %s13, 0
    loop: start=0, step=1, limit=6
    $region2: #{tpu_custom_call.1} parent=1 // loop_pre_header
      _
    $region3: #{tpu_custom_call.1} parent=1 // loop_header
      %s16 = sphi 0, %s20
      %p17 = scmp.ge.s32.totalorder %s16, 6
      %s23 = sphi 0, %s35
      %s24 = sphi 0, %s31
      %s25 = sphi 0, %s23
      %s26 = sphi 0, %s24
      %s27 = sphi 0, %s25
      %s28 = sphi 0, %s26
      %s40 = sphi 0, %s42
      %s43 = sphi 0, %s40
      %s44 = sphi 0, %s43
      %s60 = sphi 0, %s44
      %s64 = sphi 0, %s64
      %s66 = sphi 0, %s64
      %s67 = sphi 0, %s66
      %s81 = sphi 0, %s67
      %s85 = sphi 0, %s85
      %s87 = sphi 0, %s85
      %s88 = sphi 0, %s87
      %s102 = sphi 0, %s88
      %s106 = sphi 0, %s106
      %s108 = sphi 0, %s106
      %s109 = sphi 0, %s108
      %s123 = sphi 0, %s109
      %s127 = sphi 0, %s127
      %s129 = sphi 0, %s127
      %s130 = sphi 0, %s129
      %s144 = sphi 0, %s130
      %s148 = sphi 0, %s148
      %s150 = sphi 0, %s148
      %s151 = sphi 0, %s150
      %s165 = sphi 0, %s151
      %s169 = sphi 0, %s169
      %s171 = sphi 0, %s169
      %s172 = sphi 0, %s171
      %s186 = sphi 0, %s172
      %s192 = sphi 0, %s194
      %s195 = sphi 0, %s192
      %s196 = sphi 0, %s195
      %s212 = sphi 0, %s196
    $region4: #{tpu_custom_call.1} parent=1 // loop_header_branch
      %19 = sbr.rel (%p17) target = $region8
    $region5: #{tpu_custom_call.1} parent=1 // loop_body
      %s21 = ssub.s32 %s16, 1
      %s22 = ssub.s32 %s16, 2
      %s29 = sadd.s32 1, %s24
      %p30 = scmp.ge.s32.totalorder %s29, 2
      %s31 = scalar_select %p30, 0, %s29
      %s32 = sadd.s32 1, %s23
      %s33 = scalar_select %p30, %s32, %s23
      %p34 = scmp.ge.s32.totalorder %s33, 2
      %s35 = scalar_select %p34, 0, %s33
      %s36 = ssub.s32 %s23, %s35
      %s37 = ssub.s32 %s24, %s31
      %s38 = sor.u32 %s36, %s37
      %p39 = scmp.eq.s32.totalorder %s38, 0
      %s41 = sadd.s32 %s40, 1
      %s42 = scalar_select %p39, %s40, %s41
      %p45 = pneg %p39
      %p46 = scmp.eq.s32.totalorder %s16, 3
      %p47 = por %p45, %p46
      %p48 = scmp.ne.s32.totalorder %s40, %s43
      %p49 = scmp.eq.s32.totalorder %s16, 0
      %p50 = por %p48, %p49
      %p51 = scmp.ne.s32.totalorder %s40, %s43
      %p52 = scmp.eq.s32.totalorder %s21, 3
      %p53 = por %p51, %p52
      %p54 = scmp.ne.s32.totalorder %s43, %s44
      %p55 = scmp.eq.s32.totalorder %s21, 0
      %p56 = por %p54, %p55
      %p57 = scmp.ne.s32.totalorder %s43, %s44
      %p58 = scmp.eq.s32.totalorder %s22, 3
      %p59 = por %p57, %p58
      %p61 = scmp.ne.s32.totalorder %s44, %s60
      %p62 = scmp.eq.s32.totalorder %s22, 0
      %p63 = por %p61, %p62
      %s65 = sadd.s32 %s64, 1
      %p68 = scmp.eq.s32.totalorder %s16, 3
      %p69 = scmp.ne.s32.totalorder %s64, %s66
      %p70 = scmp.eq.s32.totalorder %s16, 0
      %p71 = por %p69, %p70
      %p72 = scmp.ne.s32.totalorder %s64, %s66
      %p73 = scmp.eq.s32.totalorder %s21, 3
      %p74 = por %p72, %p73
      %p75 = scmp.ne.s32.totalorder %s66, %s67
      %p76 = scmp.eq.s32.totalorder %s21, 0
      %p77 = por %p75, %p76
      %p78 = scmp.ne.s32.totalorder %s66, %s67
      %p79 = scmp.eq.s32.totalorder %s22, 3
      %p80 = por %p78, %p79
      %p82 = scmp.ne.s32.totalorder %s67, %s81
      %p83 = scmp.eq.s32.totalorder %s22, 0
      %p84 = por %p82, %p83
      %s86 = sadd.s32 %s85, 1
      %p89 = scmp.eq.s32.totalorder %s16, 3
      %p90 = scmp.ne.s32.totalorder %s85, %s87
      %p91 = scmp.eq.s32.totalorder %s16, 0
      %p92 = por %p90, %p91
      %p93 = scmp.ne.s32.totalorder %s85, %s87
      %p94 = scmp.eq.s32.totalorder %s21, 3
      %p95 = por %p93, %p94
      %p96 = scmp.ne.s32.totalorder %s87, %s88
      %p97 = scmp.eq.s32.totalorder %s21, 0
      %p98 = por %p96, %p97
      %p99 = scmp.ne.s32.totalorder %s87, %s88
      %p100 = scmp.eq.s32.totalorder %s22, 3
      %p101 = por %p99, %p100
      %p103 = scmp.ne.s32.totalorder %s88, %s102
      %p104 = scmp.eq.s32.totalorder %s22, 0
      %p105 = por %p103, %p104
      %s107 = sadd.s32 %s106, 1
      %p110 = scmp.eq.s32.totalorder %s16, 3
      %p111 = scmp.ne.s32.totalorder %s106, %s108
      %p112 = scmp.eq.s32.totalorder %s16, 0
      %p113 = por %p111, %p112
      %p114 = scmp.ne.s32.totalorder %s106, %s108
      %p115 = scmp.eq.s32.totalorder %s21, 3
      %p116 = por %p114, %p115
      %p117 = scmp.ne.s32.totalorder %s108, %s109
      %p118 = scmp.eq.s32.totalorder %s21, 0
      %p119 = por %p117, %p118
      %p120 = scmp.ne.s32.totalorder %s108, %s109
      %p121 = scmp.eq.s32.totalorder %s22, 3
      %p122 = por %p120, %p121
      %p124 = scmp.ne.s32.totalorder %s109, %s123
      %p125 = scmp.eq.s32.totalorder %s22, 0
      %p126 = por %p124, %p125
      %s128 = sadd.s32 %s127, 1
      %p131 = scmp.eq.s32.totalorder %s16, 3
      %p132 = scmp.ne.s32.totalorder %s127, %s129
      %p133 = scmp.eq.s32.totalorder %s16, 0
      %p134 = por %p132, %p133
      %p135 = scmp.ne.s32.totalorder %s127, %s129
      %p136 = scmp.eq.s32.totalorder %s21, 3
      %p137 = por %p135, %p136
      %p138 = scmp.ne.s32.totalorder %s129, %s130
      %p139 = scmp.eq.s32.totalorder %s21, 0
      %p140 = por %p138, %p139
      %p141 = scmp.ne.s32.totalorder %s129, %s130
      %p142 = scmp.eq.s32.totalorder %s22, 3
      %p143 = por %p141, %p142
      %p145 = scmp.ne.s32.totalorder %s130, %s144
      %p146 = scmp.eq.s32.totalorder %s22, 0
      %p147 = por %p145, %p146
      %s149 = sadd.s32 %s148, 1
      %p152 = scmp.eq.s32.totalorder %s16, 3
      %p153 = scmp.ne.s32.totalorder %s148, %s150
      %p154 = scmp.eq.s32.totalorder %s16, 0
      %p155 = por %p153, %p154
      %p156 = scmp.ne.s32.totalorder %s148, %s150
      %p157 = scmp.eq.s32.totalorder %s21, 3
      %p158 = por %p156, %p157
      %p159 = scmp.ne.s32.totalorder %s150, %s151
      %p160 = scmp.eq.s32.totalorder %s21, 0
      %p161 = por %p159, %p160
      %p162 = scmp.ne.s32.totalorder %s150, %s151
      %p163 = scmp.eq.s32.totalorder %s22, 3
      %p164 = por %p162, %p163
      %p166 = scmp.ne.s32.totalorder %s151, %s165
      %p167 = scmp.eq.s32.totalorder %s22, 0
      %p168 = por %p166, %p167
      %s170 = sadd.s32 %s169, 1
      %p173 = scmp.eq.s32.totalorder %s16, 3
      %p174 = scmp.ne.s32.totalorder %s169, %s171
      %p175 = scmp.eq.s32.totalorder %s16, 0
      %p176 = por %p174, %p175
      %p177 = scmp.ne.s32.totalorder %s169, %s171
      %p178 = scmp.eq.s32.totalorder %s21, 3
      %p179 = por %p177, %p178
      %p180 = scmp.ne.s32.totalorder %s171, %s172
      %p181 = scmp.eq.s32.totalorder %s21, 0
      %p182 = por %p180, %p181
      %p183 = scmp.ne.s32.totalorder %s171, %s172
      %p184 = scmp.eq.s32.totalorder %s22, 3
      %p185 = por %p183, %p184
      %p187 = scmp.ne.s32.totalorder %s172, %s186
      %p188 = scmp.eq.s32.totalorder %s22, 0
      %p189 = por %p187, %p188
      %s190 = ssub.s32 %s23, %s35
      %p191 = scmp.eq.s32.totalorder %s190, 0
      %s193 = sadd.s32 %s192, 1
      %s194 = scalar_select %p191, %s192, %s193
      %p197 = pneg %p191
      %p198 = scmp.eq.s32.totalorder %s16, 3
      %p199 = por %p197, %p198
      %p200 = scmp.ne.s32.totalorder %s192, %s195
      %p201 = scmp.eq.s32.totalorder %s16, 0
      %p202 = por %p200, %p201
      %p203 = scmp.ne.s32.totalorder %s192, %s195
      %p204 = scmp.eq.s32.totalorder %s21, 3
      %p205 = por %p203, %p204
      %p206 = scmp.ne.s32.totalorder %s195, %s196
      %p207 = scmp.eq.s32.totalorder %s21, 0
      %p208 = por %p206, %p207
      %p209 = scmp.ne.s32.totalorder %s195, %s196
      %p210 = scmp.eq.s32.totalorder %s22, 3
      %p211 = por %p209, %p210
      %p213 = scmp.ne.s32.totalorder %s196, %s212
      %p214 = scmp.eq.s32.totalorder %s22, 0
      %p215 = por %p213, %p214
      %p216 = scmp.le.s32.totalorder 1, %s16
      %p217 = scmp.lt.s32.totalorder %s16, 5
      %p218 = pnand %p216, %p217
      %p219 = pneg %p218
      // Predicated region
      $region9: #{tpu_custom_call.1} parent=5 // pred_check
        _
      $region10: #{tpu_custom_call.1} parent=5 // pred_check_branch
        %221 = sbr.rel (%p218) target = $region12
      $region11: #{tpu_custom_call.1} parent=5 // pred_region
        %s222 = ssub.s32 %s16, 1
        // Predicated region
        $region13: #{tpu_custom_call.1} parent=11 // pred_check
          %p223 = pneg %p77
        $region14: #{tpu_custom_call.1} parent=11 // pred_check_branch
          %225 = sbr.rel (%p223) target = $region16
        $region15: #{tpu_custom_call.1} parent=11 // pred_region
          _
        $region16: #{tpu_custom_call.1} parent=11 // pred_fallthru
          _
        // Predicated region
        $region17: #{tpu_custom_call.1} parent=11 // pred_check
          %p226 = pneg %p98
        $region18: #{tpu_custom_call.1} parent=11 // pred_check_branch
          %228 = sbr.rel (%p226) target = $region20
        $region19: #{tpu_custom_call.1} parent=11 // pred_region
          _
        $region20: #{tpu_custom_call.1} parent=11 // pred_fallthru
          _
        // Predicated region
        $region21: #{tpu_custom_call.1} parent=11 // pred_check
          %p229 = pneg %p119
        $region22: #{tpu_custom_call.1} parent=11 // pred_check_branch
          %231 = sbr.rel (%p229) target = $region24
        $region23: #{tpu_custom_call.1} parent=11 // pred_region
          _
        $region24: #{tpu_custom_call.1} parent=11 // pred_fallthru
          _
        // Predicated region
        $region25: #{tpu_custom_call.1} parent=11 // pred_check
          %p232 = pneg %p140
        $region26: #{tpu_custom_call.1} parent=11 // pred_check_branch
          %234 = sbr.rel (%p232) target = $region28
        $region27: #{tpu_custom_call.1} parent=11 // pred_region
          _
        $region28: #{tpu_custom_call.1} parent=11 // pred_fallthru
          _
        // Predicated region
        $region29: #{tpu_custom_call.1} parent=11 // pred_check
          %p235 = pneg %p161
        $region30: #{tpu_custom_call.1} parent=11 // pred_check_branch
          %237 = sbr.rel (%p235) target = $region32
        $region31: #{tpu_custom_call.1} parent=11 // pred_region
          _
        $region32: #{tpu_custom_call.1} parent=11 // pred_fallthru
          _
        // Predicated region
        $region33: #{tpu_custom_call.1} parent=11 // pred_check
          %p238 = pneg %p182
        $region34: #{tpu_custom_call.1} parent=11 // pred_check_branch
          %240 = sbr.rel (%p238) target = $region36
        $region35: #{tpu_custom_call.1} parent=11 // pred_region
          _
        $region36: #{tpu_custom_call.1} parent=11 // pred_fallthru
          _
      $region12: #{tpu_custom_call.1} parent=5 // pred_fallthru
        _
      %p241 = scmp.lt.s32.totalorder %s16, 4
      // Predicated region
      $region37: #{tpu_custom_call.1} parent=5 // pred_check
        %p242 = pneg %p241
      $region38: #{tpu_custom_call.1} parent=5 // pred_check_branch
        %244 = sbr.rel (%p242) target = $region40
      $region39: #{tpu_custom_call.1} parent=5 // pred_region
        // Predicated region
        $region41: #{tpu_custom_call.1} parent=39 // pred_check
          %p245 = pneg %p50
        $region42: #{tpu_custom_call.1} parent=39 // pred_check_branch
          %247 = sbr.rel (%p245) target = $region44
        $region43: #{tpu_custom_call.1} parent=39 // pred_region
          %s248 = smul.u32 64, %s24
          %s249 = ssub.s32 65, %s248
          %p250 = scmp.lt.s32.totalorder %s249, 64
          %s251 = scalar_select %p250, %s249, 64
          %s252 = smul.u32 128, %s251
          %p253 = scmp.lt.s32.totalorder %s23, 1
          %s254 = scalar_select %p253, %s23, 1
          %p255 = scmp.lt.s32.totalorder %s248, 64
          %s256 = scalar_select %p255, %s248, 64
          %s257 = smul.addr %s254, 65
          %s258 = sadd.s32 %s256, %s257
          %s259 = smul.addr %s258, 8
          %s260 = scalar_lea.vmem %s0, %s259
          %s261 = smul.u32 64, %s24
          %s262 = ssub.s32 65, %s261
          %p263 = scmp.lt.s32.totalorder %s262, 64
          %s264 = scalar_select %p263, %s262, 64
          %s265 = smul.u32 128, %s264
        $region44: #{tpu_custom_call.1} parent=39 // pred_fallthru
          _
      $region40: #{tpu_custom_call.1} parent=5 // pred_fallthru
        _
      %p266 = scmp.le.s32.totalorder 1, %s16
      %p267 = scmp.lt.s32.totalorder %s16, 5
      %p268 = pnand %p266, %p267
      %p269 = pneg %p268
      // Predicated region
      $region45: #{tpu_custom_call.1} parent=5 // pred_check
        _
      $region46: #{tpu_custom_call.1} parent=5 // pred_check_branch
        %271 = sbr.rel (%p268) target = $region48
      $region47: #{tpu_custom_call.1} parent=5 // pred_region
        %s272 = ssub.s32 %s16, 1
        %s273 = smul.u32 64, %s26
        %s274 = ssub.s32 65, %s273
        %p275 = scmp.lt.s32.totalorder %s274, 64
        %s276 = scalar_select %p275, %s274, 64
        %s277 = smul.u32 128, %s276
        %p278 = scmp.lt.s32.totalorder %s25, 1
        %s279 = scalar_select %p278, %s25, 1
        %p280 = scmp.lt.s32.totalorder %s273, 64
        %s281 = scalar_select %p280, %s273, 64
        %s282 = smul.addr %s279, 65
        %s283 = sadd.s32 %s281, %s282
        %s284 = smul.addr %s283, 8
        %s285 = scalar_lea.vmem %s0, %s284
        %p286 = pneg %p56
        %p287 = pneg %p53
        %p288 = pneg %p77
        %p289 = pneg %p74
        %p290 = pneg %p98
        %p291 = pneg %p95
        %p292 = pneg %p119
        %p293 = pneg %p116
        %p294 = pneg %p140
        %p295 = pneg %p137
        %p296 = pneg %p161
        %p297 = pneg %p158
        %p298 = pneg %p182
        %p299 = pneg %p179
        %p300 = pneg %p208
        %p301 = pneg %p205
        %s302 = sand.u32 %s195, 1
        %s303 = scalar_lea.sflag [#allocation3], %s302
        %s304 = sand.u32 %s195, 1
        %s305 = smul.addr %s304, 8
        %s306 = scalar_lea.vmem [#allocation2], %s305
        %s307 = smul.u32 64, %s26
        %s308 = ssub.s32 65, %s307
        %p309 = scmp.lt.s32.totalorder %s308, 64
        %s310 = scalar_select %p309, %s308, 64
        %s311 = smul.u32 128, %s310
        %p312 = scmp.lt.s32.totalorder %s25, 1
        %s313 = scalar_select %p312, %s25, 1
        %p314 = scmp.lt.s32.totalorder %s307, 64
        %s315 = scalar_select %p314, %s307, 64
        %s316 = smul.addr %s313, 65
        %s317 = sadd.s32 %s315, %s316
        %s318 = smul.addr %s317, 8
        %s319 = scalar_lea.vmem %s0, %s318
        %s320 = smul.u32 64, %s26
        %s321 = ssub.s32 65, %s320
        %p322 = scmp.lt.s32.totalorder %s321, 64
        %s323 = scalar_select %p322, %s321, 64
        %s324 = smul.u32 128, %s323
        %v326 = vld [vmem:[%s319] sm:$0xff]
        %v327 = vld [vmem:[%s319 + $0x8] sm:$0xff]
        %v328 = vld [vmem:[%s319 + $0x10] sm:$0xff]
        %v329 = vld [vmem:[%s319 + $0x18] sm:$0xff]
        %v330 = vld [vmem:[%s319 + $0x20] sm:$0xff]
        %v331 = vld [vmem:[%s319 + $0x28] sm:$0xff]
        %v332 = vld [vmem:[%s319 + $0x30] sm:$0xff]
        %v333 = vld [vmem:[%s319 + $0x38] sm:$0xff]
        %v334 = vld [vmem:[%s319 + $0x40] sm:$0xff]
        %v335 = vld [vmem:[%s319 + $0x48] sm:$0xff]
        %v336 = vld [vmem:[%s319 + $0x50] sm:$0xff]
        %v337 = vld [vmem:[%s319 + $0x58] sm:$0xff]
        %v338 = vld [vmem:[%s319 + $0x60] sm:$0xff]
        %v339 = vld [vmem:[%s319 + $0x68] sm:$0xff]
        %v340 = vld [vmem:[%s319 + $0x70] sm:$0xff]
        %v341 = vld [vmem:[%s319 + $0x78] sm:$0xff]
        %v342 = vld [vmem:[%s319 + $0x80] sm:$0xff]
        %v343 = vld [vmem:[%s319 + $0x88] sm:$0xff]
        %v344 = vld [vmem:[%s319 + $0x90] sm:$0xff]
        %v345 = vld [vmem:[%s319 + $0x98] sm:$0xff]
        %v346 = vld [vmem:[%s319 + $0xa0] sm:$0xff]
        %v347 = vld [vmem:[%s319 + $0xa8] sm:$0xff]
        %v348 = vld [vmem:[%s319 + $0xb0] sm:$0xff]
        %v349 = vld [vmem:[%s319 + $0xb8] sm:$0xff]
        %v350 = vld [vmem:[%s319 + $0xc0] sm:$0xff]
        %v351 = vld [vmem:[%s319 + $0xc8] sm:$0xff]
        %v352 = vld [vmem:[%s319 + $0xd0] sm:$0xff]
        %v353 = vld [vmem:[%s319 + $0xd8] sm:$0xff]
        %v354 = vld [vmem:[%s319 + $0xe0] sm:$0xff]
        %v355 = vld [vmem:[%s319 + $0xe8] sm:$0xff]
        %v356 = vld [vmem:[%s319 + $0xf0] sm:$0xff]
        %v357 = vld [vmem:[%s319 + $0xf8] sm:$0xff]
        %v358 = vld [vmem:[%s319 + $0x100] sm:$0xff]
        %v359 = vld [vmem:[%s319 + $0x108] sm:$0xff]
        %v360 = vld [vmem:[%s319 + $0x110] sm:$0xff]
        %v361 = vld [vmem:[%s319 + $0x118] sm:$0xff]
        %v362 = vld [vmem:[%s319 + $0x120] sm:$0xff]
        %v363 = vld [vmem:[%s319 + $0x128] sm:$0xff]
        %v364 = vld [vmem:[%s319 + $0x130] sm:$0xff]
        %v365 = vld [vmem:[%s319 + $0x138] sm:$0xff]
        %v366 = vld [vmem:[%s319 + $0x140] sm:$0xff]
        %v367 = vld [vmem:[%s319 + $0x148] sm:$0xff]
        %v368 = vld [vmem:[%s319 + $0x150] sm:$0xff]
        %v369 = vld [vmem:[%s319 + $0x158] sm:$0xff]
        %v370 = vld [vmem:[%s319 + $0x160] sm:$0xff]
        %v371 = vld [vmem:[%s319 + $0x168] sm:$0xff]
        %v372 = vld [vmem:[%s319 + $0x170] sm:$0xff]
        %v373 = vld [vmem:[%s319 + $0x178] sm:$0xff]
        %v374 = vld [vmem:[%s319 + $0x180] sm:$0xff]
        %v375 = vld [vmem:[%s319 + $0x188] sm:$0xff]
        %v376 = vld [vmem:[%s319 + $0x190] sm:$0xff]
        %v377 = vld [vmem:[%s319 + $0x198] sm:$0xff]
        %v378 = vld [vmem:[%s319 + $0x1a0] sm:$0xff]
        %v379 = vld [vmem:[%s319 + $0x1a8] sm:$0xff]
        %v380 = vld [vmem:[%s319 + $0x1b0] sm:$0xff]
        %v381 = vld [vmem:[%s319 + $0x1b8] sm:$0xff]
        %v382 = vld [vmem:[%s319 + $0x1c0] sm:$0xff]
        %v383 = vld [vmem:[%s319 + $0x1c8] sm:$0xff]
        %v384 = vld [vmem:[%s319 + $0x1d0] sm:$0xff]
        %v385 = vld [vmem:[%s319 + $0x1d8] sm:$0xff]
        %v386 = vld [vmem:[%s319 + $0x1e0] sm:$0xff]
        %v387 = vld [vmem:[%s319 + $0x1e8] sm:$0xff]
        %v388 = vld [vmem:[%s319 + $0x1f0] sm:$0xff]
        %v389 = vld [vmem:[%s319 + $0x1f8] sm:$0xff]
        %v390 = vlaneseq
        %v391 = vshrl.u32 %v390, 7
        %v392 = vadd.s32 %v391, 8
        %v393 = vadd.s32 %v391, 16
        %v394 = vadd.s32 %v391, 24
        %v395 = vadd.s32 %v391, 32
        %v396 = vadd.s32 %v391, 40
        %v397 = vadd.s32 %v391, 48
        %v398 = vadd.s32 %v391, 56
        %v399 = vadd.s32 %v391, 64
        %v400 = vadd.s32 %v391, 72
        %v401 = vadd.s32 %v391, 80
        %v402 = vadd.s32 %v391, 88
        %v403 = vadd.s32 %v391, 96
        %v404 = vadd.s32 %v391, 104
        %v405 = vadd.s32 %v391, 112
        %v406 = vadd.s32 %v391, 120
        %v407 = vadd.s32 %v391, 128
        %v408 = vadd.s32 %v391, 136
        %v409 = vadd.s32 %v391, 144
        %v410 = vadd.s32 %v391, 152
        %v411 = vadd.s32 %v391, 160
        %v412 = vadd.s32 %v391, 168
        %v413 = vadd.s32 %v391, 176
        %v414 = vadd.s32 %v391, 184
        %v415 = vadd.s32 %v391, 192
        %v416 = vadd.s32 %v391, 200
        %v417 = vadd.s32 %v391, 208
        %v418 = vadd.s32 %v391, 216
        %v419 = vadd.s32 %v391, 224
        %v420 = vadd.s32 %v391, 232
        %v421 = vadd.s32 %v391, 240
        %v422 = vadd.s32 %v391, 248
        %v423 = vadd.s32 %v391, 256
        %v424 = vadd.s32 %v391, 264
        %v425 = vadd.s32 %v391, 272
        %v426 = vadd.s32 %v391, 280
        %v427 = vadd.s32 %v391, 288
        %v428 = vadd.s32 %v391, 296
        %v429 = vadd.s32 %v391, 304
        %v430 = vadd.s32 %v391, 312
        %v431 = vadd.s32 %v391, 320
        %v432 = vadd.s32 %v391, 328
        %v433 = vadd.s32 %v391, 336
        %v434 = vadd.s32 %v391, 344
        %v435 = vadd.s32 %v391, 352
        %v436 = vadd.s32 %v391, 360
        %v437 = vadd.s32 %v391, 368
        %v438 = vadd.s32 %v391, 376
        %v439 = vadd.s32 %v391, 384
        %v440 = vadd.s32 %v391, 392
        %v441 = vadd.s32 %v391, 400
        %v442 = vadd.s32 %v391, 408
        %v443 = vadd.s32 %v391, 416
        %v444 = vadd.s32 %v391, 424
        %v445 = vadd.s32 %v391, 432
        %v446 = vadd.s32 %v391, 440
        %v447 = vadd.s32 %v391, 448
        %v448 = vadd.s32 %v391, 456
        %v449 = vadd.s32 %v391, 464
        %v450 = vadd.s32 %v391, 472
        %v451 = vadd.s32 %v391, 480
        %v452 = vadd.s32 %v391, 488
        %v453 = vadd.s32 %v391, 496
        %v454 = vadd.s32 %v391, 504
        %s455 = smul.u32 %s26, 512
        %s456 = ssub.s32 520, %s455
        %v457 = vstv %s456
        %vm458 = vcmp.lt.s32.totalorder %v391, %v457
        %vm459 = vcmp.lt.s32.totalorder %v392, %v457
        %vm460 = vcmp.lt.s32.totalorder %v393, %v457
        %vm461 = vcmp.lt.s32.totalorder %v394, %v457
        %vm462 = vcmp.lt.s32.totalorder %v395, %v457
        %vm463 = vcmp.lt.s32.totalorder %v396, %v457
        %vm464 = vcmp.lt.s32.totalorder %v397, %v457
        %vm465 = vcmp.lt.s32.totalorder %v398, %v457
        %vm466 = vcmp.lt.s32.totalorder %v399, %v457
        %vm467 = vcmp.lt.s32.totalorder %v400, %v457
        %vm468 = vcmp.lt.s32.totalorder %v401, %v457
        %vm469 = vcmp.lt.s32.totalorder %v402, %v457
        %vm470 = vcmp.lt.s32.totalorder %v403, %v457
        %vm471 = vcmp.lt.s32.totalorder %v404, %v457
        %vm472 = vcmp.lt.s32.totalorder %v405, %v457
        %vm473 = vcmp.lt.s32.totalorder %v406, %v457
        %vm474 = vcmp.lt.s32.totalorder %v407, %v457
        %vm475 = vcmp.lt.s32.totalorder %v408, %v457
        %vm476 = vcmp.lt.s32.totalorder %v409, %v457
        %vm477 = vcmp.lt.s32.totalorder %v410, %v457
        %vm478 = vcmp.lt.s32.totalorder %v411, %v457
        %vm479 = vcmp.lt.s32.totalorder %v412, %v457
        %vm480 = vcmp.lt.s32.totalorder %v413, %v457
        %vm481 = vcmp.lt.s32.totalorder %v414, %v457
        %vm482 = vcmp.lt.s32.totalorder %v415, %v457
        %vm483 = vcmp.lt.s32.totalorder %v416, %v457
        %vm484 = vcmp.lt.s32.totalorder %v417, %v457
        %vm485 = vcmp.lt.s32.totalorder %v418, %v457
        %vm486 = vcmp.lt.s32.totalorder %v419, %v457
        %vm487 = vcmp.lt.s32.totalorder %v420, %v457
        %vm488 = vcmp.lt.s32.totalorder %v421, %v457
        %vm489 = vcmp.lt.s32.totalorder %v422, %v457
        %vm490 = vcmp.lt.s32.totalorder %v423, %v457
        %vm491 = vcmp.lt.s32.totalorder %v424, %v457
        %vm492 = vcmp.lt.s32.totalorder %v425, %v457
        %vm493 = vcmp.lt.s32.totalorder %v426, %v457
        %vm494 = vcmp.lt.s32.totalorder %v427, %v457
        %vm495 = vcmp.lt.s32.totalorder %v428, %v457
        %vm496 = vcmp.lt.s32.totalorder %v429, %v457
        %vm497 = vcmp.lt.s32.totalorder %v430, %v457
        %vm498 = vcmp.lt.s32.totalorder %v431, %v457
        %vm499 = vcmp.lt.s32.totalorder %v432, %v457
        %vm500 = vcmp.lt.s32.totalorder %v433, %v457
        %vm501 = vcmp.lt.s32.totalorder %v434, %v457
        %vm502 = vcmp.lt.s32.totalorder %v435, %v457
        %vm503 = vcmp.lt.s32.totalorder %v436, %v457
        %vm504 = vcmp.lt.s32.totalorder %v437, %v457
        %vm505 = vcmp.lt.s32.totalorder %v438, %v457
        %vm506 = vcmp.lt.s32.totalorder %v439, %v457
        %vm507 = vcmp.lt.s32.totalorder %v440, %v457
        %vm508 = vcmp.lt.s32.totalorder %v441, %v457
        %vm509 = vcmp.lt.s32.totalorder %v442, %v457
        %vm510 = vcmp.lt.s32.totalorder %v443, %v457
        %vm511 = vcmp.lt.s32.totalorder %v444, %v457
        %vm512 = vcmp.lt.s32.totalorder %v445, %v457
        %vm513 = vcmp.lt.s32.totalorder %v446, %v457
        %vm514 = vcmp.lt.s32.totalorder %v447, %v457
        %vm515 = vcmp.lt.s32.totalorder %v448, %v457
        %vm516 = vcmp.lt.s32.totalorder %v449, %v457
        %vm517 = vcmp.lt.s32.totalorder %v450, %v457
        %vm518 = vcmp.lt.s32.totalorder %v451, %v457
        %vm519 = vcmp.lt.s32.totalorder %v452, %v457
        %vm520 = vcmp.lt.s32.totalorder %v453, %v457
        %vm521 = vcmp.lt.s32.totalorder %v454, %v457
        %v522 = vsel %vm458, 1, 0
        %v523 = vsel %vm459, 1, 0
        %v524 = vsel %vm460, 1, 0
        %v525 = vsel %vm461, 1, 0
        %v526 = vsel %vm462, 1, 0
        %v527 = vsel %vm463, 1, 0
        %v528 = vsel %vm464, 1, 0
        %v529 = vsel %vm465, 1, 0
        %v530 = vsel %vm466, 1, 0
        %v531 = vsel %vm467, 1, 0
        %v532 = vsel %vm468, 1, 0
        %v533 = vsel %vm469, 1, 0
        %v534 = vsel %vm470, 1, 0
        %v535 = vsel %vm471, 1, 0
        %v536 = vsel %vm472, 1, 0
        %v537 = vsel %vm473, 1, 0
        %v538 = vsel %vm474, 1, 0
        %v539 = vsel %vm475, 1, 0
        %v540 = vsel %vm476, 1, 0
        %v541 = vsel %vm477, 1, 0
        %v542 = vsel %vm478, 1, 0
        %v543 = vsel %vm479, 1, 0
        %v544 = vsel %vm480, 1, 0
        %v545 = vsel %vm481, 1, 0
        %v546 = vsel %vm482, 1, 0
        %v547 = vsel %vm483, 1, 0
        %v548 = vsel %vm484, 1, 0
        %v549 = vsel %vm485, 1, 0
        %v550 = vsel %vm486, 1, 0
        %v551 = vsel %vm487, 1, 0
        %v552 = vsel %vm488, 1, 0
        %v553 = vsel %vm489, 1, 0
        %v554 = vsel %vm490, 1, 0
        %v555 = vsel %vm491, 1, 0
        %v556 = vsel %vm492, 1, 0
        %v557 = vsel %vm493, 1, 0
        %v558 = vsel %vm494, 1, 0
        %v559 = vsel %vm495, 1, 0
        %v560 = vsel %vm496, 1, 0
        %v561 = vsel %vm497, 1, 0
        %v562 = vsel %vm498, 1, 0
        %v563 = vsel %vm499, 1, 0
        %v564 = vsel %vm500, 1, 0
        %v565 = vsel %vm501, 1, 0
        %v566 = vsel %vm502, 1, 0
        %v567 = vsel %vm503, 1, 0
        %v568 = vsel %vm504, 1, 0
        %v569 = vsel %vm505, 1, 0
        %v570 = vsel %vm506, 1, 0
        %v571 = vsel %vm507, 1, 0
        %v572 = vsel %vm508, 1, 0
        %v573 = vsel %vm509, 1, 0
        %v574 = vsel %vm510, 1, 0
        %v575 = vsel %vm511, 1, 0
        %v576 = vsel %vm512, 1, 0
        %v577 = vsel %vm513, 1, 0
        %v578 = vsel %vm514, 1, 0
        %v579 = vsel %vm515, 1, 0
        %v580 = vsel %vm516, 1, 0
        %v581 = vsel %vm517, 1, 0
        %v582 = vsel %vm518, 1, 0
        %v583 = vsel %vm519, 1, 0
        %v584 = vsel %vm520, 1, 0
        %v585 = vsel %vm521, 1, 0
        %vm586 = vcmp.eq.s32.totalorder %v522, 1
        %vm587 = vcmp.eq.s32.totalorder %v523, 1
        %vm588 = vcmp.eq.s32.totalorder %v524, 1
        %vm589 = vcmp.eq.s32.totalorder %v525, 1
        %vm590 = vcmp.eq.s32.totalorder %v526, 1
        %vm591 = vcmp.eq.s32.totalorder %v527, 1
        %vm592 = vcmp.eq.s32.totalorder %v528, 1
        %vm593 = vcmp.eq.s32.totalorder %v529, 1
        %vm594 = vcmp.eq.s32.totalorder %v530, 1
        %vm595 = vcmp.eq.s32.totalorder %v531, 1
        %vm596 = vcmp.eq.s32.totalorder %v532, 1
        %vm597 = vcmp.eq.s32.totalorder %v533, 1
        %vm598 = vcmp.eq.s32.totalorder %v534, 1
        %vm599 = vcmp.eq.s32.totalorder %v535, 1
        %vm600 = vcmp.eq.s32.totalorder %v536, 1
        %vm601 = vcmp.eq.s32.totalorder %v537, 1
        %vm602 = vcmp.eq.s32.totalorder %v538, 1
        %vm603 = vcmp.eq.s32.totalorder %v539, 1
        %vm604 = vcmp.eq.s32.totalorder %v540, 1
        %vm605 = vcmp.eq.s32.totalorder %v541, 1
        %vm606 = vcmp.eq.s32.totalorder %v542, 1
        %vm607 = vcmp.eq.s32.totalorder %v543, 1
        %vm608 = vcmp.eq.s32.totalorder %v544, 1
        %vm609 = vcmp.eq.s32.totalorder %v545, 1
        %vm610 = vcmp.eq.s32.totalorder %v546, 1
        %vm611 = vcmp.eq.s32.totalorder %v547, 1
        %vm612 = vcmp.eq.s32.totalorder %v548, 1
        %vm613 = vcmp.eq.s32.totalorder %v549, 1
        %vm614 = vcmp.eq.s32.totalorder %v550, 1
        %vm615 = vcmp.eq.s32.totalorder %v551, 1
        %vm616 = vcmp.eq.s32.totalorder %v552, 1
        %vm617 = vcmp.eq.s32.totalorder %v553, 1
        %vm618 = vcmp.eq.s32.totalorder %v554, 1
        %vm619 = vcmp.eq.s32.totalorder %v555, 1
        %vm620 = vcmp.eq.s32.totalorder %v556, 1
        %vm621 = vcmp.eq.s32.totalorder %v557, 1
        %vm622 = vcmp.eq.s32.totalorder %v558, 1
        %vm623 = vcmp.eq.s32.totalorder %v559, 1
        %vm624 = vcmp.eq.s32.totalorder %v560, 1
        %vm625 = vcmp.eq.s32.totalorder %v561, 1
        %vm626 = vcmp.eq.s32.totalorder %v562, 1
        %vm627 = vcmp.eq.s32.totalorder %v563, 1
        %vm628 = vcmp.eq.s32.totalorder %v564, 1
        %vm629 = vcmp.eq.s32.totalorder %v565, 1
        %vm630 = vcmp.eq.s32.totalorder %v566, 1
        %vm631 = vcmp.eq.s32.totalorder %v567, 1
        %vm632 = vcmp.eq.s32.totalorder %v568, 1
        %vm633 = vcmp.eq.s32.totalorder %v569, 1
        %vm634 = vcmp.eq.s32.totalorder %v570, 1
        %vm635 = vcmp.eq.s32.totalorder %v571, 1
        %vm636 = vcmp.eq.s32.totalorder %v572, 1
        %vm637 = vcmp.eq.s32.totalorder %v573, 1
        %vm638 = vcmp.eq.s32.totalorder %v574, 1
        %vm639 = vcmp.eq.s32.totalorder %v575, 1
        %vm640 = vcmp.eq.s32.totalorder %v576, 1
        %vm641 = vcmp.eq.s32.totalorder %v577, 1
        %vm642 = vcmp.eq.s32.totalorder %v578, 1
        %vm643 = vcmp.eq.s32.totalorder %v579, 1
        %vm644 = vcmp.eq.s32.totalorder %v580, 1
        %vm645 = vcmp.eq.s32.totalorder %v581, 1
        %vm646 = vcmp.eq.s32.totalorder %v582, 1
        %vm647 = vcmp.eq.s32.totalorder %v583, 1
        %vm648 = vcmp.eq.s32.totalorder %v584, 1
        %vm649 = vcmp.eq.s32.totalorder %v585, 1
        %v650 = vsel %vm586, %v326, 0.0
        %v651 = vsel %vm587, %v327, 0.0
        %v652 = vsel %vm588, %v328, 0.0
        %v653 = vsel %vm589, %v329, 0.0
        %v654 = vsel %vm590, %v330, 0.0
        %v655 = vsel %vm591, %v331, 0.0
        %v656 = vsel %vm592, %v332, 0.0
        %v657 = vsel %vm593, %v333, 0.0
        %v658 = vsel %vm594, %v334, 0.0
        %v659 = vsel %vm595, %v335, 0.0
        %v660 = vsel %vm596, %v336, 0.0
        %v661 = vsel %vm597, %v337, 0.0
        %v662 = vsel %vm598, %v338, 0.0
        %v663 = vsel %vm599, %v339, 0.0
        %v664 = vsel %vm600, %v340, 0.0
        %v665 = vsel %vm601, %v341, 0.0
        %v666 = vsel %vm602, %v342, 0.0
        %v667 = vsel %vm603, %v343, 0.0
        %v668 = vsel %vm604, %v344, 0.0
        %v669 = vsel %vm605, %v345, 0.0
        %v670 = vsel %vm606, %v346, 0.0
        %v671 = vsel %vm607, %v347, 0.0
        %v672 = vsel %vm608, %v348, 0.0
        %v673 = vsel %vm609, %v349, 0.0
        %v674 = vsel %vm610, %v350, 0.0
        %v675 = vsel %vm611, %v351, 0.0
        %v676 = vsel %vm612, %v352, 0.0
        %v677 = vsel %vm613, %v353, 0.0
        %v678 = vsel %vm614, %v354, 0.0
        %v679 = vsel %vm615, %v355, 0.0
        %v680 = vsel %vm616, %v356, 0.0
        %v681 = vsel %vm617, %v357, 0.0
        %v682 = vsel %vm618, %v358, 0.0
        %v683 = vsel %vm619, %v359, 0.0
        %v684 = vsel %vm620, %v360, 0.0
        %v685 = vsel %vm621, %v361, 0.0
        %v686 = vsel %vm622, %v362, 0.0
        %v687 = vsel %vm623, %v363, 0.0
        %v688 = vsel %vm624, %v364, 0.0
        %v689 = vsel %vm625, %v365, 0.0
        %v690 = vsel %vm626, %v366, 0.0
        %v691 = vsel %vm627, %v367, 0.0
        %v692 = vsel %vm628, %v368, 0.0
        %v693 = vsel %vm629, %v369, 0.0
        %v694 = vsel %vm630, %v370, 0.0
        %v695 = vsel %vm631, %v371, 0.0
        %v696 = vsel %vm632, %v372, 0.0
        %v697 = vsel %vm633, %v373, 0.0
        %v698 = vsel %vm634, %v374, 0.0
        %v699 = vsel %vm635, %v375, 0.0
        %v700 = vsel %vm636, %v376, 0.0
        %v701 = vsel %vm637, %v377, 0.0
        %v702 = vsel %vm638, %v378, 0.0
        %v703 = vsel %vm639, %v379, 0.0
        %v704 = vsel %vm640, %v380, 0.0
        %v705 = vsel %vm641, %v381, 0.0
        %v706 = vsel %vm642, %v382, 0.0
        %v707 = vsel %vm643, %v383, 0.0
        %v708 = vsel %vm644, %v384, 0.0
        %v709 = vsel %vm645, %v385, 0.0
        %v710 = vsel %vm646, %v386, 0.0
        %v711 = vsel %vm647, %v387, 0.0
        %v712 = vsel %vm648, %v388, 0.0
        %v713 = vsel %vm649, %v389, 0.0
        %v714 = vpack.c.bf16 %v651, %v650
        %v715 = vpack.c.bf16 %v653, %v652
        %v716 = vpack.c.bf16 %v655, %v654
        %v717 = vpack.c.bf16 %v657, %v656
        %v718 = vpack.c.bf16 %v659, %v658
        %v719 = vpack.c.bf16 %v661, %v660
        %v720 = vpack.c.bf16 %v663, %v662
        %v721 = vpack.c.bf16 %v665, %v664
        %v722 = vpack.c.bf16 %v667, %v666
        %v723 = vpack.c.bf16 %v669, %v668
        %v724 = vpack.c.bf16 %v671, %v670
        %v725 = vpack.c.bf16 %v673, %v672
        %v726 = vpack.c.bf16 %v675, %v674
        %v727 = vpack.c.bf16 %v677, %v676
        %v728 = vpack.c.bf16 %v679, %v678
        %v729 = vpack.c.bf16 %v681, %v680
        %v730 = vpack.c.bf16 %v683, %v682
        %v731 = vpack.c.bf16 %v685, %v684
        %v732 = vpack.c.bf16 %v687, %v686
        %v733 = vpack.c.bf16 %v689, %v688
        %v734 = vpack.c.bf16 %v691, %v690
        %v735 = vpack.c.bf16 %v693, %v692
        %v736 = vpack.c.bf16 %v695, %v694
        %v737 = vpack.c.bf16 %v697, %v696
        %v738 = vpack.c.bf16 %v699, %v698
        %v739 = vpack.c.bf16 %v701, %v700
        %v740 = vpack.c.bf16 %v703, %v702
        %v741 = vpack.c.bf16 %v705, %v704
        %v742 = vpack.c.bf16 %v707, %v706
        %v743 = vpack.c.bf16 %v709, %v708
        %v744 = vpack.c.bf16 %v711, %v710
        %v745 = vpack.c.bf16 %v713, %v712
        %v746 = vld [vmem:[%s1] sm:$0xf]
        %v747 = vld [vmem:[%s1 + $0x4] sm:$0xf]
        %v748 = vld [vmem:[%s2] sm:$0x1]
        %v749 = vlaneseq
        %v750 = vshrl.u32 %v749, 7
        %v751 = vsub.s32 0, %v750
        %v752 = vrot.slane %v748, %v751
        %v755 = vunpack.c.l.b16 %v746
        %v756 = vunpack.c.l.b16 %v747
        %v757 = vpack.c.b16 %v756, %v755
        %vm759 = vcmask 130048
        %v761 = vsel %vm759, %v714, 0
        %v764 = vsel %vm759, %v715, 0
        %v767 = vsel %vm759, %v716, 0
        %v770 = vsel %vm759, %v717, 0
        %v773 = vsel %vm759, %v718, 0
        %v776 = vsel %vm759, %v719, 0
        %v779 = vsel %vm759, %v720, 0
        %v782 = vsel %vm759, %v721, 0
        %v785 = vsel %vm759, %v722, 0
        %v788 = vsel %vm759, %v723, 0
        %v791 = vsel %vm759, %v724, 0
        %v794 = vsel %vm759, %v725, 0
        %v797 = vsel %vm759, %v726, 0
        %v800 = vsel %vm759, %v727, 0
        %v803 = vsel %vm759, %v728, 0
        %v806 = vsel %vm759, %v729, 0
        %v809 = vsel %vm759, %v730, 0
        %v812 = vsel %vm759, %v731, 0
        %v815 = vsel %vm759, %v732, 0
        %v818 = vsel %vm759, %v733, 0
        %v821 = vsel %vm759, %v734, 0
        %v824 = vsel %vm759, %v735, 0
        %v827 = vsel %vm759, %v736, 0
        %v830 = vsel %vm759, %v737, 0
        %v833 = vsel %vm759, %v738, 0
        %v836 = vsel %vm759, %v739, 0
        %v839 = vsel %vm759, %v740, 0
        %v842 = vsel %vm759, %v741, 0
        %v845 = vsel %vm759, %v742, 0
        %v848 = vsel %vm759, %v743, 0
        %v851 = vsel %vm759, %v744, 0
        %v854 = vsel %vm759, %v745, 0
        %856 = vmatprep.subr.bf16.mxu0 0
        %857 = vmatpush1.bf16.msra.mxu0 0
        %858 = vmatprep.subr.bf16.mxu0 0
        %859 = vmatpush1.bf16.msra.mxu0 0
        %860 = vmatprep.subr.bf16.mxu0 0
        %861 = vmatpush1.bf16.msra.mxu0 0
        %862 = vmatprep.subr.bf16.mxu0 0
        %863 = vmatpush1.bf16.msra.mxu0 0
        %864 = vmatprep.subr.bf16.mxu0 0
        %865 = vmatpush1.bf16.msra.mxu0 0
        %866 = vmatprep.subr.bf16.mxu0 0
        %867 = vmatpush1.bf16.msra.mxu0 0
        %868 = vmatprep.subr.bf16.mxu0 0
        %869 = vmatpush1.bf16.msra.mxu0 0
        %870 = vmatprep.subr.bf16.mxu0 0
        %871 = vmatpush1.bf16.msra.mxu0 %v757
        %872 = vmatprep.subr.bf16.mxu0 0
        %873 = vmatpush2.bf16.msra.mxu0 0
        %874 = vmatprep.subr.bf16.mxu0 0
        %875 = vmatpush2.bf16.msra.mxu0 0
        %876 = vmatprep.subr.bf16.mxu0 0
        %877 = vmatpush2.bf16.msra.mxu0 0
        %878 = vmatprep.subr.bf16.mxu0 0
        %879 = vmatpush2.bf16.msra.mxu0 0
        %880 = vmatprep.subr.bf16.mxu0 0
        %881 = vmatpush2.bf16.msra.mxu0 0
        %882 = vmatprep.subr.bf16.mxu0 0
        %883 = vmatpush2.bf16.msra.mxu0 0
        %884 = vmatprep.subr.bf16.mxu0 0
        %885 = vmatpush2.bf16.msra.mxu0 0
        %886 = vmatprep.subr.bf16.mxu0 0
        %887 = vmatpush2.bf16.msra.mxu0 0
        %888 = vmatprep.mubr.bf16.mxu0 0
        %889 = vmatmul.mubr.bf16.gmra.mxu0 %v761
        %v890 = vpop.f32.mrf.mxu0
        %v891 = vadd.f32 %v752, %v890
        %v892 = vpop.f32.mrf.mxu0
        %v893 = vpop.f32.mrf.mxu0
        %v894 = vadd.f32 %v752, %v893
        %v895 = vpop.f32.mrf.mxu0
        %896 = vmatprep.mubr.bf16.mxu0 0
        %897 = vmatmul.mubr.bf16.gmra.mxu0 %v764
        %v898 = vpop.f32.mrf.mxu0
        %v899 = vadd.f32 %v752, %v898
        %v900 = vpop.f32.mrf.mxu0
        %v901 = vpop.f32.mrf.mxu0
        %v902 = vadd.f32 %v752, %v901
        %v903 = vpop.f32.mrf.mxu0
        %904 = vmatprep.mubr.bf16.mxu0 0
        %905 = vmatmul.mubr.bf16.gmra.mxu0 %v767
        %v906 = vpop.f32.mrf.mxu0
        %v907 = vadd.f32 %v752, %v906
        %v908 = vpop.f32.mrf.mxu0
        %v909 = vpop.f32.mrf.mxu0
        %v910 = vadd.f32 %v752, %v909
        %v911 = vpop.f32.mrf.mxu0
        %912 = vmatprep.mubr.bf16.mxu0 0
        %913 = vmatmul.mubr.bf16.gmra.mxu0 %v770
        %v914 = vpop.f32.mrf.mxu0
        %v915 = vadd.f32 %v752, %v914
        %v916 = vpop.f32.mrf.mxu0
        %v917 = vpop.f32.mrf.mxu0
        %v918 = vadd.f32 %v752, %v917
        %v919 = vpop.f32.mrf.mxu0
        %920 = vmatprep.mubr.bf16.mxu0 0
        %921 = vmatmul.mubr.bf16.gmra.mxu0 %v773
        %v922 = vpop.f32.mrf.mxu0
        %v923 = vadd.f32 %v752, %v922
        %v924 = vpop.f32.mrf.mxu0
        %v925 = vpop.f32.mrf.mxu0
        %v926 = vadd.f32 %v752, %v925
        %v927 = vpop.f32.mrf.mxu0
        %928 = vmatprep.mubr.bf16.mxu0 0
        %929 = vmatmul.mubr.bf16.gmra.mxu0 %v776
        %v930 = vpop.f32.mrf.mxu0
        %v931 = vadd.f32 %v752, %v930
        %v932 = vpop.f32.mrf.mxu0
        %v933 = vpop.f32.mrf.mxu0
        %v934 = vadd.f32 %v752, %v933
        %v935 = vpop.f32.mrf.mxu0
        %936 = vmatprep.mubr.bf16.mxu0 0
        %937 = vmatmul.mubr.bf16.gmra.mxu0 %v779
        %v938 = vpop.f32.mrf.mxu0
        %v939 = vadd.f32 %v752, %v938
        %v940 = vpop.f32.mrf.mxu0
        %v941 = vpop.f32.mrf.mxu0
        %v942 = vadd.f32 %v752, %v941
        %v943 = vpop.f32.mrf.mxu0
        %944 = vmatprep.mubr.bf16.mxu0 0
        %945 = vmatmul.mubr.bf16.gmra.mxu0 %v782
        %v946 = vpop.f32.mrf.mxu0
        %v947 = vadd.f32 %v752, %v946
        %v948 = vpop.f32.mrf.mxu0
        %v949 = vpop.f32.mrf.mxu0
        %v950 = vadd.f32 %v752, %v949
        %v951 = vpop.f32.mrf.mxu0
        %952 = vmatprep.mubr.bf16.mxu0 0
        %953 = vmatmul.mubr.bf16.gmra.mxu0 %v785
        %v954 = vpop.f32.mrf.mxu0
        %v955 = vadd.f32 %v752, %v954
        %v956 = vpop.f32.mrf.mxu0
        %v957 = vpop.f32.mrf.mxu0
        %v958 = vadd.f32 %v752, %v957
        %v959 = vpop.f32.mrf.mxu0
        %960 = vmatprep.mubr.bf16.mxu0 0
        %961 = vmatmul.mubr.bf16.gmra.mxu0 %v788
        %v962 = vpop.f32.mrf.mxu0
        %v963 = vadd.f32 %v752, %v962
        %v964 = vpop.f32.mrf.mxu0
        %v965 = vpop.f32.mrf.mxu0
        %v966 = vadd.f32 %v752, %v965
        %v967 = vpop.f32.mrf.mxu0
        %968 = vmatprep.mubr.bf16.mxu0 0
        %969 = vmatmul.mubr.bf16.gmra.mxu0 %v791
        %v970 = vpop.f32.mrf.mxu0
        %v971 = vadd.f32 %v752, %v970
        %v972 = vpop.f32.mrf.mxu0
        %v973 = vpop.f32.mrf.mxu0
        %v974 = vadd.f32 %v752, %v973
        %v975 = vpop.f32.mrf.mxu0
        %976 = vmatprep.mubr.bf16.mxu0 0
        %977 = vmatmul.mubr.bf16.gmra.mxu0 %v794
        %v978 = vpop.f32.mrf.mxu0
        %v979 = vadd.f32 %v752, %v978
        %v980 = vpop.f32.mrf.mxu0
        %v981 = vpop.f32.mrf.mxu0
        %v982 = vadd.f32 %v752, %v981
        %v983 = vpop.f32.mrf.mxu0
        %984 = vmatprep.mubr.bf16.mxu0 0
        %985 = vmatmul.mubr.bf16.gmra.mxu0 %v797
        %v986 = vpop.f32.mrf.mxu0
        %v987 = vadd.f32 %v752, %v986
        %v988 = vpop.f32.mrf.mxu0
        %v989 = vpop.f32.mrf.mxu0
        %v990 = vadd.f32 %v752, %v989
        %v991 = vpop.f32.mrf.mxu0
        %992 = vmatprep.mubr.bf16.mxu0 0
        %993 = vmatmul.mubr.bf16.gmra.mxu0 %v800
        %v994 = vpop.f32.mrf.mxu0
        %v995 = vadd.f32 %v752, %v994
        %v996 = vpop.f32.mrf.mxu0
        %v997 = vpop.f32.mrf.mxu0
        %v998 = vadd.f32 %v752, %v997
        %v999 = vpop.f32.mrf.mxu0
        %1000 = vmatprep.mubr.bf16.mxu0 0
        %1001 = vmatmul.mubr.bf16.gmra.mxu0 %v803
        %v1002 = vpop.f32.mrf.mxu0
        %v1003 = vadd.f32 %v752, %v1002
        %v1004 = vpop.f32.mrf.mxu0
        %v1005 = vpop.f32.mrf.mxu0
        %v1006 = vadd.f32 %v752, %v1005
        %v1007 = vpop.f32.mrf.mxu0
        %1008 = vmatprep.mubr.bf16.mxu0 0
        %1009 = vmatmul.mubr.bf16.gmra.mxu0 %v806
        %v1010 = vpop.f32.mrf.mxu0
        %v1011 = vadd.f32 %v752, %v1010
        %v1012 = vpop.f32.mrf.mxu0
        %v1013 = vpop.f32.mrf.mxu0
        %v1014 = vadd.f32 %v752, %v1013
        %v1015 = vpop.f32.mrf.mxu0
        %1016 = vmatprep.mubr.bf16.mxu0 0
        %1017 = vmatmul.mubr.bf16.gmra.mxu0 %v809
        %v1018 = vpop.f32.mrf.mxu0
        %v1019 = vadd.f32 %v752, %v1018
        %v1020 = vpop.f32.mrf.mxu0
        %v1021 = vpop.f32.mrf.mxu0
        %v1022 = vadd.f32 %v752, %v1021
        %v1023 = vpop.f32.mrf.mxu0
        %1024 = vmatprep.mubr.bf16.mxu0 0
        %1025 = vmatmul.mubr.bf16.gmra.mxu0 %v812
        %v1026 = vpop.f32.mrf.mxu0
        %v1027 = vadd.f32 %v752, %v1026
        %v1028 = vpop.f32.mrf.mxu0
        %v1029 = vpop.f32.mrf.mxu0
        %v1030 = vadd.f32 %v752, %v1029
        %v1031 = vpop.f32.mrf.mxu0
        %1032 = vmatprep.mubr.bf16.mxu0 0
        %1033 = vmatmul.mubr.bf16.gmra.mxu0 %v815
        %v1034 = vpop.f32.mrf.mxu0
        %v1035 = vadd.f32 %v752, %v1034
        %v1036 = vpop.f32.mrf.mxu0
        %v1037 = vpop.f32.mrf.mxu0
        %v1038 = vadd.f32 %v752, %v1037
        %v1039 = vpop.f32.mrf.mxu0
        %1040 = vmatprep.mubr.bf16.mxu0 0
        %1041 = vmatmul.mubr.bf16.gmra.mxu0 %v818
        %v1042 = vpop.f32.mrf.mxu0
        %v1043 = vadd.f32 %v752, %v1042
        %v1044 = vpop.f32.mrf.mxu0
        %v1045 = vpop.f32.mrf.mxu0
        %v1046 = vadd.f32 %v752, %v1045
        %v1047 = vpop.f32.mrf.mxu0
        %1048 = vmatprep.mubr.bf16.mxu0 0
        %1049 = vmatmul.mubr.bf16.gmra.mxu0 %v821
        %v1050 = vpop.f32.mrf.mxu0
        %v1051 = vadd.f32 %v752, %v1050
        %v1052 = vpop.f32.mrf.mxu0
        %v1053 = vpop.f32.mrf.mxu0
        %v1054 = vadd.f32 %v752, %v1053
        %v1055 = vpop.f32.mrf.mxu0
        %1056 = vmatprep.mubr.bf16.mxu0 0
        %1057 = vmatmul.mubr.bf16.gmra.mxu0 %v824
        %v1058 = vpop.f32.mrf.mxu0
        %v1059 = vadd.f32 %v752, %v1058
        %v1060 = vpop.f32.mrf.mxu0
        %v1061 = vpop.f32.mrf.mxu0
        %v1062 = vadd.f32 %v752, %v1061
        %v1063 = vpop.f32.mrf.mxu0
        %1064 = vmatprep.mubr.bf16.mxu0 0
        %1065 = vmatmul.mubr.bf16.gmra.mxu0 %v827
        %v1066 = vpop.f32.mrf.mxu0
        %v1067 = vadd.f32 %v752, %v1066
        %v1068 = vpop.f32.mrf.mxu0
        %v1069 = vpop.f32.mrf.mxu0
        %v1070 = vadd.f32 %v752, %v1069
        %v1071 = vpop.f32.mrf.mxu0
        %1072 = vmatprep.mubr.bf16.mxu0 0
        %1073 = vmatmul.mubr.bf16.gmra.mxu0 %v830
        %v1074 = vpop.f32.mrf.mxu0
        %v1075 = vadd.f32 %v752, %v1074
        %v1076 = vpop.f32.mrf.mxu0
        %v1077 = vpop.f32.mrf.mxu0
        %v1078 = vadd.f32 %v752, %v1077
        %v1079 = vpop.f32.mrf.mxu0
        %1080 = vmatprep.mubr.bf16.mxu0 0
        %1081 = vmatmul.mubr.bf16.gmra.mxu0 %v833
        %v1082 = vpop.f32.mrf.mxu0
        %v1083 = vadd.f32 %v752, %v1082
        %v1084 = vpop.f32.mrf.mxu0
        %v1085 = vpop.f32.mrf.mxu0
        %v1086 = vadd.f32 %v752, %v1085
        %v1087 = vpop.f32.mrf.mxu0
        %1088 = vmatprep.mubr.bf16.mxu0 0
        %1089 = vmatmul.mubr.bf16.gmra.mxu0 %v836
        %v1090 = vpop.f32.mrf.mxu0
        %v1091 = vadd.f32 %v752, %v1090
        %v1092 = vpop.f32.mrf.mxu0
        %v1093 = vpop.f32.mrf.mxu0
        %v1094 = vadd.f32 %v752, %v1093
        %v1095 = vpop.f32.mrf.mxu0
        %1096 = vmatprep.mubr.bf16.mxu0 0
        %1097 = vmatmul.mubr.bf16.gmra.mxu0 %v839
        %v1098 = vpop.f32.mrf.mxu0
        %v1099 = vadd.f32 %v752, %v1098
        %v1100 = vpop.f32.mrf.mxu0
        %v1101 = vpop.f32.mrf.mxu0
        %v1102 = vadd.f32 %v752, %v1101
        %v1103 = vpop.f32.mrf.mxu0
        %1104 = vmatprep.mubr.bf16.mxu0 0
        %1105 = vmatmul.mubr.bf16.gmra.mxu0 %v842
        %v1106 = vpop.f32.mrf.mxu0
        %v1107 = vadd.f32 %v752, %v1106
        %v1108 = vpop.f32.mrf.mxu0
        %v1109 = vpop.f32.mrf.mxu0
        %v1110 = vadd.f32 %v752, %v1109
        %v1111 = vpop.f32.mrf.mxu0
        %1112 = vmatprep.mubr.bf16.mxu0 0
        %1113 = vmatmul.mubr.bf16.gmra.mxu0 %v845
        %v1114 = vpop.f32.mrf.mxu0
        %v1115 = vadd.f32 %v752, %v1114
        %v1116 = vpop.f32.mrf.mxu0
        %v1117 = vpop.f32.mrf.mxu0
        %v1118 = vadd.f32 %v752, %v1117
        %v1119 = vpop.f32.mrf.mxu0
        %1120 = vmatprep.mubr.bf16.mxu0 0
        %1121 = vmatmul.mubr.bf16.gmra.mxu0 %v848
        %v1122 = vpop.f32.mrf.mxu0
        %v1123 = vadd.f32 %v752, %v1122
        %v1124 = vpop.f32.mrf.mxu0
        %v1125 = vpop.f32.mrf.mxu0
        %v1126 = vadd.f32 %v752, %v1125
        %v1127 = vpop.f32.mrf.mxu0
        %1128 = vmatprep.mubr.bf16.mxu0 0
        %1129 = vmatmul.mubr.bf16.gmra.mxu0 %v851
        %v1130 = vpop.f32.mrf.mxu0
        %v1131 = vadd.f32 %v752, %v1130
        %v1132 = vpop.f32.mrf.mxu0
        %v1133 = vpop.f32.mrf.mxu0
        %v1134 = vadd.f32 %v752, %v1133
        %v1135 = vpop.f32.mrf.mxu0
        %1136 = vmatprep.mubr.bf16.mxu0 0
        %1137 = vmatmul.mubr.bf16.gmra.mxu0 %v854
        %v1138 = vpop.f32.mrf.mxu0
        %v1139 = vadd.f32 %v752, %v1138
        %v1140 = vpop.f32.mrf.mxu0
        %v1141 = vpop.f32.mrf.mxu0
        %v1142 = vadd.f32 %v752, %v1141
        %v1143 = vpop.f32.mrf.mxu0
        %1144 = vdwg.mxu0
        %v1145 = vld [vmem:[%s2 + $0x1] sm:$0x1]
        %v1146 = vld [vmem:[%s2 + $0x2] sm:$0x1]
        %vm1147 = vcmask 523264
        %v1148 = vsel %vm1147, %v891, 0.0
        %1149 = vadd.xlane.f32.xlu0 %v1148
        %v1150 = vpop.xlane.xlu0 %1149
        %v1151 = vsel %vm1147, %v894, 0.0
        %1152 = vadd.xlane.f32.xlu0 %v1151
        %v1153 = vpop.xlane.xlu0 %1152
        %v1154 = vsel %vm1147, %v899, 0.0
        %1155 = vadd.xlane.f32.xlu0 %v1154
        %v1156 = vpop.xlane.xlu0 %1155
        %v1157 = vsel %vm1147, %v902, 0.0
        %1158 = vadd.xlane.f32.xlu0 %v1157
        %v1159 = vpop.xlane.xlu0 %1158
        %v1160 = vsel %vm1147, %v907, 0.0
        %1161 = vadd.xlane.f32.xlu0 %v1160
        %v1162 = vpop.xlane.xlu0 %1161
        %v1163 = vsel %vm1147, %v910, 0.0
        %1164 = vadd.xlane.f32.xlu0 %v1163
        %v1165 = vpop.xlane.xlu0 %1164
        %v1166 = vsel %vm1147, %v915, 0.0
        %1167 = vadd.xlane.f32.xlu0 %v1166
        %v1168 = vpop.xlane.xlu0 %1167
        %v1169 = vsel %vm1147, %v918, 0.0
        %1170 = vadd.xlane.f32.xlu0 %v1169
        %v1171 = vpop.xlane.xlu0 %1170
        %v1172 = vsel %vm1147, %v923, 0.0
        %1173 = vadd.xlane.f32.xlu0 %v1172
        %v1174 = vpop.xlane.xlu0 %1173
        %v1175 = vsel %vm1147, %v926, 0.0
        %1176 = vadd.xlane.f32.xlu0 %v1175
        %v1177 = vpop.xlane.xlu0 %1176
        %v1178 = vsel %vm1147, %v931, 0.0
        %1179 = vadd.xlane.f32.xlu0 %v1178
        %v1180 = vpop.xlane.xlu0 %1179
        %v1181 = vsel %vm1147, %v934, 0.0
        %1182 = vadd.xlane.f32.xlu0 %v1181
        %v1183 = vpop.xlane.xlu0 %1182
        %v1184 = vsel %vm1147, %v939, 0.0
        %1185 = vadd.xlane.f32.xlu0 %v1184
        %v1186 = vpop.xlane.xlu0 %1185
        %v1187 = vsel %vm1147, %v942, 0.0
        %1188 = vadd.xlane.f32.xlu0 %v1187
        %v1189 = vpop.xlane.xlu0 %1188
        %v1190 = vsel %vm1147, %v947, 0.0
        %1191 = vadd.xlane.f32.xlu0 %v1190
        %v1192 = vpop.xlane.xlu0 %1191
        %v1193 = vsel %vm1147, %v950, 0.0
        %1194 = vadd.xlane.f32.xlu0 %v1193
        %v1195 = vpop.xlane.xlu0 %1194
        %v1196 = vsel %vm1147, %v955, 0.0
        %1197 = vadd.xlane.f32.xlu0 %v1196
        %v1198 = vpop.xlane.xlu0 %1197
        %v1199 = vsel %vm1147, %v958, 0.0
        %1200 = vadd.xlane.f32.xlu0 %v1199
        %v1201 = vpop.xlane.xlu0 %1200
        %v1202 = vsel %vm1147, %v963, 0.0
        %1203 = vadd.xlane.f32.xlu0 %v1202
        %v1204 = vpop.xlane.xlu0 %1203
        %v1205 = vsel %vm1147, %v966, 0.0
        %1206 = vadd.xlane.f32.xlu0 %v1205
        %v1207 = vpop.xlane.xlu0 %1206
        %v1208 = vsel %vm1147, %v971, 0.0
        %1209 = vadd.xlane.f32.xlu0 %v1208
        %v1210 = vpop.xlane.xlu0 %1209
        %v1211 = vsel %vm1147, %v974, 0.0
        %1212 = vadd.xlane.f32.xlu0 %v1211
        %v1213 = vpop.xlane.xlu0 %1212
        %v1214 = vsel %vm1147, %v979, 0.0
        %1215 = vadd.xlane.f32.xlu0 %v1214
        %v1216 = vpop.xlane.xlu0 %1215
        %v1217 = vsel %vm1147, %v982, 0.0
        %1218 = vadd.xlane.f32.xlu0 %v1217
        %v1219 = vpop.xlane.xlu0 %1218
        %v1220 = vsel %vm1147, %v987, 0.0
        %1221 = vadd.xlane.f32.xlu0 %v1220
        %v1222 = vpop.xlane.xlu0 %1221
        %v1223 = vsel %vm1147, %v990, 0.0
        %1224 = vadd.xlane.f32.xlu0 %v1223
        %v1225 = vpop.xlane.xlu0 %1224
        %v1226 = vsel %vm1147, %v995, 0.0
        %1227 = vadd.xlane.f32.xlu0 %v1226
        %v1228 = vpop.xlane.xlu0 %1227
        %v1229 = vsel %vm1147, %v998, 0.0
        %1230 = vadd.xlane.f32.xlu0 %v1229
        %v1231 = vpop.xlane.xlu0 %1230
        %v1232 = vsel %vm1147, %v1003, 0.0
        %1233 = vadd.xlane.f32.xlu0 %v1232
        %v1234 = vpop.xlane.xlu0 %1233
        %v1235 = vsel %vm1147, %v1006, 0.0
        %1236 = vadd.xlane.f32.xlu0 %v1235
        %v1237 = vpop.xlane.xlu0 %1236
        %v1238 = vsel %vm1147, %v1011, 0.0
        %1239 = vadd.xlane.f32.xlu0 %v1238
        %v1240 = vpop.xlane.xlu0 %1239
        %v1241 = vsel %vm1147, %v1014, 0.0
        %1242 = vadd.xlane.f32.xlu0 %v1241
        %v1243 = vpop.xlane.xlu0 %1242
        %v1244 = vsel %vm1147, %v1019, 0.0
        %1245 = vadd.xlane.f32.xlu0 %v1244
        %v1246 = vpop.xlane.xlu0 %1245
        %v1247 = vsel %vm1147, %v1022, 0.0
        %1248 = vadd.xlane.f32.xlu0 %v1247
        %v1249 = vpop.xlane.xlu0 %1248
        %v1250 = vsel %vm1147, %v1027, 0.0
        %1251 = vadd.xlane.f32.xlu0 %v1250
        %v1252 = vpop.xlane.xlu0 %1251
        %v1253 = vsel %vm1147, %v1030, 0.0
        %1254 = vadd.xlane.f32.xlu0 %v1253
        %v1255 = vpop.xlane.xlu0 %1254
        %v1256 = vsel %vm1147, %v1035, 0.0
        %1257 = vadd.xlane.f32.xlu0 %v1256
        %v1258 = vpop.xlane.xlu0 %1257
        %v1259 = vsel %vm1147, %v1038, 0.0
        %1260 = vadd.xlane.f32.xlu0 %v1259
        %v1261 = vpop.xlane.xlu0 %1260
        %v1262 = vsel %vm1147, %v1043, 0.0
        %1263 = vadd.xlane.f32.xlu0 %v1262
        %v1264 = vpop.xlane.xlu0 %1263
        %v1265 = vsel %vm1147, %v1046, 0.0
        %1266 = vadd.xlane.f32.xlu0 %v1265
        %v1267 = vpop.xlane.xlu0 %1266
        %v1268 = vsel %vm1147, %v1051, 0.0
        %1269 = vadd.xlane.f32.xlu0 %v1268
        %v1270 = vpop.xlane.xlu0 %1269
        %v1271 = vsel %vm1147, %v1054, 0.0
        %1272 = vadd.xlane.f32.xlu0 %v1271
        %v1273 = vpop.xlane.xlu0 %1272
        %v1274 = vsel %vm1147, %v1059, 0.0
        %1275 = vadd.xlane.f32.xlu0 %v1274
        %v1276 = vpop.xlane.xlu0 %1275
        %v1277 = vsel %vm1147, %v1062, 0.0
        %1278 = vadd.xlane.f32.xlu0 %v1277
        %v1279 = vpop.xlane.xlu0 %1278
        %v1280 = vsel %vm1147, %v1067, 0.0
        %1281 = vadd.xlane.f32.xlu0 %v1280
        %v1282 = vpop.xlane.xlu0 %1281
        %v1283 = vsel %vm1147, %v1070, 0.0
        %1284 = vadd.xlane.f32.xlu0 %v1283
        %v1285 = vpop.xlane.xlu0 %1284
        %v1286 = vsel %vm1147, %v1075, 0.0
        %1287 = vadd.xlane.f32.xlu0 %v1286
        %v1288 = vpop.xlane.xlu0 %1287
        %v1289 = vsel %vm1147, %v1078, 0.0
        %1290 = vadd.xlane.f32.xlu0 %v1289
        %v1291 = vpop.xlane.xlu0 %1290
        %v1292 = vsel %vm1147, %v1083, 0.0
        %1293 = vadd.xlane.f32.xlu0 %v1292
        %v1294 = vpop.xlane.xlu0 %1293
        %v1295 = vsel %vm1147, %v1086, 0.0
        %1296 = vadd.xlane.f32.xlu0 %v1295
        %v1297 = vpop.xlane.xlu0 %1296
        %v1298 = vsel %vm1147, %v1091, 0.0
        %1299 = vadd.xlane.f32.xlu0 %v1298
        %v1300 = vpop.xlane.xlu0 %1299
        %v1301 = vsel %vm1147, %v1094, 0.0
        %1302 = vadd.xlane.f32.xlu0 %v1301
        %v1303 = vpop.xlane.xlu0 %1302
        %v1304 = vsel %vm1147, %v1099, 0.0
        %1305 = vadd.xlane.f32.xlu0 %v1304
        %v1306 = vpop.xlane.xlu0 %1305
        %v1307 = vsel %vm1147, %v1102, 0.0
        %1308 = vadd.xlane.f32.xlu0 %v1307
        %v1309 = vpop.xlane.xlu0 %1308
        %v1310 = vsel %vm1147, %v1107, 0.0
        %1311 = vadd.xlane.f32.xlu0 %v1310
        %v1312 = vpop.xlane.xlu0 %1311
        %v1313 = vsel %vm1147, %v1110, 0.0
        %1314 = vadd.xlane.f32.xlu0 %v1313
        %v1315 = vpop.xlane.xlu0 %1314
        %v1316 = vsel %vm1147, %v1115, 0.0
        %1317 = vadd.xlane.f32.xlu0 %v1316
        %v1318 = vpop.xlane.xlu0 %1317
        %v1319 = vsel %vm1147, %v1118, 0.0
        %1320 = vadd.xlane.f32.xlu0 %v1319
        %v1321 = vpop.xlane.xlu0 %1320
        %v1322 = vsel %vm1147, %v1123, 0.0
        %1323 = vadd.xlane.f32.xlu0 %v1322
        %v1324 = vpop.xlane.xlu0 %1323
        %v1325 = vsel %vm1147, %v1126, 0.0
        %1326 = vadd.xlane.f32.xlu0 %v1325
        %v1327 = vpop.xlane.xlu0 %1326
        %v1328 = vsel %vm1147, %v1131, 0.0
        %1329 = vadd.xlane.f32.xlu0 %v1328
        %v1330 = vpop.xlane.xlu0 %1329
        %v1331 = vsel %vm1147, %v1134, 0.0
        %1332 = vadd.xlane.f32.xlu0 %v1331
        %v1333 = vpop.xlane.xlu0 %1332
        %v1334 = vsel %vm1147, %v1139, 0.0
        %1335 = vadd.xlane.f32.xlu0 %v1334
        %v1336 = vpop.xlane.xlu0 %1335
        %v1337 = vsel %vm1147, %v1142, 0.0
        %1338 = vadd.xlane.f32.xlu0 %v1337
        %v1339 = vpop.xlane.xlu0 %1338
        %v1340 = vmul.f32 %v1150, 0.015625
        %v1341 = vmul.f32 %v1153, 0.015625
        %v1342 = vmul.f32 %v1156, 0.015625
        %v1343 = vmul.f32 %v1159, 0.015625
        %v1344 = vmul.f32 %v1162, 0.015625
        %v1345 = vmul.f32 %v1165, 0.015625
        %v1346 = vmul.f32 %v1168, 0.015625
        %v1347 = vmul.f32 %v1171, 0.015625
        %v1348 = vmul.f32 %v1174, 0.015625
        %v1349 = vmul.f32 %v1177, 0.015625
        %v1350 = vmul.f32 %v1180, 0.015625
        %v1351 = vmul.f32 %v1183, 0.015625
        %v1352 = vmul.f32 %v1186, 0.015625
        %v1353 = vmul.f32 %v1189, 0.015625
        %v1354 = vmul.f32 %v1192, 0.015625
        %v1355 = vmul.f32 %v1195, 0.015625
        %v1356 = vmul.f32 %v1198, 0.015625
        %v1357 = vmul.f32 %v1201, 0.015625
        %v1358 = vmul.f32 %v1204, 0.015625
        %v1359 = vmul.f32 %v1207, 0.015625
        %v1360 = vmul.f32 %v1210, 0.015625
        %v1361 = vmul.f32 %v1213, 0.015625
        %v1362 = vmul.f32 %v1216, 0.015625
        %v1363 = vmul.f32 %v1219, 0.015625
        %v1364 = vmul.f32 %v1222, 0.015625
        %v1365 = vmul.f32 %v1225, 0.015625
        %v1366 = vmul.f32 %v1228, 0.015625
        %v1367 = vmul.f32 %v1231, 0.015625
        %v1368 = vmul.f32 %v1234, 0.015625
        %v1369 = vmul.f32 %v1237, 0.015625
        %v1370 = vmul.f32 %v1240, 0.015625
        %v1371 = vmul.f32 %v1243, 0.015625
        %v1372 = vmul.f32 %v1246, 0.015625
        %v1373 = vmul.f32 %v1249, 0.015625
        %v1374 = vmul.f32 %v1252, 0.015625
        %v1375 = vmul.f32 %v1255, 0.015625
        %v1376 = vmul.f32 %v1258, 0.015625
        %v1377 = vmul.f32 %v1261, 0.015625
        %v1378 = vmul.f32 %v1264, 0.015625
        %v1379 = vmul.f32 %v1267, 0.015625
        %v1380 = vmul.f32 %v1270, 0.015625
        %v1381 = vmul.f32 %v1273, 0.015625
        %v1382 = vmul.f32 %v1276, 0.015625
        %v1383 = vmul.f32 %v1279, 0.015625
        %v1384 = vmul.f32 %v1282, 0.015625
        %v1385 = vmul.f32 %v1285, 0.015625
        %v1386 = vmul.f32 %v1288, 0.015625
        %v1387 = vmul.f32 %v1291, 0.015625
        %v1388 = vmul.f32 %v1294, 0.015625
        %v1389 = vmul.f32 %v1297, 0.015625
        %v1390 = vmul.f32 %v1300, 0.015625
        %v1391 = vmul.f32 %v1303, 0.015625
        %v1392 = vmul.f32 %v1306, 0.015625
        %v1393 = vmul.f32 %v1309, 0.015625
        %v1394 = vmul.f32 %v1312, 0.015625
        %v1395 = vmul.f32 %v1315, 0.015625
        %v1396 = vmul.f32 %v1318, 0.015625
        %v1397 = vmul.f32 %v1321, 0.015625
        %v1398 = vmul.f32 %v1324, 0.015625
        %v1399 = vmul.f32 %v1327, 0.015625
        %v1400 = vmul.f32 %v1330, 0.015625
        %v1401 = vmul.f32 %v1333, 0.015625
        %v1402 = vmul.f32 %v1336, 0.015625
        %v1403 = vmul.f32 %v1339, 0.015625
        %v1404 = vmul.f32 %v891, %v891
        %v1405 = vmul.f32 %v894, %v894
        %v1406 = vmul.f32 %v899, %v899
        %v1407 = vmul.f32 %v902, %v902
        %v1408 = vmul.f32 %v907, %v907
        %v1409 = vmul.f32 %v910, %v910
        %v1410 = vmul.f32 %v915, %v915
        %v1411 = vmul.f32 %v918, %v918
        %v1412 = vmul.f32 %v923, %v923
        %v1413 = vmul.f32 %v926, %v926
        %v1414 = vmul.f32 %v931, %v931
        %v1415 = vmul.f32 %v934, %v934
        %v1416 = vmul.f32 %v939, %v939
        %v1417 = vmul.f32 %v942, %v942
        %v1418 = vmul.f32 %v947, %v947
        %v1419 = vmul.f32 %v950, %v950
        %v1420 = vmul.f32 %v955, %v955
        %v1421 = vmul.f32 %v958, %v958
        %v1422 = vmul.f32 %v963, %v963
        %v1423 = vmul.f32 %v966, %v966
        %v1424 = vmul.f32 %v971, %v971
        %v1425 = vmul.f32 %v974, %v974
        %v1426 = vmul.f32 %v979, %v979
        %v1427 = vmul.f32 %v982, %v982
        %v1428 = vmul.f32 %v987, %v987
        %v1429 = vmul.f32 %v990, %v990
        %v1430 = vmul.f32 %v995, %v995
        %v1431 = vmul.f32 %v998, %v998
        %v1432 = vmul.f32 %v1003, %v1003
        %v1433 = vmul.f32 %v1006, %v1006
        %v1434 = vmul.f32 %v1011, %v1011
        %v1435 = vmul.f32 %v1014, %v1014
        %v1436 = vmul.f32 %v1019, %v1019
        %v1437 = vmul.f32 %v1022, %v1022
        %v1438 = vmul.f32 %v1027, %v1027
        %v1439 = vmul.f32 %v1030, %v1030
        %v1440 = vmul.f32 %v1035, %v1035
        %v1441 = vmul.f32 %v1038, %v1038
        %v1442 = vmul.f32 %v1043, %v1043
        %v1443 = vmul.f32 %v1046, %v1046
        %v1444 = vmul.f32 %v1051, %v1051
        %v1445 = vmul.f32 %v1054, %v1054
        %v1446 = vmul.f32 %v1059, %v1059
        %v1447 = vmul.f32 %v1062, %v1062
        %v1448 = vmul.f32 %v1067, %v1067
        %v1449 = vmul.f32 %v1070, %v1070
        %v1450 = vmul.f32 %v1075, %v1075
        %v1451 = vmul.f32 %v1078, %v1078
        %v1452 = vmul.f32 %v1083, %v1083
        %v1453 = vmul.f32 %v1086, %v1086
        %v1454 = vmul.f32 %v1091, %v1091
        %v1455 = vmul.f32 %v1094, %v1094
        %v1456 = vmul.f32 %v1099, %v1099
        %v1457 = vmul.f32 %v1102, %v1102
        %v1458 = vmul.f32 %v1107, %v1107
        %v1459 = vmul.f32 %v1110, %v1110
        %v1460 = vmul.f32 %v1115, %v1115
        %v1461 = vmul.f32 %v1118, %v1118
        %v1462 = vmul.f32 %v1123, %v1123
        %v1463 = vmul.f32 %v1126, %v1126
        %v1464 = vmul.f32 %v1131, %v1131
        %v1465 = vmul.f32 %v1134, %v1134
        %v1466 = vmul.f32 %v1139, %v1139
        %v1467 = vmul.f32 %v1142, %v1142
        %v1468 = vsel %vm1147, %v1404, 0.0
        %1469 = vadd.xlane.f32.xlu0 %v1468
        %v1470 = vpop.xlane.xlu0 %1469
        %v1471 = vsel %vm1147, %v1405, 0.0
        %1472 = vadd.xlane.f32.xlu0 %v1471
        %v1473 = vpop.xlane.xlu0 %1472
        %v1474 = vsel %vm1147, %v1406, 0.0
        %1475 = vadd.xlane.f32.xlu0 %v1474
        %v1476 = vpop.xlane.xlu0 %1475
        %v1477 = vsel %vm1147, %v1407, 0.0
        %1478 = vadd.xlane.f32.xlu0 %v1477
        %v1479 = vpop.xlane.xlu0 %1478
        %v1480 = vsel %vm1147, %v1408, 0.0
        %1481 = vadd.xlane.f32.xlu0 %v1480
        %v1482 = vpop.xlane.xlu0 %1481
        %v1483 = vsel %vm1147, %v1409, 0.0
        %1484 = vadd.xlane.f32.xlu0 %v1483
        %v1485 = vpop.xlane.xlu0 %1484
        %v1486 = vsel %vm1147, %v1410, 0.0
        %1487 = vadd.xlane.f32.xlu0 %v1486
        %v1488 = vpop.xlane.xlu0 %1487
        %v1489 = vsel %vm1147, %v1411, 0.0
        %1490 = vadd.xlane.f32.xlu0 %v1489
        %v1491 = vpop.xlane.xlu0 %1490
        %v1492 = vsel %vm1147, %v1412, 0.0
        %1493 = vadd.xlane.f32.xlu0 %v1492
        %v1494 = vpop.xlane.xlu0 %1493
        %v1495 = vsel %vm1147, %v1413, 0.0
        %1496 = vadd.xlane.f32.xlu0 %v1495
        %v1497 = vpop.xlane.xlu0 %1496
        %v1498 = vsel %vm1147, %v1414, 0.0
        %1499 = vadd.xlane.f32.xlu0 %v1498
        %v1500 = vpop.xlane.xlu0 %1499
        %v1501 = vsel %vm1147, %v1415, 0.0
        %1502 = vadd.xlane.f32.xlu0 %v1501
        %v1503 = vpop.xlane.xlu0 %1502
        %v1504 = vsel %vm1147, %v1416, 0.0
        %1505 = vadd.xlane.f32.xlu0 %v1504
        %v1506 = vpop.xlane.xlu0 %1505
        %v1507 = vsel %vm1147, %v1417, 0.0
        %1508 = vadd.xlane.f32.xlu0 %v1507
        %v1509 = vpop.xlane.xlu0 %1508
        %v1510 = vsel %vm1147, %v1418, 0.0
        %1511 = vadd.xlane.f32.xlu0 %v1510
        %v1512 = vpop.xlane.xlu0 %1511
        %v1513 = vsel %vm1147, %v1419, 0.0
        %1514 = vadd.xlane.f32.xlu0 %v1513
        %v1515 = vpop.xlane.xlu0 %1514
        %v1516 = vsel %vm1147, %v1420, 0.0
        %1517 = vadd.xlane.f32.xlu0 %v1516
        %v1518 = vpop.xlane.xlu0 %1517
        %v1519 = vsel %vm1147, %v1421, 0.0
        %1520 = vadd.xlane.f32.xlu0 %v1519
        %v1521 = vpop.xlane.xlu0 %1520
        %v1522 = vsel %vm1147, %v1422, 0.0
        %1523 = vadd.xlane.f32.xlu0 %v1522
        %v1524 = vpop.xlane.xlu0 %1523
        %v1525 = vsel %vm1147, %v1423, 0.0
        %1526 = vadd.xlane.f32.xlu0 %v1525
        %v1527 = vpop.xlane.xlu0 %1526
        %v1528 = vsel %vm1147, %v1424, 0.0
        %1529 = vadd.xlane.f32.xlu0 %v1528
        %v1530 = vpop.xlane.xlu0 %1529
        %v1531 = vsel %vm1147, %v1425, 0.0
        %1532 = vadd.xlane.f32.xlu0 %v1531
        %v1533 = vpop.xlane.xlu0 %1532
        %v1534 = vsel %vm1147, %v1426, 0.0
        %1535 = vadd.xlane.f32.xlu0 %v1534
        %v1536 = vpop.xlane.xlu0 %1535
        %v1537 = vsel %vm1147, %v1427, 0.0
        %1538 = vadd.xlane.f32.xlu0 %v1537
        %v1539 = vpop.xlane.xlu0 %1538
        %v1540 = vsel %vm1147, %v1428, 0.0
        %1541 = vadd.xlane.f32.xlu0 %v1540
        %v1542 = vpop.xlane.xlu0 %1541
        %v1543 = vsel %vm1147, %v1429, 0.0
        %1544 = vadd.xlane.f32.xlu0 %v1543
        %v1545 = vpop.xlane.xlu0 %1544
        %v1546 = vsel %vm1147, %v1430, 0.0
        %1547 = vadd.xlane.f32.xlu0 %v1546
        %v1548 = vpop.xlane.xlu0 %1547
        %v1549 = vsel %vm1147, %v1431, 0.0
        %1550 = vadd.xlane.f32.xlu0 %v1549
        %v1551 = vpop.xlane.xlu0 %1550
        %v1552 = vsel %vm1147, %v1432, 0.0
        %1553 = vadd.xlane.f32.xlu0 %v1552
        %v1554 = vpop.xlane.xlu0 %1553
        %v1555 = vsel %vm1147, %v1433, 0.0
        %1556 = vadd.xlane.f32.xlu0 %v1555
        %v1557 = vpop.xlane.xlu0 %1556
        %v1558 = vsel %vm1147, %v1434, 0.0
        %1559 = vadd.xlane.f32.xlu0 %v1558
        %v1560 = vpop.xlane.xlu0 %1559
        %v1561 = vsel %vm1147, %v1435, 0.0
        %1562 = vadd.xlane.f32.xlu0 %v1561
        %v1563 = vpop.xlane.xlu0 %1562
        %v1564 = vsel %vm1147, %v1436, 0.0
        %1565 = vadd.xlane.f32.xlu0 %v1564
        %v1566 = vpop.xlane.xlu0 %1565
        %v1567 = vsel %vm1147, %v1437, 0.0
        %1568 = vadd.xlane.f32.xlu0 %v1567
        %v1569 = vpop.xlane.xlu0 %1568
        %v1570 = vsel %vm1147, %v1438, 0.0
        %1571 = vadd.xlane.f32.xlu0 %v1570
        %v1572 = vpop.xlane.xlu0 %1571
        %v1573 = vsel %vm1147, %v1439, 0.0
        %1574 = vadd.xlane.f32.xlu0 %v1573
        %v1575 = vpop.xlane.xlu0 %1574
        %v1576 = vsel %vm1147, %v1440, 0.0
        %1577 = vadd.xlane.f32.xlu0 %v1576
        %v1578 = vpop.xlane.xlu0 %1577
        %v1579 = vsel %vm1147, %v1441, 0.0
        %1580 = vadd.xlane.f32.xlu0 %v1579
        %v1581 = vpop.xlane.xlu0 %1580
        %v1582 = vsel %vm1147, %v1442, 0.0
        %1583 = vadd.xlane.f32.xlu0 %v1582
        %v1584 = vpop.xlane.xlu0 %1583
        %v1585 = vsel %vm1147, %v1443, 0.0
        %1586 = vadd.xlane.f32.xlu0 %v1585
        %v1587 = vpop.xlane.xlu0 %1586
        %v1588 = vsel %vm1147, %v1444, 0.0
        %1589 = vadd.xlane.f32.xlu0 %v1588
        %v1590 = vpop.xlane.xlu0 %1589
        %v1591 = vsel %vm1147, %v1445, 0.0
        %1592 = vadd.xlane.f32.xlu0 %v1591
        %v1593 = vpop.xlane.xlu0 %1592
        %v1594 = vsel %vm1147, %v1446, 0.0
        %1595 = vadd.xlane.f32.xlu0 %v1594
        %v1596 = vpop.xlane.xlu0 %1595
        %v1597 = vsel %vm1147, %v1447, 0.0
        %1598 = vadd.xlane.f32.xlu0 %v1597
        %v1599 = vpop.xlane.xlu0 %1598
        %v1600 = vsel %vm1147, %v1448, 0.0
        %1601 = vadd.xlane.f32.xlu0 %v1600
        %v1602 = vpop.xlane.xlu0 %1601
        %v1603 = vsel %vm1147, %v1449, 0.0
        %1604 = vadd.xlane.f32.xlu0 %v1603
        %v1605 = vpop.xlane.xlu0 %1604
        %v1606 = vsel %vm1147, %v1450, 0.0
        %1607 = vadd.xlane.f32.xlu0 %v1606
        %v1608 = vpop.xlane.xlu0 %1607
        %v1609 = vsel %vm1147, %v1451, 0.0
        %1610 = vadd.xlane.f32.xlu0 %v1609
        %v1611 = vpop.xlane.xlu0 %1610
        %v1612 = vsel %vm1147, %v1452, 0.0
        %1613 = vadd.xlane.f32.xlu0 %v1612
        %v1614 = vpop.xlane.xlu0 %1613
        %v1615 = vsel %vm1147, %v1453, 0.0
        %1616 = vadd.xlane.f32.xlu0 %v1615
        %v1617 = vpop.xlane.xlu0 %1616
        %v1618 = vsel %vm1147, %v1454, 0.0
        %1619 = vadd.xlane.f32.xlu0 %v1618
        %v1620 = vpop.xlane.xlu0 %1619
        %v1621 = vsel %vm1147, %v1455, 0.0
        %1622 = vadd.xlane.f32.xlu0 %v1621
        %v1623 = vpop.xlane.xlu0 %1622
        %v1624 = vsel %vm1147, %v1456, 0.0
        %1625 = vadd.xlane.f32.xlu0 %v1624
        %v1626 = vpop.xlane.xlu0 %1625
        %v1627 = vsel %vm1147, %v1457, 0.0
        %1628 = vadd.xlane.f32.xlu0 %v1627
        %v1629 = vpop.xlane.xlu0 %1628
        %v1630 = vsel %vm1147, %v1458, 0.0
        %1631 = vadd.xlane.f32.xlu0 %v1630
        %v1632 = vpop.xlane.xlu0 %1631
        %v1633 = vsel %vm1147, %v1459, 0.0
        %1634 = vadd.xlane.f32.xlu0 %v1633
        %v1635 = vpop.xlane.xlu0 %1634
        %v1636 = vsel %vm1147, %v1460, 0.0
        %1637 = vadd.xlane.f32.xlu0 %v1636
        %v1638 = vpop.xlane.xlu0 %1637
        %v1639 = vsel %vm1147, %v1461, 0.0
        %1640 = vadd.xlane.f32.xlu0 %v1639
        %v1641 = vpop.xlane.xlu0 %1640
        %v1642 = vsel %vm1147, %v1462, 0.0
        %1643 = vadd.xlane.f32.xlu0 %v1642
        %v1644 = vpop.xlane.xlu0 %1643
        %v1645 = vsel %vm1147, %v1463, 0.0
        %1646 = vadd.xlane.f32.xlu0 %v1645
        %v1647 = vpop.xlane.xlu0 %1646
        %v1648 = vsel %vm1147, %v1464, 0.0
        %1649 = vadd.xlane.f32.xlu0 %v1648
        %v1650 = vpop.xlane.xlu0 %1649
        %v1651 = vsel %vm1147, %v1465, 0.0
        %1652 = vadd.xlane.f32.xlu0 %v1651
        %v1653 = vpop.xlane.xlu0 %1652
        %v1654 = vsel %vm1147, %v1466, 0.0
        %1655 = vadd.xlane.f32.xlu0 %v1654
        %v1656 = vpop.xlane.xlu0 %1655
        %v1657 = vsel %vm1147, %v1467, 0.0
        %1658 = vadd.xlane.f32.xlu0 %v1657
        %v1659 = vpop.xlane.xlu0 %1658
        %v1660 = vmul.f32 %v1470, 0.015625
        %v1661 = vmul.f32 %v1473, 0.015625
        %v1662 = vmul.f32 %v1476, 0.015625
        %v1663 = vmul.f32 %v1479, 0.015625
        %v1664 = vmul.f32 %v1482, 0.015625
        %v1665 = vmul.f32 %v1485, 0.015625
        %v1666 = vmul.f32 %v1488, 0.015625
        %v1667 = vmul.f32 %v1491, 0.015625
        %v1668 = vmul.f32 %v1494, 0.015625
        %v1669 = vmul.f32 %v1497, 0.015625
        %v1670 = vmul.f32 %v1500, 0.015625
        %v1671 = vmul.f32 %v1503, 0.015625
        %v1672 = vmul.f32 %v1506, 0.015625
        %v1673 = vmul.f32 %v1509, 0.015625
        %v1674 = vmul.f32 %v1512, 0.015625
        %v1675 = vmul.f32 %v1515, 0.015625
        %v1676 = vmul.f32 %v1518, 0.015625
        %v1677 = vmul.f32 %v1521, 0.015625
        %v1678 = vmul.f32 %v1524, 0.015625
        %v1679 = vmul.f32 %v1527, 0.015625
        %v1680 = vmul.f32 %v1530, 0.015625
        %v1681 = vmul.f32 %v1533, 0.015625
        %v1682 = vmul.f32 %v1536, 0.015625
        %v1683 = vmul.f32 %v1539, 0.015625
        %v1684 = vmul.f32 %v1542, 0.015625
        %v1685 = vmul.f32 %v1545, 0.015625
        %v1686 = vmul.f32 %v1548, 0.015625
        %v1687 = vmul.f32 %v1551, 0.015625
        %v1688 = vmul.f32 %v1554, 0.015625
        %v1689 = vmul.f32 %v1557, 0.015625
        %v1690 = vmul.f32 %v1560, 0.015625
        %v1691 = vmul.f32 %v1563, 0.015625
        %v1692 = vmul.f32 %v1566, 0.015625
        %v1693 = vmul.f32 %v1569, 0.015625
        %v1694 = vmul.f32 %v1572, 0.015625
        %v1695 = vmul.f32 %v1575, 0.015625
        %v1696 = vmul.f32 %v1578, 0.015625
        %v1697 = vmul.f32 %v1581, 0.015625
        %v1698 = vmul.f32 %v1584, 0.015625
        %v1699 = vmul.f32 %v1587, 0.015625
        %v1700 = vmul.f32 %v1590, 0.015625
        %v1701 = vmul.f32 %v1593, 0.015625
        %v1702 = vmul.f32 %v1596, 0.015625
        %v1703 = vmul.f32 %v1599, 0.015625
        %v1704 = vmul.f32 %v1602, 0.015625
        %v1705 = vmul.f32 %v1605, 0.015625
        %v1706 = vmul.f32 %v1608, 0.015625
        %v1707 = vmul.f32 %v1611, 0.015625
        %v1708 = vmul.f32 %v1614, 0.015625
        %v1709 = vmul.f32 %v1617, 0.015625
        %v1710 = vmul.f32 %v1620, 0.015625
        %v1711 = vmul.f32 %v1623, 0.015625
        %v1712 = vmul.f32 %v1626, 0.015625
        %v1713 = vmul.f32 %v1629, 0.015625
        %v1714 = vmul.f32 %v1632, 0.015625
        %v1715 = vmul.f32 %v1635, 0.015625
        %v1716 = vmul.f32 %v1638, 0.015625
        %v1717 = vmul.f32 %v1641, 0.015625
        %v1718 = vmul.f32 %v1644, 0.015625
        %v1719 = vmul.f32 %v1647, 0.015625
        %v1720 = vmul.f32 %v1650, 0.015625
        %v1721 = vmul.f32 %v1653, 0.015625
        %v1722 = vmul.f32 %v1656, 0.015625
        %v1723 = vmul.f32 %v1659, 0.015625
        %v1724 = vmul.f32 %v1340, %v1340
        %v1725 = vmul.f32 %v1341, %v1341
        %v1726 = vmul.f32 %v1342, %v1342
        %v1727 = vmul.f32 %v1343, %v1343
        %v1728 = vmul.f32 %v1344, %v1344
        %v1729 = vmul.f32 %v1345, %v1345
        %v1730 = vmul.f32 %v1346, %v1346
        %v1731 = vmul.f32 %v1347, %v1347
        %v1732 = vmul.f32 %v1348, %v1348
        %v1733 = vmul.f32 %v1349, %v1349
        %v1734 = vmul.f32 %v1350, %v1350
        %v1735 = vmul.f32 %v1351, %v1351
        %v1736 = vmul.f32 %v1352, %v1352
        %v1737 = vmul.f32 %v1353, %v1353
        %v1738 = vmul.f32 %v1354, %v1354
        %v1739 = vmul.f32 %v1355, %v1355
        %v1740 = vmul.f32 %v1356, %v1356
        %v1741 = vmul.f32 %v1357, %v1357
        %v1742 = vmul.f32 %v1358, %v1358
        %v1743 = vmul.f32 %v1359, %v1359
        %v1744 = vmul.f32 %v1360, %v1360
        %v1745 = vmul.f32 %v1361, %v1361
        %v1746 = vmul.f32 %v1362, %v1362
        %v1747 = vmul.f32 %v1363, %v1363
        %v1748 = vmul.f32 %v1364, %v1364
        %v1749 = vmul.f32 %v1365, %v1365
        %v1750 = vmul.f32 %v1366, %v1366
        %v1751 = vmul.f32 %v1367, %v1367
        %v1752 = vmul.f32 %v1368, %v1368
        %v1753 = vmul.f32 %v1369, %v1369
        %v1754 = vmul.f32 %v1370, %v1370
        %v1755 = vmul.f32 %v1371, %v1371
        %v1756 = vmul.f32 %v1372, %v1372
        %v1757 = vmul.f32 %v1373, %v1373
        %v1758 = vmul.f32 %v1374, %v1374
        %v1759 = vmul.f32 %v1375, %v1375
        %v1760 = vmul.f32 %v1376, %v1376
        %v1761 = vmul.f32 %v1377, %v1377
        %v1762 = vmul.f32 %v1378, %v1378
        %v1763 = vmul.f32 %v1379, %v1379
        %v1764 = vmul.f32 %v1380, %v1380
        %v1765 = vmul.f32 %v1381, %v1381
        %v1766 = vmul.f32 %v1382, %v1382
        %v1767 = vmul.f32 %v1383, %v1383
        %v1768 = vmul.f32 %v1384, %v1384
        %v1769 = vmul.f32 %v1385, %v1385
        %v1770 = vmul.f32 %v1386, %v1386
        %v1771 = vmul.f32 %v1387, %v1387
        %v1772 = vmul.f32 %v1388, %v1388
        %v1773 = vmul.f32 %v1389, %v1389
        %v1774 = vmul.f32 %v1390, %v1390
        %v1775 = vmul.f32 %v1391, %v1391
        %v1776 = vmul.f32 %v1392, %v1392
        %v1777 = vmul.f32 %v1393, %v1393
        %v1778 = vmul.f32 %v1394, %v1394
        %v1779 = vmul.f32 %v1395, %v1395
        %v1780 = vmul.f32 %v1396, %v1396
        %v1781 = vmul.f32 %v1397, %v1397
        %v1782 = vmul.f32 %v1398, %v1398
        %v1783 = vmul.f32 %v1399, %v1399
        %v1784 = vmul.f32 %v1400, %v1400
        %v1785 = vmul.f32 %v1401, %v1401
        %v1786 = vmul.f32 %v1402, %v1402
        %v1787 = vmul.f32 %v1403, %v1403
        %v1788 = vsub.f32 %v1660, %v1724
        %v1789 = vsub.f32 %v1661, %v1725
        %v1790 = vsub.f32 %v1662, %v1726
        %v1791 = vsub.f32 %v1663, %v1727
        %v1792 = vsub.f32 %v1664, %v1728
        %v1793 = vsub.f32 %v1665, %v1729
        %v1794 = vsub.f32 %v1666, %v1730
        %v1795 = vsub.f32 %v1667, %v1731
        %v1796 = vsub.f32 %v1668, %v1732
        %v1797 = vsub.f32 %v1669, %v1733
        %v1798 = vsub.f32 %v1670, %v1734
        %v1799 = vsub.f32 %v1671, %v1735
        %v1800 = vsub.f32 %v1672, %v1736
        %v1801 = vsub.f32 %v1673, %v1737
        %v1802 = vsub.f32 %v1674, %v1738
        %v1803 = vsub.f32 %v1675, %v1739
        %v1804 = vsub.f32 %v1676, %v1740
        %v1805 = vsub.f32 %v1677, %v1741
        %v1806 = vsub.f32 %v1678, %v1742
        %v1807 = vsub.f32 %v1679, %v1743
        %v1808 = vsub.f32 %v1680, %v1744
        %v1809 = vsub.f32 %v1681, %v1745
        %v1810 = vsub.f32 %v1682, %v1746
        %v1811 = vsub.f32 %v1683, %v1747
        %v1812 = vsub.f32 %v1684, %v1748
        %v1813 = vsub.f32 %v1685, %v1749
        %v1814 = vsub.f32 %v1686, %v1750
        %v1815 = vsub.f32 %v1687, %v1751
        %v1816 = vsub.f32 %v1688, %v1752
        %v1817 = vsub.f32 %v1689, %v1753
        %v1818 = vsub.f32 %v1690, %v1754
        %v1819 = vsub.f32 %v1691, %v1755
        %v1820 = vsub.f32 %v1692, %v1756
        %v1821 = vsub.f32 %v1693, %v1757
        %v1822 = vsub.f32 %v1694, %v1758
        %v1823 = vsub.f32 %v1695, %v1759
        %v1824 = vsub.f32 %v1696, %v1760
        %v1825 = vsub.f32 %v1697, %v1761
        %v1826 = vsub.f32 %v1698, %v1762
        %v1827 = vsub.f32 %v1699, %v1763
        %v1828 = vsub.f32 %v1700, %v1764
        %v1829 = vsub.f32 %v1701, %v1765
        %v1830 = vsub.f32 %v1702, %v1766
        %v1831 = vsub.f32 %v1703, %v1767
        %v1832 = vsub.f32 %v1704, %v1768
        %v1833 = vsub.f32 %v1705, %v1769
        %v1834 = vsub.f32 %v1706, %v1770
        %v1835 = vsub.f32 %v1707, %v1771
        %v1836 = vsub.f32 %v1708, %v1772
        %v1837 = vsub.f32 %v1709, %v1773
        %v1838 = vsub.f32 %v1710, %v1774
        %v1839 = vsub.f32 %v1711, %v1775
        %v1840 = vsub.f32 %v1712, %v1776
        %v1841 = vsub.f32 %v1713, %v1777
        %v1842 = vsub.f32 %v1714, %v1778
        %v1843 = vsub.f32 %v1715, %v1779
        %v1844 = vsub.f32 %v1716, %v1780
        %v1845 = vsub.f32 %v1717, %v1781
        %v1846 = vsub.f32 %v1718, %v1782
        %v1847 = vsub.f32 %v1719, %v1783
        %v1848 = vsub.f32 %v1720, %v1784
        %v1849 = vsub.f32 %v1721, %v1785
        %v1850 = vsub.f32 %v1722, %v1786
        %v1851 = vsub.f32 %v1723, %v1787
        %v1852 = vsub.f32 %v891, %v1340
        %v1853 = vsub.f32 %v894, %v1341
        %v1854 = vsub.f32 %v899, %v1342
        %v1855 = vsub.f32 %v902, %v1343
        %v1856 = vsub.f32 %v907, %v1344
        %v1857 = vsub.f32 %v910, %v1345
        %v1858 = vsub.f32 %v915, %v1346
        %v1859 = vsub.f32 %v918, %v1347
        %v1860 = vsub.f32 %v923, %v1348
        %v1861 = vsub.f32 %v926, %v1349
        %v1862 = vsub.f32 %v931, %v1350
        %v1863 = vsub.f32 %v934, %v1351
        %v1864 = vsub.f32 %v939, %v1352
        %v1865 = vsub.f32 %v942, %v1353
        %v1866 = vsub.f32 %v947, %v1354
        %v1867 = vsub.f32 %v950, %v1355
        %v1868 = vsub.f32 %v955, %v1356
        %v1869 = vsub.f32 %v958, %v1357
        %v1870 = vsub.f32 %v963, %v1358
        %v1871 = vsub.f32 %v966, %v1359
        %v1872 = vsub.f32 %v971, %v1360
        %v1873 = vsub.f32 %v974, %v1361
        %v1874 = vsub.f32 %v979, %v1362
        %v1875 = vsub.f32 %v982, %v1363
        %v1876 = vsub.f32 %v987, %v1364
        %v1877 = vsub.f32 %v990, %v1365
        %v1878 = vsub.f32 %v995, %v1366
        %v1879 = vsub.f32 %v998, %v1367
        %v1880 = vsub.f32 %v1003, %v1368
        %v1881 = vsub.f32 %v1006, %v1369
        %v1882 = vsub.f32 %v1011, %v1370
        %v1883 = vsub.f32 %v1014, %v1371
        %v1884 = vsub.f32 %v1019, %v1372
        %v1885 = vsub.f32 %v1022, %v1373
        %v1886 = vsub.f32 %v1027, %v1374
        %v1887 = vsub.f32 %v1030, %v1375
        %v1888 = vsub.f32 %v1035, %v1376
        %v1889 = vsub.f32 %v1038, %v1377
        %v1890 = vsub.f32 %v1043, %v1378
        %v1891 = vsub.f32 %v1046, %v1379
        %v1892 = vsub.f32 %v1051, %v1380
        %v1893 = vsub.f32 %v1054, %v1381
        %v1894 = vsub.f32 %v1059, %v1382
        %v1895 = vsub.f32 %v1062, %v1383
        %v1896 = vsub.f32 %v1067, %v1384
        %v1897 = vsub.f32 %v1070, %v1385
        %v1898 = vsub.f32 %v1075, %v1386
        %v1899 = vsub.f32 %v1078, %v1387
        %v1900 = vsub.f32 %v1083, %v1388
        %v1901 = vsub.f32 %v1086, %v1389
        %v1902 = vsub.f32 %v1091, %v1390
        %v1903 = vsub.f32 %v1094, %v1391
        %v1904 = vsub.f32 %v1099, %v1392
        %v1905 = vsub.f32 %v1102, %v1393
        %v1906 = vsub.f32 %v1107, %v1394
        %v1907 = vsub.f32 %v1110, %v1395
        %v1908 = vsub.f32 %v1115, %v1396
        %v1909 = vsub.f32 %v1118, %v1397
        %v1910 = vsub.f32 %v1123, %v1398
        %v1911 = vsub.f32 %v1126, %v1399
        %v1912 = vsub.f32 %v1131, %v1400
        %v1913 = vsub.f32 %v1134, %v1401
        %v1914 = vsub.f32 %v1139, %v1402
        %v1915 = vsub.f32 %v1142, %v1403
        %v1916 = vadd.f32 %v1788, 1e-05
        %v1917 = vadd.f32 %v1789, 1e-05
        %v1918 = vadd.f32 %v1790, 1e-05
        %v1919 = vadd.f32 %v1791, 1e-05
        %v1920 = vadd.f32 %v1792, 1e-05
        %v1921 = vadd.f32 %v1793, 1e-05
        %v1922 = vadd.f32 %v1794, 1e-05
        %v1923 = vadd.f32 %v1795, 1e-05
        %v1924 = vadd.f32 %v1796, 1e-05
        %v1925 = vadd.f32 %v1797, 1e-05
        %v1926 = vadd.f32 %v1798, 1e-05
        %v1927 = vadd.f32 %v1799, 1e-05
        %v1928 = vadd.f32 %v1800, 1e-05
        %v1929 = vadd.f32 %v1801, 1e-05
        %v1930 = vadd.f32 %v1802, 1e-05
        %v1931 = vadd.f32 %v1803, 1e-05
        %v1932 = vadd.f32 %v1804, 1e-05
        %v1933 = vadd.f32 %v1805, 1e-05
        %v1934 = vadd.f32 %v1806, 1e-05
        %v1935 = vadd.f32 %v1807, 1e-05
        %v1936 = vadd.f32 %v1808, 1e-05
        %v1937 = vadd.f32 %v1809, 1e-05
        %v1938 = vadd.f32 %v1810, 1e-05
        %v1939 = vadd.f32 %v1811, 1e-05
        %v1940 = vadd.f32 %v1812, 1e-05
        %v1941 = vadd.f32 %v1813, 1e-05
        %v1942 = vadd.f32 %v1814, 1e-05
        %v1943 = vadd.f32 %v1815, 1e-05
        %v1944 = vadd.f32 %v1816, 1e-05
        %v1945 = vadd.f32 %v1817, 1e-05
        %v1946 = vadd.f32 %v1818, 1e-05
        %v1947 = vadd.f32 %v1819, 1e-05
        %v1948 = vadd.f32 %v1820, 1e-05
        %v1949 = vadd.f32 %v1821, 1e-05
        %v1950 = vadd.f32 %v1822, 1e-05
        %v1951 = vadd.f32 %v1823, 1e-05
        %v1952 = vadd.f32 %v1824, 1e-05
        %v1953 = vadd.f32 %v1825, 1e-05
        %v1954 = vadd.f32 %v1826, 1e-05
        %v1955 = vadd.f32 %v1827, 1e-05
        %v1956 = vadd.f32 %v1828, 1e-05
        %v1957 = vadd.f32 %v1829, 1e-05
        %v1958 = vadd.f32 %v1830, 1e-05
        %v1959 = vadd.f32 %v1831, 1e-05
        %v1960 = vadd.f32 %v1832, 1e-05
        %v1961 = vadd.f32 %v1833, 1e-05
        %v1962 = vadd.f32 %v1834, 1e-05
        %v1963 = vadd.f32 %v1835, 1e-05
        %v1964 = vadd.f32 %v1836, 1e-05
        %v1965 = vadd.f32 %v1837, 1e-05
        %v1966 = vadd.f32 %v1838, 1e-05
        %v1967 = vadd.f32 %v1839, 1e-05
        %v1968 = vadd.f32 %v1840, 1e-05
        %v1969 = vadd.f32 %v1841, 1e-05
        %v1970 = vadd.f32 %v1842, 1e-05
        %v1971 = vadd.f32 %v1843, 1e-05
        %v1972 = vadd.f32 %v1844, 1e-05
        %v1973 = vadd.f32 %v1845, 1e-05
        %v1974 = vadd.f32 %v1846, 1e-05
        %v1975 = vadd.f32 %v1847, 1e-05
        %v1976 = vadd.f32 %v1848, 1e-05
        %v1977 = vadd.f32 %v1849, 1e-05
        %v1978 = vadd.f32 %v1850, 1e-05
        %v1979 = vadd.f32 %v1851, 1e-05
        %v1980 = vrsqrt.pop %v1916
        %v1981 = vrsqrt.pop %v1917
        %v1982 = vrsqrt.pop %v1918
        %v1983 = vrsqrt.pop %v1919
        %v1984 = vrsqrt.pop %v1920
        %v1985 = vrsqrt.pop %v1921
        %v1986 = vrsqrt.pop %v1922
        %v1987 = vrsqrt.pop %v1923
        %v1988 = vrsqrt.pop %v1924
        %v1989 = vrsqrt.pop %v1925
        %v1990 = vrsqrt.pop %v1926
        %v1991 = vrsqrt.pop %v1927
        %v1992 = vrsqrt.pop %v1928
        %v1993 = vrsqrt.pop %v1929
        %v1994 = vrsqrt.pop %v1930
        %v1995 = vrsqrt.pop %v1931
        %v1996 = vrsqrt.pop %v1932
        %v1997 = vrsqrt.pop %v1933
        %v1998 = vrsqrt.pop %v1934
        %v1999 = vrsqrt.pop %v1935
        %v2000 = vrsqrt.pop %v1936
        %v2001 = vrsqrt.pop %v1937
        %v2002 = vrsqrt.pop %v1938
        %v2003 = vrsqrt.pop %v1939
        %v2004 = vrsqrt.pop %v1940
        %v2005 = vrsqrt.pop %v1941
        %v2006 = vrsqrt.pop %v1942
        %v2007 = vrsqrt.pop %v1943
        %v2008 = vrsqrt.pop %v1944
        %v2009 = vrsqrt.pop %v1945
        %v2010 = vrsqrt.pop %v1946
        %v2011 = vrsqrt.pop %v1947
        %v2012 = vrsqrt.pop %v1948
        %v2013 = vrsqrt.pop %v1949
        %v2014 = vrsqrt.pop %v1950
        %v2015 = vrsqrt.pop %v1951
        %v2016 = vrsqrt.pop %v1952
        %v2017 = vrsqrt.pop %v1953
        %v2018 = vrsqrt.pop %v1954
        %v2019 = vrsqrt.pop %v1955
        %v2020 = vrsqrt.pop %v1956
        %v2021 = vrsqrt.pop %v1957
        %v2022 = vrsqrt.pop %v1958
        %v2023 = vrsqrt.pop %v1959
        %v2024 = vrsqrt.pop %v1960
        %v2025 = vrsqrt.pop %v1961
        %v2026 = vrsqrt.pop %v1962
        %v2027 = vrsqrt.pop %v1963
        %v2028 = vrsqrt.pop %v1964
        %v2029 = vrsqrt.pop %v1965
        %v2030 = vrsqrt.pop %v1966
        %v2031 = vrsqrt.pop %v1967
        %v2032 = vrsqrt.pop %v1968
        %v2033 = vrsqrt.pop %v1969
        %v2034 = vrsqrt.pop %v1970
        %v2035 = vrsqrt.pop %v1971
        %v2036 = vrsqrt.pop %v1972
        %v2037 = vrsqrt.pop %v1973
        %v2038 = vrsqrt.pop %v1974
        %v2039 = vrsqrt.pop %v1975
        %v2040 = vrsqrt.pop %v1976
        %v2041 = vrsqrt.pop %v1977
        %v2042 = vrsqrt.pop %v1978
        %v2043 = vrsqrt.pop %v1979
        %v2044 = vmul.f32 %v1852, %v1980
        %v2045 = vmul.f32 %v1853, %v1981
        %v2046 = vmul.f32 %v1854, %v1982
        %v2047 = vmul.f32 %v1855, %v1983
        %v2048 = vmul.f32 %v1856, %v1984
        %v2049 = vmul.f32 %v1857, %v1985
        %v2050 = vmul.f32 %v1858, %v1986
        %v2051 = vmul.f32 %v1859, %v1987
        %v2052 = vmul.f32 %v1860, %v1988
        %v2053 = vmul.f32 %v1861, %v1989
        %v2054 = vmul.f32 %v1862, %v1990
        %v2055 = vmul.f32 %v1863, %v1991
        %v2056 = vmul.f32 %v1864, %v1992
        %v2057 = vmul.f32 %v1865, %v1993
        %v2058 = vmul.f32 %v1866, %v1994
        %v2059 = vmul.f32 %v1867, %v1995
        %v2060 = vmul.f32 %v1868, %v1996
        %v2061 = vmul.f32 %v1869, %v1997
        %v2062 = vmul.f32 %v1870, %v1998
        %v2063 = vmul.f32 %v1871, %v1999
        %v2064 = vmul.f32 %v1872, %v2000
        %v2065 = vmul.f32 %v1873, %v2001
        %v2066 = vmul.f32 %v1874, %v2002
        %v2067 = vmul.f32 %v1875, %v2003
        %v2068 = vmul.f32 %v1876, %v2004
        %v2069 = vmul.f32 %v1877, %v2005
        %v2070 = vmul.f32 %v1878, %v2006
        %v2071 = vmul.f32 %v1879, %v2007
        %v2072 = vmul.f32 %v1880, %v2008
        %v2073 = vmul.f32 %v1881, %v2009
        %v2074 = vmul.f32 %v1882, %v2010
        %v2075 = vmul.f32 %v1883, %v2011
        %v2076 = vmul.f32 %v1884, %v2012
        %v2077 = vmul.f32 %v1885, %v2013
        %v2078 = vmul.f32 %v1886, %v2014
        %v2079 = vmul.f32 %v1887, %v2015
        %v2080 = vmul.f32 %v1888, %v2016
        %v2081 = vmul.f32 %v1889, %v2017
        %v2082 = vmul.f32 %v1890, %v2018
        %v2083 = vmul.f32 %v1891, %v2019
        %v2084 = vmul.f32 %v1892, %v2020
        %v2085 = vmul.f32 %v1893, %v2021
        %v2086 = vmul.f32 %v1894, %v2022
        %v2087 = vmul.f32 %v1895, %v2023
        %v2088 = vmul.f32 %v1896, %v2024
        %v2089 = vmul.f32 %v1897, %v2025
        %v2090 = vmul.f32 %v1898, %v2026
        %v2091 = vmul.f32 %v1899, %v2027
        %v2092 = vmul.f32 %v1900, %v2028
        %v2093 = vmul.f32 %v1901, %v2029
        %v2094 = vmul.f32 %v1902, %v2030
        %v2095 = vmul.f32 %v1903, %v2031
        %v2096 = vmul.f32 %v1904, %v2032
        %v2097 = vmul.f32 %v1905, %v2033
        %v2098 = vmul.f32 %v1906, %v2034
        %v2099 = vmul.f32 %v1907, %v2035
        %v2100 = vmul.f32 %v1908, %v2036
        %v2101 = vmul.f32 %v1909, %v2037
        %v2102 = vmul.f32 %v1910, %v2038
        %v2103 = vmul.f32 %v1911, %v2039
        %v2104 = vmul.f32 %v1912, %v2040
        %v2105 = vmul.f32 %v1913, %v2041
        %v2106 = vmul.f32 %v1914, %v2042
        %v2107 = vmul.f32 %v1915, %v2043
        %v2108 = vlaneseq
        %v2109 = vshrl.u32 %v2108, 7
        %v2110 = vsub.s32 0, %v2109
        %v2111 = vrot.slane %v1145, %v2110
        %v2112 = vmul.f32 %v2044, %v2111
        %v2113 = vmul.f32 %v2045, %v2111
        %v2114 = vmul.f32 %v2046, %v2111
        %v2115 = vmul.f32 %v2047, %v2111
        %v2116 = vmul.f32 %v2048, %v2111
        %v2117 = vmul.f32 %v2049, %v2111
        %v2118 = vmul.f32 %v2050, %v2111
        %v2119 = vmul.f32 %v2051, %v2111
        %v2120 = vmul.f32 %v2052, %v2111
        %v2121 = vmul.f32 %v2053, %v2111
        %v2122 = vmul.f32 %v2054, %v2111
        %v2123 = vmul.f32 %v2055, %v2111
        %v2124 = vmul.f32 %v2056, %v2111
        %v2125 = vmul.f32 %v2057, %v2111
        %v2126 = vmul.f32 %v2058, %v2111
        %v2127 = vmul.f32 %v2059, %v2111
        %v2128 = vmul.f32 %v2060, %v2111
        %v2129 = vmul.f32 %v2061, %v2111
        %v2130 = vmul.f32 %v2062, %v2111
        %v2131 = vmul.f32 %v2063, %v2111
        %v2132 = vmul.f32 %v2064, %v2111
        %v2133 = vmul.f32 %v2065, %v2111
        %v2134 = vmul.f32 %v2066, %v2111
        %v2135 = vmul.f32 %v2067, %v2111
        %v2136 = vmul.f32 %v2068, %v2111
        %v2137 = vmul.f32 %v2069, %v2111
        %v2138 = vmul.f32 %v2070, %v2111
        %v2139 = vmul.f32 %v2071, %v2111
        %v2140 = vmul.f32 %v2072, %v2111
        %v2141 = vmul.f32 %v2073, %v2111
        %v2142 = vmul.f32 %v2074, %v2111
        %v2143 = vmul.f32 %v2075, %v2111
        %v2144 = vmul.f32 %v2076, %v2111
        %v2145 = vmul.f32 %v2077, %v2111
        %v2146 = vmul.f32 %v2078, %v2111
        %v2147 = vmul.f32 %v2079, %v2111
        %v2148 = vmul.f32 %v2080, %v2111
        %v2149 = vmul.f32 %v2081, %v2111
        %v2150 = vmul.f32 %v2082, %v2111
        %v2151 = vmul.f32 %v2083, %v2111
        %v2152 = vmul.f32 %v2084, %v2111
        %v2153 = vmul.f32 %v2085, %v2111
        %v2154 = vmul.f32 %v2086, %v2111
        %v2155 = vmul.f32 %v2087, %v2111
        %v2156 = vmul.f32 %v2088, %v2111
        %v2157 = vmul.f32 %v2089, %v2111
        %v2158 = vmul.f32 %v2090, %v2111
        %v2159 = vmul.f32 %v2091, %v2111
        %v2160 = vmul.f32 %v2092, %v2111
        %v2161 = vmul.f32 %v2093, %v2111
        %v2162 = vmul.f32 %v2094, %v2111
        %v2163 = vmul.f32 %v2095, %v2111
        %v2164 = vmul.f32 %v2096, %v2111
        %v2165 = vmul.f32 %v2097, %v2111
        %v2166 = vmul.f32 %v2098, %v2111
        %v2167 = vmul.f32 %v2099, %v2111
        %v2168 = vmul.f32 %v2100, %v2111
        %v2169 = vmul.f32 %v2101, %v2111
        %v2170 = vmul.f32 %v2102, %v2111
        %v2171 = vmul.f32 %v2103, %v2111
        %v2172 = vmul.f32 %v2104, %v2111
        %v2173 = vmul.f32 %v2105, %v2111
        %v2174 = vmul.f32 %v2106, %v2111
        %v2175 = vmul.f32 %v2107, %v2111
        %v2176 = vlaneseq
        %v2177 = vshrl.u32 %v2176, 7
        %v2178 = vsub.s32 0, %v2177
        %v2179 = vrot.slane %v1146, %v2178
        %v2180 = vadd.f32 %v2112, %v2179
        %v2181 = vadd.f32 %v2113, %v2179
        %v2182 = vadd.f32 %v2114, %v2179
        %v2183 = vadd.f32 %v2115, %v2179
        %v2184 = vadd.f32 %v2116, %v2179
        %v2185 = vadd.f32 %v2117, %v2179
        %v2186 = vadd.f32 %v2118, %v2179
        %v2187 = vadd.f32 %v2119, %v2179
        %v2188 = vadd.f32 %v2120, %v2179
        %v2189 = vadd.f32 %v2121, %v2179
        %v2190 = vadd.f32 %v2122, %v2179
        %v2191 = vadd.f32 %v2123, %v2179
        %v2192 = vadd.f32 %v2124, %v2179
        %v2193 = vadd.f32 %v2125, %v2179
        %v2194 = vadd.f32 %v2126, %v2179
        %v2195 = vadd.f32 %v2127, %v2179
        %v2196 = vadd.f32 %v2128, %v2179
        %v2197 = vadd.f32 %v2129, %v2179
        %v2198 = vadd.f32 %v2130, %v2179
        %v2199 = vadd.f32 %v2131, %v2179
        %v2200 = vadd.f32 %v2132, %v2179
        %v2201 = vadd.f32 %v2133, %v2179
        %v2202 = vadd.f32 %v2134, %v2179
        %v2203 = vadd.f32 %v2135, %v2179
        %v2204 = vadd.f32 %v2136, %v2179
        %v2205 = vadd.f32 %v2137, %v2179
        %v2206 = vadd.f32 %v2138, %v2179
        %v2207 = vadd.f32 %v2139, %v2179
        %v2208 = vadd.f32 %v2140, %v2179
        %v2209 = vadd.f32 %v2141, %v2179
        %v2210 = vadd.f32 %v2142, %v2179
        %v2211 = vadd.f32 %v2143, %v2179
        %v2212 = vadd.f32 %v2144, %v2179
        %v2213 = vadd.f32 %v2145, %v2179
        %v2214 = vadd.f32 %v2146, %v2179
        %v2215 = vadd.f32 %v2147, %v2179
        %v2216 = vadd.f32 %v2148, %v2179
        %v2217 = vadd.f32 %v2149, %v2179
        %v2218 = vadd.f32 %v2150, %v2179
        %v2219 = vadd.f32 %v2151, %v2179
        %v2220 = vadd.f32 %v2152, %v2179
        %v2221 = vadd.f32 %v2153, %v2179
        %v2222 = vadd.f32 %v2154, %v2179
        %v2223 = vadd.f32 %v2155, %v2179
        %v2224 = vadd.f32 %v2156, %v2179
        %v2225 = vadd.f32 %v2157, %v2179
        %v2226 = vadd.f32 %v2158, %v2179
        %v2227 = vadd.f32 %v2159, %v2179
        %v2228 = vadd.f32 %v2160, %v2179
        %v2229 = vadd.f32 %v2161, %v2179
        %v2230 = vadd.f32 %v2162, %v2179
        %v2231 = vadd.f32 %v2163, %v2179
        %v2232 = vadd.f32 %v2164, %v2179
        %v2233 = vadd.f32 %v2165, %v2179
        %v2234 = vadd.f32 %v2166, %v2179
        %v2235 = vadd.f32 %v2167, %v2179
        %v2236 = vadd.f32 %v2168, %v2179
        %v2237 = vadd.f32 %v2169, %v2179
        %v2238 = vadd.f32 %v2170, %v2179
        %v2239 = vadd.f32 %v2171, %v2179
        %v2240 = vadd.f32 %v2172, %v2179
        %v2241 = vadd.f32 %v2173, %v2179
        %v2242 = vadd.f32 %v2174, %v2179
        %v2243 = vadd.f32 %v2175, %v2179
        %v2244 = vmax.f32 %v2180, 0.0
        %v2245 = vmax.f32 %v2181, 0.0
        %v2246 = vmax.f32 %v2182, 0.0
        %v2247 = vmax.f32 %v2183, 0.0
        %v2248 = vmax.f32 %v2184, 0.0
        %v2249 = vmax.f32 %v2185, 0.0
        %v2250 = vmax.f32 %v2186, 0.0
        %v2251 = vmax.f32 %v2187, 0.0
        %v2252 = vmax.f32 %v2188, 0.0
        %v2253 = vmax.f32 %v2189, 0.0
        %v2254 = vmax.f32 %v2190, 0.0
        %v2255 = vmax.f32 %v2191, 0.0
        %v2256 = vmax.f32 %v2192, 0.0
        %v2257 = vmax.f32 %v2193, 0.0
        %v2258 = vmax.f32 %v2194, 0.0
        %v2259 = vmax.f32 %v2195, 0.0
        %v2260 = vmax.f32 %v2196, 0.0
        %v2261 = vmax.f32 %v2197, 0.0
        %v2262 = vmax.f32 %v2198, 0.0
        %v2263 = vmax.f32 %v2199, 0.0
        %v2264 = vmax.f32 %v2200, 0.0
        %v2265 = vmax.f32 %v2201, 0.0
        %v2266 = vmax.f32 %v2202, 0.0
        %v2267 = vmax.f32 %v2203, 0.0
        %v2268 = vmax.f32 %v2204, 0.0
        %v2269 = vmax.f32 %v2205, 0.0
        %v2270 = vmax.f32 %v2206, 0.0
        %v2271 = vmax.f32 %v2207, 0.0
        %v2272 = vmax.f32 %v2208, 0.0
        %v2273 = vmax.f32 %v2209, 0.0
        %v2274 = vmax.f32 %v2210, 0.0
        %v2275 = vmax.f32 %v2211, 0.0
        %v2276 = vmax.f32 %v2212, 0.0
        %v2277 = vmax.f32 %v2213, 0.0
        %v2278 = vmax.f32 %v2214, 0.0
        %v2279 = vmax.f32 %v2215, 0.0
        %v2280 = vmax.f32 %v2216, 0.0
        %v2281 = vmax.f32 %v2217, 0.0
        %v2282 = vmax.f32 %v2218, 0.0
        %v2283 = vmax.f32 %v2219, 0.0
        %v2284 = vmax.f32 %v2220, 0.0
        %v2285 = vmax.f32 %v2221, 0.0
        %v2286 = vmax.f32 %v2222, 0.0
        %v2287 = vmax.f32 %v2223, 0.0
        %v2288 = vmax.f32 %v2224, 0.0
        %v2289 = vmax.f32 %v2225, 0.0
        %v2290 = vmax.f32 %v2226, 0.0
        %v2291 = vmax.f32 %v2227, 0.0
        %v2292 = vmax.f32 %v2228, 0.0
        %v2293 = vmax.f32 %v2229, 0.0
        %v2294 = vmax.f32 %v2230, 0.0
        %v2295 = vmax.f32 %v2231, 0.0
        %v2296 = vmax.f32 %v2232, 0.0
        %v2297 = vmax.f32 %v2233, 0.0
        %v2298 = vmax.f32 %v2234, 0.0
        %v2299 = vmax.f32 %v2235, 0.0
        %v2300 = vmax.f32 %v2236, 0.0
        %v2301 = vmax.f32 %v2237, 0.0
        %v2302 = vmax.f32 %v2238, 0.0
        %v2303 = vmax.f32 %v2239, 0.0
        %v2304 = vmax.f32 %v2240, 0.0
        %v2305 = vmax.f32 %v2241, 0.0
        %v2306 = vmax.f32 %v2242, 0.0
        %v2307 = vmax.f32 %v2243, 0.0
        %v2308 = vpack.c.bf16 %v2245, %v2244
        %v2309 = vpack.c.bf16 %v2247, %v2246
        %v2310 = vpack.c.bf16 %v2249, %v2248
        %v2311 = vpack.c.bf16 %v2251, %v2250
        %v2312 = vpack.c.bf16 %v2253, %v2252
        %v2313 = vpack.c.bf16 %v2255, %v2254
        %v2314 = vpack.c.bf16 %v2257, %v2256
        %v2315 = vpack.c.bf16 %v2259, %v2258
        %v2316 = vpack.c.bf16 %v2261, %v2260
        %v2317 = vpack.c.bf16 %v2263, %v2262
        %v2318 = vpack.c.bf16 %v2265, %v2264
        %v2319 = vpack.c.bf16 %v2267, %v2266
        %v2320 = vpack.c.bf16 %v2269, %v2268
        %v2321 = vpack.c.bf16 %v2271, %v2270
        %v2322 = vpack.c.bf16 %v2273, %v2272
        %v2323 = vpack.c.bf16 %v2275, %v2274
        %v2324 = vpack.c.bf16 %v2277, %v2276
        %v2325 = vpack.c.bf16 %v2279, %v2278
        %v2326 = vpack.c.bf16 %v2281, %v2280
        %v2327 = vpack.c.bf16 %v2283, %v2282
        %v2328 = vpack.c.bf16 %v2285, %v2284
        %v2329 = vpack.c.bf16 %v2287, %v2286
        %v2330 = vpack.c.bf16 %v2289, %v2288
        %v2331 = vpack.c.bf16 %v2291, %v2290
        %v2332 = vpack.c.bf16 %v2293, %v2292
        %v2333 = vpack.c.bf16 %v2295, %v2294
        %v2334 = vpack.c.bf16 %v2297, %v2296
        %v2335 = vpack.c.bf16 %v2299, %v2298
        %v2336 = vpack.c.bf16 %v2301, %v2300
        %v2337 = vpack.c.bf16 %v2303, %v2302
        %v2338 = vpack.c.bf16 %v2305, %v2304
        %v2339 = vpack.c.bf16 %v2307, %v2306
        %v2340 = vld [vmem:[%s3] sm:$0xf]
        %v2341 = vld [vmem:[%s3 + $0x4] sm:$0xf]
        %v2342 = vld [vmem:[%s3 + $0x8] sm:$0xf]
        %v2343 = vld [vmem:[%s3 + $0xc] sm:$0xf]
        %v2344 = vld [vmem:[%s3 + $0x10] sm:$0xf]
        %v2345 = vld [vmem:[%s3 + $0x14] sm:$0xf]
        %v2346 = vld [vmem:[%s3 + $0x18] sm:$0xf]
        %v2347 = vld [vmem:[%s3 + $0x1c] sm:$0xf]
        %v2348 = vld [vmem:[%s4] sm:$0x1]
        %v2349 = vlaneseq
        %v2350 = vshrl.u32 %v2349, 7
        %v2351 = vsub.s32 0, %v2350
        %v2352 = vrot.slane %v2348, %v2351
        %v2361 = vunpack.c.l.b16 %v2340
        %v2362 = vunpack.c.l.b16 %v2341
        %v2363 = vunpack.c.l.b16 %v2342
        %v2364 = vunpack.c.l.b16 %v2343
        %v2365 = vunpack.c.l.b16 %v2344
        %v2366 = vunpack.c.l.b16 %v2345
        %v2367 = vunpack.c.l.b16 %v2346
        %v2368 = vunpack.c.l.b16 %v2347
        %v2369 = vpack.c.b16 %v2362, %v2361
        %v2370 = vpack.c.b16 %v2364, %v2363
        %v2371 = vpack.c.b16 %v2366, %v2365
        %v2372 = vpack.c.b16 %v2368, %v2367
        %v2378 = vsel %vm1147, %v2308, 0
        %v2381 = vsel %vm1147, %v2309, 0
        %v2384 = vsel %vm1147, %v2310, 0
        %v2387 = vsel %vm1147, %v2311, 0
        %v2390 = vsel %vm1147, %v2312, 0
        %v2393 = vsel %vm1147, %v2313, 0
        %v2396 = vsel %vm1147, %v2314, 0
        %v2399 = vsel %vm1147, %v2315, 0
        %v2402 = vsel %vm1147, %v2316, 0
        %v2405 = vsel %vm1147, %v2317, 0
        %v2408 = vsel %vm1147, %v2318, 0
        %v2411 = vsel %vm1147, %v2319, 0
        %v2414 = vsel %vm1147, %v2320, 0
        %v2417 = vsel %vm1147, %v2321, 0
        %v2420 = vsel %vm1147, %v2322, 0
        %v2423 = vsel %vm1147, %v2323, 0
        %v2426 = vsel %vm1147, %v2324, 0
        %v2429 = vsel %vm1147, %v2325, 0
        %v2432 = vsel %vm1147, %v2326, 0
        %v2435 = vsel %vm1147, %v2327, 0
        %v2438 = vsel %vm1147, %v2328, 0
        %v2441 = vsel %vm1147, %v2329, 0
        %v2444 = vsel %vm1147, %v2330, 0
        %v2447 = vsel %vm1147, %v2331, 0
        %v2450 = vsel %vm1147, %v2332, 0
        %v2453 = vsel %vm1147, %v2333, 0
        %v2456 = vsel %vm1147, %v2334, 0
        %v2459 = vsel %vm1147, %v2335, 0
        %v2462 = vsel %vm1147, %v2336, 0
        %v2465 = vsel %vm1147, %v2337, 0
        %v2468 = vsel %vm1147, %v2338, 0
        %v2471 = vsel %vm1147, %v2339, 0
        %2473 = vmatprep.subr.bf16.mxu0 0
        %2474 = vmatpush1.bf16.msra.mxu0 0
        %2475 = vmatprep.subr.bf16.mxu0 0
        %2476 = vmatpush1.bf16.msra.mxu0 0
        %2477 = vmatprep.subr.bf16.mxu0 0
        %2478 = vmatpush1.bf16.msra.mxu0 0
        %2479 = vmatprep.subr.bf16.mxu0 0
        %2480 = vmatpush1.bf16.msra.mxu0 0
        %2481 = vmatprep.subr.bf16.mxu0 0
        %2482 = vmatpush1.bf16.msra.mxu0 %v2372
        %2483 = vmatprep.subr.bf16.mxu0 0
        %2484 = vmatpush1.bf16.msra.mxu0 %v2371
        %2485 = vmatprep.subr.bf16.mxu0 0
        %2486 = vmatpush1.bf16.msra.mxu0 %v2370
        %2487 = vmatprep.subr.bf16.mxu0 0
        %2488 = vmatpush1.bf16.msra.mxu0 %v2369
        %2489 = vmatprep.subr.bf16.mxu0 0
        %2490 = vmatpush2.bf16.msra.mxu0 0
        %2491 = vmatprep.subr.bf16.mxu0 0
        %2492 = vmatpush2.bf16.msra.mxu0 0
        %2493 = vmatprep.subr.bf16.mxu0 0
        %2494 = vmatpush2.bf16.msra.mxu0 0
        %2495 = vmatprep.subr.bf16.mxu0 0
        %2496 = vmatpush2.bf16.msra.mxu0 0
        %2497 = vmatprep.subr.bf16.mxu0 0
        %2498 = vmatpush2.bf16.msra.mxu0 0
        %2499 = vmatprep.subr.bf16.mxu0 0
        %2500 = vmatpush2.bf16.msra.mxu0 0
        %2501 = vmatprep.subr.bf16.mxu0 0
        %2502 = vmatpush2.bf16.msra.mxu0 0
        %2503 = vmatprep.subr.bf16.mxu0 0
        %2504 = vmatpush2.bf16.msra.mxu0 0
        %2505 = vmatprep.mubr.bf16.mxu0 0
        %2506 = vmatmul.mubr.bf16.gmra.mxu0 %v2378
        %v2507 = vpop.f32.mrf.mxu0
        %v2508 = vadd.f32 %v2352, %v2507
        %v2509 = vpop.f32.mrf.mxu0
        %v2510 = vpop.f32.mrf.mxu0
        %v2511 = vadd.f32 %v2352, %v2510
        %v2512 = vpop.f32.mrf.mxu0
        %2513 = vmatprep.mubr.bf16.mxu0 0
        %2514 = vmatmul.mubr.bf16.gmra.mxu0 %v2381
        %v2515 = vpop.f32.mrf.mxu0
        %v2516 = vadd.f32 %v2352, %v2515
        %v2517 = vpop.f32.mrf.mxu0
        %v2518 = vpop.f32.mrf.mxu0
        %v2519 = vadd.f32 %v2352, %v2518
        %v2520 = vpop.f32.mrf.mxu0
        %2521 = vmatprep.mubr.bf16.mxu0 0
        %2522 = vmatmul.mubr.bf16.gmra.mxu0 %v2384
        %v2523 = vpop.f32.mrf.mxu0
        %v2524 = vadd.f32 %v2352, %v2523
        %v2525 = vpop.f32.mrf.mxu0
        %v2526 = vpop.f32.mrf.mxu0
        %v2527 = vadd.f32 %v2352, %v2526
        %v2528 = vpop.f32.mrf.mxu0
        %2529 = vmatprep.mubr.bf16.mxu0 0
        %2530 = vmatmul.mubr.bf16.gmra.mxu0 %v2387
        %v2531 = vpop.f32.mrf.mxu0
        %v2532 = vadd.f32 %v2352, %v2531
        %v2533 = vpop.f32.mrf.mxu0
        %v2534 = vpop.f32.mrf.mxu0
        %v2535 = vadd.f32 %v2352, %v2534
        %v2536 = vpop.f32.mrf.mxu0
        %2537 = vmatprep.mubr.bf16.mxu0 0
        %2538 = vmatmul.mubr.bf16.gmra.mxu0 %v2390
        %v2539 = vpop.f32.mrf.mxu0
        %v2540 = vadd.f32 %v2352, %v2539
        %v2541 = vpop.f32.mrf.mxu0
        %v2542 = vpop.f32.mrf.mxu0
        %v2543 = vadd.f32 %v2352, %v2542
        %v2544 = vpop.f32.mrf.mxu0
        %2545 = vmatprep.mubr.bf16.mxu0 0
        %2546 = vmatmul.mubr.bf16.gmra.mxu0 %v2393
        %v2547 = vpop.f32.mrf.mxu0
        %v2548 = vadd.f32 %v2352, %v2547
        %v2549 = vpop.f32.mrf.mxu0
        %v2550 = vpop.f32.mrf.mxu0
        %v2551 = vadd.f32 %v2352, %v2550
        %v2552 = vpop.f32.mrf.mxu0
        %2553 = vmatprep.mubr.bf16.mxu0 0
        %2554 = vmatmul.mubr.bf16.gmra.mxu0 %v2396
        %v2555 = vpop.f32.mrf.mxu0
        %v2556 = vadd.f32 %v2352, %v2555
        %v2557 = vpop.f32.mrf.mxu0
        %v2558 = vpop.f32.mrf.mxu0
        %v2559 = vadd.f32 %v2352, %v2558
        %v2560 = vpop.f32.mrf.mxu0
        %2561 = vmatprep.mubr.bf16.mxu0 0
        %2562 = vmatmul.mubr.bf16.gmra.mxu0 %v2399
        %v2563 = vpop.f32.mrf.mxu0
        %v2564 = vadd.f32 %v2352, %v2563
        %v2565 = vpop.f32.mrf.mxu0
        %v2566 = vpop.f32.mrf.mxu0
        %v2567 = vadd.f32 %v2352, %v2566
        %v2568 = vpop.f32.mrf.mxu0
        %2569 = vmatprep.mubr.bf16.mxu0 0
        %2570 = vmatmul.mubr.bf16.gmra.mxu0 %v2402
        %v2571 = vpop.f32.mrf.mxu0
        %v2572 = vadd.f32 %v2352, %v2571
        %v2573 = vpop.f32.mrf.mxu0
        %v2574 = vpop.f32.mrf.mxu0
        %v2575 = vadd.f32 %v2352, %v2574
        %v2576 = vpop.f32.mrf.mxu0
        %2577 = vmatprep.mubr.bf16.mxu0 0
        %2578 = vmatmul.mubr.bf16.gmra.mxu0 %v2405
        %v2579 = vpop.f32.mrf.mxu0
        %v2580 = vadd.f32 %v2352, %v2579
        %v2581 = vpop.f32.mrf.mxu0
        %v2582 = vpop.f32.mrf.mxu0
        %v2583 = vadd.f32 %v2352, %v2582
        %v2584 = vpop.f32.mrf.mxu0
        %2585 = vmatprep.mubr.bf16.mxu0 0
        %2586 = vmatmul.mubr.bf16.gmra.mxu0 %v2408
        %v2587 = vpop.f32.mrf.mxu0
        %v2588 = vadd.f32 %v2352, %v2587
        %v2589 = vpop.f32.mrf.mxu0
        %v2590 = vpop.f32.mrf.mxu0
        %v2591 = vadd.f32 %v2352, %v2590
        %v2592 = vpop.f32.mrf.mxu0
        %2593 = vmatprep.mubr.bf16.mxu0 0
        %2594 = vmatmul.mubr.bf16.gmra.mxu0 %v2411
        %v2595 = vpop.f32.mrf.mxu0
        %v2596 = vadd.f32 %v2352, %v2595
        %v2597 = vpop.f32.mrf.mxu0
        %v2598 = vpop.f32.mrf.mxu0
        %v2599 = vadd.f32 %v2352, %v2598
        %v2600 = vpop.f32.mrf.mxu0
        %2601 = vmatprep.mubr.bf16.mxu0 0
        %2602 = vmatmul.mubr.bf16.gmra.mxu0 %v2414
        %v2603 = vpop.f32.mrf.mxu0
        %v2604 = vadd.f32 %v2352, %v2603
        %v2605 = vpop.f32.mrf.mxu0
        %v2606 = vpop.f32.mrf.mxu0
        %v2607 = vadd.f32 %v2352, %v2606
        %v2608 = vpop.f32.mrf.mxu0
        %2609 = vmatprep.mubr.bf16.mxu0 0
        %2610 = vmatmul.mubr.bf16.gmra.mxu0 %v2417
        %v2611 = vpop.f32.mrf.mxu0
        %v2612 = vadd.f32 %v2352, %v2611
        %v2613 = vpop.f32.mrf.mxu0
        %v2614 = vpop.f32.mrf.mxu0
        %v2615 = vadd.f32 %v2352, %v2614
        %v2616 = vpop.f32.mrf.mxu0
        %2617 = vmatprep.mubr.bf16.mxu0 0
        %2618 = vmatmul.mubr.bf16.gmra.mxu0 %v2420
        %v2619 = vpop.f32.mrf.mxu0
        %v2620 = vadd.f32 %v2352, %v2619
        %v2621 = vpop.f32.mrf.mxu0
        %v2622 = vpop.f32.mrf.mxu0
        %v2623 = vadd.f32 %v2352, %v2622
        %v2624 = vpop.f32.mrf.mxu0
        %2625 = vmatprep.mubr.bf16.mxu0 0
        %2626 = vmatmul.mubr.bf16.gmra.mxu0 %v2423
        %v2627 = vpop.f32.mrf.mxu0
        %v2628 = vadd.f32 %v2352, %v2627
        %v2629 = vpop.f32.mrf.mxu0
        %v2630 = vpop.f32.mrf.mxu0
        %v2631 = vadd.f32 %v2352, %v2630
        %v2632 = vpop.f32.mrf.mxu0
        %2633 = vmatprep.mubr.bf16.mxu0 0
        %2634 = vmatmul.mubr.bf16.gmra.mxu0 %v2426
        %v2635 = vpop.f32.mrf.mxu0
        %v2636 = vadd.f32 %v2352, %v2635
        %v2637 = vpop.f32.mrf.mxu0
        %v2638 = vpop.f32.mrf.mxu0
        %v2639 = vadd.f32 %v2352, %v2638
        %v2640 = vpop.f32.mrf.mxu0
        %2641 = vmatprep.mubr.bf16.mxu0 0
        %2642 = vmatmul.mubr.bf16.gmra.mxu0 %v2429
        %v2643 = vpop.f32.mrf.mxu0
        %v2644 = vadd.f32 %v2352, %v2643
        %v2645 = vpop.f32.mrf.mxu0
        %v2646 = vpop.f32.mrf.mxu0
        %v2647 = vadd.f32 %v2352, %v2646
        %v2648 = vpop.f32.mrf.mxu0
        %2649 = vmatprep.mubr.bf16.mxu0 0
        %2650 = vmatmul.mubr.bf16.gmra.mxu0 %v2432
        %v2651 = vpop.f32.mrf.mxu0
        %v2652 = vadd.f32 %v2352, %v2651
        %v2653 = vpop.f32.mrf.mxu0
        %v2654 = vpop.f32.mrf.mxu0
        %v2655 = vadd.f32 %v2352, %v2654
        %v2656 = vpop.f32.mrf.mxu0
        %2657 = vmatprep.mubr.bf16.mxu0 0
        %2658 = vmatmul.mubr.bf16.gmra.mxu0 %v2435
        %v2659 = vpop.f32.mrf.mxu0
        %v2660 = vadd.f32 %v2352, %v2659
        %v2661 = vpop.f32.mrf.mxu0
        %v2662 = vpop.f32.mrf.mxu0
        %v2663 = vadd.f32 %v2352, %v2662
        %v2664 = vpop.f32.mrf.mxu0
        %2665 = vmatprep.mubr.bf16.mxu0 0
        %2666 = vmatmul.mubr.bf16.gmra.mxu0 %v2438
        %v2667 = vpop.f32.mrf.mxu0
        %v2668 = vadd.f32 %v2352, %v2667
        %v2669 = vpop.f32.mrf.mxu0
        %v2670 = vpop.f32.mrf.mxu0
        %v2671 = vadd.f32 %v2352, %v2670
        %v2672 = vpop.f32.mrf.mxu0
        %2673 = vmatprep.mubr.bf16.mxu0 0
        %2674 = vmatmul.mubr.bf16.gmra.mxu0 %v2441
        %v2675 = vpop.f32.mrf.mxu0
        %v2676 = vadd.f32 %v2352, %v2675
        %v2677 = vpop.f32.mrf.mxu0
        %v2678 = vpop.f32.mrf.mxu0
        %v2679 = vadd.f32 %v2352, %v2678
        %v2680 = vpop.f32.mrf.mxu0
        %2681 = vmatprep.mubr.bf16.mxu0 0
        %2682 = vmatmul.mubr.bf16.gmra.mxu0 %v2444
        %v2683 = vpop.f32.mrf.mxu0
        %v2684 = vadd.f32 %v2352, %v2683
        %v2685 = vpop.f32.mrf.mxu0
        %v2686 = vpop.f32.mrf.mxu0
        %v2687 = vadd.f32 %v2352, %v2686
        %v2688 = vpop.f32.mrf.mxu0
        %2689 = vmatprep.mubr.bf16.mxu0 0
        %2690 = vmatmul.mubr.bf16.gmra.mxu0 %v2447
        %v2691 = vpop.f32.mrf.mxu0
        %v2692 = vadd.f32 %v2352, %v2691
        %v2693 = vpop.f32.mrf.mxu0
        %v2694 = vpop.f32.mrf.mxu0
        %v2695 = vadd.f32 %v2352, %v2694
        %v2696 = vpop.f32.mrf.mxu0
        %2697 = vmatprep.mubr.bf16.mxu0 0
        %2698 = vmatmul.mubr.bf16.gmra.mxu0 %v2450
        %v2699 = vpop.f32.mrf.mxu0
        %v2700 = vadd.f32 %v2352, %v2699
        %v2701 = vpop.f32.mrf.mxu0
        %v2702 = vpop.f32.mrf.mxu0
        %v2703 = vadd.f32 %v2352, %v2702
        %v2704 = vpop.f32.mrf.mxu0
        %2705 = vmatprep.mubr.bf16.mxu0 0
        %2706 = vmatmul.mubr.bf16.gmra.mxu0 %v2453
        %v2707 = vpop.f32.mrf.mxu0
        %v2708 = vadd.f32 %v2352, %v2707
        %v2709 = vpop.f32.mrf.mxu0
        %v2710 = vpop.f32.mrf.mxu0
        %v2711 = vadd.f32 %v2352, %v2710
        %v2712 = vpop.f32.mrf.mxu0
        %2713 = vmatprep.mubr.bf16.mxu0 0
        %2714 = vmatmul.mubr.bf16.gmra.mxu0 %v2456
        %v2715 = vpop.f32.mrf.mxu0
        %v2716 = vadd.f32 %v2352, %v2715
        %v2717 = vpop.f32.mrf.mxu0
        %v2718 = vpop.f32.mrf.mxu0
        %v2719 = vadd.f32 %v2352, %v2718
        %v2720 = vpop.f32.mrf.mxu0
        %2721 = vmatprep.mubr.bf16.mxu0 0
        %2722 = vmatmul.mubr.bf16.gmra.mxu0 %v2459
        %v2723 = vpop.f32.mrf.mxu0
        %v2724 = vadd.f32 %v2352, %v2723
        %v2725 = vpop.f32.mrf.mxu0
        %v2726 = vpop.f32.mrf.mxu0
        %v2727 = vadd.f32 %v2352, %v2726
        %v2728 = vpop.f32.mrf.mxu0
        %2729 = vmatprep.mubr.bf16.mxu0 0
        %2730 = vmatmul.mubr.bf16.gmra.mxu0 %v2462
        %v2731 = vpop.f32.mrf.mxu0
        %v2732 = vadd.f32 %v2352, %v2731
        %v2733 = vpop.f32.mrf.mxu0
        %v2734 = vpop.f32.mrf.mxu0
        %v2735 = vadd.f32 %v2352, %v2734
        %v2736 = vpop.f32.mrf.mxu0
        %2737 = vmatprep.mubr.bf16.mxu0 0
        %2738 = vmatmul.mubr.bf16.gmra.mxu0 %v2465
        %v2739 = vpop.f32.mrf.mxu0
        %v2740 = vadd.f32 %v2352, %v2739
        %v2741 = vpop.f32.mrf.mxu0
        %v2742 = vpop.f32.mrf.mxu0
        %v2743 = vadd.f32 %v2352, %v2742
        %v2744 = vpop.f32.mrf.mxu0
        %2745 = vmatprep.mubr.bf16.mxu0 0
        %2746 = vmatmul.mubr.bf16.gmra.mxu0 %v2468
        %v2747 = vpop.f32.mrf.mxu0
        %v2748 = vadd.f32 %v2352, %v2747
        %v2749 = vpop.f32.mrf.mxu0
        %v2750 = vpop.f32.mrf.mxu0
        %v2751 = vadd.f32 %v2352, %v2750
        %v2752 = vpop.f32.mrf.mxu0
        %2753 = vmatprep.mubr.bf16.mxu0 0
        %2754 = vmatmul.mubr.bf16.gmra.mxu0 %v2471
        %v2755 = vpop.f32.mrf.mxu0
        %v2756 = vadd.f32 %v2352, %v2755
        %v2757 = vpop.f32.mrf.mxu0
        %v2758 = vpop.f32.mrf.mxu0
        %v2759 = vadd.f32 %v2352, %v2758
        %v2760 = vpop.f32.mrf.mxu0
        %2761 = vdwg.mxu0
        %v2762 = vld [vmem:[%s4 + $0x1] sm:$0x1]
        %v2763 = vld [vmem:[%s4 + $0x2] sm:$0x1]
        %2764 = vadd.xlane.f32.xlu0 %v2508
        %v2765 = vpop.xlane.xlu0 %2764
        %2766 = vadd.xlane.f32.xlu0 %v2511
        %v2767 = vpop.xlane.xlu0 %2766
        %2768 = vadd.xlane.f32.xlu0 %v2516
        %v2769 = vpop.xlane.xlu0 %2768
        %2770 = vadd.xlane.f32.xlu0 %v2519
        %v2771 = vpop.xlane.xlu0 %2770
        %2772 = vadd.xlane.f32.xlu0 %v2524
        %v2773 = vpop.xlane.xlu0 %2772
        %2774 = vadd.xlane.f32.xlu0 %v2527
        %v2775 = vpop.xlane.xlu0 %2774
        %2776 = vadd.xlane.f32.xlu0 %v2532
        %v2777 = vpop.xlane.xlu0 %2776
        %2778 = vadd.xlane.f32.xlu0 %v2535
        %v2779 = vpop.xlane.xlu0 %2778
        %2780 = vadd.xlane.f32.xlu0 %v2540
        %v2781 = vpop.xlane.xlu0 %2780
        %2782 = vadd.xlane.f32.xlu0 %v2543
        %v2783 = vpop.xlane.xlu0 %2782
        %2784 = vadd.xlane.f32.xlu0 %v2548
        %v2785 = vpop.xlane.xlu0 %2784
        %2786 = vadd.xlane.f32.xlu0 %v2551
        %v2787 = vpop.xlane.xlu0 %2786
        %2788 = vadd.xlane.f32.xlu0 %v2556
        %v2789 = vpop.xlane.xlu0 %2788
        %2790 = vadd.xlane.f32.xlu0 %v2559
        %v2791 = vpop.xlane.xlu0 %2790
        %2792 = vadd.xlane.f32.xlu0 %v2564
        %v2793 = vpop.xlane.xlu0 %2792
        %2794 = vadd.xlane.f32.xlu0 %v2567
        %v2795 = vpop.xlane.xlu0 %2794
        %2796 = vadd.xlane.f32.xlu0 %v2572
        %v2797 = vpop.xlane.xlu0 %2796
        %2798 = vadd.xlane.f32.xlu0 %v2575
        %v2799 = vpop.xlane.xlu0 %2798
        %2800 = vadd.xlane.f32.xlu0 %v2580
        %v2801 = vpop.xlane.xlu0 %2800
        %2802 = vadd.xlane.f32.xlu0 %v2583
        %v2803 = vpop.xlane.xlu0 %2802
        %2804 = vadd.xlane.f32.xlu0 %v2588
        %v2805 = vpop.xlane.xlu0 %2804
        %2806 = vadd.xlane.f32.xlu0 %v2591
        %v2807 = vpop.xlane.xlu0 %2806
        %2808 = vadd.xlane.f32.xlu0 %v2596
        %v2809 = vpop.xlane.xlu0 %2808
        %2810 = vadd.xlane.f32.xlu0 %v2599
        %v2811 = vpop.xlane.xlu0 %2810
        %2812 = vadd.xlane.f32.xlu0 %v2604
        %v2813 = vpop.xlane.xlu0 %2812
        %2814 = vadd.xlane.f32.xlu0 %v2607
        %v2815 = vpop.xlane.xlu0 %2814
        %2816 = vadd.xlane.f32.xlu0 %v2612
        %v2817 = vpop.xlane.xlu0 %2816
        %2818 = vadd.xlane.f32.xlu0 %v2615
        %v2819 = vpop.xlane.xlu0 %2818
        %2820 = vadd.xlane.f32.xlu0 %v2620
        %v2821 = vpop.xlane.xlu0 %2820
        %2822 = vadd.xlane.f32.xlu0 %v2623
        %v2823 = vpop.xlane.xlu0 %2822
        %2824 = vadd.xlane.f32.xlu0 %v2628
        %v2825 = vpop.xlane.xlu0 %2824
        %2826 = vadd.xlane.f32.xlu0 %v2631
        %v2827 = vpop.xlane.xlu0 %2826
        %2828 = vadd.xlane.f32.xlu0 %v2636
        %v2829 = vpop.xlane.xlu0 %2828
        %2830 = vadd.xlane.f32.xlu0 %v2639
        %v2831 = vpop.xlane.xlu0 %2830
        %2832 = vadd.xlane.f32.xlu0 %v2644
        %v2833 = vpop.xlane.xlu0 %2832
        %2834 = vadd.xlane.f32.xlu0 %v2647
        %v2835 = vpop.xlane.xlu0 %2834
        %2836 = vadd.xlane.f32.xlu0 %v2652
        %v2837 = vpop.xlane.xlu0 %2836
        %2838 = vadd.xlane.f32.xlu0 %v2655
        %v2839 = vpop.xlane.xlu0 %2838
        %2840 = vadd.xlane.f32.xlu0 %v2660
        %v2841 = vpop.xlane.xlu0 %2840
        %2842 = vadd.xlane.f32.xlu0 %v2663
        %v2843 = vpop.xlane.xlu0 %2842
        %2844 = vadd.xlane.f32.xlu0 %v2668
        %v2845 = vpop.xlane.xlu0 %2844
        %2846 = vadd.xlane.f32.xlu0 %v2671
        %v2847 = vpop.xlane.xlu0 %2846
        %2848 = vadd.xlane.f32.xlu0 %v2676
        %v2849 = vpop.xlane.xlu0 %2848
        %2850 = vadd.xlane.f32.xlu0 %v2679
        %v2851 = vpop.xlane.xlu0 %2850
        %2852 = vadd.xlane.f32.xlu0 %v2684
        %v2853 = vpop.xlane.xlu0 %2852
        %2854 = vadd.xlane.f32.xlu0 %v2687
        %v2855 = vpop.xlane.xlu0 %2854
        %2856 = vadd.xlane.f32.xlu0 %v2692
        %v2857 = vpop.xlane.xlu0 %2856
        %2858 = vadd.xlane.f32.xlu0 %v2695
        %v2859 = vpop.xlane.xlu0 %2858
        %2860 = vadd.xlane.f32.xlu0 %v2700
        %v2861 = vpop.xlane.xlu0 %2860
        %2862 = vadd.xlane.f32.xlu0 %v2703
        %v2863 = vpop.xlane.xlu0 %2862
        %2864 = vadd.xlane.f32.xlu0 %v2708
        %v2865 = vpop.xlane.xlu0 %2864
        %2866 = vadd.xlane.f32.xlu0 %v2711
        %v2867 = vpop.xlane.xlu0 %2866
        %2868 = vadd.xlane.f32.xlu0 %v2716
        %v2869 = vpop.xlane.xlu0 %2868
        %2870 = vadd.xlane.f32.xlu0 %v2719
        %v2871 = vpop.xlane.xlu0 %2870
        %2872 = vadd.xlane.f32.xlu0 %v2724
        %v2873 = vpop.xlane.xlu0 %2872
        %2874 = vadd.xlane.f32.xlu0 %v2727
        %v2875 = vpop.xlane.xlu0 %2874
        %2876 = vadd.xlane.f32.xlu0 %v2732
        %v2877 = vpop.xlane.xlu0 %2876
        %2878 = vadd.xlane.f32.xlu0 %v2735
        %v2879 = vpop.xlane.xlu0 %2878
        %2880 = vadd.xlane.f32.xlu0 %v2740
        %v2881 = vpop.xlane.xlu0 %2880
        %2882 = vadd.xlane.f32.xlu0 %v2743
        %v2883 = vpop.xlane.xlu0 %2882
        %2884 = vadd.xlane.f32.xlu0 %v2748
        %v2885 = vpop.xlane.xlu0 %2884
        %2886 = vadd.xlane.f32.xlu0 %v2751
        %v2887 = vpop.xlane.xlu0 %2886
        %2888 = vadd.xlane.f32.xlu0 %v2756
        %v2889 = vpop.xlane.xlu0 %2888
        %2890 = vadd.xlane.f32.xlu0 %v2759
        %v2891 = vpop.xlane.xlu0 %2890
        %v2892 = vmul.f32 %v2765, 0.0078125
        %v2893 = vmul.f32 %v2767, 0.0078125
        %v2894 = vmul.f32 %v2769, 0.0078125
        %v2895 = vmul.f32 %v2771, 0.0078125
        %v2896 = vmul.f32 %v2773, 0.0078125
        %v2897 = vmul.f32 %v2775, 0.0078125
        %v2898 = vmul.f32 %v2777, 0.0078125
        %v2899 = vmul.f32 %v2779, 0.0078125
        %v2900 = vmul.f32 %v2781, 0.0078125
        %v2901 = vmul.f32 %v2783, 0.0078125
        %v2902 = vmul.f32 %v2785, 0.0078125
        %v2903 = vmul.f32 %v2787, 0.0078125
        %v2904 = vmul.f32 %v2789, 0.0078125
        %v2905 = vmul.f32 %v2791, 0.0078125
        %v2906 = vmul.f32 %v2793, 0.0078125
        %v2907 = vmul.f32 %v2795, 0.0078125
        %v2908 = vmul.f32 %v2797, 0.0078125
        %v2909 = vmul.f32 %v2799, 0.0078125
        %v2910 = vmul.f32 %v2801, 0.0078125
        %v2911 = vmul.f32 %v2803, 0.0078125
        %v2912 = vmul.f32 %v2805, 0.0078125
        %v2913 = vmul.f32 %v2807, 0.0078125
        %v2914 = vmul.f32 %v2809, 0.0078125
        %v2915 = vmul.f32 %v2811, 0.0078125
        %v2916 = vmul.f32 %v2813, 0.0078125
        %v2917 = vmul.f32 %v2815, 0.0078125
        %v2918 = vmul.f32 %v2817, 0.0078125
        %v2919 = vmul.f32 %v2819, 0.0078125
        %v2920 = vmul.f32 %v2821, 0.0078125
        %v2921 = vmul.f32 %v2823, 0.0078125
        %v2922 = vmul.f32 %v2825, 0.0078125
        %v2923 = vmul.f32 %v2827, 0.0078125
        %v2924 = vmul.f32 %v2829, 0.0078125
        %v2925 = vmul.f32 %v2831, 0.0078125
        %v2926 = vmul.f32 %v2833, 0.0078125
        %v2927 = vmul.f32 %v2835, 0.0078125
        %v2928 = vmul.f32 %v2837, 0.0078125
        %v2929 = vmul.f32 %v2839, 0.0078125
        %v2930 = vmul.f32 %v2841, 0.0078125
        %v2931 = vmul.f32 %v2843, 0.0078125
        %v2932 = vmul.f32 %v2845, 0.0078125
        %v2933 = vmul.f32 %v2847, 0.0078125
        %v2934 = vmul.f32 %v2849, 0.0078125
        %v2935 = vmul.f32 %v2851, 0.0078125
        %v2936 = vmul.f32 %v2853, 0.0078125
        %v2937 = vmul.f32 %v2855, 0.0078125
        %v2938 = vmul.f32 %v2857, 0.0078125
        %v2939 = vmul.f32 %v2859, 0.0078125
        %v2940 = vmul.f32 %v2861, 0.0078125
        %v2941 = vmul.f32 %v2863, 0.0078125
        %v2942 = vmul.f32 %v2865, 0.0078125
        %v2943 = vmul.f32 %v2867, 0.0078125
        %v2944 = vmul.f32 %v2869, 0.0078125
        %v2945 = vmul.f32 %v2871, 0.0078125
        %v2946 = vmul.f32 %v2873, 0.0078125
        %v2947 = vmul.f32 %v2875, 0.0078125
        %v2948 = vmul.f32 %v2877, 0.0078125
        %v2949 = vmul.f32 %v2879, 0.0078125
        %v2950 = vmul.f32 %v2881, 0.0078125
        %v2951 = vmul.f32 %v2883, 0.0078125
        %v2952 = vmul.f32 %v2885, 0.0078125
        %v2953 = vmul.f32 %v2887, 0.0078125
        %v2954 = vmul.f32 %v2889, 0.0078125
        %v2955 = vmul.f32 %v2891, 0.0078125
        %v2956 = vmul.f32 %v2508, %v2508
        %v2957 = vmul.f32 %v2511, %v2511
        %v2958 = vmul.f32 %v2516, %v2516
        %v2959 = vmul.f32 %v2519, %v2519
        %v2960 = vmul.f32 %v2524, %v2524
        %v2961 = vmul.f32 %v2527, %v2527
        %v2962 = vmul.f32 %v2532, %v2532
        %v2963 = vmul.f32 %v2535, %v2535
        %v2964 = vmul.f32 %v2540, %v2540
        %v2965 = vmul.f32 %v2543, %v2543
        %v2966 = vmul.f32 %v2548, %v2548
        %v2967 = vmul.f32 %v2551, %v2551
        %v2968 = vmul.f32 %v2556, %v2556
        %v2969 = vmul.f32 %v2559, %v2559
        %v2970 = vmul.f32 %v2564, %v2564
        %v2971 = vmul.f32 %v2567, %v2567
        %v2972 = vmul.f32 %v2572, %v2572
        %v2973 = vmul.f32 %v2575, %v2575
        %v2974 = vmul.f32 %v2580, %v2580
        %v2975 = vmul.f32 %v2583, %v2583
        %v2976 = vmul.f32 %v2588, %v2588
        %v2977 = vmul.f32 %v2591, %v2591
        %v2978 = vmul.f32 %v2596, %v2596
        %v2979 = vmul.f32 %v2599, %v2599
        %v2980 = vmul.f32 %v2604, %v2604
        %v2981 = vmul.f32 %v2607, %v2607
        %v2982 = vmul.f32 %v2612, %v2612
        %v2983 = vmul.f32 %v2615, %v2615
        %v2984 = vmul.f32 %v2620, %v2620
        %v2985 = vmul.f32 %v2623, %v2623
        %v2986 = vmul.f32 %v2628, %v2628
        %v2987 = vmul.f32 %v2631, %v2631
        %v2988 = vmul.f32 %v2636, %v2636
        %v2989 = vmul.f32 %v2639, %v2639
        %v2990 = vmul.f32 %v2644, %v2644
        %v2991 = vmul.f32 %v2647, %v2647
        %v2992 = vmul.f32 %v2652, %v2652
        %v2993 = vmul.f32 %v2655, %v2655
        %v2994 = vmul.f32 %v2660, %v2660
        %v2995 = vmul.f32 %v2663, %v2663
        %v2996 = vmul.f32 %v2668, %v2668
        %v2997 = vmul.f32 %v2671, %v2671
        %v2998 = vmul.f32 %v2676, %v2676
        %v2999 = vmul.f32 %v2679, %v2679
        %v3000 = vmul.f32 %v2684, %v2684
        %v3001 = vmul.f32 %v2687, %v2687
        %v3002 = vmul.f32 %v2692, %v2692
        %v3003 = vmul.f32 %v2695, %v2695
        %v3004 = vmul.f32 %v2700, %v2700
        %v3005 = vmul.f32 %v2703, %v2703
        %v3006 = vmul.f32 %v2708, %v2708
        %v3007 = vmul.f32 %v2711, %v2711
        %v3008 = vmul.f32 %v2716, %v2716
        %v3009 = vmul.f32 %v2719, %v2719
        %v3010 = vmul.f32 %v2724, %v2724
        %v3011 = vmul.f32 %v2727, %v2727
        %v3012 = vmul.f32 %v2732, %v2732
        %v3013 = vmul.f32 %v2735, %v2735
        %v3014 = vmul.f32 %v2740, %v2740
        %v3015 = vmul.f32 %v2743, %v2743
        %v3016 = vmul.f32 %v2748, %v2748
        %v3017 = vmul.f32 %v2751, %v2751
        %v3018 = vmul.f32 %v2756, %v2756
        %v3019 = vmul.f32 %v2759, %v2759
        %3020 = vadd.xlane.f32.xlu0 %v2956
        %v3021 = vpop.xlane.xlu0 %3020
        %3022 = vadd.xlane.f32.xlu0 %v2957
        %v3023 = vpop.xlane.xlu0 %3022
        %3024 = vadd.xlane.f32.xlu0 %v2958
        %v3025 = vpop.xlane.xlu0 %3024
        %3026 = vadd.xlane.f32.xlu0 %v2959
        %v3027 = vpop.xlane.xlu0 %3026
        %3028 = vadd.xlane.f32.xlu0 %v2960
        %v3029 = vpop.xlane.xlu0 %3028
        %3030 = vadd.xlane.f32.xlu0 %v2961
        %v3031 = vpop.xlane.xlu0 %3030
        %3032 = vadd.xlane.f32.xlu0 %v2962
        %v3033 = vpop.xlane.xlu0 %3032
        %3034 = vadd.xlane.f32.xlu0 %v2963
        %v3035 = vpop.xlane.xlu0 %3034
        %3036 = vadd.xlane.f32.xlu0 %v2964
        %v3037 = vpop.xlane.xlu0 %3036
        %3038 = vadd.xlane.f32.xlu0 %v2965
        %v3039 = vpop.xlane.xlu0 %3038
        %3040 = vadd.xlane.f32.xlu0 %v2966
        %v3041 = vpop.xlane.xlu0 %3040
        %3042 = vadd.xlane.f32.xlu0 %v2967
        %v3043 = vpop.xlane.xlu0 %3042
        %3044 = vadd.xlane.f32.xlu0 %v2968
        %v3045 = vpop.xlane.xlu0 %3044
        %3046 = vadd.xlane.f32.xlu0 %v2969
        %v3047 = vpop.xlane.xlu0 %3046
        %3048 = vadd.xlane.f32.xlu0 %v2970
        %v3049 = vpop.xlane.xlu0 %3048
        %3050 = vadd.xlane.f32.xlu0 %v2971
        %v3051 = vpop.xlane.xlu0 %3050
        %3052 = vadd.xlane.f32.xlu0 %v2972
        %v3053 = vpop.xlane.xlu0 %3052
        %3054 = vadd.xlane.f32.xlu0 %v2973
        %v3055 = vpop.xlane.xlu0 %3054
        %3056 = vadd.xlane.f32.xlu0 %v2974
        %v3057 = vpop.xlane.xlu0 %3056
        %3058 = vadd.xlane.f32.xlu0 %v2975
        %v3059 = vpop.xlane.xlu0 %3058
        %3060 = vadd.xlane.f32.xlu0 %v2976
        %v3061 = vpop.xlane.xlu0 %3060
        %3062 = vadd.xlane.f32.xlu0 %v2977
        %v3063 = vpop.xlane.xlu0 %3062
        %3064 = vadd.xlane.f32.xlu0 %v2978
        %v3065 = vpop.xlane.xlu0 %3064
        %3066 = vadd.xlane.f32.xlu0 %v2979
        %v3067 = vpop.xlane.xlu0 %3066
        %3068 = vadd.xlane.f32.xlu0 %v2980
        %v3069 = vpop.xlane.xlu0 %3068
        %3070 = vadd.xlane.f32.xlu0 %v2981
        %v3071 = vpop.xlane.xlu0 %3070
        %3072 = vadd.xlane.f32.xlu0 %v2982
        %v3073 = vpop.xlane.xlu0 %3072
        %3074 = vadd.xlane.f32.xlu0 %v2983
        %v3075 = vpop.xlane.xlu0 %3074
        %3076 = vadd.xlane.f32.xlu0 %v2984
        %v3077 = vpop.xlane.xlu0 %3076
        %3078 = vadd.xlane.f32.xlu0 %v2985
        %v3079 = vpop.xlane.xlu0 %3078
        %3080 = vadd.xlane.f32.xlu0 %v2986
        %v3081 = vpop.xlane.xlu0 %3080
        %3082 = vadd.xlane.f32.xlu0 %v2987
        %v3083 = vpop.xlane.xlu0 %3082
        %3084 = vadd.xlane.f32.xlu0 %v2988
        %v3085 = vpop.xlane.xlu0 %3084
        %3086 = vadd.xlane.f32.xlu0 %v2989
        %v3087 = vpop.xlane.xlu0 %3086
        %3088 = vadd.xlane.f32.xlu0 %v2990
        %v3089 = vpop.xlane.xlu0 %3088
        %3090 = vadd.xlane.f32.xlu0 %v2991
        %v3091 = vpop.xlane.xlu0 %3090
        %3092 = vadd.xlane.f32.xlu0 %v2992
        %v3093 = vpop.xlane.xlu0 %3092
        %3094 = vadd.xlane.f32.xlu0 %v2993
        %v3095 = vpop.xlane.xlu0 %3094
        %3096 = vadd.xlane.f32.xlu0 %v2994
        %v3097 = vpop.xlane.xlu0 %3096
        %3098 = vadd.xlane.f32.xlu0 %v2995
        %v3099 = vpop.xlane.xlu0 %3098
        %3100 = vadd.xlane.f32.xlu0 %v2996
        %v3101 = vpop.xlane.xlu0 %3100
        %3102 = vadd.xlane.f32.xlu0 %v2997
        %v3103 = vpop.xlane.xlu0 %3102
        %3104 = vadd.xlane.f32.xlu0 %v2998
        %v3105 = vpop.xlane.xlu0 %3104
        %3106 = vadd.xlane.f32.xlu0 %v2999
        %v3107 = vpop.xlane.xlu0 %3106
        %3108 = vadd.xlane.f32.xlu0 %v3000
        %v3109 = vpop.xlane.xlu0 %3108
        %3110 = vadd.xlane.f32.xlu0 %v3001
        %v3111 = vpop.xlane.xlu0 %3110
        %3112 = vadd.xlane.f32.xlu0 %v3002
        %v3113 = vpop.xlane.xlu0 %3112
        %3114 = vadd.xlane.f32.xlu0 %v3003
        %v3115 = vpop.xlane.xlu0 %3114
        %3116 = vadd.xlane.f32.xlu0 %v3004
        %v3117 = vpop.xlane.xlu0 %3116
        %3118 = vadd.xlane.f32.xlu0 %v3005
        %v3119 = vpop.xlane.xlu0 %3118
        %3120 = vadd.xlane.f32.xlu0 %v3006
        %v3121 = vpop.xlane.xlu0 %3120
        %3122 = vadd.xlane.f32.xlu0 %v3007
        %v3123 = vpop.xlane.xlu0 %3122
        %3124 = vadd.xlane.f32.xlu0 %v3008
        %v3125 = vpop.xlane.xlu0 %3124
        %3126 = vadd.xlane.f32.xlu0 %v3009
        %v3127 = vpop.xlane.xlu0 %3126
        %3128 = vadd.xlane.f32.xlu0 %v3010
        %v3129 = vpop.xlane.xlu0 %3128
        %3130 = vadd.xlane.f32.xlu0 %v3011
        %v3131 = vpop.xlane.xlu0 %3130
        %3132 = vadd.xlane.f32.xlu0 %v3012
        %v3133 = vpop.xlane.xlu0 %3132
        %3134 = vadd.xlane.f32.xlu0 %v3013
        %v3135 = vpop.xlane.xlu0 %3134
        %3136 = vadd.xlane.f32.xlu0 %v3014
        %v3137 = vpop.xlane.xlu0 %3136
        %3138 = vadd.xlane.f32.xlu0 %v3015
        %v3139 = vpop.xlane.xlu0 %3138
        %3140 = vadd.xlane.f32.xlu0 %v3016
        %v3141 = vpop.xlane.xlu0 %3140
        %3142 = vadd.xlane.f32.xlu0 %v3017
        %v3143 = vpop.xlane.xlu0 %3142
        %3144 = vadd.xlane.f32.xlu0 %v3018
        %v3145 = vpop.xlane.xlu0 %3144
        %3146 = vadd.xlane.f32.xlu0 %v3019
        %v3147 = vpop.xlane.xlu0 %3146
        %v3148 = vmul.f32 %v3021, 0.0078125
        %v3149 = vmul.f32 %v3023, 0.0078125
        %v3150 = vmul.f32 %v3025, 0.0078125
        %v3151 = vmul.f32 %v3027, 0.0078125
        %v3152 = vmul.f32 %v3029, 0.0078125
        %v3153 = vmul.f32 %v3031, 0.0078125
        %v3154 = vmul.f32 %v3033, 0.0078125
        %v3155 = vmul.f32 %v3035, 0.0078125
        %v3156 = vmul.f32 %v3037, 0.0078125
        %v3157 = vmul.f32 %v3039, 0.0078125
        %v3158 = vmul.f32 %v3041, 0.0078125
        %v3159 = vmul.f32 %v3043, 0.0078125
        %v3160 = vmul.f32 %v3045, 0.0078125
        %v3161 = vmul.f32 %v3047, 0.0078125
        %v3162 = vmul.f32 %v3049, 0.0078125
        %v3163 = vmul.f32 %v3051, 0.0078125
        %v3164 = vmul.f32 %v3053, 0.0078125
        %v3165 = vmul.f32 %v3055, 0.0078125
        %v3166 = vmul.f32 %v3057, 0.0078125
        %v3167 = vmul.f32 %v3059, 0.0078125
        %v3168 = vmul.f32 %v3061, 0.0078125
        %v3169 = vmul.f32 %v3063, 0.0078125
        %v3170 = vmul.f32 %v3065, 0.0078125
        %v3171 = vmul.f32 %v3067, 0.0078125
        %v3172 = vmul.f32 %v3069, 0.0078125
        %v3173 = vmul.f32 %v3071, 0.0078125
        %v3174 = vmul.f32 %v3073, 0.0078125
        %v3175 = vmul.f32 %v3075, 0.0078125
        %v3176 = vmul.f32 %v3077, 0.0078125
        %v3177 = vmul.f32 %v3079, 0.0078125
        %v3178 = vmul.f32 %v3081, 0.0078125
        %v3179 = vmul.f32 %v3083, 0.0078125
        %v3180 = vmul.f32 %v3085, 0.0078125
        %v3181 = vmul.f32 %v3087, 0.0078125
        %v3182 = vmul.f32 %v3089, 0.0078125
        %v3183 = vmul.f32 %v3091, 0.0078125
        %v3184 = vmul.f32 %v3093, 0.0078125
        %v3185 = vmul.f32 %v3095, 0.0078125
        %v3186 = vmul.f32 %v3097, 0.0078125
        %v3187 = vmul.f32 %v3099, 0.0078125
        %v3188 = vmul.f32 %v3101, 0.0078125
        %v3189 = vmul.f32 %v3103, 0.0078125
        %v3190 = vmul.f32 %v3105, 0.0078125
        %v3191 = vmul.f32 %v3107, 0.0078125
        %v3192 = vmul.f32 %v3109, 0.0078125
        %v3193 = vmul.f32 %v3111, 0.0078125
        %v3194 = vmul.f32 %v3113, 0.0078125
        %v3195 = vmul.f32 %v3115, 0.0078125
        %v3196 = vmul.f32 %v3117, 0.0078125
        %v3197 = vmul.f32 %v3119, 0.0078125
        %v3198 = vmul.f32 %v3121, 0.0078125
        %v3199 = vmul.f32 %v3123, 0.0078125
        %v3200 = vmul.f32 %v3125, 0.0078125
        %v3201 = vmul.f32 %v3127, 0.0078125
        %v3202 = vmul.f32 %v3129, 0.0078125
        %v3203 = vmul.f32 %v3131, 0.0078125
        %v3204 = vmul.f32 %v3133, 0.0078125
        %v3205 = vmul.f32 %v3135, 0.0078125
        %v3206 = vmul.f32 %v3137, 0.0078125
        %v3207 = vmul.f32 %v3139, 0.0078125
        %v3208 = vmul.f32 %v3141, 0.0078125
        %v3209 = vmul.f32 %v3143, 0.0078125
        %v3210 = vmul.f32 %v3145, 0.0078125
        %v3211 = vmul.f32 %v3147, 0.0078125
        %v3212 = vmul.f32 %v2892, %v2892
        %v3213 = vmul.f32 %v2893, %v2893
        %v3214 = vmul.f32 %v2894, %v2894
        %v3215 = vmul.f32 %v2895, %v2895
        %v3216 = vmul.f32 %v2896, %v2896
        %v3217 = vmul.f32 %v2897, %v2897
        %v3218 = vmul.f32 %v2898, %v2898
        %v3219 = vmul.f32 %v2899, %v2899
        %v3220 = vmul.f32 %v2900, %v2900
        %v3221 = vmul.f32 %v2901, %v2901
        %v3222 = vmul.f32 %v2902, %v2902
        %v3223 = vmul.f32 %v2903, %v2903
        %v3224 = vmul.f32 %v2904, %v2904
        %v3225 = vmul.f32 %v2905, %v2905
        %v3226 = vmul.f32 %v2906, %v2906
        %v3227 = vmul.f32 %v2907, %v2907
        %v3228 = vmul.f32 %v2908, %v2908
        %v3229 = vmul.f32 %v2909, %v2909
        %v3230 = vmul.f32 %v2910, %v2910
        %v3231 = vmul.f32 %v2911, %v2911
        %v3232 = vmul.f32 %v2912, %v2912
        %v3233 = vmul.f32 %v2913, %v2913
        %v3234 = vmul.f32 %v2914, %v2914
        %v3235 = vmul.f32 %v2915, %v2915
        %v3236 = vmul.f32 %v2916, %v2916
        %v3237 = vmul.f32 %v2917, %v2917
        %v3238 = vmul.f32 %v2918, %v2918
        %v3239 = vmul.f32 %v2919, %v2919
        %v3240 = vmul.f32 %v2920, %v2920
        %v3241 = vmul.f32 %v2921, %v2921
        %v3242 = vmul.f32 %v2922, %v2922
        %v3243 = vmul.f32 %v2923, %v2923
        %v3244 = vmul.f32 %v2924, %v2924
        %v3245 = vmul.f32 %v2925, %v2925
        %v3246 = vmul.f32 %v2926, %v2926
        %v3247 = vmul.f32 %v2927, %v2927
        %v3248 = vmul.f32 %v2928, %v2928
        %v3249 = vmul.f32 %v2929, %v2929
        %v3250 = vmul.f32 %v2930, %v2930
        %v3251 = vmul.f32 %v2931, %v2931
        %v3252 = vmul.f32 %v2932, %v2932
        %v3253 = vmul.f32 %v2933, %v2933
        %v3254 = vmul.f32 %v2934, %v2934
        %v3255 = vmul.f32 %v2935, %v2935
        %v3256 = vmul.f32 %v2936, %v2936
        %v3257 = vmul.f32 %v2937, %v2937
        %v3258 = vmul.f32 %v2938, %v2938
        %v3259 = vmul.f32 %v2939, %v2939
        %v3260 = vmul.f32 %v2940, %v2940
        %v3261 = vmul.f32 %v2941, %v2941
        %v3262 = vmul.f32 %v2942, %v2942
        %v3263 = vmul.f32 %v2943, %v2943
        %v3264 = vmul.f32 %v2944, %v2944
        %v3265 = vmul.f32 %v2945, %v2945
        %v3266 = vmul.f32 %v2946, %v2946
        %v3267 = vmul.f32 %v2947, %v2947
        %v3268 = vmul.f32 %v2948, %v2948
        %v3269 = vmul.f32 %v2949, %v2949
        %v3270 = vmul.f32 %v2950, %v2950
        %v3271 = vmul.f32 %v2951, %v2951
        %v3272 = vmul.f32 %v2952, %v2952
        %v3273 = vmul.f32 %v2953, %v2953
        %v3274 = vmul.f32 %v2954, %v2954
        %v3275 = vmul.f32 %v2955, %v2955
        %v3276 = vsub.f32 %v3148, %v3212
        %v3277 = vsub.f32 %v3149, %v3213
        %v3278 = vsub.f32 %v3150, %v3214
        %v3279 = vsub.f32 %v3151, %v3215
        %v3280 = vsub.f32 %v3152, %v3216
        %v3281 = vsub.f32 %v3153, %v3217
        %v3282 = vsub.f32 %v3154, %v3218
        %v3283 = vsub.f32 %v3155, %v3219
        %v3284 = vsub.f32 %v3156, %v3220
        %v3285 = vsub.f32 %v3157, %v3221
        %v3286 = vsub.f32 %v3158, %v3222
        %v3287 = vsub.f32 %v3159, %v3223
        %v3288 = vsub.f32 %v3160, %v3224
        %v3289 = vsub.f32 %v3161, %v3225
        %v3290 = vsub.f32 %v3162, %v3226
        %v3291 = vsub.f32 %v3163, %v3227
        %v3292 = vsub.f32 %v3164, %v3228
        %v3293 = vsub.f32 %v3165, %v3229
        %v3294 = vsub.f32 %v3166, %v3230
        %v3295 = vsub.f32 %v3167, %v3231
        %v3296 = vsub.f32 %v3168, %v3232
        %v3297 = vsub.f32 %v3169, %v3233
        %v3298 = vsub.f32 %v3170, %v3234
        %v3299 = vsub.f32 %v3171, %v3235
        %v3300 = vsub.f32 %v3172, %v3236
        %v3301 = vsub.f32 %v3173, %v3237
        %v3302 = vsub.f32 %v3174, %v3238
        %v3303 = vsub.f32 %v3175, %v3239
        %v3304 = vsub.f32 %v3176, %v3240
        %v3305 = vsub.f32 %v3177, %v3241
        %v3306 = vsub.f32 %v3178, %v3242
        %v3307 = vsub.f32 %v3179, %v3243
        %v3308 = vsub.f32 %v3180, %v3244
        %v3309 = vsub.f32 %v3181, %v3245
        %v3310 = vsub.f32 %v3182, %v3246
        %v3311 = vsub.f32 %v3183, %v3247
        %v3312 = vsub.f32 %v3184, %v3248
        %v3313 = vsub.f32 %v3185, %v3249
        %v3314 = vsub.f32 %v3186, %v3250
        %v3315 = vsub.f32 %v3187, %v3251
        %v3316 = vsub.f32 %v3188, %v3252
        %v3317 = vsub.f32 %v3189, %v3253
        %v3318 = vsub.f32 %v3190, %v3254
        %v3319 = vsub.f32 %v3191, %v3255
        %v3320 = vsub.f32 %v3192, %v3256
        %v3321 = vsub.f32 %v3193, %v3257
        %v3322 = vsub.f32 %v3194, %v3258
        %v3323 = vsub.f32 %v3195, %v3259
        %v3324 = vsub.f32 %v3196, %v3260
        %v3325 = vsub.f32 %v3197, %v3261
        %v3326 = vsub.f32 %v3198, %v3262
        %v3327 = vsub.f32 %v3199, %v3263
        %v3328 = vsub.f32 %v3200, %v3264
        %v3329 = vsub.f32 %v3201, %v3265
        %v3330 = vsub.f32 %v3202, %v3266
        %v3331 = vsub.f32 %v3203, %v3267
        %v3332 = vsub.f32 %v3204, %v3268
        %v3333 = vsub.f32 %v3205, %v3269
        %v3334 = vsub.f32 %v3206, %v3270
        %v3335 = vsub.f32 %v3207, %v3271
        %v3336 = vsub.f32 %v3208, %v3272
        %v3337 = vsub.f32 %v3209, %v3273
        %v3338 = vsub.f32 %v3210, %v3274
        %v3339 = vsub.f32 %v3211, %v3275
        %v3340 = vsub.f32 %v2508, %v2892
        %v3341 = vsub.f32 %v2511, %v2893
        %v3342 = vsub.f32 %v2516, %v2894
        %v3343 = vsub.f32 %v2519, %v2895
        %v3344 = vsub.f32 %v2524, %v2896
        %v3345 = vsub.f32 %v2527, %v2897
        %v3346 = vsub.f32 %v2532, %v2898
        %v3347 = vsub.f32 %v2535, %v2899
        %v3348 = vsub.f32 %v2540, %v2900
        %v3349 = vsub.f32 %v2543, %v2901
        %v3350 = vsub.f32 %v2548, %v2902
        %v3351 = vsub.f32 %v2551, %v2903
        %v3352 = vsub.f32 %v2556, %v2904
        %v3353 = vsub.f32 %v2559, %v2905
        %v3354 = vsub.f32 %v2564, %v2906
        %v3355 = vsub.f32 %v2567, %v2907
        %v3356 = vsub.f32 %v2572, %v2908
        %v3357 = vsub.f32 %v2575, %v2909
        %v3358 = vsub.f32 %v2580, %v2910
        %v3359 = vsub.f32 %v2583, %v2911
        %v3360 = vsub.f32 %v2588, %v2912
        %v3361 = vsub.f32 %v2591, %v2913
        %v3362 = vsub.f32 %v2596, %v2914
        %v3363 = vsub.f32 %v2599, %v2915
        %v3364 = vsub.f32 %v2604, %v2916
        %v3365 = vsub.f32 %v2607, %v2917
        %v3366 = vsub.f32 %v2612, %v2918
        %v3367 = vsub.f32 %v2615, %v2919
        %v3368 = vsub.f32 %v2620, %v2920
        %v3369 = vsub.f32 %v2623, %v2921
        %v3370 = vsub.f32 %v2628, %v2922
        %v3371 = vsub.f32 %v2631, %v2923
        %v3372 = vsub.f32 %v2636, %v2924
        %v3373 = vsub.f32 %v2639, %v2925
        %v3374 = vsub.f32 %v2644, %v2926
        %v3375 = vsub.f32 %v2647, %v2927
        %v3376 = vsub.f32 %v2652, %v2928
        %v3377 = vsub.f32 %v2655, %v2929
        %v3378 = vsub.f32 %v2660, %v2930
        %v3379 = vsub.f32 %v2663, %v2931
        %v3380 = vsub.f32 %v2668, %v2932
        %v3381 = vsub.f32 %v2671, %v2933
        %v3382 = vsub.f32 %v2676, %v2934
        %v3383 = vsub.f32 %v2679, %v2935
        %v3384 = vsub.f32 %v2684, %v2936
        %v3385 = vsub.f32 %v2687, %v2937
        %v3386 = vsub.f32 %v2692, %v2938
        %v3387 = vsub.f32 %v2695, %v2939
        %v3388 = vsub.f32 %v2700, %v2940
        %v3389 = vsub.f32 %v2703, %v2941
        %v3390 = vsub.f32 %v2708, %v2942
        %v3391 = vsub.f32 %v2711, %v2943
        %v3392 = vsub.f32 %v2716, %v2944
        %v3393 = vsub.f32 %v2719, %v2945
        %v3394 = vsub.f32 %v2724, %v2946
        %v3395 = vsub.f32 %v2727, %v2947
        %v3396 = vsub.f32 %v2732, %v2948
        %v3397 = vsub.f32 %v2735, %v2949
        %v3398 = vsub.f32 %v2740, %v2950
        %v3399 = vsub.f32 %v2743, %v2951
        %v3400 = vsub.f32 %v2748, %v2952
        %v3401 = vsub.f32 %v2751, %v2953
        %v3402 = vsub.f32 %v2756, %v2954
        %v3403 = vsub.f32 %v2759, %v2955
        %v3404 = vadd.f32 %v3276, 1e-05
        %v3405 = vadd.f32 %v3277, 1e-05
        %v3406 = vadd.f32 %v3278, 1e-05
        %v3407 = vadd.f32 %v3279, 1e-05
        %v3408 = vadd.f32 %v3280, 1e-05
        %v3409 = vadd.f32 %v3281, 1e-05
        %v3410 = vadd.f32 %v3282, 1e-05
        %v3411 = vadd.f32 %v3283, 1e-05
        %v3412 = vadd.f32 %v3284, 1e-05
        %v3413 = vadd.f32 %v3285, 1e-05
        %v3414 = vadd.f32 %v3286, 1e-05
        %v3415 = vadd.f32 %v3287, 1e-05
        %v3416 = vadd.f32 %v3288, 1e-05
        %v3417 = vadd.f32 %v3289, 1e-05
        %v3418 = vadd.f32 %v3290, 1e-05
        %v3419 = vadd.f32 %v3291, 1e-05
        %v3420 = vadd.f32 %v3292, 1e-05
        %v3421 = vadd.f32 %v3293, 1e-05
        %v3422 = vadd.f32 %v3294, 1e-05
        %v3423 = vadd.f32 %v3295, 1e-05
        %v3424 = vadd.f32 %v3296, 1e-05
        %v3425 = vadd.f32 %v3297, 1e-05
        %v3426 = vadd.f32 %v3298, 1e-05
        %v3427 = vadd.f32 %v3299, 1e-05
        %v3428 = vadd.f32 %v3300, 1e-05
        %v3429 = vadd.f32 %v3301, 1e-05
        %v3430 = vadd.f32 %v3302, 1e-05
        %v3431 = vadd.f32 %v3303, 1e-05
        %v3432 = vadd.f32 %v3304, 1e-05
        %v3433 = vadd.f32 %v3305, 1e-05
        %v3434 = vadd.f32 %v3306, 1e-05
        %v3435 = vadd.f32 %v3307, 1e-05
        %v3436 = vadd.f32 %v3308, 1e-05
        %v3437 = vadd.f32 %v3309, 1e-05
        %v3438 = vadd.f32 %v3310, 1e-05
        %v3439 = vadd.f32 %v3311, 1e-05
        %v3440 = vadd.f32 %v3312, 1e-05
        %v3441 = vadd.f32 %v3313, 1e-05
        %v3442 = vadd.f32 %v3314, 1e-05
        %v3443 = vadd.f32 %v3315, 1e-05
        %v3444 = vadd.f32 %v3316, 1e-05
        %v3445 = vadd.f32 %v3317, 1e-05
        %v3446 = vadd.f32 %v3318, 1e-05
        %v3447 = vadd.f32 %v3319, 1e-05
        %v3448 = vadd.f32 %v3320, 1e-05
        %v3449 = vadd.f32 %v3321, 1e-05
        %v3450 = vadd.f32 %v3322, 1e-05
        %v3451 = vadd.f32 %v3323, 1e-05
        %v3452 = vadd.f32 %v3324, 1e-05
        %v3453 = vadd.f32 %v3325, 1e-05
        %v3454 = vadd.f32 %v3326, 1e-05
        %v3455 = vadd.f32 %v3327, 1e-05
        %v3456 = vadd.f32 %v3328, 1e-05
        %v3457 = vadd.f32 %v3329, 1e-05
        %v3458 = vadd.f32 %v3330, 1e-05
        %v3459 = vadd.f32 %v3331, 1e-05
        %v3460 = vadd.f32 %v3332, 1e-05
        %v3461 = vadd.f32 %v3333, 1e-05
        %v3462 = vadd.f32 %v3334, 1e-05
        %v3463 = vadd.f32 %v3335, 1e-05
        %v3464 = vadd.f32 %v3336, 1e-05
        %v3465 = vadd.f32 %v3337, 1e-05
        %v3466 = vadd.f32 %v3338, 1e-05
        %v3467 = vadd.f32 %v3339, 1e-05
        %v3468 = vrsqrt.pop %v3404
        %v3469 = vrsqrt.pop %v3405
        %v3470 = vrsqrt.pop %v3406
        %v3471 = vrsqrt.pop %v3407
        %v3472 = vrsqrt.pop %v3408
        %v3473 = vrsqrt.pop %v3409
        %v3474 = vrsqrt.pop %v3410
        %v3475 = vrsqrt.pop %v3411
        %v3476 = vrsqrt.pop %v3412
        %v3477 = vrsqrt.pop %v3413
        %v3478 = vrsqrt.pop %v3414
        %v3479 = vrsqrt.pop %v3415
        %v3480 = vrsqrt.pop %v3416
        %v3481 = vrsqrt.pop %v3417
        %v3482 = vrsqrt.pop %v3418
        %v3483 = vrsqrt.pop %v3419
        %v3484 = vrsqrt.pop %v3420
        %v3485 = vrsqrt.pop %v3421
        %v3486 = vrsqrt.pop %v3422
        %v3487 = vrsqrt.pop %v3423
        %v3488 = vrsqrt.pop %v3424
        %v3489 = vrsqrt.pop %v3425
        %v3490 = vrsqrt.pop %v3426
        %v3491 = vrsqrt.pop %v3427
        %v3492 = vrsqrt.pop %v3428
        %v3493 = vrsqrt.pop %v3429
        %v3494 = vrsqrt.pop %v3430
        %v3495 = vrsqrt.pop %v3431
        %v3496 = vrsqrt.pop %v3432
        %v3497 = vrsqrt.pop %v3433
        %v3498 = vrsqrt.pop %v3434
        %v3499 = vrsqrt.pop %v3435
        %v3500 = vrsqrt.pop %v3436
        %v3501 = vrsqrt.pop %v3437
        %v3502 = vrsqrt.pop %v3438
        %v3503 = vrsqrt.pop %v3439
        %v3504 = vrsqrt.pop %v3440
        %v3505 = vrsqrt.pop %v3441
        %v3506 = vrsqrt.pop %v3442
        %v3507 = vrsqrt.pop %v3443
        %v3508 = vrsqrt.pop %v3444
        %v3509 = vrsqrt.pop %v3445
        %v3510 = vrsqrt.pop %v3446
        %v3511 = vrsqrt.pop %v3447
        %v3512 = vrsqrt.pop %v3448
        %v3513 = vrsqrt.pop %v3449
        %v3514 = vrsqrt.pop %v3450
        %v3515 = vrsqrt.pop %v3451
        %v3516 = vrsqrt.pop %v3452
        %v3517 = vrsqrt.pop %v3453
        %v3518 = vrsqrt.pop %v3454
        %v3519 = vrsqrt.pop %v3455
        %v3520 = vrsqrt.pop %v3456
        %v3521 = vrsqrt.pop %v3457
        %v3522 = vrsqrt.pop %v3458
        %v3523 = vrsqrt.pop %v3459
        %v3524 = vrsqrt.pop %v3460
        %v3525 = vrsqrt.pop %v3461
        %v3526 = vrsqrt.pop %v3462
        %v3527 = vrsqrt.pop %v3463
        %v3528 = vrsqrt.pop %v3464
        %v3529 = vrsqrt.pop %v3465
        %v3530 = vrsqrt.pop %v3466
        %v3531 = vrsqrt.pop %v3467
        %v3532 = vmul.f32 %v3340, %v3468
        %v3533 = vmul.f32 %v3341, %v3469
        %v3534 = vmul.f32 %v3342, %v3470
        %v3535 = vmul.f32 %v3343, %v3471
        %v3536 = vmul.f32 %v3344, %v3472
        %v3537 = vmul.f32 %v3345, %v3473
        %v3538 = vmul.f32 %v3346, %v3474
        %v3539 = vmul.f32 %v3347, %v3475
        %v3540 = vmul.f32 %v3348, %v3476
        %v3541 = vmul.f32 %v3349, %v3477
        %v3542 = vmul.f32 %v3350, %v3478
        %v3543 = vmul.f32 %v3351, %v3479
        %v3544 = vmul.f32 %v3352, %v3480
        %v3545 = vmul.f32 %v3353, %v3481
        %v3546 = vmul.f32 %v3354, %v3482
        %v3547 = vmul.f32 %v3355, %v3483
        %v3548 = vmul.f32 %v3356, %v3484
        %v3549 = vmul.f32 %v3357, %v3485
        %v3550 = vmul.f32 %v3358, %v3486
        %v3551 = vmul.f32 %v3359, %v3487
        %v3552 = vmul.f32 %v3360, %v3488
        %v3553 = vmul.f32 %v3361, %v3489
        %v3554 = vmul.f32 %v3362, %v3490
        %v3555 = vmul.f32 %v3363, %v3491
        %v3556 = vmul.f32 %v3364, %v3492
        %v3557 = vmul.f32 %v3365, %v3493
        %v3558 = vmul.f32 %v3366, %v3494
        %v3559 = vmul.f32 %v3367, %v3495
        %v3560 = vmul.f32 %v3368, %v3496
        %v3561 = vmul.f32 %v3369, %v3497
        %v3562 = vmul.f32 %v3370, %v3498
        %v3563 = vmul.f32 %v3371, %v3499
        %v3564 = vmul.f32 %v3372, %v3500
        %v3565 = vmul.f32 %v3373, %v3501
        %v3566 = vmul.f32 %v3374, %v3502
        %v3567 = vmul.f32 %v3375, %v3503
        %v3568 = vmul.f32 %v3376, %v3504
        %v3569 = vmul.f32 %v3377, %v3505
        %v3570 = vmul.f32 %v3378, %v3506
        %v3571 = vmul.f32 %v3379, %v3507
        %v3572 = vmul.f32 %v3380, %v3508
        %v3573 = vmul.f32 %v3381, %v3509
        %v3574 = vmul.f32 %v3382, %v3510
        %v3575 = vmul.f32 %v3383, %v3511
        %v3576 = vmul.f32 %v3384, %v3512
        %v3577 = vmul.f32 %v3385, %v3513
        %v3578 = vmul.f32 %v3386, %v3514
        %v3579 = vmul.f32 %v3387, %v3515
        %v3580 = vmul.f32 %v3388, %v3516
        %v3581 = vmul.f32 %v3389, %v3517
        %v3582 = vmul.f32 %v3390, %v3518
        %v3583 = vmul.f32 %v3391, %v3519
        %v3584 = vmul.f32 %v3392, %v3520
        %v3585 = vmul.f32 %v3393, %v3521
        %v3586 = vmul.f32 %v3394, %v3522
        %v3587 = vmul.f32 %v3395, %v3523
        %v3588 = vmul.f32 %v3396, %v3524
        %v3589 = vmul.f32 %v3397, %v3525
        %v3590 = vmul.f32 %v3398, %v3526
        %v3591 = vmul.f32 %v3399, %v3527
        %v3592 = vmul.f32 %v3400, %v3528
        %v3593 = vmul.f32 %v3401, %v3529
        %v3594 = vmul.f32 %v3402, %v3530
        %v3595 = vmul.f32 %v3403, %v3531
        %v3596 = vlaneseq
        %v3597 = vshrl.u32 %v3596, 7
        %v3598 = vsub.s32 0, %v3597
        %v3599 = vrot.slane %v2762, %v3598
        %v3600 = vmul.f32 %v3532, %v3599
        %v3601 = vmul.f32 %v3533, %v3599
        %v3602 = vmul.f32 %v3534, %v3599
        %v3603 = vmul.f32 %v3535, %v3599
        %v3604 = vmul.f32 %v3536, %v3599
        %v3605 = vmul.f32 %v3537, %v3599
        %v3606 = vmul.f32 %v3538, %v3599
        %v3607 = vmul.f32 %v3539, %v3599
        %v3608 = vmul.f32 %v3540, %v3599
        %v3609 = vmul.f32 %v3541, %v3599
        %v3610 = vmul.f32 %v3542, %v3599
        %v3611 = vmul.f32 %v3543, %v3599
        %v3612 = vmul.f32 %v3544, %v3599
        %v3613 = vmul.f32 %v3545, %v3599
        %v3614 = vmul.f32 %v3546, %v3599
        %v3615 = vmul.f32 %v3547, %v3599
        %v3616 = vmul.f32 %v3548, %v3599
        %v3617 = vmul.f32 %v3549, %v3599
        %v3618 = vmul.f32 %v3550, %v3599
        %v3619 = vmul.f32 %v3551, %v3599
        %v3620 = vmul.f32 %v3552, %v3599
        %v3621 = vmul.f32 %v3553, %v3599
        %v3622 = vmul.f32 %v3554, %v3599
        %v3623 = vmul.f32 %v3555, %v3599
        %v3624 = vmul.f32 %v3556, %v3599
        %v3625 = vmul.f32 %v3557, %v3599
        %v3626 = vmul.f32 %v3558, %v3599
        %v3627 = vmul.f32 %v3559, %v3599
        %v3628 = vmul.f32 %v3560, %v3599
        %v3629 = vmul.f32 %v3561, %v3599
        %v3630 = vmul.f32 %v3562, %v3599
        %v3631 = vmul.f32 %v3563, %v3599
        %v3632 = vmul.f32 %v3564, %v3599
        %v3633 = vmul.f32 %v3565, %v3599
        %v3634 = vmul.f32 %v3566, %v3599
        %v3635 = vmul.f32 %v3567, %v3599
        %v3636 = vmul.f32 %v3568, %v3599
        %v3637 = vmul.f32 %v3569, %v3599
        %v3638 = vmul.f32 %v3570, %v3599
        %v3639 = vmul.f32 %v3571, %v3599
        %v3640 = vmul.f32 %v3572, %v3599
        %v3641 = vmul.f32 %v3573, %v3599
        %v3642 = vmul.f32 %v3574, %v3599
        %v3643 = vmul.f32 %v3575, %v3599
        %v3644 = vmul.f32 %v3576, %v3599
        %v3645 = vmul.f32 %v3577, %v3599
        %v3646 = vmul.f32 %v3578, %v3599
        %v3647 = vmul.f32 %v3579, %v3599
        %v3648 = vmul.f32 %v3580, %v3599
        %v3649 = vmul.f32 %v3581, %v3599
        %v3650 = vmul.f32 %v3582, %v3599
        %v3651 = vmul.f32 %v3583, %v3599
        %v3652 = vmul.f32 %v3584, %v3599
        %v3653 = vmul.f32 %v3585, %v3599
        %v3654 = vmul.f32 %v3586, %v3599
        %v3655 = vmul.f32 %v3587, %v3599
        %v3656 = vmul.f32 %v3588, %v3599
        %v3657 = vmul.f32 %v3589, %v3599
        %v3658 = vmul.f32 %v3590, %v3599
        %v3659 = vmul.f32 %v3591, %v3599
        %v3660 = vmul.f32 %v3592, %v3599
        %v3661 = vmul.f32 %v3593, %v3599
        %v3662 = vmul.f32 %v3594, %v3599
        %v3663 = vmul.f32 %v3595, %v3599
        %v3664 = vlaneseq
        %v3665 = vshrl.u32 %v3664, 7
        %v3666 = vsub.s32 0, %v3665
        %v3667 = vrot.slane %v2763, %v3666
        %v3668 = vadd.f32 %v3600, %v3667
        %v3669 = vadd.f32 %v3601, %v3667
        %v3670 = vadd.f32 %v3602, %v3667
        %v3671 = vadd.f32 %v3603, %v3667
        %v3672 = vadd.f32 %v3604, %v3667
        %v3673 = vadd.f32 %v3605, %v3667
        %v3674 = vadd.f32 %v3606, %v3667
        %v3675 = vadd.f32 %v3607, %v3667
        %v3676 = vadd.f32 %v3608, %v3667
        %v3677 = vadd.f32 %v3609, %v3667
        %v3678 = vadd.f32 %v3610, %v3667
        %v3679 = vadd.f32 %v3611, %v3667
        %v3680 = vadd.f32 %v3612, %v3667
        %v3681 = vadd.f32 %v3613, %v3667
        %v3682 = vadd.f32 %v3614, %v3667
        %v3683 = vadd.f32 %v3615, %v3667
        %v3684 = vadd.f32 %v3616, %v3667
        %v3685 = vadd.f32 %v3617, %v3667
        %v3686 = vadd.f32 %v3618, %v3667
        %v3687 = vadd.f32 %v3619, %v3667
        %v3688 = vadd.f32 %v3620, %v3667
        %v3689 = vadd.f32 %v3621, %v3667
        %v3690 = vadd.f32 %v3622, %v3667
        %v3691 = vadd.f32 %v3623, %v3667
        %v3692 = vadd.f32 %v3624, %v3667
        %v3693 = vadd.f32 %v3625, %v3667
        %v3694 = vadd.f32 %v3626, %v3667
        %v3695 = vadd.f32 %v3627, %v3667
        %v3696 = vadd.f32 %v3628, %v3667
        %v3697 = vadd.f32 %v3629, %v3667
        %v3698 = vadd.f32 %v3630, %v3667
        %v3699 = vadd.f32 %v3631, %v3667
        %v3700 = vadd.f32 %v3632, %v3667
        %v3701 = vadd.f32 %v3633, %v3667
        %v3702 = vadd.f32 %v3634, %v3667
        %v3703 = vadd.f32 %v3635, %v3667
        %v3704 = vadd.f32 %v3636, %v3667
        %v3705 = vadd.f32 %v3637, %v3667
        %v3706 = vadd.f32 %v3638, %v3667
        %v3707 = vadd.f32 %v3639, %v3667
        %v3708 = vadd.f32 %v3640, %v3667
        %v3709 = vadd.f32 %v3641, %v3667
        %v3710 = vadd.f32 %v3642, %v3667
        %v3711 = vadd.f32 %v3643, %v3667
        %v3712 = vadd.f32 %v3644, %v3667
        %v3713 = vadd.f32 %v3645, %v3667
        %v3714 = vadd.f32 %v3646, %v3667
        %v3715 = vadd.f32 %v3647, %v3667
        %v3716 = vadd.f32 %v3648, %v3667
        %v3717 = vadd.f32 %v3649, %v3667
        %v3718 = vadd.f32 %v3650, %v3667
        %v3719 = vadd.f32 %v3651, %v3667
        %v3720 = vadd.f32 %v3652, %v3667
        %v3721 = vadd.f32 %v3653, %v3667
        %v3722 = vadd.f32 %v3654, %v3667
        %v3723 = vadd.f32 %v3655, %v3667
        %v3724 = vadd.f32 %v3656, %v3667
        %v3725 = vadd.f32 %v3657, %v3667
        %v3726 = vadd.f32 %v3658, %v3667
        %v3727 = vadd.f32 %v3659, %v3667
        %v3728 = vadd.f32 %v3660, %v3667
        %v3729 = vadd.f32 %v3661, %v3667
        %v3730 = vadd.f32 %v3662, %v3667
        %v3731 = vadd.f32 %v3663, %v3667
        %v3732 = vmax.f32 %v3668, 0.0
        %v3733 = vmax.f32 %v3669, 0.0
        %v3734 = vmax.f32 %v3670, 0.0
        %v3735 = vmax.f32 %v3671, 0.0
        %v3736 = vmax.f32 %v3672, 0.0
        %v3737 = vmax.f32 %v3673, 0.0
        %v3738 = vmax.f32 %v3674, 0.0
        %v3739 = vmax.f32 %v3675, 0.0
        %v3740 = vmax.f32 %v3676, 0.0
        %v3741 = vmax.f32 %v3677, 0.0
        %v3742 = vmax.f32 %v3678, 0.0
        %v3743 = vmax.f32 %v3679, 0.0
        %v3744 = vmax.f32 %v3680, 0.0
        %v3745 = vmax.f32 %v3681, 0.0
        %v3746 = vmax.f32 %v3682, 0.0
        %v3747 = vmax.f32 %v3683, 0.0
        %v3748 = vmax.f32 %v3684, 0.0
        %v3749 = vmax.f32 %v3685, 0.0
        %v3750 = vmax.f32 %v3686, 0.0
        %v3751 = vmax.f32 %v3687, 0.0
        %v3752 = vmax.f32 %v3688, 0.0
        %v3753 = vmax.f32 %v3689, 0.0
        %v3754 = vmax.f32 %v3690, 0.0
        %v3755 = vmax.f32 %v3691, 0.0
        %v3756 = vmax.f32 %v3692, 0.0
        %v3757 = vmax.f32 %v3693, 0.0
        %v3758 = vmax.f32 %v3694, 0.0
        %v3759 = vmax.f32 %v3695, 0.0
        %v3760 = vmax.f32 %v3696, 0.0
        %v3761 = vmax.f32 %v3697, 0.0
        %v3762 = vmax.f32 %v3698, 0.0
        %v3763 = vmax.f32 %v3699, 0.0
        %v3764 = vmax.f32 %v3700, 0.0
        %v3765 = vmax.f32 %v3701, 0.0
        %v3766 = vmax.f32 %v3702, 0.0
        %v3767 = vmax.f32 %v3703, 0.0
        %v3768 = vmax.f32 %v3704, 0.0
        %v3769 = vmax.f32 %v3705, 0.0
        %v3770 = vmax.f32 %v3706, 0.0
        %v3771 = vmax.f32 %v3707, 0.0
        %v3772 = vmax.f32 %v3708, 0.0
        %v3773 = vmax.f32 %v3709, 0.0
        %v3774 = vmax.f32 %v3710, 0.0
        %v3775 = vmax.f32 %v3711, 0.0
        %v3776 = vmax.f32 %v3712, 0.0
        %v3777 = vmax.f32 %v3713, 0.0
        %v3778 = vmax.f32 %v3714, 0.0
        %v3779 = vmax.f32 %v3715, 0.0
        %v3780 = vmax.f32 %v3716, 0.0
        %v3781 = vmax.f32 %v3717, 0.0
        %v3782 = vmax.f32 %v3718, 0.0
        %v3783 = vmax.f32 %v3719, 0.0
        %v3784 = vmax.f32 %v3720, 0.0
        %v3785 = vmax.f32 %v3721, 0.0
        %v3786 = vmax.f32 %v3722, 0.0
        %v3787 = vmax.f32 %v3723, 0.0
        %v3788 = vmax.f32 %v3724, 0.0
        %v3789 = vmax.f32 %v3725, 0.0
        %v3790 = vmax.f32 %v3726, 0.0
        %v3791 = vmax.f32 %v3727, 0.0
        %v3792 = vmax.f32 %v3728, 0.0
        %v3793 = vmax.f32 %v3729, 0.0
        %v3794 = vmax.f32 %v3730, 0.0
        %v3795 = vmax.f32 %v3731, 0.0
        %v3796 = vpack.c.bf16 %v3733, %v3732
        %v3797 = vpack.c.bf16 %v3735, %v3734
        %v3798 = vpack.c.bf16 %v3737, %v3736
        %v3799 = vpack.c.bf16 %v3739, %v3738
        %v3800 = vpack.c.bf16 %v3741, %v3740
        %v3801 = vpack.c.bf16 %v3743, %v3742
        %v3802 = vpack.c.bf16 %v3745, %v3744
        %v3803 = vpack.c.bf16 %v3747, %v3746
        %v3804 = vpack.c.bf16 %v3749, %v3748
        %v3805 = vpack.c.bf16 %v3751, %v3750
        %v3806 = vpack.c.bf16 %v3753, %v3752
        %v3807 = vpack.c.bf16 %v3755, %v3754
        %v3808 = vpack.c.bf16 %v3757, %v3756
        %v3809 = vpack.c.bf16 %v3759, %v3758
        %v3810 = vpack.c.bf16 %v3761, %v3760
        %v3811 = vpack.c.bf16 %v3763, %v3762
        %v3812 = vpack.c.bf16 %v3765, %v3764
        %v3813 = vpack.c.bf16 %v3767, %v3766
        %v3814 = vpack.c.bf16 %v3769, %v3768
        %v3815 = vpack.c.bf16 %v3771, %v3770
        %v3816 = vpack.c.bf16 %v3773, %v3772
        %v3817 = vpack.c.bf16 %v3775, %v3774
        %v3818 = vpack.c.bf16 %v3777, %v3776
        %v3819 = vpack.c.bf16 %v3779, %v3778
        %v3820 = vpack.c.bf16 %v3781, %v3780
        %v3821 = vpack.c.bf16 %v3783, %v3782
        %v3822 = vpack.c.bf16 %v3785, %v3784
        %v3823 = vpack.c.bf16 %v3787, %v3786
        %v3824 = vpack.c.bf16 %v3789, %v3788
        %v3825 = vpack.c.bf16 %v3791, %v3790
        %v3826 = vpack.c.bf16 %v3793, %v3792
        %v3827 = vpack.c.bf16 %v3795, %v3794
        %v3828 = vld [vmem:[%s5] sm:$0xff]
        %v3829 = vld [vmem:[%s5 + $0x8] sm:$0xff]
        %v3830 = vld [vmem:[%s5 + $0x10] sm:$0xff]
        %v3831 = vld [vmem:[%s5 + $0x18] sm:$0xff]
        %v3832 = vld [vmem:[%s5 + $0x20] sm:$0xff]
        %v3833 = vld [vmem:[%s5 + $0x28] sm:$0xff]
        %v3834 = vld [vmem:[%s5 + $0x30] sm:$0xff]
        %v3835 = vld [vmem:[%s5 + $0x38] sm:$0xff]
        %v3836 = vld [vmem:[%s5 + $0x40] sm:$0xff]
        %v3837 = vld [vmem:[%s5 + $0x48] sm:$0xff]
        %v3838 = vld [vmem:[%s5 + $0x50] sm:$0xff]
        %v3839 = vld [vmem:[%s5 + $0x58] sm:$0xff]
        %v3840 = vld [vmem:[%s5 + $0x60] sm:$0xff]
        %v3841 = vld [vmem:[%s5 + $0x68] sm:$0xff]
        %v3842 = vld [vmem:[%s5 + $0x70] sm:$0xff]
        %v3843 = vld [vmem:[%s5 + $0x78] sm:$0xff]
        %v3844 = vld [vmem:[%s5 + $0x80] sm:$0xff]
        %v3845 = vld [vmem:[%s5 + $0x88] sm:$0xff]
        %v3846 = vld [vmem:[%s5 + $0x90] sm:$0xff]
        %v3847 = vld [vmem:[%s5 + $0x98] sm:$0xff]
        %v3848 = vld [vmem:[%s5 + $0xa0] sm:$0xff]
        %v3849 = vld [vmem:[%s5 + $0xa8] sm:$0xff]
        %v3850 = vld [vmem:[%s5 + $0xb0] sm:$0xff]
        %v3851 = vld [vmem:[%s5 + $0xb8] sm:$0xff]
        %v3852 = vld [vmem:[%s5 + $0xc0] sm:$0xff]
        %v3853 = vld [vmem:[%s5 + $0xc8] sm:$0xff]
        %v3854 = vld [vmem:[%s5 + $0xd0] sm:$0xff]
        %v3855 = vld [vmem:[%s5 + $0xd8] sm:$0xff]
        %v3856 = vld [vmem:[%s5 + $0xe0] sm:$0xff]
        %v3857 = vld [vmem:[%s5 + $0xe8] sm:$0xff]
        %v3858 = vld [vmem:[%s5 + $0xf0] sm:$0xff]
        %v3859 = vld [vmem:[%s5 + $0xf8] sm:$0xff]
        %v3860 = vld [vmem:[%s5 + $0x100] sm:$0xff]
        %v3861 = vld [vmem:[%s5 + $0x108] sm:$0xff]
        %v3862 = vld [vmem:[%s5 + $0x110] sm:$0xff]
        %v3863 = vld [vmem:[%s5 + $0x118] sm:$0xff]
        %v3864 = vld [vmem:[%s5 + $0x120] sm:$0xff]
        %v3865 = vld [vmem:[%s5 + $0x128] sm:$0xff]
        %v3866 = vld [vmem:[%s5 + $0x130] sm:$0xff]
        %v3867 = vld [vmem:[%s5 + $0x138] sm:$0xff]
        %v3868 = vld [vmem:[%s5 + $0x140] sm:$0xff]
        %v3869 = vld [vmem:[%s5 + $0x148] sm:$0xff]
        %v3870 = vld [vmem:[%s5 + $0x150] sm:$0xff]
        %v3871 = vld [vmem:[%s5 + $0x158] sm:$0xff]
        %v3872 = vld [vmem:[%s5 + $0x160] sm:$0xff]
        %v3873 = vld [vmem:[%s5 + $0x168] sm:$0xff]
        %v3874 = vld [vmem:[%s5 + $0x170] sm:$0xff]
        %v3875 = vld [vmem:[%s5 + $0x178] sm:$0xff]
        %v3876 = vld [vmem:[%s5 + $0x180] sm:$0xff]
        %v3877 = vld [vmem:[%s5 + $0x188] sm:$0xff]
        %v3878 = vld [vmem:[%s5 + $0x190] sm:$0xff]
        %v3879 = vld [vmem:[%s5 + $0x198] sm:$0xff]
        %v3880 = vld [vmem:[%s5 + $0x1a0] sm:$0xff]
        %v3881 = vld [vmem:[%s5 + $0x1a8] sm:$0xff]
        %v3882 = vld [vmem:[%s5 + $0x1b0] sm:$0xff]
        %v3883 = vld [vmem:[%s5 + $0x1b8] sm:$0xff]
        %v3884 = vld [vmem:[%s5 + $0x1c0] sm:$0xff]
        %v3885 = vld [vmem:[%s5 + $0x1c8] sm:$0xff]
        %v3886 = vld [vmem:[%s5 + $0x1d0] sm:$0xff]
        %v3887 = vld [vmem:[%s5 + $0x1d8] sm:$0xff]
        %v3888 = vld [vmem:[%s5 + $0x1e0] sm:$0xff]
        %v3889 = vld [vmem:[%s5 + $0x1e8] sm:$0xff]
        %v3890 = vld [vmem:[%s5 + $0x1f0] sm:$0xff]
        %v3891 = vld [vmem:[%s5 + $0x1f8] sm:$0xff]
        %v3892 = vld [vmem:[%s6] ss:$4 sm:$0xff]
        %v3894 = vlaneseq
        %v3895 = vshrl.u32 %v3894, 7
        %v3896 = vsub.s32 0, %v3895
        %v3897 = vrot.slane %v3892, %v3896
        %v3898 = vlaneseq
        %v3899 = vshrl.u32 %v3898, 7
        %v3900 = vsub.s32 1, %v3899
        %v3901 = vrot.slane %v3892, %v3900
        %v3902 = vlaneseq
        %v3903 = vshrl.u32 %v3902, 7
        %v3904 = vsub.s32 2, %v3903
        %v3905 = vrot.slane %v3892, %v3904
        %v3906 = vlaneseq
        %v3907 = vshrl.u32 %v3906, 7
        %v3908 = vsub.s32 3, %v3907
        %v3909 = vrot.slane %v3892, %v3908
        %v3910 = vlaneseq
        %v3911 = vshrl.u32 %v3910, 7
        %v3912 = vsub.s32 4, %v3911
        %v3913 = vrot.slane %v3892, %v3912
        %v3914 = vlaneseq
        %v3915 = vshrl.u32 %v3914, 7
        %v3916 = vsub.s32 5, %v3915
        %v3917 = vrot.slane %v3892, %v3916
        %v3918 = vlaneseq
        %v3919 = vshrl.u32 %v3918, 7
        %v3920 = vsub.s32 6, %v3919
        %v3921 = vrot.slane %v3892, %v3920
        %v3922 = vlaneseq
        %v3923 = vshrl.u32 %v3922, 7
        %v3924 = vsub.s32 7, %v3923
        %v3925 = vrot.slane %v3892, %v3924
        %v3998 = vunpack.c.l.b16 %v3828
        %v3999 = vunpack.c.h.b16 %v3828
        %v4000 = vunpack.c.l.b16 %v3829
        %v4001 = vunpack.c.h.b16 %v3829
        %v4002 = vunpack.c.l.b16 %v3830
        %v4003 = vunpack.c.h.b16 %v3830
        %v4004 = vunpack.c.l.b16 %v3831
        %v4005 = vunpack.c.h.b16 %v3831
        %v4006 = vunpack.c.l.b16 %v3832
        %v4007 = vunpack.c.h.b16 %v3832
        %v4008 = vunpack.c.l.b16 %v3833
        %v4009 = vunpack.c.h.b16 %v3833
        %v4010 = vunpack.c.l.b16 %v3834
        %v4011 = vunpack.c.h.b16 %v3834
        %v4012 = vunpack.c.l.b16 %v3835
        %v4013 = vunpack.c.h.b16 %v3835
        %v4014 = vunpack.c.l.b16 %v3836
        %v4015 = vunpack.c.h.b16 %v3836
        %v4016 = vunpack.c.l.b16 %v3837
        %v4017 = vunpack.c.h.b16 %v3837
        %v4018 = vunpack.c.l.b16 %v3838
        %v4019 = vunpack.c.h.b16 %v3838
        %v4020 = vunpack.c.l.b16 %v3839
        %v4021 = vunpack.c.h.b16 %v3839
        %v4022 = vunpack.c.l.b16 %v3840
        %v4023 = vunpack.c.h.b16 %v3840
        %v4024 = vunpack.c.l.b16 %v3841
        %v4025 = vunpack.c.h.b16 %v3841
        %v4026 = vunpack.c.l.b16 %v3842
        %v4027 = vunpack.c.h.b16 %v3842
        %v4028 = vunpack.c.l.b16 %v3843
        %v4029 = vunpack.c.h.b16 %v3843
        %v4030 = vunpack.c.l.b16 %v3844
        %v4031 = vunpack.c.h.b16 %v3844
        %v4032 = vunpack.c.l.b16 %v3845
        %v4033 = vunpack.c.h.b16 %v3845
        %v4034 = vunpack.c.l.b16 %v3846
        %v4035 = vunpack.c.h.b16 %v3846
        %v4036 = vunpack.c.l.b16 %v3847
        %v4037 = vunpack.c.h.b16 %v3847
        %v4038 = vunpack.c.l.b16 %v3848
        %v4039 = vunpack.c.h.b16 %v3848
        %v4040 = vunpack.c.l.b16 %v3849
        %v4041 = vunpack.c.h.b16 %v3849
        %v4042 = vunpack.c.l.b16 %v3850
        %v4043 = vunpack.c.h.b16 %v3850
        %v4044 = vunpack.c.l.b16 %v3851
        %v4045 = vunpack.c.h.b16 %v3851
        %v4046 = vunpack.c.l.b16 %v3852
        %v4047 = vunpack.c.h.b16 %v3852
        %v4048 = vunpack.c.l.b16 %v3853
        %v4049 = vunpack.c.h.b16 %v3853
        %v4050 = vunpack.c.l.b16 %v3854
        %v4051 = vunpack.c.h.b16 %v3854
        %v4052 = vunpack.c.l.b16 %v3855
        %v4053 = vunpack.c.h.b16 %v3855
        %v4054 = vunpack.c.l.b16 %v3856
        %v4055 = vunpack.c.h.b16 %v3856
        %v4056 = vunpack.c.l.b16 %v3857
        %v4057 = vunpack.c.h.b16 %v3857
        %v4058 = vunpack.c.l.b16 %v3858
        %v4059 = vunpack.c.h.b16 %v3858
        %v4060 = vunpack.c.l.b16 %v3859
        %v4061 = vunpack.c.h.b16 %v3859
        %v4062 = vunpack.c.l.b16 %v3860
        %v4063 = vunpack.c.h.b16 %v3860
        %v4064 = vunpack.c.l.b16 %v3861
        %v4065 = vunpack.c.h.b16 %v3861
        %v4066 = vunpack.c.l.b16 %v3862
        %v4067 = vunpack.c.h.b16 %v3862
        %v4068 = vunpack.c.l.b16 %v3863
        %v4069 = vunpack.c.h.b16 %v3863
        %v4070 = vunpack.c.l.b16 %v3864
        %v4071 = vunpack.c.h.b16 %v3864
        %v4072 = vunpack.c.l.b16 %v3865
        %v4073 = vunpack.c.h.b16 %v3865
        %v4074 = vunpack.c.l.b16 %v3866
        %v4075 = vunpack.c.h.b16 %v3866
        %v4076 = vunpack.c.l.b16 %v3867
        %v4077 = vunpack.c.h.b16 %v3867
        %v4078 = vunpack.c.l.b16 %v3868
        %v4079 = vunpack.c.h.b16 %v3868
        %v4080 = vunpack.c.l.b16 %v3869
        %v4081 = vunpack.c.h.b16 %v3869
        %v4082 = vunpack.c.l.b16 %v3870
        %v4083 = vunpack.c.h.b16 %v3870
        %v4084 = vunpack.c.l.b16 %v3871
        %v4085 = vunpack.c.h.b16 %v3871
        %v4086 = vunpack.c.l.b16 %v3872
        %v4087 = vunpack.c.h.b16 %v3872
        %v4088 = vunpack.c.l.b16 %v3873
        %v4089 = vunpack.c.h.b16 %v3873
        %v4090 = vunpack.c.l.b16 %v3874
        %v4091 = vunpack.c.h.b16 %v3874
        %v4092 = vunpack.c.l.b16 %v3875
        %v4093 = vunpack.c.h.b16 %v3875
        %v4094 = vunpack.c.l.b16 %v3876
        %v4095 = vunpack.c.h.b16 %v3876
        %v4096 = vunpack.c.l.b16 %v3877
        %v4097 = vunpack.c.h.b16 %v3877
        %v4098 = vunpack.c.l.b16 %v3878
        %v4099 = vunpack.c.h.b16 %v3878
        %v4100 = vunpack.c.l.b16 %v3879
        %v4101 = vunpack.c.h.b16 %v3879
        %v4102 = vunpack.c.l.b16 %v3880
        %v4103 = vunpack.c.h.b16 %v3880
        %v4104 = vunpack.c.l.b16 %v3881
        %v4105 = vunpack.c.h.b16 %v3881
        %v4106 = vunpack.c.l.b16 %v3882
        %v4107 = vunpack.c.h.b16 %v3882
        %v4108 = vunpack.c.l.b16 %v3883
        %v4109 = vunpack.c.h.b16 %v3883
        %v4110 = vunpack.c.l.b16 %v3884
        %v4111 = vunpack.c.h.b16 %v3884
        %v4112 = vunpack.c.l.b16 %v3885
        %v4113 = vunpack.c.h.b16 %v3885
        %v4114 = vunpack.c.l.b16 %v3886
        %v4115 = vunpack.c.h.b16 %v3886
        %v4116 = vunpack.c.l.b16 %v3887
        %v4117 = vunpack.c.h.b16 %v3887
        %v4118 = vunpack.c.l.b16 %v3888
        %v4119 = vunpack.c.h.b16 %v3888
        %v4120 = vunpack.c.l.b16 %v3889
        %v4121 = vunpack.c.h.b16 %v3889
        %v4122 = vunpack.c.l.b16 %v3890
        %v4123 = vunpack.c.h.b16 %v3890
        %v4124 = vunpack.c.l.b16 %v3891
        %v4125 = vunpack.c.h.b16 %v3891
        %v4126 = vpack.c.b16 %v4006, %v3998
        %v4127 = vpack.c.b16 %v4007, %v3999
        %v4128 = vpack.c.b16 %v4008, %v4000
        %v4129 = vpack.c.b16 %v4009, %v4001
        %v4130 = vpack.c.b16 %v4010, %v4002
        %v4131 = vpack.c.b16 %v4011, %v4003
        %v4132 = vpack.c.b16 %v4012, %v4004
        %v4133 = vpack.c.b16 %v4013, %v4005
        %v4134 = vpack.c.b16 %v4022, %v4014
        %v4135 = vpack.c.b16 %v4023, %v4015
        %v4136 = vpack.c.b16 %v4024, %v4016
        %v4137 = vpack.c.b16 %v4025, %v4017
        %v4138 = vpack.c.b16 %v4026, %v4018
        %v4139 = vpack.c.b16 %v4027, %v4019
        %v4140 = vpack.c.b16 %v4028, %v4020
        %v4141 = vpack.c.b16 %v4029, %v4021
        %v4142 = vpack.c.b16 %v4038, %v4030
        %v4143 = vpack.c.b16 %v4039, %v4031
        %v4144 = vpack.c.b16 %v4040, %v4032
        %v4145 = vpack.c.b16 %v4041, %v4033
        %v4146 = vpack.c.b16 %v4042, %v4034
        %v4147 = vpack.c.b16 %v4043, %v4035
        %v4148 = vpack.c.b16 %v4044, %v4036
        %v4149 = vpack.c.b16 %v4045, %v4037
        %v4150 = vpack.c.b16 %v4054, %v4046
        %v4151 = vpack.c.b16 %v4055, %v4047
        %v4152 = vpack.c.b16 %v4056, %v4048
        %v4153 = vpack.c.b16 %v4057, %v4049
        %v4154 = vpack.c.b16 %v4058, %v4050
        %v4155 = vpack.c.b16 %v4059, %v4051
        %v4156 = vpack.c.b16 %v4060, %v4052
        %v4157 = vpack.c.b16 %v4061, %v4053
        %v4158 = vpack.c.b16 %v4070, %v4062
        %v4159 = vpack.c.b16 %v4071, %v4063
        %v4160 = vpack.c.b16 %v4072, %v4064
        %v4161 = vpack.c.b16 %v4073, %v4065
        %v4162 = vpack.c.b16 %v4074, %v4066
        %v4163 = vpack.c.b16 %v4075, %v4067
        %v4164 = vpack.c.b16 %v4076, %v4068
        %v4165 = vpack.c.b16 %v4077, %v4069
        %v4166 = vpack.c.b16 %v4086, %v4078
        %v4167 = vpack.c.b16 %v4087, %v4079
        %v4168 = vpack.c.b16 %v4088, %v4080
        %v4169 = vpack.c.b16 %v4089, %v4081
        %v4170 = vpack.c.b16 %v4090, %v4082
        %v4171 = vpack.c.b16 %v4091, %v4083
        %v4172 = vpack.c.b16 %v4092, %v4084
        %v4173 = vpack.c.b16 %v4093, %v4085
        %v4174 = vpack.c.b16 %v4102, %v4094
        %v4175 = vpack.c.b16 %v4103, %v4095
        %v4176 = vpack.c.b16 %v4104, %v4096
        %v4177 = vpack.c.b16 %v4105, %v4097
        %v4178 = vpack.c.b16 %v4106, %v4098
        %v4179 = vpack.c.b16 %v4107, %v4099
        %v4180 = vpack.c.b16 %v4108, %v4100
        %v4181 = vpack.c.b16 %v4109, %v4101
        %v4182 = vpack.c.b16 %v4118, %v4110
        %v4183 = vpack.c.b16 %v4119, %v4111
        %v4184 = vpack.c.b16 %v4120, %v4112
        %v4185 = vpack.c.b16 %v4121, %v4113
        %v4186 = vpack.c.b16 %v4122, %v4114
        %v4187 = vpack.c.b16 %v4123, %v4115
        %v4188 = vpack.c.b16 %v4124, %v4116
        %v4189 = vpack.c.b16 %v4125, %v4117
        %4254 = vmatprep.subr.bf16.mxu0 %v4183
        %4255 = vmatpush1.bf16.msra.mxu0 %v4182
        %4256 = vmatprep.subr.bf16.mxu0 %v4175
        %4257 = vmatpush1.bf16.msra.mxu0 %v4174
        %4258 = vmatprep.subr.bf16.mxu0 %v4167
        %4259 = vmatpush1.bf16.msra.mxu0 %v4166
        %4260 = vmatprep.subr.bf16.mxu0 %v4159
        %4261 = vmatpush1.bf16.msra.mxu0 %v4158
        %4262 = vmatprep.subr.bf16.mxu0 %v4151
        %4263 = vmatpush1.bf16.msra.mxu0 %v4150
        %4264 = vmatprep.subr.bf16.mxu0 %v4143
        %4265 = vmatpush1.bf16.msra.mxu0 %v4142
        %4266 = vmatprep.subr.bf16.mxu0 %v4135
        %4267 = vmatpush1.bf16.msra.mxu0 %v4134
        %4268 = vmatprep.subr.bf16.mxu0 %v4127
        %4269 = vmatpush1.bf16.msra.mxu0 %v4126
        %4270 = vmatprep.subr.bf16.mxu0 0
        %4271 = vmatpush2.bf16.msra.mxu0 0
        %4272 = vmatprep.subr.bf16.mxu0 0
        %4273 = vmatpush2.bf16.msra.mxu0 0
        %4274 = vmatprep.subr.bf16.mxu0 0
        %4275 = vmatpush2.bf16.msra.mxu0 0
        %4276 = vmatprep.subr.bf16.mxu0 0
        %4277 = vmatpush2.bf16.msra.mxu0 0
        %4278 = vmatprep.subr.bf16.mxu0 0
        %4279 = vmatpush2.bf16.msra.mxu0 0
        %4280 = vmatprep.subr.bf16.mxu0 0
        %4281 = vmatpush2.bf16.msra.mxu0 0
        %4282 = vmatprep.subr.bf16.mxu0 0
        %4283 = vmatpush2.bf16.msra.mxu0 0
        %4284 = vmatprep.subr.bf16.mxu0 0
        %4285 = vmatpush2.bf16.msra.mxu0 0
        %4286 = vmatprep.mubr.bf16.mxu0 0
        %4287 = vmatmul.mubr.bf16.gmra.mxu0 %v3796
        %v4288 = vpop.f32.mrf.mxu0
        %v4289 = vadd.f32 %v3897, %v4288
        %v4290 = vpop.f32.mrf.mxu0
        %v4291 = vadd.f32 %v3901, %v4290
        %v4292 = vpop.f32.mrf.mxu0
        %v4293 = vadd.f32 %v3897, %v4292
        %v4294 = vpop.f32.mrf.mxu0
        %v4295 = vadd.f32 %v3901, %v4294
        %4296 = vmatprep.mubr.bf16.mxu0 0
        %4297 = vmatmul.mubr.bf16.gmra.mxu0 %v3797
        %v4298 = vpop.f32.mrf.mxu0
        %v4299 = vadd.f32 %v3897, %v4298
        %v4300 = vpop.f32.mrf.mxu0
        %v4301 = vadd.f32 %v3901, %v4300
        %v4302 = vpop.f32.mrf.mxu0
        %v4303 = vadd.f32 %v3897, %v4302
        %v4304 = vpop.f32.mrf.mxu0
        %v4305 = vadd.f32 %v3901, %v4304
        %4306 = vmatprep.mubr.bf16.mxu0 0
        %4307 = vmatmul.mubr.bf16.gmra.mxu0 %v3798
        %v4308 = vpop.f32.mrf.mxu0
        %v4309 = vadd.f32 %v3897, %v4308
        %v4310 = vpop.f32.mrf.mxu0
        %v4311 = vadd.f32 %v3901, %v4310
        %v4312 = vpop.f32.mrf.mxu0
        %v4313 = vadd.f32 %v3897, %v4312
        %v4314 = vpop.f32.mrf.mxu0
        %v4315 = vadd.f32 %v3901, %v4314
        %4316 = vmatprep.mubr.bf16.mxu0 0
        %4317 = vmatmul.mubr.bf16.gmra.mxu0 %v3799
        %v4318 = vpop.f32.mrf.mxu0
        %v4319 = vadd.f32 %v3897, %v4318
        %v4320 = vpop.f32.mrf.mxu0
        %v4321 = vadd.f32 %v3901, %v4320
        %v4322 = vpop.f32.mrf.mxu0
        %v4323 = vadd.f32 %v3897, %v4322
        %v4324 = vpop.f32.mrf.mxu0
        %v4325 = vadd.f32 %v3901, %v4324
        %4326 = vmatprep.mubr.bf16.mxu0 0
        %4327 = vmatmul.mubr.bf16.gmra.mxu0 %v3800
        %v4328 = vpop.f32.mrf.mxu0
        %v4329 = vadd.f32 %v3897, %v4328
        %v4330 = vpop.f32.mrf.mxu0
        %v4331 = vadd.f32 %v3901, %v4330
        %v4332 = vpop.f32.mrf.mxu0
        %v4333 = vadd.f32 %v3897, %v4332
        %v4334 = vpop.f32.mrf.mxu0
        %v4335 = vadd.f32 %v3901, %v4334
        %4336 = vmatprep.mubr.bf16.mxu0 0
        %4337 = vmatmul.mubr.bf16.gmra.mxu0 %v3801
        %v4338 = vpop.f32.mrf.mxu0
        %v4339 = vadd.f32 %v3897, %v4338
        %v4340 = vpop.f32.mrf.mxu0
        %v4341 = vadd.f32 %v3901, %v4340
        %v4342 = vpop.f32.mrf.mxu0
        %v4343 = vadd.f32 %v3897, %v4342
        %v4344 = vpop.f32.mrf.mxu0
        %v4345 = vadd.f32 %v3901, %v4344
        %4346 = vmatprep.mubr.bf16.mxu0 0
        %4347 = vmatmul.mubr.bf16.gmra.mxu0 %v3802
        %v4348 = vpop.f32.mrf.mxu0
        %v4349 = vadd.f32 %v3897, %v4348
        %v4350 = vpop.f32.mrf.mxu0
        %v4351 = vadd.f32 %v3901, %v4350
        %v4352 = vpop.f32.mrf.mxu0
        %v4353 = vadd.f32 %v3897, %v4352
        %v4354 = vpop.f32.mrf.mxu0
        %v4355 = vadd.f32 %v3901, %v4354
        %4356 = vmatprep.mubr.bf16.mxu0 0
        %4357 = vmatmul.mubr.bf16.gmra.mxu0 %v3803
        %v4358 = vpop.f32.mrf.mxu0
        %v4359 = vadd.f32 %v3897, %v4358
        %v4360 = vpop.f32.mrf.mxu0
        %v4361 = vadd.f32 %v3901, %v4360
        %v4362 = vpop.f32.mrf.mxu0
        %v4363 = vadd.f32 %v3897, %v4362
        %v4364 = vpop.f32.mrf.mxu0
        %v4365 = vadd.f32 %v3901, %v4364
        %4366 = vmatprep.mubr.bf16.mxu0 0
        %4367 = vmatmul.mubr.bf16.gmra.mxu0 %v3804
        %v4368 = vpop.f32.mrf.mxu0
        %v4369 = vadd.f32 %v3897, %v4368
        %v4370 = vpop.f32.mrf.mxu0
        %v4371 = vadd.f32 %v3901, %v4370
        %v4372 = vpop.f32.mrf.mxu0
        %v4373 = vadd.f32 %v3897, %v4372
        %v4374 = vpop.f32.mrf.mxu0
        %v4375 = vadd.f32 %v3901, %v4374
        %4376 = vmatprep.mubr.bf16.mxu0 0
        %4377 = vmatmul.mubr.bf16.gmra.mxu0 %v3805
        %v4378 = vpop.f32.mrf.mxu0
        %v4379 = vadd.f32 %v3897, %v4378
        %v4380 = vpop.f32.mrf.mxu0
        %v4381 = vadd.f32 %v3901, %v4380
        %v4382 = vpop.f32.mrf.mxu0
        %v4383 = vadd.f32 %v3897, %v4382
        %v4384 = vpop.f32.mrf.mxu0
        %v4385 = vadd.f32 %v3901, %v4384
        %4386 = vmatprep.mubr.bf16.mxu0 0
        %4387 = vmatmul.mubr.bf16.gmra.mxu0 %v3806
        %v4388 = vpop.f32.mrf.mxu0
        %v4389 = vadd.f32 %v3897, %v4388
        %v4390 = vpop.f32.mrf.mxu0
        %v4391 = vadd.f32 %v3901, %v4390
        %v4392 = vpop.f32.mrf.mxu0
        %v4393 = vadd.f32 %v3897, %v4392
        %v4394 = vpop.f32.mrf.mxu0
        %v4395 = vadd.f32 %v3901, %v4394
        %4396 = vmatprep.mubr.bf16.mxu0 0
        %4397 = vmatmul.mubr.bf16.gmra.mxu0 %v3807
        %v4398 = vpop.f32.mrf.mxu0
        %v4399 = vadd.f32 %v3897, %v4398
        %v4400 = vpop.f32.mrf.mxu0
        %v4401 = vadd.f32 %v3901, %v4400
        %v4402 = vpop.f32.mrf.mxu0
        %v4403 = vadd.f32 %v3897, %v4402
        %v4404 = vpop.f32.mrf.mxu0
        %v4405 = vadd.f32 %v3901, %v4404
        %4406 = vmatprep.mubr.bf16.mxu0 0
        %4407 = vmatmul.mubr.bf16.gmra.mxu0 %v3808
        %v4408 = vpop.f32.mrf.mxu0
        %v4409 = vadd.f32 %v3897, %v4408
        %v4410 = vpop.f32.mrf.mxu0
        %v4411 = vadd.f32 %v3901, %v4410
        %v4412 = vpop.f32.mrf.mxu0
        %v4413 = vadd.f32 %v3897, %v4412
        %v4414 = vpop.f32.mrf.mxu0
        %v4415 = vadd.f32 %v3901, %v4414
        %4416 = vmatprep.mubr.bf16.mxu0 0
        %4417 = vmatmul.mubr.bf16.gmra.mxu0 %v3809
        %v4418 = vpop.f32.mrf.mxu0
        %v4419 = vadd.f32 %v3897, %v4418
        %v4420 = vpop.f32.mrf.mxu0
        %v4421 = vadd.f32 %v3901, %v4420
        %v4422 = vpop.f32.mrf.mxu0
        %v4423 = vadd.f32 %v3897, %v4422
        %v4424 = vpop.f32.mrf.mxu0
        %v4425 = vadd.f32 %v3901, %v4424
        %4426 = vmatprep.mubr.bf16.mxu0 0
        %4427 = vmatmul.mubr.bf16.gmra.mxu0 %v3810
        %v4428 = vpop.f32.mrf.mxu0
        %v4429 = vadd.f32 %v3897, %v4428
        %v4430 = vpop.f32.mrf.mxu0
        %v4431 = vadd.f32 %v3901, %v4430
        %v4432 = vpop.f32.mrf.mxu0
        %v4433 = vadd.f32 %v3897, %v4432
        %v4434 = vpop.f32.mrf.mxu0
        %v4435 = vadd.f32 %v3901, %v4434
        %4436 = vmatprep.mubr.bf16.mxu0 0
        %4437 = vmatmul.mubr.bf16.gmra.mxu0 %v3811
        %v4438 = vpop.f32.mrf.mxu0
        %v4439 = vadd.f32 %v3897, %v4438
        %v4440 = vpop.f32.mrf.mxu0
        %v4441 = vadd.f32 %v3901, %v4440
        %v4442 = vpop.f32.mrf.mxu0
        %v4443 = vadd.f32 %v3897, %v4442
        %v4444 = vpop.f32.mrf.mxu0
        %v4445 = vadd.f32 %v3901, %v4444
        %4446 = vmatprep.mubr.bf16.mxu0 0
        %4447 = vmatmul.mubr.bf16.gmra.mxu0 %v3812
        %v4448 = vpop.f32.mrf.mxu0
        %v4449 = vadd.f32 %v3897, %v4448
        %v4450 = vpop.f32.mrf.mxu0
        %v4451 = vadd.f32 %v3901, %v4450
        %v4452 = vpop.f32.mrf.mxu0
        %v4453 = vadd.f32 %v3897, %v4452
        %v4454 = vpop.f32.mrf.mxu0
        %v4455 = vadd.f32 %v3901, %v4454
        %4456 = vmatprep.mubr.bf16.mxu0 0
        %4457 = vmatmul.mubr.bf16.gmra.mxu0 %v3813
        %v4458 = vpop.f32.mrf.mxu0
        %v4459 = vadd.f32 %v3897, %v4458
        %v4460 = vpop.f32.mrf.mxu0
        %v4461 = vadd.f32 %v3901, %v4460
        %v4462 = vpop.f32.mrf.mxu0
        %v4463 = vadd.f32 %v3897, %v4462
        %v4464 = vpop.f32.mrf.mxu0
        %v4465 = vadd.f32 %v3901, %v4464
        %4466 = vmatprep.mubr.bf16.mxu0 0
        %4467 = vmatmul.mubr.bf16.gmra.mxu0 %v3814
        %v4468 = vpop.f32.mrf.mxu0
        %v4469 = vadd.f32 %v3897, %v4468
        %v4470 = vpop.f32.mrf.mxu0
        %v4471 = vadd.f32 %v3901, %v4470
        %v4472 = vpop.f32.mrf.mxu0
        %v4473 = vadd.f32 %v3897, %v4472
        %v4474 = vpop.f32.mrf.mxu0
        %v4475 = vadd.f32 %v3901, %v4474
        %4476 = vmatprep.mubr.bf16.mxu0 0
        %4477 = vmatmul.mubr.bf16.gmra.mxu0 %v3815
        %v4478 = vpop.f32.mrf.mxu0
        %v4479 = vadd.f32 %v3897, %v4478
        %v4480 = vpop.f32.mrf.mxu0
        %v4481 = vadd.f32 %v3901, %v4480
        %v4482 = vpop.f32.mrf.mxu0
        %v4483 = vadd.f32 %v3897, %v4482
        %v4484 = vpop.f32.mrf.mxu0
        %v4485 = vadd.f32 %v3901, %v4484
        %4486 = vmatprep.mubr.bf16.mxu0 0
        %4487 = vmatmul.mubr.bf16.gmra.mxu0 %v3816
        %v4488 = vpop.f32.mrf.mxu0
        %v4489 = vadd.f32 %v3897, %v4488
        %v4490 = vpop.f32.mrf.mxu0
        %v4491 = vadd.f32 %v3901, %v4490
        %v4492 = vpop.f32.mrf.mxu0
        %v4493 = vadd.f32 %v3897, %v4492
        %v4494 = vpop.f32.mrf.mxu0
        %v4495 = vadd.f32 %v3901, %v4494
        %4496 = vmatprep.mubr.bf16.mxu0 0
        %4497 = vmatmul.mubr.bf16.gmra.mxu0 %v3817
        %v4498 = vpop.f32.mrf.mxu0
        %v4499 = vadd.f32 %v3897, %v4498
        %v4500 = vpop.f32.mrf.mxu0
        %v4501 = vadd.f32 %v3901, %v4500
        %v4502 = vpop.f32.mrf.mxu0
        %v4503 = vadd.f32 %v3897, %v4502
        %v4504 = vpop.f32.mrf.mxu0
        %v4505 = vadd.f32 %v3901, %v4504
        %4506 = vmatprep.mubr.bf16.mxu0 0
        %4507 = vmatmul.mubr.bf16.gmra.mxu0 %v3818
        %v4508 = vpop.f32.mrf.mxu0
        %v4509 = vadd.f32 %v3897, %v4508
        %v4510 = vpop.f32.mrf.mxu0
        %v4511 = vadd.f32 %v3901, %v4510
        %v4512 = vpop.f32.mrf.mxu0
        %v4513 = vadd.f32 %v3897, %v4512
        %v4514 = vpop.f32.mrf.mxu0
        %v4515 = vadd.f32 %v3901, %v4514
        %4516 = vmatprep.mubr.bf16.mxu0 0
        %4517 = vmatmul.mubr.bf16.gmra.mxu0 %v3819
        %v4518 = vpop.f32.mrf.mxu0
        %v4519 = vadd.f32 %v3897, %v4518
        %v4520 = vpop.f32.mrf.mxu0
        %v4521 = vadd.f32 %v3901, %v4520
        %v4522 = vpop.f32.mrf.mxu0
        %v4523 = vadd.f32 %v3897, %v4522
        %v4524 = vpop.f32.mrf.mxu0
        %v4525 = vadd.f32 %v3901, %v4524
        %4526 = vmatprep.mubr.bf16.mxu0 0
        %4527 = vmatmul.mubr.bf16.gmra.mxu0 %v3820
        %v4528 = vpop.f32.mrf.mxu0
        %v4529 = vadd.f32 %v3897, %v4528
        %v4530 = vpop.f32.mrf.mxu0
        %v4531 = vadd.f32 %v3901, %v4530
        %v4532 = vpop.f32.mrf.mxu0
        %v4533 = vadd.f32 %v3897, %v4532
        %v4534 = vpop.f32.mrf.mxu0
        %v4535 = vadd.f32 %v3901, %v4534
        %4536 = vmatprep.mubr.bf16.mxu0 0
        %4537 = vmatmul.mubr.bf16.gmra.mxu0 %v3821
        %v4538 = vpop.f32.mrf.mxu0
        %v4539 = vadd.f32 %v3897, %v4538
        %v4540 = vpop.f32.mrf.mxu0
        %v4541 = vadd.f32 %v3901, %v4540
        %v4542 = vpop.f32.mrf.mxu0
        %v4543 = vadd.f32 %v3897, %v4542
        %v4544 = vpop.f32.mrf.mxu0
        %v4545 = vadd.f32 %v3901, %v4544
        %4546 = vmatprep.mubr.bf16.mxu0 0
        %4547 = vmatmul.mubr.bf16.gmra.mxu0 %v3822
        %v4548 = vpop.f32.mrf.mxu0
        %v4549 = vadd.f32 %v3897, %v4548
        %v4550 = vpop.f32.mrf.mxu0
        %v4551 = vadd.f32 %v3901, %v4550
        %v4552 = vpop.f32.mrf.mxu0
        %v4553 = vadd.f32 %v3897, %v4552
        %v4554 = vpop.f32.mrf.mxu0
        %v4555 = vadd.f32 %v3901, %v4554
        %4556 = vmatprep.mubr.bf16.mxu0 0
        %4557 = vmatmul.mubr.bf16.gmra.mxu0 %v3823
        %v4558 = vpop.f32.mrf.mxu0
        %v4559 = vadd.f32 %v3897, %v4558
        %v4560 = vpop.f32.mrf.mxu0
        %v4561 = vadd.f32 %v3901, %v4560
        %v4562 = vpop.f32.mrf.mxu0
        %v4563 = vadd.f32 %v3897, %v4562
        %v4564 = vpop.f32.mrf.mxu0
        %v4565 = vadd.f32 %v3901, %v4564
        %4566 = vmatprep.mubr.bf16.mxu0 0
        %4567 = vmatmul.mubr.bf16.gmra.mxu0 %v3824
        %v4568 = vpop.f32.mrf.mxu0
        %v4569 = vadd.f32 %v3897, %v4568
        %v4570 = vpop.f32.mrf.mxu0
        %v4571 = vadd.f32 %v3901, %v4570
        %v4572 = vpop.f32.mrf.mxu0
        %v4573 = vadd.f32 %v3897, %v4572
        %v4574 = vpop.f32.mrf.mxu0
        %v4575 = vadd.f32 %v3901, %v4574
        %4576 = vmatprep.mubr.bf16.mxu0 0
        %4577 = vmatmul.mubr.bf16.gmra.mxu0 %v3825
        %v4578 = vpop.f32.mrf.mxu0
        %v4579 = vadd.f32 %v3897, %v4578
        %v4580 = vpop.f32.mrf.mxu0
        %v4581 = vadd.f32 %v3901, %v4580
        %v4582 = vpop.f32.mrf.mxu0
        %v4583 = vadd.f32 %v3897, %v4582
        %v4584 = vpop.f32.mrf.mxu0
        %v4585 = vadd.f32 %v3901, %v4584
        %4586 = vmatprep.mubr.bf16.mxu0 0
        %4587 = vmatmul.mubr.bf16.gmra.mxu0 %v3826
        %v4588 = vpop.f32.mrf.mxu0
        %v4589 = vadd.f32 %v3897, %v4588
        %v4590 = vpop.f32.mrf.mxu0
        %v4591 = vadd.f32 %v3901, %v4590
        %v4592 = vpop.f32.mrf.mxu0
        %v4593 = vadd.f32 %v3897, %v4592
        %v4594 = vpop.f32.mrf.mxu0
        %v4595 = vadd.f32 %v3901, %v4594
        %4596 = vmatprep.mubr.bf16.mxu0 0
        %4597 = vmatmul.mubr.bf16.gmra.mxu0 %v3827
        %v4598 = vpop.f32.mrf.mxu0
        %v4599 = vadd.f32 %v3897, %v4598
        %v4600 = vpop.f32.mrf.mxu0
        %v4601 = vadd.f32 %v3901, %v4600
        %v4602 = vpop.f32.mrf.mxu0
        %v4603 = vadd.f32 %v3897, %v4602
        %v4604 = vpop.f32.mrf.mxu0
        %v4605 = vadd.f32 %v3901, %v4604
        %4606 = vdwg.mxu0
        %4607 = vmatprep.subr.bf16.mxu0 %v4185
        %4608 = vmatpush1.bf16.msra.mxu0 %v4184
        %4609 = vmatprep.subr.bf16.mxu0 %v4177
        %4610 = vmatpush1.bf16.msra.mxu0 %v4176
        %4611 = vmatprep.subr.bf16.mxu0 %v4169
        %4612 = vmatpush1.bf16.msra.mxu0 %v4168
        %4613 = vmatprep.subr.bf16.mxu0 %v4161
        %4614 = vmatpush1.bf16.msra.mxu0 %v4160
        %4615 = vmatprep.subr.bf16.mxu0 %v4153
        %4616 = vmatpush1.bf16.msra.mxu0 %v4152
        %4617 = vmatprep.subr.bf16.mxu0 %v4145
        %4618 = vmatpush1.bf16.msra.mxu0 %v4144
        %4619 = vmatprep.subr.bf16.mxu0 %v4137
        %4620 = vmatpush1.bf16.msra.mxu0 %v4136
        %4621 = vmatprep.subr.bf16.mxu0 %v4129
        %4622 = vmatpush1.bf16.msra.mxu0 %v4128
        %4623 = vmatprep.subr.bf16.mxu0 0
        %4624 = vmatpush2.bf16.msra.mxu0 0
        %4625 = vmatprep.subr.bf16.mxu0 0
        %4626 = vmatpush2.bf16.msra.mxu0 0
        %4627 = vmatprep.subr.bf16.mxu0 0
        %4628 = vmatpush2.bf16.msra.mxu0 0
        %4629 = vmatprep.subr.bf16.mxu0 0
        %4630 = vmatpush2.bf16.msra.mxu0 0
        %4631 = vmatprep.subr.bf16.mxu0 0
        %4632 = vmatpush2.bf16.msra.mxu0 0
        %4633 = vmatprep.subr.bf16.mxu0 0
        %4634 = vmatpush2.bf16.msra.mxu0 0
        %4635 = vmatprep.subr.bf16.mxu0 0
        %4636 = vmatpush2.bf16.msra.mxu0 0
        %4637 = vmatprep.subr.bf16.mxu0 0
        %4638 = vmatpush2.bf16.msra.mxu0 0
        %4639 = vmatprep.mubr.bf16.mxu0 0
        %4640 = vmatmul.mubr.bf16.gmra.mxu0 %v3796
        %v4641 = vpop.f32.mrf.mxu0
        %v4642 = vadd.f32 %v3905, %v4641
        %v4643 = vpop.f32.mrf.mxu0
        %v4644 = vadd.f32 %v3909, %v4643
        %v4645 = vpop.f32.mrf.mxu0
        %v4646 = vadd.f32 %v3905, %v4645
        %v4647 = vpop.f32.mrf.mxu0
        %v4648 = vadd.f32 %v3909, %v4647
        %4649 = vmatprep.mubr.bf16.mxu0 0
        %4650 = vmatmul.mubr.bf16.gmra.mxu0 %v3797
        %v4651 = vpop.f32.mrf.mxu0
        %v4652 = vadd.f32 %v3905, %v4651
        %v4653 = vpop.f32.mrf.mxu0
        %v4654 = vadd.f32 %v3909, %v4653
        %v4655 = vpop.f32.mrf.mxu0
        %v4656 = vadd.f32 %v3905, %v4655
        %v4657 = vpop.f32.mrf.mxu0
        %v4658 = vadd.f32 %v3909, %v4657
        %4659 = vmatprep.mubr.bf16.mxu0 0
        %4660 = vmatmul.mubr.bf16.gmra.mxu0 %v3798
        %v4661 = vpop.f32.mrf.mxu0
        %v4662 = vadd.f32 %v3905, %v4661
        %v4663 = vpop.f32.mrf.mxu0
        %v4664 = vadd.f32 %v3909, %v4663
        %v4665 = vpop.f32.mrf.mxu0
        %v4666 = vadd.f32 %v3905, %v4665
        %v4667 = vpop.f32.mrf.mxu0
        %v4668 = vadd.f32 %v3909, %v4667
        %4669 = vmatprep.mubr.bf16.mxu0 0
        %4670 = vmatmul.mubr.bf16.gmra.mxu0 %v3799
        %v4671 = vpop.f32.mrf.mxu0
        %v4672 = vadd.f32 %v3905, %v4671
        %v4673 = vpop.f32.mrf.mxu0
        %v4674 = vadd.f32 %v3909, %v4673
        %v4675 = vpop.f32.mrf.mxu0
        %v4676 = vadd.f32 %v3905, %v4675
        %v4677 = vpop.f32.mrf.mxu0
        %v4678 = vadd.f32 %v3909, %v4677
        %4679 = vmatprep.mubr.bf16.mxu0 0
        %4680 = vmatmul.mubr.bf16.gmra.mxu0 %v3800
        %v4681 = vpop.f32.mrf.mxu0
        %v4682 = vadd.f32 %v3905, %v4681
        %v4683 = vpop.f32.mrf.mxu0
        %v4684 = vadd.f32 %v3909, %v4683
        %v4685 = vpop.f32.mrf.mxu0
        %v4686 = vadd.f32 %v3905, %v4685
        %v4687 = vpop.f32.mrf.mxu0
        %v4688 = vadd.f32 %v3909, %v4687
        %4689 = vmatprep.mubr.bf16.mxu0 0
        %4690 = vmatmul.mubr.bf16.gmra.mxu0 %v3801
        %v4691 = vpop.f32.mrf.mxu0
        %v4692 = vadd.f32 %v3905, %v4691
        %v4693 = vpop.f32.mrf.mxu0
        %v4694 = vadd.f32 %v3909, %v4693
        %v4695 = vpop.f32.mrf.mxu0
        %v4696 = vadd.f32 %v3905, %v4695
        %v4697 = vpop.f32.mrf.mxu0
        %v4698 = vadd.f32 %v3909, %v4697
        %4699 = vmatprep.mubr.bf16.mxu0 0
        %4700 = vmatmul.mubr.bf16.gmra.mxu0 %v3802
        %v4701 = vpop.f32.mrf.mxu0
        %v4702 = vadd.f32 %v3905, %v4701
        %v4703 = vpop.f32.mrf.mxu0
        %v4704 = vadd.f32 %v3909, %v4703
        %v4705 = vpop.f32.mrf.mxu0
        %v4706 = vadd.f32 %v3905, %v4705
        %v4707 = vpop.f32.mrf.mxu0
        %v4708 = vadd.f32 %v3909, %v4707
        %4709 = vmatprep.mubr.bf16.mxu0 0
        %4710 = vmatmul.mubr.bf16.gmra.mxu0 %v3803
        %v4711 = vpop.f32.mrf.mxu0
        %v4712 = vadd.f32 %v3905, %v4711
        %v4713 = vpop.f32.mrf.mxu0
        %v4714 = vadd.f32 %v3909, %v4713
        %v4715 = vpop.f32.mrf.mxu0
        %v4716 = vadd.f32 %v3905, %v4715
        %v4717 = vpop.f32.mrf.mxu0
        %v4718 = vadd.f32 %v3909, %v4717
        %4719 = vmatprep.mubr.bf16.mxu0 0
        %4720 = vmatmul.mubr.bf16.gmra.mxu0 %v3804
        %v4721 = vpop.f32.mrf.mxu0
        %v4722 = vadd.f32 %v3905, %v4721
        %v4723 = vpop.f32.mrf.mxu0
        %v4724 = vadd.f32 %v3909, %v4723
        %v4725 = vpop.f32.mrf.mxu0
        %v4726 = vadd.f32 %v3905, %v4725
        %v4727 = vpop.f32.mrf.mxu0
        %v4728 = vadd.f32 %v3909, %v4727
        %4729 = vmatprep.mubr.bf16.mxu0 0
        %4730 = vmatmul.mubr.bf16.gmra.mxu0 %v3805
        %v4731 = vpop.f32.mrf.mxu0
        %v4732 = vadd.f32 %v3905, %v4731
        %v4733 = vpop.f32.mrf.mxu0
        %v4734 = vadd.f32 %v3909, %v4733
        %v4735 = vpop.f32.mrf.mxu0
        %v4736 = vadd.f32 %v3905, %v4735
        %v4737 = vpop.f32.mrf.mxu0
        %v4738 = vadd.f32 %v3909, %v4737
        %4739 = vmatprep.mubr.bf16.mxu0 0
        %4740 = vmatmul.mubr.bf16.gmra.mxu0 %v3806
        %v4741 = vpop.f32.mrf.mxu0
        %v4742 = vadd.f32 %v3905, %v4741
        %v4743 = vpop.f32.mrf.mxu0
        %v4744 = vadd.f32 %v3909, %v4743
        %v4745 = vpop.f32.mrf.mxu0
        %v4746 = vadd.f32 %v3905, %v4745
        %v4747 = vpop.f32.mrf.mxu0
        %v4748 = vadd.f32 %v3909, %v4747
        %4749 = vmatprep.mubr.bf16.mxu0 0
        %4750 = vmatmul.mubr.bf16.gmra.mxu0 %v3807
        %v4751 = vpop.f32.mrf.mxu0
        %v4752 = vadd.f32 %v3905, %v4751
        %v4753 = vpop.f32.mrf.mxu0
        %v4754 = vadd.f32 %v3909, %v4753
        %v4755 = vpop.f32.mrf.mxu0
        %v4756 = vadd.f32 %v3905, %v4755
        %v4757 = vpop.f32.mrf.mxu0
        %v4758 = vadd.f32 %v3909, %v4757
        %4759 = vmatprep.mubr.bf16.mxu0 0
        %4760 = vmatmul.mubr.bf16.gmra.mxu0 %v3808
        %v4761 = vpop.f32.mrf.mxu0
        %v4762 = vadd.f32 %v3905, %v4761
        %v4763 = vpop.f32.mrf.mxu0
        %v4764 = vadd.f32 %v3909, %v4763
        %v4765 = vpop.f32.mrf.mxu0
        %v4766 = vadd.f32 %v3905, %v4765
        %v4767 = vpop.f32.mrf.mxu0
        %v4768 = vadd.f32 %v3909, %v4767
        %4769 = vmatprep.mubr.bf16.mxu0 0
        %4770 = vmatmul.mubr.bf16.gmra.mxu0 %v3809
        %v4771 = vpop.f32.mrf.mxu0
        %v4772 = vadd.f32 %v3905, %v4771
        %v4773 = vpop.f32.mrf.mxu0
        %v4774 = vadd.f32 %v3909, %v4773
        %v4775 = vpop.f32.mrf.mxu0
        %v4776 = vadd.f32 %v3905, %v4775
        %v4777 = vpop.f32.mrf.mxu0
        %v4778 = vadd.f32 %v3909, %v4777
        %4779 = vmatprep.mubr.bf16.mxu0 0
        %4780 = vmatmul.mubr.bf16.gmra.mxu0 %v3810
        %v4781 = vpop.f32.mrf.mxu0
        %v4782 = vadd.f32 %v3905, %v4781
        %v4783 = vpop.f32.mrf.mxu0
        %v4784 = vadd.f32 %v3909, %v4783
        %v4785 = vpop.f32.mrf.mxu0
        %v4786 = vadd.f32 %v3905, %v4785
        %v4787 = vpop.f32.mrf.mxu0
        %v4788 = vadd.f32 %v3909, %v4787
        %4789 = vmatprep.mubr.bf16.mxu0 0
        %4790 = vmatmul.mubr.bf16.gmra.mxu0 %v3811
        %v4791 = vpop.f32.mrf.mxu0
        %v4792 = vadd.f32 %v3905, %v4791
        %v4793 = vpop.f32.mrf.mxu0
        %v4794 = vadd.f32 %v3909, %v4793
        %v4795 = vpop.f32.mrf.mxu0
        %v4796 = vadd.f32 %v3905, %v4795
        %v4797 = vpop.f32.mrf.mxu0
        %v4798 = vadd.f32 %v3909, %v4797
        %4799 = vmatprep.mubr.bf16.mxu0 0
        %4800 = vmatmul.mubr.bf16.gmra.mxu0 %v3812
        %v4801 = vpop.f32.mrf.mxu0
        %v4802 = vadd.f32 %v3905, %v4801
        %v4803 = vpop.f32.mrf.mxu0
        %v4804 = vadd.f32 %v3909, %v4803
        %v4805 = vpop.f32.mrf.mxu0
        %v4806 = vadd.f32 %v3905, %v4805
        %v4807 = vpop.f32.mrf.mxu0
        %v4808 = vadd.f32 %v3909, %v4807
        %4809 = vmatprep.mubr.bf16.mxu0 0
        %4810 = vmatmul.mubr.bf16.gmra.mxu0 %v3813
        %v4811 = vpop.f32.mrf.mxu0
        %v4812 = vadd.f32 %v3905, %v4811
        %v4813 = vpop.f32.mrf.mxu0
        %v4814 = vadd.f32 %v3909, %v4813
        %v4815 = vpop.f32.mrf.mxu0
        %v4816 = vadd.f32 %v3905, %v4815
        %v4817 = vpop.f32.mrf.mxu0
        %v4818 = vadd.f32 %v3909, %v4817
        %4819 = vmatprep.mubr.bf16.mxu0 0
        %4820 = vmatmul.mubr.bf16.gmra.mxu0 %v3814
        %v4821 = vpop.f32.mrf.mxu0
        %v4822 = vadd.f32 %v3905, %v4821
        %v4823 = vpop.f32.mrf.mxu0
        %v4824 = vadd.f32 %v3909, %v4823
        %v4825 = vpop.f32.mrf.mxu0
        %v4826 = vadd.f32 %v3905, %v4825
        %v4827 = vpop.f32.mrf.mxu0
        %v4828 = vadd.f32 %v3909, %v4827
        %4829 = vmatprep.mubr.bf16.mxu0 0
        %4830 = vmatmul.mubr.bf16.gmra.mxu0 %v3815
        %v4831 = vpop.f32.mrf.mxu0
        %v4832 = vadd.f32 %v3905, %v4831
        %v4833 = vpop.f32.mrf.mxu0
        %v4834 = vadd.f32 %v3909, %v4833
        %v4835 = vpop.f32.mrf.mxu0
        %v4836 = vadd.f32 %v3905, %v4835
        %v4837 = vpop.f32.mrf.mxu0
        %v4838 = vadd.f32 %v3909, %v4837
        %4839 = vmatprep.mubr.bf16.mxu0 0
        %4840 = vmatmul.mubr.bf16.gmra.mxu0 %v3816
        %v4841 = vpop.f32.mrf.mxu0
        %v4842 = vadd.f32 %v3905, %v4841
        %v4843 = vpop.f32.mrf.mxu0
        %v4844 = vadd.f32 %v3909, %v4843
        %v4845 = vpop.f32.mrf.mxu0
        %v4846 = vadd.f32 %v3905, %v4845
        %v4847 = vpop.f32.mrf.mxu0
        %v4848 = vadd.f32 %v3909, %v4847
        %4849 = vmatprep.mubr.bf16.mxu0 0
        %4850 = vmatmul.mubr.bf16.gmra.mxu0 %v3817
        %v4851 = vpop.f32.mrf.mxu0
        %v4852 = vadd.f32 %v3905, %v4851
        %v4853 = vpop.f32.mrf.mxu0
        %v4854 = vadd.f32 %v3909, %v4853
        %v4855 = vpop.f32.mrf.mxu0
        %v4856 = vadd.f32 %v3905, %v4855
        %v4857 = vpop.f32.mrf.mxu0
        %v4858 = vadd.f32 %v3909, %v4857
        %4859 = vmatprep.mubr.bf16.mxu0 0
        %4860 = vmatmul.mubr.bf16.gmra.mxu0 %v3818
        %v4861 = vpop.f32.mrf.mxu0
        %v4862 = vadd.f32 %v3905, %v4861
        %v4863 = vpop.f32.mrf.mxu0
        %v4864 = vadd.f32 %v3909, %v4863
        %v4865 = vpop.f32.mrf.mxu0
        %v4866 = vadd.f32 %v3905, %v4865
        %v4867 = vpop.f32.mrf.mxu0
        %v4868 = vadd.f32 %v3909, %v4867
        %4869 = vmatprep.mubr.bf16.mxu0 0
        %4870 = vmatmul.mubr.bf16.gmra.mxu0 %v3819
        %v4871 = vpop.f32.mrf.mxu0
        %v4872 = vadd.f32 %v3905, %v4871
        %v4873 = vpop.f32.mrf.mxu0
        %v4874 = vadd.f32 %v3909, %v4873
        %v4875 = vpop.f32.mrf.mxu0
        %v4876 = vadd.f32 %v3905, %v4875
        %v4877 = vpop.f32.mrf.mxu0
        %v4878 = vadd.f32 %v3909, %v4877
        %4879 = vmatprep.mubr.bf16.mxu0 0
        %4880 = vmatmul.mubr.bf16.gmra.mxu0 %v3820
        %v4881 = vpop.f32.mrf.mxu0
        %v4882 = vadd.f32 %v3905, %v4881
        %v4883 = vpop.f32.mrf.mxu0
        %v4884 = vadd.f32 %v3909, %v4883
        %v4885 = vpop.f32.mrf.mxu0
        %v4886 = vadd.f32 %v3905, %v4885
        %v4887 = vpop.f32.mrf.mxu0
        %v4888 = vadd.f32 %v3909, %v4887
        %4889 = vmatprep.mubr.bf16.mxu0 0
        %4890 = vmatmul.mubr.bf16.gmra.mxu0 %v3821
        %v4891 = vpop.f32.mrf.mxu0
        %v4892 = vadd.f32 %v3905, %v4891
        %v4893 = vpop.f32.mrf.mxu0
        %v4894 = vadd.f32 %v3909, %v4893
        %v4895 = vpop.f32.mrf.mxu0
        %v4896 = vadd.f32 %v3905, %v4895
        %v4897 = vpop.f32.mrf.mxu0
        %v4898 = vadd.f32 %v3909, %v4897
        %4899 = vmatprep.mubr.bf16.mxu0 0
        %4900 = vmatmul.mubr.bf16.gmra.mxu0 %v3822
        %v4901 = vpop.f32.mrf.mxu0
        %v4902 = vadd.f32 %v3905, %v4901
        %v4903 = vpop.f32.mrf.mxu0
        %v4904 = vadd.f32 %v3909, %v4903
        %v4905 = vpop.f32.mrf.mxu0
        %v4906 = vadd.f32 %v3905, %v4905
        %v4907 = vpop.f32.mrf.mxu0
        %v4908 = vadd.f32 %v3909, %v4907
        %4909 = vmatprep.mubr.bf16.mxu0 0
        %4910 = vmatmul.mubr.bf16.gmra.mxu0 %v3823
        %v4911 = vpop.f32.mrf.mxu0
        %v4912 = vadd.f32 %v3905, %v4911
        %v4913 = vpop.f32.mrf.mxu0
        %v4914 = vadd.f32 %v3909, %v4913
        %v4915 = vpop.f32.mrf.mxu0
        %v4916 = vadd.f32 %v3905, %v4915
        %v4917 = vpop.f32.mrf.mxu0
        %v4918 = vadd.f32 %v3909, %v4917
        %4919 = vmatprep.mubr.bf16.mxu0 0
        %4920 = vmatmul.mubr.bf16.gmra.mxu0 %v3824
        %v4921 = vpop.f32.mrf.mxu0
        %v4922 = vadd.f32 %v3905, %v4921
        %v4923 = vpop.f32.mrf.mxu0
        %v4924 = vadd.f32 %v3909, %v4923
        %v4925 = vpop.f32.mrf.mxu0
        %v4926 = vadd.f32 %v3905, %v4925
        %v4927 = vpop.f32.mrf.mxu0
        %v4928 = vadd.f32 %v3909, %v4927
        %4929 = vmatprep.mubr.bf16.mxu0 0
        %4930 = vmatmul.mubr.bf16.gmra.mxu0 %v3825
        %v4931 = vpop.f32.mrf.mxu0
        %v4932 = vadd.f32 %v3905, %v4931
        %v4933 = vpop.f32.mrf.mxu0
        %v4934 = vadd.f32 %v3909, %v4933
        %v4935 = vpop.f32.mrf.mxu0
        %v4936 = vadd.f32 %v3905, %v4935
        %v4937 = vpop.f32.mrf.mxu0
        %v4938 = vadd.f32 %v3909, %v4937
        %4939 = vmatprep.mubr.bf16.mxu0 0
        %4940 = vmatmul.mubr.bf16.gmra.mxu0 %v3826
        %v4941 = vpop.f32.mrf.mxu0
        %v4942 = vadd.f32 %v3905, %v4941
        %v4943 = vpop.f32.mrf.mxu0
        %v4944 = vadd.f32 %v3909, %v4943
        %v4945 = vpop.f32.mrf.mxu0
        %v4946 = vadd.f32 %v3905, %v4945
        %v4947 = vpop.f32.mrf.mxu0
        %v4948 = vadd.f32 %v3909, %v4947
        %4949 = vmatprep.mubr.bf16.mxu0 0
        %4950 = vmatmul.mubr.bf16.gmra.mxu0 %v3827
        %v4951 = vpop.f32.mrf.mxu0
        %v4952 = vadd.f32 %v3905, %v4951
        %v4953 = vpop.f32.mrf.mxu0
        %v4954 = vadd.f32 %v3909, %v4953
        %v4955 = vpop.f32.mrf.mxu0
        %v4956 = vadd.f32 %v3905, %v4955
        %v4957 = vpop.f32.mrf.mxu0
        %v4958 = vadd.f32 %v3909, %v4957
        %4959 = vdwg.mxu0
        %4960 = vmatprep.subr.bf16.mxu0 %v4187
        %4961 = vmatpush1.bf16.msra.mxu0 %v4186
        %4962 = vmatprep.subr.bf16.mxu0 %v4179
        %4963 = vmatpush1.bf16.msra.mxu0 %v4178
        %4964 = vmatprep.subr.bf16.mxu0 %v4171
        %4965 = vmatpush1.bf16.msra.mxu0 %v4170
        %4966 = vmatprep.subr.bf16.mxu0 %v4163
        %4967 = vmatpush1.bf16.msra.mxu0 %v4162
        %4968 = vmatprep.subr.bf16.mxu0 %v4155
        %4969 = vmatpush1.bf16.msra.mxu0 %v4154
        %4970 = vmatprep.subr.bf16.mxu0 %v4147
        %4971 = vmatpush1.bf16.msra.mxu0 %v4146
        %4972 = vmatprep.subr.bf16.mxu0 %v4139
        %4973 = vmatpush1.bf16.msra.mxu0 %v4138
        %4974 = vmatprep.subr.bf16.mxu0 %v4131
        %4975 = vmatpush1.bf16.msra.mxu0 %v4130
        %4976 = vmatprep.subr.bf16.mxu0 0
        %4977 = vmatpush2.bf16.msra.mxu0 0
        %4978 = vmatprep.subr.bf16.mxu0 0
        %4979 = vmatpush2.bf16.msra.mxu0 0
        %4980 = vmatprep.subr.bf16.mxu0 0
        %4981 = vmatpush2.bf16.msra.mxu0 0
        %4982 = vmatprep.subr.bf16.mxu0 0
        %4983 = vmatpush2.bf16.msra.mxu0 0
        %4984 = vmatprep.subr.bf16.mxu0 0
        %4985 = vmatpush2.bf16.msra.mxu0 0
        %4986 = vmatprep.subr.bf16.mxu0 0
        %4987 = vmatpush2.bf16.msra.mxu0 0
        %4988 = vmatprep.subr.bf16.mxu0 0
        %4989 = vmatpush2.bf16.msra.mxu0 0
        %4990 = vmatprep.subr.bf16.mxu0 0
        %4991 = vmatpush2.bf16.msra.mxu0 0
        %4992 = vmatprep.mubr.bf16.mxu0 0
        %4993 = vmatmul.mubr.bf16.gmra.mxu0 %v3796
        %v4994 = vpop.f32.mrf.mxu0
        %v4995 = vadd.f32 %v3913, %v4994
        %v4996 = vpop.f32.mrf.mxu0
        %v4997 = vadd.f32 %v3917, %v4996
        %v4998 = vpop.f32.mrf.mxu0
        %v4999 = vadd.f32 %v3913, %v4998
        %v5000 = vpop.f32.mrf.mxu0
        %v5001 = vadd.f32 %v3917, %v5000
        %5002 = vmatprep.mubr.bf16.mxu0 0
        %5003 = vmatmul.mubr.bf16.gmra.mxu0 %v3797
        %v5004 = vpop.f32.mrf.mxu0
        %v5005 = vadd.f32 %v3913, %v5004
        %v5006 = vpop.f32.mrf.mxu0
        %v5007 = vadd.f32 %v3917, %v5006
        %v5008 = vpop.f32.mrf.mxu0
        %v5009 = vadd.f32 %v3913, %v5008
        %v5010 = vpop.f32.mrf.mxu0
        %v5011 = vadd.f32 %v3917, %v5010
        %5012 = vmatprep.mubr.bf16.mxu0 0
        %5013 = vmatmul.mubr.bf16.gmra.mxu0 %v3798
        %v5014 = vpop.f32.mrf.mxu0
        %v5015 = vadd.f32 %v3913, %v5014
        %v5016 = vpop.f32.mrf.mxu0
        %v5017 = vadd.f32 %v3917, %v5016
        %v5018 = vpop.f32.mrf.mxu0
        %v5019 = vadd.f32 %v3913, %v5018
        %v5020 = vpop.f32.mrf.mxu0
        %v5021 = vadd.f32 %v3917, %v5020
        %5022 = vmatprep.mubr.bf16.mxu0 0
        %5023 = vmatmul.mubr.bf16.gmra.mxu0 %v3799
        %v5024 = vpop.f32.mrf.mxu0
        %v5025 = vadd.f32 %v3913, %v5024
        %v5026 = vpop.f32.mrf.mxu0
        %v5027 = vadd.f32 %v3917, %v5026
        %v5028 = vpop.f32.mrf.mxu0
        %v5029 = vadd.f32 %v3913, %v5028
        %v5030 = vpop.f32.mrf.mxu0
        %v5031 = vadd.f32 %v3917, %v5030
        %5032 = vmatprep.mubr.bf16.mxu0 0
        %5033 = vmatmul.mubr.bf16.gmra.mxu0 %v3800
        %v5034 = vpop.f32.mrf.mxu0
        %v5035 = vadd.f32 %v3913, %v5034
        %v5036 = vpop.f32.mrf.mxu0
        %v5037 = vadd.f32 %v3917, %v5036
        %v5038 = vpop.f32.mrf.mxu0
        %v5039 = vadd.f32 %v3913, %v5038
        %v5040 = vpop.f32.mrf.mxu0
        %v5041 = vadd.f32 %v3917, %v5040
        %5042 = vmatprep.mubr.bf16.mxu0 0
        %5043 = vmatmul.mubr.bf16.gmra.mxu0 %v3801
        %v5044 = vpop.f32.mrf.mxu0
        %v5045 = vadd.f32 %v3913, %v5044
        %v5046 = vpop.f32.mrf.mxu0
        %v5047 = vadd.f32 %v3917, %v5046
        %v5048 = vpop.f32.mrf.mxu0
        %v5049 = vadd.f32 %v3913, %v5048
        %v5050 = vpop.f32.mrf.mxu0
        %v5051 = vadd.f32 %v3917, %v5050
        %5052 = vmatprep.mubr.bf16.mxu0 0
        %5053 = vmatmul.mubr.bf16.gmra.mxu0 %v3802
        %v5054 = vpop.f32.mrf.mxu0
        %v5055 = vadd.f32 %v3913, %v5054
        %v5056 = vpop.f32.mrf.mxu0
        %v5057 = vadd.f32 %v3917, %v5056
        %v5058 = vpop.f32.mrf.mxu0
        %v5059 = vadd.f32 %v3913, %v5058
        %v5060 = vpop.f32.mrf.mxu0
        %v5061 = vadd.f32 %v3917, %v5060
        %5062 = vmatprep.mubr.bf16.mxu0 0
        %5063 = vmatmul.mubr.bf16.gmra.mxu0 %v3803
        %v5064 = vpop.f32.mrf.mxu0
        %v5065 = vadd.f32 %v3913, %v5064
        %v5066 = vpop.f32.mrf.mxu0
        %v5067 = vadd.f32 %v3917, %v5066
        %v5068 = vpop.f32.mrf.mxu0
        %v5069 = vadd.f32 %v3913, %v5068
        %v5070 = vpop.f32.mrf.mxu0
        %v5071 = vadd.f32 %v3917, %v5070
        %5072 = vmatprep.mubr.bf16.mxu0 0
        %5073 = vmatmul.mubr.bf16.gmra.mxu0 %v3804
        %v5074 = vpop.f32.mrf.mxu0
        %v5075 = vadd.f32 %v3913, %v5074
        %v5076 = vpop.f32.mrf.mxu0
        %v5077 = vadd.f32 %v3917, %v5076
        %v5078 = vpop.f32.mrf.mxu0
        %v5079 = vadd.f32 %v3913, %v5078
        %v5080 = vpop.f32.mrf.mxu0
        %v5081 = vadd.f32 %v3917, %v5080
        %5082 = vmatprep.mubr.bf16.mxu0 0
        %5083 = vmatmul.mubr.bf16.gmra.mxu0 %v3805
        %v5084 = vpop.f32.mrf.mxu0
        %v5085 = vadd.f32 %v3913, %v5084
        %v5086 = vpop.f32.mrf.mxu0
        %v5087 = vadd.f32 %v3917, %v5086
        %v5088 = vpop.f32.mrf.mxu0
        %v5089 = vadd.f32 %v3913, %v5088
        %v5090 = vpop.f32.mrf.mxu0
        %v5091 = vadd.f32 %v3917, %v5090
        %5092 = vmatprep.mubr.bf16.mxu0 0
        %5093 = vmatmul.mubr.bf16.gmra.mxu0 %v3806
        %v5094 = vpop.f32.mrf.mxu0
        %v5095 = vadd.f32 %v3913, %v5094
        %v5096 = vpop.f32.mrf.mxu0
        %v5097 = vadd.f32 %v3917, %v5096
        %v5098 = vpop.f32.mrf.mxu0
        %v5099 = vadd.f32 %v3913, %v5098
        %v5100 = vpop.f32.mrf.mxu0
        %v5101 = vadd.f32 %v3917, %v5100
        %5102 = vmatprep.mubr.bf16.mxu0 0
        %5103 = vmatmul.mubr.bf16.gmra.mxu0 %v3807
        %v5104 = vpop.f32.mrf.mxu0
        %v5105 = vadd.f32 %v3913, %v5104
        %v5106 = vpop.f32.mrf.mxu0
        %v5107 = vadd.f32 %v3917, %v5106
        %v5108 = vpop.f32.mrf.mxu0
        %v5109 = vadd.f32 %v3913, %v5108
        %v5110 = vpop.f32.mrf.mxu0
        %v5111 = vadd.f32 %v3917, %v5110
        %5112 = vmatprep.mubr.bf16.mxu0 0
        %5113 = vmatmul.mubr.bf16.gmra.mxu0 %v3808
        %v5114 = vpop.f32.mrf.mxu0
        %v5115 = vadd.f32 %v3913, %v5114
        %v5116 = vpop.f32.mrf.mxu0
        %v5117 = vadd.f32 %v3917, %v5116
        %v5118 = vpop.f32.mrf.mxu0
        %v5119 = vadd.f32 %v3913, %v5118
        %v5120 = vpop.f32.mrf.mxu0
        %v5121 = vadd.f32 %v3917, %v5120
        %5122 = vmatprep.mubr.bf16.mxu0 0
        %5123 = vmatmul.mubr.bf16.gmra.mxu0 %v3809
        %v5124 = vpop.f32.mrf.mxu0
        %v5125 = vadd.f32 %v3913, %v5124
        %v5126 = vpop.f32.mrf.mxu0
        %v5127 = vadd.f32 %v3917, %v5126
        %v5128 = vpop.f32.mrf.mxu0
        %v5129 = vadd.f32 %v3913, %v5128
        %v5130 = vpop.f32.mrf.mxu0
        %v5131 = vadd.f32 %v3917, %v5130
        %5132 = vmatprep.mubr.bf16.mxu0 0
        %5133 = vmatmul.mubr.bf16.gmra.mxu0 %v3810
        %v5134 = vpop.f32.mrf.mxu0
        %v5135 = vadd.f32 %v3913, %v5134
        %v5136 = vpop.f32.mrf.mxu0
        %v5137 = vadd.f32 %v3917, %v5136
        %v5138 = vpop.f32.mrf.mxu0
        %v5139 = vadd.f32 %v3913, %v5138
        %v5140 = vpop.f32.mrf.mxu0
        %v5141 = vadd.f32 %v3917, %v5140
        %5142 = vmatprep.mubr.bf16.mxu0 0
        %5143 = vmatmul.mubr.bf16.gmra.mxu0 %v3811
        %v5144 = vpop.f32.mrf.mxu0
        %v5145 = vadd.f32 %v3913, %v5144
        %v5146 = vpop.f32.mrf.mxu0
        %v5147 = vadd.f32 %v3917, %v5146
        %v5148 = vpop.f32.mrf.mxu0
        %v5149 = vadd.f32 %v3913, %v5148
        %v5150 = vpop.f32.mrf.mxu0
        %v5151 = vadd.f32 %v3917, %v5150
        %5152 = vmatprep.mubr.bf16.mxu0 0
        %5153 = vmatmul.mubr.bf16.gmra.mxu0 %v3812
        %v5154 = vpop.f32.mrf.mxu0
        %v5155 = vadd.f32 %v3913, %v5154
        %v5156 = vpop.f32.mrf.mxu0
        %v5157 = vadd.f32 %v3917, %v5156
        %v5158 = vpop.f32.mrf.mxu0
        %v5159 = vadd.f32 %v3913, %v5158
        %v5160 = vpop.f32.mrf.mxu0
        %v5161 = vadd.f32 %v3917, %v5160
        %5162 = vmatprep.mubr.bf16.mxu0 0
        %5163 = vmatmul.mubr.bf16.gmra.mxu0 %v3813
        %v5164 = vpop.f32.mrf.mxu0
        %v5165 = vadd.f32 %v3913, %v5164
        %v5166 = vpop.f32.mrf.mxu0
        %v5167 = vadd.f32 %v3917, %v5166
        %v5168 = vpop.f32.mrf.mxu0
        %v5169 = vadd.f32 %v3913, %v5168
        %v5170 = vpop.f32.mrf.mxu0
        %v5171 = vadd.f32 %v3917, %v5170
        %5172 = vmatprep.mubr.bf16.mxu0 0
        %5173 = vmatmul.mubr.bf16.gmra.mxu0 %v3814
        %v5174 = vpop.f32.mrf.mxu0
        %v5175 = vadd.f32 %v3913, %v5174
        %v5176 = vpop.f32.mrf.mxu0
        %v5177 = vadd.f32 %v3917, %v5176
        %v5178 = vpop.f32.mrf.mxu0
        %v5179 = vadd.f32 %v3913, %v5178
        %v5180 = vpop.f32.mrf.mxu0
        %v5181 = vadd.f32 %v3917, %v5180
        %5182 = vmatprep.mubr.bf16.mxu0 0
        %5183 = vmatmul.mubr.bf16.gmra.mxu0 %v3815
        %v5184 = vpop.f32.mrf.mxu0
        %v5185 = vadd.f32 %v3913, %v5184
        %v5186 = vpop.f32.mrf.mxu0
        %v5187 = vadd.f32 %v3917, %v5186
        %v5188 = vpop.f32.mrf.mxu0
        %v5189 = vadd.f32 %v3913, %v5188
        %v5190 = vpop.f32.mrf.mxu0
        %v5191 = vadd.f32 %v3917, %v5190
        %5192 = vmatprep.mubr.bf16.mxu0 0
        %5193 = vmatmul.mubr.bf16.gmra.mxu0 %v3816
        %v5194 = vpop.f32.mrf.mxu0
        %v5195 = vadd.f32 %v3913, %v5194
        %v5196 = vpop.f32.mrf.mxu0
        %v5197 = vadd.f32 %v3917, %v5196
        %v5198 = vpop.f32.mrf.mxu0
        %v5199 = vadd.f32 %v3913, %v5198
        %v5200 = vpop.f32.mrf.mxu0
        %v5201 = vadd.f32 %v3917, %v5200
        %5202 = vmatprep.mubr.bf16.mxu0 0
        %5203 = vmatmul.mubr.bf16.gmra.mxu0 %v3817
        %v5204 = vpop.f32.mrf.mxu0
        %v5205 = vadd.f32 %v3913, %v5204
        %v5206 = vpop.f32.mrf.mxu0
        %v5207 = vadd.f32 %v3917, %v5206
        %v5208 = vpop.f32.mrf.mxu0
        %v5209 = vadd.f32 %v3913, %v5208
        %v5210 = vpop.f32.mrf.mxu0
        %v5211 = vadd.f32 %v3917, %v5210
        %5212 = vmatprep.mubr.bf16.mxu0 0
        %5213 = vmatmul.mubr.bf16.gmra.mxu0 %v3818
        %v5214 = vpop.f32.mrf.mxu0
        %v5215 = vadd.f32 %v3913, %v5214
        %v5216 = vpop.f32.mrf.mxu0
        %v5217 = vadd.f32 %v3917, %v5216
        %v5218 = vpop.f32.mrf.mxu0
        %v5219 = vadd.f32 %v3913, %v5218
        %v5220 = vpop.f32.mrf.mxu0
        %v5221 = vadd.f32 %v3917, %v5220
        %5222 = vmatprep.mubr.bf16.mxu0 0
        %5223 = vmatmul.mubr.bf16.gmra.mxu0 %v3819
        %v5224 = vpop.f32.mrf.mxu0
        %v5225 = vadd.f32 %v3913, %v5224
        %v5226 = vpop.f32.mrf.mxu0
        %v5227 = vadd.f32 %v3917, %v5226
        %v5228 = vpop.f32.mrf.mxu0
        %v5229 = vadd.f32 %v3913, %v5228
        %v5230 = vpop.f32.mrf.mxu0
        %v5231 = vadd.f32 %v3917, %v5230
        %5232 = vmatprep.mubr.bf16.mxu0 0
        %5233 = vmatmul.mubr.bf16.gmra.mxu0 %v3820
        %v5234 = vpop.f32.mrf.mxu0
        %v5235 = vadd.f32 %v3913, %v5234
        %v5236 = vpop.f32.mrf.mxu0
        %v5237 = vadd.f32 %v3917, %v5236
        %v5238 = vpop.f32.mrf.mxu0
        %v5239 = vadd.f32 %v3913, %v5238
        %v5240 = vpop.f32.mrf.mxu0
        %v5241 = vadd.f32 %v3917, %v5240
        %5242 = vmatprep.mubr.bf16.mxu0 0
        %5243 = vmatmul.mubr.bf16.gmra.mxu0 %v3821
        %v5244 = vpop.f32.mrf.mxu0
        %v5245 = vadd.f32 %v3913, %v5244
        %v5246 = vpop.f32.mrf.mxu0
        %v5247 = vadd.f32 %v3917, %v5246
        %v5248 = vpop.f32.mrf.mxu0
        %v5249 = vadd.f32 %v3913, %v5248
        %v5250 = vpop.f32.mrf.mxu0
        %v5251 = vadd.f32 %v3917, %v5250
        %5252 = vmatprep.mubr.bf16.mxu0 0
        %5253 = vmatmul.mubr.bf16.gmra.mxu0 %v3822
        %v5254 = vpop.f32.mrf.mxu0
        %v5255 = vadd.f32 %v3913, %v5254
        %v5256 = vpop.f32.mrf.mxu0
        %v5257 = vadd.f32 %v3917, %v5256
        %v5258 = vpop.f32.mrf.mxu0
        %v5259 = vadd.f32 %v3913, %v5258
        %v5260 = vpop.f32.mrf.mxu0
        %v5261 = vadd.f32 %v3917, %v5260
        %5262 = vmatprep.mubr.bf16.mxu0 0
        %5263 = vmatmul.mubr.bf16.gmra.mxu0 %v3823
        %v5264 = vpop.f32.mrf.mxu0
        %v5265 = vadd.f32 %v3913, %v5264
        %v5266 = vpop.f32.mrf.mxu0
        %v5267 = vadd.f32 %v3917, %v5266
        %v5268 = vpop.f32.mrf.mxu0
        %v5269 = vadd.f32 %v3913, %v5268
        %v5270 = vpop.f32.mrf.mxu0
        %v5271 = vadd.f32 %v3917, %v5270
        %5272 = vmatprep.mubr.bf16.mxu0 0
        %5273 = vmatmul.mubr.bf16.gmra.mxu0 %v3824
        %v5274 = vpop.f32.mrf.mxu0
        %v5275 = vadd.f32 %v3913, %v5274
        %v5276 = vpop.f32.mrf.mxu0
        %v5277 = vadd.f32 %v3917, %v5276
        %v5278 = vpop.f32.mrf.mxu0
        %v5279 = vadd.f32 %v3913, %v5278
        %v5280 = vpop.f32.mrf.mxu0
        %v5281 = vadd.f32 %v3917, %v5280
        %5282 = vmatprep.mubr.bf16.mxu0 0
        %5283 = vmatmul.mubr.bf16.gmra.mxu0 %v3825
        %v5284 = vpop.f32.mrf.mxu0
        %v5285 = vadd.f32 %v3913, %v5284
        %v5286 = vpop.f32.mrf.mxu0
        %v5287 = vadd.f32 %v3917, %v5286
        %v5288 = vpop.f32.mrf.mxu0
        %v5289 = vadd.f32 %v3913, %v5288
        %v5290 = vpop.f32.mrf.mxu0
        %v5291 = vadd.f32 %v3917, %v5290
        %5292 = vmatprep.mubr.bf16.mxu0 0
        %5293 = vmatmul.mubr.bf16.gmra.mxu0 %v3826
        %v5294 = vpop.f32.mrf.mxu0
        %v5295 = vadd.f32 %v3913, %v5294
        %v5296 = vpop.f32.mrf.mxu0
        %v5297 = vadd.f32 %v3917, %v5296
        %v5298 = vpop.f32.mrf.mxu0
        %v5299 = vadd.f32 %v3913, %v5298
        %v5300 = vpop.f32.mrf.mxu0
        %v5301 = vadd.f32 %v3917, %v5300
        %5302 = vmatprep.mubr.bf16.mxu0 0
        %5303 = vmatmul.mubr.bf16.gmra.mxu0 %v3827
        %v5304 = vpop.f32.mrf.mxu0
        %v5305 = vadd.f32 %v3913, %v5304
        %v5306 = vpop.f32.mrf.mxu0
        %v5307 = vadd.f32 %v3917, %v5306
        %v5308 = vpop.f32.mrf.mxu0
        %v5309 = vadd.f32 %v3913, %v5308
        %v5310 = vpop.f32.mrf.mxu0
        %v5311 = vadd.f32 %v3917, %v5310
        %5312 = vdwg.mxu0
        %5313 = vmatprep.subr.bf16.mxu0 %v4189
        %5314 = vmatpush1.bf16.msra.mxu0 %v4188
        %5315 = vmatprep.subr.bf16.mxu0 %v4181
        %5316 = vmatpush1.bf16.msra.mxu0 %v4180
        %5317 = vmatprep.subr.bf16.mxu0 %v4173
        %5318 = vmatpush1.bf16.msra.mxu0 %v4172
        %5319 = vmatprep.subr.bf16.mxu0 %v4165
        %5320 = vmatpush1.bf16.msra.mxu0 %v4164
        %5321 = vmatprep.subr.bf16.mxu0 %v4157
        %5322 = vmatpush1.bf16.msra.mxu0 %v4156
        %5323 = vmatprep.subr.bf16.mxu0 %v4149
        %5324 = vmatpush1.bf16.msra.mxu0 %v4148
        %5325 = vmatprep.subr.bf16.mxu0 %v4141
        %5326 = vmatpush1.bf16.msra.mxu0 %v4140
        %5327 = vmatprep.subr.bf16.mxu0 %v4133
        %5328 = vmatpush1.bf16.msra.mxu0 %v4132
        %5329 = vmatprep.subr.bf16.mxu0 0
        %5330 = vmatpush2.bf16.msra.mxu0 0
        %5331 = vmatprep.subr.bf16.mxu0 0
        %5332 = vmatpush2.bf16.msra.mxu0 0
        %5333 = vmatprep.subr.bf16.mxu0 0
        %5334 = vmatpush2.bf16.msra.mxu0 0
        %5335 = vmatprep.subr.bf16.mxu0 0
        %5336 = vmatpush2.bf16.msra.mxu0 0
        %5337 = vmatprep.subr.bf16.mxu0 0
        %5338 = vmatpush2.bf16.msra.mxu0 0
        %5339 = vmatprep.subr.bf16.mxu0 0
        %5340 = vmatpush2.bf16.msra.mxu0 0
        %5341 = vmatprep.subr.bf16.mxu0 0
        %5342 = vmatpush2.bf16.msra.mxu0 0
        %5343 = vmatprep.subr.bf16.mxu0 0
        %5344 = vmatpush2.bf16.msra.mxu0 0
        %5345 = vmatprep.mubr.bf16.mxu0 0
        %5346 = vmatmul.mubr.bf16.gmra.mxu0 %v3796
        %v5347 = vpop.f32.mrf.mxu0
        %v5348 = vadd.f32 %v3921, %v5347
        %v5349 = vpop.f32.mrf.mxu0
        %v5350 = vadd.f32 %v3925, %v5349
        %v5351 = vpop.f32.mrf.mxu0
        %v5352 = vadd.f32 %v3921, %v5351
        %v5353 = vpop.f32.mrf.mxu0
        %v5354 = vadd.f32 %v3925, %v5353
        %5355 = vmatprep.mubr.bf16.mxu0 0
        %5356 = vmatmul.mubr.bf16.gmra.mxu0 %v3797
        %v5357 = vpop.f32.mrf.mxu0
        %v5358 = vadd.f32 %v3921, %v5357
        %v5359 = vpop.f32.mrf.mxu0
        %v5360 = vadd.f32 %v3925, %v5359
        %v5361 = vpop.f32.mrf.mxu0
        %v5362 = vadd.f32 %v3921, %v5361
        %v5363 = vpop.f32.mrf.mxu0
        %v5364 = vadd.f32 %v3925, %v5363
        %5365 = vmatprep.mubr.bf16.mxu0 0
        %5366 = vmatmul.mubr.bf16.gmra.mxu0 %v3798
        %v5367 = vpop.f32.mrf.mxu0
        %v5368 = vadd.f32 %v3921, %v5367
        %v5369 = vpop.f32.mrf.mxu0
        %v5370 = vadd.f32 %v3925, %v5369
        %v5371 = vpop.f32.mrf.mxu0
        %v5372 = vadd.f32 %v3921, %v5371
        %v5373 = vpop.f32.mrf.mxu0
        %v5374 = vadd.f32 %v3925, %v5373
        %5375 = vmatprep.mubr.bf16.mxu0 0
        %5376 = vmatmul.mubr.bf16.gmra.mxu0 %v3799
        %v5377 = vpop.f32.mrf.mxu0
        %v5378 = vadd.f32 %v3921, %v5377
        %v5379 = vpop.f32.mrf.mxu0
        %v5380 = vadd.f32 %v3925, %v5379
        %v5381 = vpop.f32.mrf.mxu0
        %v5382 = vadd.f32 %v3921, %v5381
        %v5383 = vpop.f32.mrf.mxu0
        %v5384 = vadd.f32 %v3925, %v5383
        %5385 = vmatprep.mubr.bf16.mxu0 0
        %5386 = vmatmul.mubr.bf16.gmra.mxu0 %v3800
        %v5387 = vpop.f32.mrf.mxu0
        %v5388 = vadd.f32 %v3921, %v5387
        %v5389 = vpop.f32.mrf.mxu0
        %v5390 = vadd.f32 %v3925, %v5389
        %v5391 = vpop.f32.mrf.mxu0
        %v5392 = vadd.f32 %v3921, %v5391
        %v5393 = vpop.f32.mrf.mxu0
        %v5394 = vadd.f32 %v3925, %v5393
        %5395 = vmatprep.mubr.bf16.mxu0 0
        %5396 = vmatmul.mubr.bf16.gmra.mxu0 %v3801
        %v5397 = vpop.f32.mrf.mxu0
        %v5398 = vadd.f32 %v3921, %v5397
        %v5399 = vpop.f32.mrf.mxu0
        %v5400 = vadd.f32 %v3925, %v5399
        %v5401 = vpop.f32.mrf.mxu0
        %v5402 = vadd.f32 %v3921, %v5401
        %v5403 = vpop.f32.mrf.mxu0
        %v5404 = vadd.f32 %v3925, %v5403
        %5405 = vmatprep.mubr.bf16.mxu0 0
        %5406 = vmatmul.mubr.bf16.gmra.mxu0 %v3802
        %v5407 = vpop.f32.mrf.mxu0
        %v5408 = vadd.f32 %v3921, %v5407
        %v5409 = vpop.f32.mrf.mxu0
        %v5410 = vadd.f32 %v3925, %v5409
        %v5411 = vpop.f32.mrf.mxu0
        %v5412 = vadd.f32 %v3921, %v5411
        %v5413 = vpop.f32.mrf.mxu0
        %v5414 = vadd.f32 %v3925, %v5413
        %5415 = vmatprep.mubr.bf16.mxu0 0
        %5416 = vmatmul.mubr.bf16.gmra.mxu0 %v3803
        %v5417 = vpop.f32.mrf.mxu0
        %v5418 = vadd.f32 %v3921, %v5417
        %v5419 = vpop.f32.mrf.mxu0
        %v5420 = vadd.f32 %v3925, %v5419
        %v5421 = vpop.f32.mrf.mxu0
        %v5422 = vadd.f32 %v3921, %v5421
        %v5423 = vpop.f32.mrf.mxu0
        %v5424 = vadd.f32 %v3925, %v5423
        %5425 = vmatprep.mubr.bf16.mxu0 0
        %5426 = vmatmul.mubr.bf16.gmra.mxu0 %v3804
        %v5427 = vpop.f32.mrf.mxu0
        %v5428 = vadd.f32 %v3921, %v5427
        %v5429 = vpop.f32.mrf.mxu0
        %v5430 = vadd.f32 %v3925, %v5429
        %v5431 = vpop.f32.mrf.mxu0
        %v5432 = vadd.f32 %v3921, %v5431
        %v5433 = vpop.f32.mrf.mxu0
        %v5434 = vadd.f32 %v3925, %v5433
        %5435 = vmatprep.mubr.bf16.mxu0 0
        %5436 = vmatmul.mubr.bf16.gmra.mxu0 %v3805
        %v5437 = vpop.f32.mrf.mxu0
        %v5438 = vadd.f32 %v3921, %v5437
        %v5439 = vpop.f32.mrf.mxu0
        %v5440 = vadd.f32 %v3925, %v5439
        %v5441 = vpop.f32.mrf.mxu0
        %v5442 = vadd.f32 %v3921, %v5441
        %v5443 = vpop.f32.mrf.mxu0
        %v5444 = vadd.f32 %v3925, %v5443
        %5445 = vmatprep.mubr.bf16.mxu0 0
        %5446 = vmatmul.mubr.bf16.gmra.mxu0 %v3806
        %v5447 = vpop.f32.mrf.mxu0
        %v5448 = vadd.f32 %v3921, %v5447
        %v5449 = vpop.f32.mrf.mxu0
        %v5450 = vadd.f32 %v3925, %v5449
        %v5451 = vpop.f32.mrf.mxu0
        %v5452 = vadd.f32 %v3921, %v5451
        %v5453 = vpop.f32.mrf.mxu0
        %v5454 = vadd.f32 %v3925, %v5453
        %5455 = vmatprep.mubr.bf16.mxu0 0
        %5456 = vmatmul.mubr.bf16.gmra.mxu0 %v3807
        %v5457 = vpop.f32.mrf.mxu0
        %v5458 = vadd.f32 %v3921, %v5457
        %v5459 = vpop.f32.mrf.mxu0
        %v5460 = vadd.f32 %v3925, %v5459
        %v5461 = vpop.f32.mrf.mxu0
        %v5462 = vadd.f32 %v3921, %v5461
        %v5463 = vpop.f32.mrf.mxu0
        %v5464 = vadd.f32 %v3925, %v5463
        %5465 = vmatprep.mubr.bf16.mxu0 0
        %5466 = vmatmul.mubr.bf16.gmra.mxu0 %v3808
        %v5467 = vpop.f32.mrf.mxu0
        %v5468 = vadd.f32 %v3921, %v5467
        %v5469 = vpop.f32.mrf.mxu0
        %v5470 = vadd.f32 %v3925, %v5469
        %v5471 = vpop.f32.mrf.mxu0
        %v5472 = vadd.f32 %v3921, %v5471
        %v5473 = vpop.f32.mrf.mxu0
        %v5474 = vadd.f32 %v3925, %v5473
        %5475 = vmatprep.mubr.bf16.mxu0 0
        %5476 = vmatmul.mubr.bf16.gmra.mxu0 %v3809
        %v5477 = vpop.f32.mrf.mxu0
        %v5478 = vadd.f32 %v3921, %v5477
        %v5479 = vpop.f32.mrf.mxu0
        %v5480 = vadd.f32 %v3925, %v5479
        %v5481 = vpop.f32.mrf.mxu0
        %v5482 = vadd.f32 %v3921, %v5481
        %v5483 = vpop.f32.mrf.mxu0
        %v5484 = vadd.f32 %v3925, %v5483
        %5485 = vmatprep.mubr.bf16.mxu0 0
        %5486 = vmatmul.mubr.bf16.gmra.mxu0 %v3810
        %v5487 = vpop.f32.mrf.mxu0
        %v5488 = vadd.f32 %v3921, %v5487
        %v5489 = vpop.f32.mrf.mxu0
        %v5490 = vadd.f32 %v3925, %v5489
        %v5491 = vpop.f32.mrf.mxu0
        %v5492 = vadd.f32 %v3921, %v5491
        %v5493 = vpop.f32.mrf.mxu0
        %v5494 = vadd.f32 %v3925, %v5493
        %5495 = vmatprep.mubr.bf16.mxu0 0
        %5496 = vmatmul.mubr.bf16.gmra.mxu0 %v3811
        %v5497 = vpop.f32.mrf.mxu0
        %v5498 = vadd.f32 %v3921, %v5497
        %v5499 = vpop.f32.mrf.mxu0
        %v5500 = vadd.f32 %v3925, %v5499
        %v5501 = vpop.f32.mrf.mxu0
        %v5502 = vadd.f32 %v3921, %v5501
        %v5503 = vpop.f32.mrf.mxu0
        %v5504 = vadd.f32 %v3925, %v5503
        %5505 = vmatprep.mubr.bf16.mxu0 0
        %5506 = vmatmul.mubr.bf16.gmra.mxu0 %v3812
        %v5507 = vpop.f32.mrf.mxu0
        %v5508 = vadd.f32 %v3921, %v5507
        %v5509 = vpop.f32.mrf.mxu0
        %v5510 = vadd.f32 %v3925, %v5509
        %v5511 = vpop.f32.mrf.mxu0
        %v5512 = vadd.f32 %v3921, %v5511
        %v5513 = vpop.f32.mrf.mxu0
        %v5514 = vadd.f32 %v3925, %v5513
        %5515 = vmatprep.mubr.bf16.mxu0 0
        %5516 = vmatmul.mubr.bf16.gmra.mxu0 %v3813
        %v5517 = vpop.f32.mrf.mxu0
        %v5518 = vadd.f32 %v3921, %v5517
        %v5519 = vpop.f32.mrf.mxu0
        %v5520 = vadd.f32 %v3925, %v5519
        %v5521 = vpop.f32.mrf.mxu0
        %v5522 = vadd.f32 %v3921, %v5521
        %v5523 = vpop.f32.mrf.mxu0
        %v5524 = vadd.f32 %v3925, %v5523
        %5525 = vmatprep.mubr.bf16.mxu0 0
        %5526 = vmatmul.mubr.bf16.gmra.mxu0 %v3814
        %v5527 = vpop.f32.mrf.mxu0
        %v5528 = vadd.f32 %v3921, %v5527
        %v5529 = vpop.f32.mrf.mxu0
        %v5530 = vadd.f32 %v3925, %v5529
        %v5531 = vpop.f32.mrf.mxu0
        %v5532 = vadd.f32 %v3921, %v5531
        %v5533 = vpop.f32.mrf.mxu0
        %v5534 = vadd.f32 %v3925, %v5533
        %5535 = vmatprep.mubr.bf16.mxu0 0
        %5536 = vmatmul.mubr.bf16.gmra.mxu0 %v3815
        %v5537 = vpop.f32.mrf.mxu0
        %v5538 = vadd.f32 %v3921, %v5537
        %v5539 = vpop.f32.mrf.mxu0
        %v5540 = vadd.f32 %v3925, %v5539
        %v5541 = vpop.f32.mrf.mxu0
        %v5542 = vadd.f32 %v3921, %v5541
        %v5543 = vpop.f32.mrf.mxu0
        %v5544 = vadd.f32 %v3925, %v5543
        %5545 = vmatprep.mubr.bf16.mxu0 0
        %5546 = vmatmul.mubr.bf16.gmra.mxu0 %v3816
        %v5547 = vpop.f32.mrf.mxu0
        %v5548 = vadd.f32 %v3921, %v5547
        %v5549 = vpop.f32.mrf.mxu0
        %v5550 = vadd.f32 %v3925, %v5549
        %v5551 = vpop.f32.mrf.mxu0
        %v5552 = vadd.f32 %v3921, %v5551
        %v5553 = vpop.f32.mrf.mxu0
        %v5554 = vadd.f32 %v3925, %v5553
        %5555 = vmatprep.mubr.bf16.mxu0 0
        %5556 = vmatmul.mubr.bf16.gmra.mxu0 %v3817
        %v5557 = vpop.f32.mrf.mxu0
        %v5558 = vadd.f32 %v3921, %v5557
        %v5559 = vpop.f32.mrf.mxu0
        %v5560 = vadd.f32 %v3925, %v5559
        %v5561 = vpop.f32.mrf.mxu0
        %v5562 = vadd.f32 %v3921, %v5561
        %v5563 = vpop.f32.mrf.mxu0
        %v5564 = vadd.f32 %v3925, %v5563
        %5565 = vmatprep.mubr.bf16.mxu0 0
        %5566 = vmatmul.mubr.bf16.gmra.mxu0 %v3818
        %v5567 = vpop.f32.mrf.mxu0
        %v5568 = vadd.f32 %v3921, %v5567
        %v5569 = vpop.f32.mrf.mxu0
        %v5570 = vadd.f32 %v3925, %v5569
        %v5571 = vpop.f32.mrf.mxu0
        %v5572 = vadd.f32 %v3921, %v5571
        %v5573 = vpop.f32.mrf.mxu0
        %v5574 = vadd.f32 %v3925, %v5573
        %5575 = vmatprep.mubr.bf16.mxu0 0
        %5576 = vmatmul.mubr.bf16.gmra.mxu0 %v3819
        %v5577 = vpop.f32.mrf.mxu0
        %v5578 = vadd.f32 %v3921, %v5577
        %v5579 = vpop.f32.mrf.mxu0
        %v5580 = vadd.f32 %v3925, %v5579
        %v5581 = vpop.f32.mrf.mxu0
        %v5582 = vadd.f32 %v3921, %v5581
        %v5583 = vpop.f32.mrf.mxu0
        %v5584 = vadd.f32 %v3925, %v5583
        %5585 = vmatprep.mubr.bf16.mxu0 0
        %5586 = vmatmul.mubr.bf16.gmra.mxu0 %v3820
        %v5587 = vpop.f32.mrf.mxu0
        %v5588 = vadd.f32 %v3921, %v5587
        %v5589 = vpop.f32.mrf.mxu0
        %v5590 = vadd.f32 %v3925, %v5589
        %v5591 = vpop.f32.mrf.mxu0
        %v5592 = vadd.f32 %v3921, %v5591
        %v5593 = vpop.f32.mrf.mxu0
        %v5594 = vadd.f32 %v3925, %v5593
        %5595 = vmatprep.mubr.bf16.mxu0 0
        %5596 = vmatmul.mubr.bf16.gmra.mxu0 %v3821
        %v5597 = vpop.f32.mrf.mxu0
        %v5598 = vadd.f32 %v3921, %v5597
        %v5599 = vpop.f32.mrf.mxu0
        %v5600 = vadd.f32 %v3925, %v5599
        %v5601 = vpop.f32.mrf.mxu0
        %v5602 = vadd.f32 %v3921, %v5601
        %v5603 = vpop.f32.mrf.mxu0
        %v5604 = vadd.f32 %v3925, %v5603
        %5605 = vmatprep.mubr.bf16.mxu0 0
        %5606 = vmatmul.mubr.bf16.gmra.mxu0 %v3822
        %v5607 = vpop.f32.mrf.mxu0
        %v5608 = vadd.f32 %v3921, %v5607
        %v5609 = vpop.f32.mrf.mxu0
        %v5610 = vadd.f32 %v3925, %v5609
        %v5611 = vpop.f32.mrf.mxu0
        %v5612 = vadd.f32 %v3921, %v5611
        %v5613 = vpop.f32.mrf.mxu0
        %v5614 = vadd.f32 %v3925, %v5613
        %5615 = vmatprep.mubr.bf16.mxu0 0
        %5616 = vmatmul.mubr.bf16.gmra.mxu0 %v3823
        %v5617 = vpop.f32.mrf.mxu0
        %v5618 = vadd.f32 %v3921, %v5617
        %v5619 = vpop.f32.mrf.mxu0
        %v5620 = vadd.f32 %v3925, %v5619
        %v5621 = vpop.f32.mrf.mxu0
        %v5622 = vadd.f32 %v3921, %v5621
        %v5623 = vpop.f32.mrf.mxu0
        %v5624 = vadd.f32 %v3925, %v5623
        %5625 = vmatprep.mubr.bf16.mxu0 0
        %5626 = vmatmul.mubr.bf16.gmra.mxu0 %v3824
        %v5627 = vpop.f32.mrf.mxu0
        %v5628 = vadd.f32 %v3921, %v5627
        %v5629 = vpop.f32.mrf.mxu0
        %v5630 = vadd.f32 %v3925, %v5629
        %v5631 = vpop.f32.mrf.mxu0
        %v5632 = vadd.f32 %v3921, %v5631
        %v5633 = vpop.f32.mrf.mxu0
        %v5634 = vadd.f32 %v3925, %v5633
        %5635 = vmatprep.mubr.bf16.mxu0 0
        %5636 = vmatmul.mubr.bf16.gmra.mxu0 %v3825
        %v5637 = vpop.f32.mrf.mxu0
        %v5638 = vadd.f32 %v3921, %v5637
        %v5639 = vpop.f32.mrf.mxu0
        %v5640 = vadd.f32 %v3925, %v5639
        %v5641 = vpop.f32.mrf.mxu0
        %v5642 = vadd.f32 %v3921, %v5641
        %v5643 = vpop.f32.mrf.mxu0
        %v5644 = vadd.f32 %v3925, %v5643
        %5645 = vmatprep.mubr.bf16.mxu0 0
        %5646 = vmatmul.mubr.bf16.gmra.mxu0 %v3826
        %v5647 = vpop.f32.mrf.mxu0
        %v5648 = vadd.f32 %v3921, %v5647
        %v5649 = vpop.f32.mrf.mxu0
        %v5650 = vadd.f32 %v3925, %v5649
        %v5651 = vpop.f32.mrf.mxu0
        %v5652 = vadd.f32 %v3921, %v5651
        %v5653 = vpop.f32.mrf.mxu0
        %v5654 = vadd.f32 %v3925, %v5653
        %5655 = vmatprep.mubr.bf16.mxu0 0
        %5656 = vmatmul.mubr.bf16.gmra.mxu0 %v3827
        %v5657 = vpop.f32.mrf.mxu0
        %v5658 = vadd.f32 %v3921, %v5657
        %v5659 = vpop.f32.mrf.mxu0
        %v5660 = vadd.f32 %v3925, %v5659
        %v5661 = vpop.f32.mrf.mxu0
        %v5662 = vadd.f32 %v3921, %v5661
        %v5663 = vpop.f32.mrf.mxu0
        %v5664 = vadd.f32 %v3925, %v5663
        %5665 = vdwg.mxu0
        %s5666 = scalar_lea.vmem %s6, 1
        %v5667 = vld [vmem:[%s5666] ss:$4 sm:$0xff]
        %s5668 = scalar_lea.vmem %s6, 2
        %v5669 = vld [vmem:[%s5668] ss:$4 sm:$0xff]
        %v5670 = vadd.f32 %v4289, %v4291
        %v5671 = vadd.f32 %v5670, %v4642
        %v5672 = vadd.f32 %v5671, %v4644
        %v5673 = vadd.f32 %v5672, %v4995
        %v5674 = vadd.f32 %v5673, %v4997
        %v5675 = vadd.f32 %v5674, %v5348
        %v5676 = vadd.f32 %v5675, %v5350
        %5677 = vadd.xlane.f32.xlu0 %v5676
        %v5678 = vpop.xlane.xlu0 %5677
        %v5679 = vadd.f32 %v4293, %v4295
        %v5680 = vadd.f32 %v5679, %v4646
        %v5681 = vadd.f32 %v5680, %v4648
        %v5682 = vadd.f32 %v5681, %v4999
        %v5683 = vadd.f32 %v5682, %v5001
        %v5684 = vadd.f32 %v5683, %v5352
        %v5685 = vadd.f32 %v5684, %v5354
        %5686 = vadd.xlane.f32.xlu0 %v5685
        %v5687 = vpop.xlane.xlu0 %5686
        %v5688 = vadd.f32 %v4299, %v4301
        %v5689 = vadd.f32 %v5688, %v4652
        %v5690 = vadd.f32 %v5689, %v4654
        %v5691 = vadd.f32 %v5690, %v5005
        %v5692 = vadd.f32 %v5691, %v5007
        %v5693 = vadd.f32 %v5692, %v5358
        %v5694 = vadd.f32 %v5693, %v5360
        %5695 = vadd.xlane.f32.xlu0 %v5694
        %v5696 = vpop.xlane.xlu0 %5695
        %v5697 = vadd.f32 %v4303, %v4305
        %v5698 = vadd.f32 %v5697, %v4656
        %v5699 = vadd.f32 %v5698, %v4658
        %v5700 = vadd.f32 %v5699, %v5009
        %v5701 = vadd.f32 %v5700, %v5011
        %v5702 = vadd.f32 %v5701, %v5362
        %v5703 = vadd.f32 %v5702, %v5364
        %5704 = vadd.xlane.f32.xlu0 %v5703
        %v5705 = vpop.xlane.xlu0 %5704
        %v5706 = vadd.f32 %v4309, %v4311
        %v5707 = vadd.f32 %v5706, %v4662
        %v5708 = vadd.f32 %v5707, %v4664
        %v5709 = vadd.f32 %v5708, %v5015
        %v5710 = vadd.f32 %v5709, %v5017
        %v5711 = vadd.f32 %v5710, %v5368
        %v5712 = vadd.f32 %v5711, %v5370
        %5713 = vadd.xlane.f32.xlu0 %v5712
        %v5714 = vpop.xlane.xlu0 %5713
        %v5715 = vadd.f32 %v4313, %v4315
        %v5716 = vadd.f32 %v5715, %v4666
        %v5717 = vadd.f32 %v5716, %v4668
        %v5718 = vadd.f32 %v5717, %v5019
        %v5719 = vadd.f32 %v5718, %v5021
        %v5720 = vadd.f32 %v5719, %v5372
        %v5721 = vadd.f32 %v5720, %v5374
        %5722 = vadd.xlane.f32.xlu0 %v5721
        %v5723 = vpop.xlane.xlu0 %5722
        %v5724 = vadd.f32 %v4319, %v4321
        %v5725 = vadd.f32 %v5724, %v4672
        %v5726 = vadd.f32 %v5725, %v4674
        %v5727 = vadd.f32 %v5726, %v5025
        %v5728 = vadd.f32 %v5727, %v5027
        %v5729 = vadd.f32 %v5728, %v5378
        %v5730 = vadd.f32 %v5729, %v5380
        %5731 = vadd.xlane.f32.xlu0 %v5730
        %v5732 = vpop.xlane.xlu0 %5731
        %v5733 = vadd.f32 %v4323, %v4325
        %v5734 = vadd.f32 %v5733, %v4676
        %v5735 = vadd.f32 %v5734, %v4678
        %v5736 = vadd.f32 %v5735, %v5029
        %v5737 = vadd.f32 %v5736, %v5031
        %v5738 = vadd.f32 %v5737, %v5382
        %v5739 = vadd.f32 %v5738, %v5384
        %5740 = vadd.xlane.f32.xlu0 %v5739
        %v5741 = vpop.xlane.xlu0 %5740
        %v5742 = vadd.f32 %v4329, %v4331
        %v5743 = vadd.f32 %v5742, %v4682
        %v5744 = vadd.f32 %v5743, %v4684
        %v5745 = vadd.f32 %v5744, %v5035
        %v5746 = vadd.f32 %v5745, %v5037
        %v5747 = vadd.f32 %v5746, %v5388
        %v5748 = vadd.f32 %v5747, %v5390
        %5749 = vadd.xlane.f32.xlu0 %v5748
        %v5750 = vpop.xlane.xlu0 %5749
        %v5751 = vadd.f32 %v4333, %v4335
        %v5752 = vadd.f32 %v5751, %v4686
        %v5753 = vadd.f32 %v5752, %v4688
        %v5754 = vadd.f32 %v5753, %v5039
        %v5755 = vadd.f32 %v5754, %v5041
        %v5756 = vadd.f32 %v5755, %v5392
        %v5757 = vadd.f32 %v5756, %v5394
        %5758 = vadd.xlane.f32.xlu0 %v5757
        %v5759 = vpop.xlane.xlu0 %5758
        %v5760 = vadd.f32 %v4339, %v4341
        %v5761 = vadd.f32 %v5760, %v4692
        %v5762 = vadd.f32 %v5761, %v4694
        %v5763 = vadd.f32 %v5762, %v5045
        %v5764 = vadd.f32 %v5763, %v5047
        %v5765 = vadd.f32 %v5764, %v5398
        %v5766 = vadd.f32 %v5765, %v5400
        %5767 = vadd.xlane.f32.xlu0 %v5766
        %v5768 = vpop.xlane.xlu0 %5767
        %v5769 = vadd.f32 %v4343, %v4345
        %v5770 = vadd.f32 %v5769, %v4696
        %v5771 = vadd.f32 %v5770, %v4698
        %v5772 = vadd.f32 %v5771, %v5049
        %v5773 = vadd.f32 %v5772, %v5051
        %v5774 = vadd.f32 %v5773, %v5402
        %v5775 = vadd.f32 %v5774, %v5404
        %5776 = vadd.xlane.f32.xlu0 %v5775
        %v5777 = vpop.xlane.xlu0 %5776
        %v5778 = vadd.f32 %v4349, %v4351
        %v5779 = vadd.f32 %v5778, %v4702
        %v5780 = vadd.f32 %v5779, %v4704
        %v5781 = vadd.f32 %v5780, %v5055
        %v5782 = vadd.f32 %v5781, %v5057
        %v5783 = vadd.f32 %v5782, %v5408
        %v5784 = vadd.f32 %v5783, %v5410
        %5785 = vadd.xlane.f32.xlu0 %v5784
        %v5786 = vpop.xlane.xlu0 %5785
        %v5787 = vadd.f32 %v4353, %v4355
        %v5788 = vadd.f32 %v5787, %v4706
        %v5789 = vadd.f32 %v5788, %v4708
        %v5790 = vadd.f32 %v5789, %v5059
        %v5791 = vadd.f32 %v5790, %v5061
        %v5792 = vadd.f32 %v5791, %v5412
        %v5793 = vadd.f32 %v5792, %v5414
        %5794 = vadd.xlane.f32.xlu0 %v5793
        %v5795 = vpop.xlane.xlu0 %5794
        %v5796 = vadd.f32 %v4359, %v4361
        %v5797 = vadd.f32 %v5796, %v4712
        %v5798 = vadd.f32 %v5797, %v4714
        %v5799 = vadd.f32 %v5798, %v5065
        %v5800 = vadd.f32 %v5799, %v5067
        %v5801 = vadd.f32 %v5800, %v5418
        %v5802 = vadd.f32 %v5801, %v5420
        %5803 = vadd.xlane.f32.xlu0 %v5802
        %v5804 = vpop.xlane.xlu0 %5803
        %v5805 = vadd.f32 %v4363, %v4365
        %v5806 = vadd.f32 %v5805, %v4716
        %v5807 = vadd.f32 %v5806, %v4718
        %v5808 = vadd.f32 %v5807, %v5069
        %v5809 = vadd.f32 %v5808, %v5071
        %v5810 = vadd.f32 %v5809, %v5422
        %v5811 = vadd.f32 %v5810, %v5424
        %5812 = vadd.xlane.f32.xlu0 %v5811
        %v5813 = vpop.xlane.xlu0 %5812
        %v5814 = vadd.f32 %v4369, %v4371
        %v5815 = vadd.f32 %v5814, %v4722
        %v5816 = vadd.f32 %v5815, %v4724
        %v5817 = vadd.f32 %v5816, %v5075
        %v5818 = vadd.f32 %v5817, %v5077
        %v5819 = vadd.f32 %v5818, %v5428
        %v5820 = vadd.f32 %v5819, %v5430
        %5821 = vadd.xlane.f32.xlu0 %v5820
        %v5822 = vpop.xlane.xlu0 %5821
        %v5823 = vadd.f32 %v4373, %v4375
        %v5824 = vadd.f32 %v5823, %v4726
        %v5825 = vadd.f32 %v5824, %v4728
        %v5826 = vadd.f32 %v5825, %v5079
        %v5827 = vadd.f32 %v5826, %v5081
        %v5828 = vadd.f32 %v5827, %v5432
        %v5829 = vadd.f32 %v5828, %v5434
        %5830 = vadd.xlane.f32.xlu0 %v5829
        %v5831 = vpop.xlane.xlu0 %5830
        %v5832 = vadd.f32 %v4379, %v4381
        %v5833 = vadd.f32 %v5832, %v4732
        %v5834 = vadd.f32 %v5833, %v4734
        %v5835 = vadd.f32 %v5834, %v5085
        %v5836 = vadd.f32 %v5835, %v5087
        %v5837 = vadd.f32 %v5836, %v5438
        %v5838 = vadd.f32 %v5837, %v5440
        %5839 = vadd.xlane.f32.xlu0 %v5838
        %v5840 = vpop.xlane.xlu0 %5839
        %v5841 = vadd.f32 %v4383, %v4385
        %v5842 = vadd.f32 %v5841, %v4736
        %v5843 = vadd.f32 %v5842, %v4738
        %v5844 = vadd.f32 %v5843, %v5089
        %v5845 = vadd.f32 %v5844, %v5091
        %v5846 = vadd.f32 %v5845, %v5442
        %v5847 = vadd.f32 %v5846, %v5444
        %5848 = vadd.xlane.f32.xlu0 %v5847
        %v5849 = vpop.xlane.xlu0 %5848
        %v5850 = vadd.f32 %v4389, %v4391
        %v5851 = vadd.f32 %v5850, %v4742
        %v5852 = vadd.f32 %v5851, %v4744
        %v5853 = vadd.f32 %v5852, %v5095
        %v5854 = vadd.f32 %v5853, %v5097
        %v5855 = vadd.f32 %v5854, %v5448
        %v5856 = vadd.f32 %v5855, %v5450
        %5857 = vadd.xlane.f32.xlu0 %v5856
        %v5858 = vpop.xlane.xlu0 %5857
        %v5859 = vadd.f32 %v4393, %v4395
        %v5860 = vadd.f32 %v5859, %v4746
        %v5861 = vadd.f32 %v5860, %v4748
        %v5862 = vadd.f32 %v5861, %v5099
        %v5863 = vadd.f32 %v5862, %v5101
        %v5864 = vadd.f32 %v5863, %v5452
        %v5865 = vadd.f32 %v5864, %v5454
        %5866 = vadd.xlane.f32.xlu0 %v5865
        %v5867 = vpop.xlane.xlu0 %5866
        %v5868 = vadd.f32 %v4399, %v4401
        %v5869 = vadd.f32 %v5868, %v4752
        %v5870 = vadd.f32 %v5869, %v4754
        %v5871 = vadd.f32 %v5870, %v5105
        %v5872 = vadd.f32 %v5871, %v5107
        %v5873 = vadd.f32 %v5872, %v5458
        %v5874 = vadd.f32 %v5873, %v5460
        %5875 = vadd.xlane.f32.xlu0 %v5874
        %v5876 = vpop.xlane.xlu0 %5875
        %v5877 = vadd.f32 %v4403, %v4405
        %v5878 = vadd.f32 %v5877, %v4756
        %v5879 = vadd.f32 %v5878, %v4758
        %v5880 = vadd.f32 %v5879, %v5109
        %v5881 = vadd.f32 %v5880, %v5111
        %v5882 = vadd.f32 %v5881, %v5462
        %v5883 = vadd.f32 %v5882, %v5464
        %5884 = vadd.xlane.f32.xlu0 %v5883
        %v5885 = vpop.xlane.xlu0 %5884
        %v5886 = vadd.f32 %v4409, %v4411
        %v5887 = vadd.f32 %v5886, %v4762
        %v5888 = vadd.f32 %v5887, %v4764
        %v5889 = vadd.f32 %v5888, %v5115
        %v5890 = vadd.f32 %v5889, %v5117
        %v5891 = vadd.f32 %v5890, %v5468
        %v5892 = vadd.f32 %v5891, %v5470
        %5893 = vadd.xlane.f32.xlu0 %v5892
        %v5894 = vpop.xlane.xlu0 %5893
        %v5895 = vadd.f32 %v4413, %v4415
        %v5896 = vadd.f32 %v5895, %v4766
        %v5897 = vadd.f32 %v5896, %v4768
        %v5898 = vadd.f32 %v5897, %v5119
        %v5899 = vadd.f32 %v5898, %v5121
        %v5900 = vadd.f32 %v5899, %v5472
        %v5901 = vadd.f32 %v5900, %v5474
        %5902 = vadd.xlane.f32.xlu0 %v5901
        %v5903 = vpop.xlane.xlu0 %5902
        %v5904 = vadd.f32 %v4419, %v4421
        %v5905 = vadd.f32 %v5904, %v4772
        %v5906 = vadd.f32 %v5905, %v4774
        %v5907 = vadd.f32 %v5906, %v5125
        %v5908 = vadd.f32 %v5907, %v5127
        %v5909 = vadd.f32 %v5908, %v5478
        %v5910 = vadd.f32 %v5909, %v5480
        %5911 = vadd.xlane.f32.xlu0 %v5910
        %v5912 = vpop.xlane.xlu0 %5911
        %v5913 = vadd.f32 %v4423, %v4425
        %v5914 = vadd.f32 %v5913, %v4776
        %v5915 = vadd.f32 %v5914, %v4778
        %v5916 = vadd.f32 %v5915, %v5129
        %v5917 = vadd.f32 %v5916, %v5131
        %v5918 = vadd.f32 %v5917, %v5482
        %v5919 = vadd.f32 %v5918, %v5484
        %5920 = vadd.xlane.f32.xlu0 %v5919
        %v5921 = vpop.xlane.xlu0 %5920
        %v5922 = vadd.f32 %v4429, %v4431
        %v5923 = vadd.f32 %v5922, %v4782
        %v5924 = vadd.f32 %v5923, %v4784
        %v5925 = vadd.f32 %v5924, %v5135
        %v5926 = vadd.f32 %v5925, %v5137
        %v5927 = vadd.f32 %v5926, %v5488
        %v5928 = vadd.f32 %v5927, %v5490
        %5929 = vadd.xlane.f32.xlu0 %v5928
        %v5930 = vpop.xlane.xlu0 %5929
        %v5931 = vadd.f32 %v4433, %v4435
        %v5932 = vadd.f32 %v5931, %v4786
        %v5933 = vadd.f32 %v5932, %v4788
        %v5934 = vadd.f32 %v5933, %v5139
        %v5935 = vadd.f32 %v5934, %v5141
        %v5936 = vadd.f32 %v5935, %v5492
        %v5937 = vadd.f32 %v5936, %v5494
        %5938 = vadd.xlane.f32.xlu0 %v5937
        %v5939 = vpop.xlane.xlu0 %5938
        %v5940 = vadd.f32 %v4439, %v4441
        %v5941 = vadd.f32 %v5940, %v4792
        %v5942 = vadd.f32 %v5941, %v4794
        %v5943 = vadd.f32 %v5942, %v5145
        %v5944 = vadd.f32 %v5943, %v5147
        %v5945 = vadd.f32 %v5944, %v5498
        %v5946 = vadd.f32 %v5945, %v5500
        %5947 = vadd.xlane.f32.xlu0 %v5946
        %v5948 = vpop.xlane.xlu0 %5947
        %v5949 = vadd.f32 %v4443, %v4445
        %v5950 = vadd.f32 %v5949, %v4796
        %v5951 = vadd.f32 %v5950, %v4798
        %v5952 = vadd.f32 %v5951, %v5149
        %v5953 = vadd.f32 %v5952, %v5151
        %v5954 = vadd.f32 %v5953, %v5502
        %v5955 = vadd.f32 %v5954, %v5504
        %5956 = vadd.xlane.f32.xlu0 %v5955
        %v5957 = vpop.xlane.xlu0 %5956
        %v5958 = vadd.f32 %v4449, %v4451
        %v5959 = vadd.f32 %v5958, %v4802
        %v5960 = vadd.f32 %v5959, %v4804
        %v5961 = vadd.f32 %v5960, %v5155
        %v5962 = vadd.f32 %v5961, %v5157
        %v5963 = vadd.f32 %v5962, %v5508
        %v5964 = vadd.f32 %v5963, %v5510
        %5965 = vadd.xlane.f32.xlu0 %v5964
        %v5966 = vpop.xlane.xlu0 %5965
        %v5967 = vadd.f32 %v4453, %v4455
        %v5968 = vadd.f32 %v5967, %v4806
        %v5969 = vadd.f32 %v5968, %v4808
        %v5970 = vadd.f32 %v5969, %v5159
        %v5971 = vadd.f32 %v5970, %v5161
        %v5972 = vadd.f32 %v5971, %v5512
        %v5973 = vadd.f32 %v5972, %v5514
        %5974 = vadd.xlane.f32.xlu0 %v5973
        %v5975 = vpop.xlane.xlu0 %5974
        %v5976 = vadd.f32 %v4459, %v4461
        %v5977 = vadd.f32 %v5976, %v4812
        %v5978 = vadd.f32 %v5977, %v4814
        %v5979 = vadd.f32 %v5978, %v5165
        %v5980 = vadd.f32 %v5979, %v5167
        %v5981 = vadd.f32 %v5980, %v5518
        %v5982 = vadd.f32 %v5981, %v5520
        %5983 = vadd.xlane.f32.xlu0 %v5982
        %v5984 = vpop.xlane.xlu0 %5983
        %v5985 = vadd.f32 %v4463, %v4465
        %v5986 = vadd.f32 %v5985, %v4816
        %v5987 = vadd.f32 %v5986, %v4818
        %v5988 = vadd.f32 %v5987, %v5169
        %v5989 = vadd.f32 %v5988, %v5171
        %v5990 = vadd.f32 %v5989, %v5522
        %v5991 = vadd.f32 %v5990, %v5524
        %5992 = vadd.xlane.f32.xlu0 %v5991
        %v5993 = vpop.xlane.xlu0 %5992
        %v5994 = vadd.f32 %v4469, %v4471
        %v5995 = vadd.f32 %v5994, %v4822
        %v5996 = vadd.f32 %v5995, %v4824
        %v5997 = vadd.f32 %v5996, %v5175
        %v5998 = vadd.f32 %v5997, %v5177
        %v5999 = vadd.f32 %v5998, %v5528
        %v6000 = vadd.f32 %v5999, %v5530
        %6001 = vadd.xlane.f32.xlu0 %v6000
        %v6002 = vpop.xlane.xlu0 %6001
        %v6003 = vadd.f32 %v4473, %v4475
        %v6004 = vadd.f32 %v6003, %v4826
        %v6005 = vadd.f32 %v6004, %v4828
        %v6006 = vadd.f32 %v6005, %v5179
        %v6007 = vadd.f32 %v6006, %v5181
        %v6008 = vadd.f32 %v6007, %v5532
        %v6009 = vadd.f32 %v6008, %v5534
        %6010 = vadd.xlane.f32.xlu0 %v6009
        %v6011 = vpop.xlane.xlu0 %6010
        %v6012 = vadd.f32 %v4479, %v4481
        %v6013 = vadd.f32 %v6012, %v4832
        %v6014 = vadd.f32 %v6013, %v4834
        %v6015 = vadd.f32 %v6014, %v5185
        %v6016 = vadd.f32 %v6015, %v5187
        %v6017 = vadd.f32 %v6016, %v5538
        %v6018 = vadd.f32 %v6017, %v5540
        %6019 = vadd.xlane.f32.xlu0 %v6018
        %v6020 = vpop.xlane.xlu0 %6019
        %v6021 = vadd.f32 %v4483, %v4485
        %v6022 = vadd.f32 %v6021, %v4836
        %v6023 = vadd.f32 %v6022, %v4838
        %v6024 = vadd.f32 %v6023, %v5189
        %v6025 = vadd.f32 %v6024, %v5191
        %v6026 = vadd.f32 %v6025, %v5542
        %v6027 = vadd.f32 %v6026, %v5544
        %6028 = vadd.xlane.f32.xlu0 %v6027
        %v6029 = vpop.xlane.xlu0 %6028
        %v6030 = vadd.f32 %v4489, %v4491
        %v6031 = vadd.f32 %v6030, %v4842
        %v6032 = vadd.f32 %v6031, %v4844
        %v6033 = vadd.f32 %v6032, %v5195
        %v6034 = vadd.f32 %v6033, %v5197
        %v6035 = vadd.f32 %v6034, %v5548
        %v6036 = vadd.f32 %v6035, %v5550
        %6037 = vadd.xlane.f32.xlu0 %v6036
        %v6038 = vpop.xlane.xlu0 %6037
        %v6039 = vadd.f32 %v4493, %v4495
        %v6040 = vadd.f32 %v6039, %v4846
        %v6041 = vadd.f32 %v6040, %v4848
        %v6042 = vadd.f32 %v6041, %v5199
        %v6043 = vadd.f32 %v6042, %v5201
        %v6044 = vadd.f32 %v6043, %v5552
        %v6045 = vadd.f32 %v6044, %v5554
        %6046 = vadd.xlane.f32.xlu0 %v6045
        %v6047 = vpop.xlane.xlu0 %6046
        %v6048 = vadd.f32 %v4499, %v4501
        %v6049 = vadd.f32 %v6048, %v4852
        %v6050 = vadd.f32 %v6049, %v4854
        %v6051 = vadd.f32 %v6050, %v5205
        %v6052 = vadd.f32 %v6051, %v5207
        %v6053 = vadd.f32 %v6052, %v5558
        %v6054 = vadd.f32 %v6053, %v5560
        %6055 = vadd.xlane.f32.xlu0 %v6054
        %v6056 = vpop.xlane.xlu0 %6055
        %v6057 = vadd.f32 %v4503, %v4505
        %v6058 = vadd.f32 %v6057, %v4856
        %v6059 = vadd.f32 %v6058, %v4858
        %v6060 = vadd.f32 %v6059, %v5209
        %v6061 = vadd.f32 %v6060, %v5211
        %v6062 = vadd.f32 %v6061, %v5562
        %v6063 = vadd.f32 %v6062, %v5564
        %6064 = vadd.xlane.f32.xlu0 %v6063
        %v6065 = vpop.xlane.xlu0 %6064
        %v6066 = vadd.f32 %v4509, %v4511
        %v6067 = vadd.f32 %v6066, %v4862
        %v6068 = vadd.f32 %v6067, %v4864
        %v6069 = vadd.f32 %v6068, %v5215
        %v6070 = vadd.f32 %v6069, %v5217
        %v6071 = vadd.f32 %v6070, %v5568
        %v6072 = vadd.f32 %v6071, %v5570
        %6073 = vadd.xlane.f32.xlu0 %v6072
        %v6074 = vpop.xlane.xlu0 %6073
        %v6075 = vadd.f32 %v4513, %v4515
        %v6076 = vadd.f32 %v6075, %v4866
        %v6077 = vadd.f32 %v6076, %v4868
        %v6078 = vadd.f32 %v6077, %v5219
        %v6079 = vadd.f32 %v6078, %v5221
        %v6080 = vadd.f32 %v6079, %v5572
        %v6081 = vadd.f32 %v6080, %v5574
        %6082 = vadd.xlane.f32.xlu0 %v6081
        %v6083 = vpop.xlane.xlu0 %6082
        %v6084 = vadd.f32 %v4519, %v4521
        %v6085 = vadd.f32 %v6084, %v4872
        %v6086 = vadd.f32 %v6085, %v4874
        %v6087 = vadd.f32 %v6086, %v5225
        %v6088 = vadd.f32 %v6087, %v5227
        %v6089 = vadd.f32 %v6088, %v5578
        %v6090 = vadd.f32 %v6089, %v5580
        %6091 = vadd.xlane.f32.xlu0 %v6090
        %v6092 = vpop.xlane.xlu0 %6091
        %v6093 = vadd.f32 %v4523, %v4525
        %v6094 = vadd.f32 %v6093, %v4876
        %v6095 = vadd.f32 %v6094, %v4878
        %v6096 = vadd.f32 %v6095, %v5229
        %v6097 = vadd.f32 %v6096, %v5231
        %v6098 = vadd.f32 %v6097, %v5582
        %v6099 = vadd.f32 %v6098, %v5584
        %6100 = vadd.xlane.f32.xlu0 %v6099
        %v6101 = vpop.xlane.xlu0 %6100
        %v6102 = vadd.f32 %v4529, %v4531
        %v6103 = vadd.f32 %v6102, %v4882
        %v6104 = vadd.f32 %v6103, %v4884
        %v6105 = vadd.f32 %v6104, %v5235
        %v6106 = vadd.f32 %v6105, %v5237
        %v6107 = vadd.f32 %v6106, %v5588
        %v6108 = vadd.f32 %v6107, %v5590
        %6109 = vadd.xlane.f32.xlu0 %v6108
        %v6110 = vpop.xlane.xlu0 %6109
        %v6111 = vadd.f32 %v4533, %v4535
        %v6112 = vadd.f32 %v6111, %v4886
        %v6113 = vadd.f32 %v6112, %v4888
        %v6114 = vadd.f32 %v6113, %v5239
        %v6115 = vadd.f32 %v6114, %v5241
        %v6116 = vadd.f32 %v6115, %v5592
        %v6117 = vadd.f32 %v6116, %v5594
        %6118 = vadd.xlane.f32.xlu0 %v6117
        %v6119 = vpop.xlane.xlu0 %6118
        %v6120 = vadd.f32 %v4539, %v4541
        %v6121 = vadd.f32 %v6120, %v4892
        %v6122 = vadd.f32 %v6121, %v4894
        %v6123 = vadd.f32 %v6122, %v5245
        %v6124 = vadd.f32 %v6123, %v5247
        %v6125 = vadd.f32 %v6124, %v5598
        %v6126 = vadd.f32 %v6125, %v5600
        %6127 = vadd.xlane.f32.xlu0 %v6126
        %v6128 = vpop.xlane.xlu0 %6127
        %v6129 = vadd.f32 %v4543, %v4545
        %v6130 = vadd.f32 %v6129, %v4896
        %v6131 = vadd.f32 %v6130, %v4898
        %v6132 = vadd.f32 %v6131, %v5249
        %v6133 = vadd.f32 %v6132, %v5251
        %v6134 = vadd.f32 %v6133, %v5602
        %v6135 = vadd.f32 %v6134, %v5604
        %6136 = vadd.xlane.f32.xlu0 %v6135
        %v6137 = vpop.xlane.xlu0 %6136
        %v6138 = vadd.f32 %v4549, %v4551
        %v6139 = vadd.f32 %v6138, %v4902
        %v6140 = vadd.f32 %v6139, %v4904
        %v6141 = vadd.f32 %v6140, %v5255
        %v6142 = vadd.f32 %v6141, %v5257
        %v6143 = vadd.f32 %v6142, %v5608
        %v6144 = vadd.f32 %v6143, %v5610
        %6145 = vadd.xlane.f32.xlu0 %v6144
        %v6146 = vpop.xlane.xlu0 %6145
        %v6147 = vadd.f32 %v4553, %v4555
        %v6148 = vadd.f32 %v6147, %v4906
        %v6149 = vadd.f32 %v6148, %v4908
        %v6150 = vadd.f32 %v6149, %v5259
        %v6151 = vadd.f32 %v6150, %v5261
        %v6152 = vadd.f32 %v6151, %v5612
        %v6153 = vadd.f32 %v6152, %v5614
        %6154 = vadd.xlane.f32.xlu0 %v6153
        %v6155 = vpop.xlane.xlu0 %6154
        %v6156 = vadd.f32 %v4559, %v4561
        %v6157 = vadd.f32 %v6156, %v4912
        %v6158 = vadd.f32 %v6157, %v4914
        %v6159 = vadd.f32 %v6158, %v5265
        %v6160 = vadd.f32 %v6159, %v5267
        %v6161 = vadd.f32 %v6160, %v5618
        %v6162 = vadd.f32 %v6161, %v5620
        %6163 = vadd.xlane.f32.xlu0 %v6162
        %v6164 = vpop.xlane.xlu0 %6163
        %v6165 = vadd.f32 %v4563, %v4565
        %v6166 = vadd.f32 %v6165, %v4916
        %v6167 = vadd.f32 %v6166, %v4918
        %v6168 = vadd.f32 %v6167, %v5269
        %v6169 = vadd.f32 %v6168, %v5271
        %v6170 = vadd.f32 %v6169, %v5622
        %v6171 = vadd.f32 %v6170, %v5624
        %6172 = vadd.xlane.f32.xlu0 %v6171
        %v6173 = vpop.xlane.xlu0 %6172
        %v6174 = vadd.f32 %v4569, %v4571
        %v6175 = vadd.f32 %v6174, %v4922
        %v6176 = vadd.f32 %v6175, %v4924
        %v6177 = vadd.f32 %v6176, %v5275
        %v6178 = vadd.f32 %v6177, %v5277
        %v6179 = vadd.f32 %v6178, %v5628
        %v6180 = vadd.f32 %v6179, %v5630
        %6181 = vadd.xlane.f32.xlu0 %v6180
        %v6182 = vpop.xlane.xlu0 %6181
        %v6183 = vadd.f32 %v4573, %v4575
        %v6184 = vadd.f32 %v6183, %v4926
        %v6185 = vadd.f32 %v6184, %v4928
        %v6186 = vadd.f32 %v6185, %v5279
        %v6187 = vadd.f32 %v6186, %v5281
        %v6188 = vadd.f32 %v6187, %v5632
        %v6189 = vadd.f32 %v6188, %v5634
        %6190 = vadd.xlane.f32.xlu0 %v6189
        %v6191 = vpop.xlane.xlu0 %6190
        %v6192 = vadd.f32 %v4579, %v4581
        %v6193 = vadd.f32 %v6192, %v4932
        %v6194 = vadd.f32 %v6193, %v4934
        %v6195 = vadd.f32 %v6194, %v5285
        %v6196 = vadd.f32 %v6195, %v5287
        %v6197 = vadd.f32 %v6196, %v5638
        %v6198 = vadd.f32 %v6197, %v5640
        %6199 = vadd.xlane.f32.xlu0 %v6198
        %v6200 = vpop.xlane.xlu0 %6199
        %v6201 = vadd.f32 %v4583, %v4585
        %v6202 = vadd.f32 %v6201, %v4936
        %v6203 = vadd.f32 %v6202, %v4938
        %v6204 = vadd.f32 %v6203, %v5289
        %v6205 = vadd.f32 %v6204, %v5291
        %v6206 = vadd.f32 %v6205, %v5642
        %v6207 = vadd.f32 %v6206, %v5644
        %6208 = vadd.xlane.f32.xlu0 %v6207
        %v6209 = vpop.xlane.xlu0 %6208
        %v6210 = vadd.f32 %v4589, %v4591
        %v6211 = vadd.f32 %v6210, %v4942
        %v6212 = vadd.f32 %v6211, %v4944
        %v6213 = vadd.f32 %v6212, %v5295
        %v6214 = vadd.f32 %v6213, %v5297
        %v6215 = vadd.f32 %v6214, %v5648
        %v6216 = vadd.f32 %v6215, %v5650
        %6217 = vadd.xlane.f32.xlu0 %v6216
        %v6218 = vpop.xlane.xlu0 %6217
        %v6219 = vadd.f32 %v4593, %v4595
        %v6220 = vadd.f32 %v6219, %v4946
        %v6221 = vadd.f32 %v6220, %v4948
        %v6222 = vadd.f32 %v6221, %v5299
        %v6223 = vadd.f32 %v6222, %v5301
        %v6224 = vadd.f32 %v6223, %v5652
        %v6225 = vadd.f32 %v6224, %v5654
        %6226 = vadd.xlane.f32.xlu0 %v6225
        %v6227 = vpop.xlane.xlu0 %6226
        %v6228 = vadd.f32 %v4599, %v4601
        %v6229 = vadd.f32 %v6228, %v4952
        %v6230 = vadd.f32 %v6229, %v4954
        %v6231 = vadd.f32 %v6230, %v5305
        %v6232 = vadd.f32 %v6231, %v5307
        %v6233 = vadd.f32 %v6232, %v5658
        %v6234 = vadd.f32 %v6233, %v5660
        %6235 = vadd.xlane.f32.xlu0 %v6234
        %v6236 = vpop.xlane.xlu0 %6235
        %v6237 = vadd.f32 %v4603, %v4605
        %v6238 = vadd.f32 %v6237, %v4956
        %v6239 = vadd.f32 %v6238, %v4958
        %v6240 = vadd.f32 %v6239, %v5309
        %v6241 = vadd.f32 %v6240, %v5311
        %v6242 = vadd.f32 %v6241, %v5662
        %v6243 = vadd.f32 %v6242, %v5664
        %6244 = vadd.xlane.f32.xlu0 %v6243
        %v6245 = vpop.xlane.xlu0 %6244
        %v6246 = vmul.f32 %v5678, 0.0009765625
        %v6247 = vmul.f32 %v5687, 0.0009765625
        %v6248 = vmul.f32 %v5696, 0.0009765625
        %v6249 = vmul.f32 %v5705, 0.0009765625
        %v6250 = vmul.f32 %v5714, 0.0009765625
        %v6251 = vmul.f32 %v5723, 0.0009765625
        %v6252 = vmul.f32 %v5732, 0.0009765625
        %v6253 = vmul.f32 %v5741, 0.0009765625
        %v6254 = vmul.f32 %v5750, 0.0009765625
        %v6255 = vmul.f32 %v5759, 0.0009765625
        %v6256 = vmul.f32 %v5768, 0.0009765625
        %v6257 = vmul.f32 %v5777, 0.0009765625
        %v6258 = vmul.f32 %v5786, 0.0009765625
        %v6259 = vmul.f32 %v5795, 0.0009765625
        %v6260 = vmul.f32 %v5804, 0.0009765625
        %v6261 = vmul.f32 %v5813, 0.0009765625
        %v6262 = vmul.f32 %v5822, 0.0009765625
        %v6263 = vmul.f32 %v5831, 0.0009765625
        %v6264 = vmul.f32 %v5840, 0.0009765625
        %v6265 = vmul.f32 %v5849, 0.0009765625
        %v6266 = vmul.f32 %v5858, 0.0009765625
        %v6267 = vmul.f32 %v5867, 0.0009765625
        %v6268 = vmul.f32 %v5876, 0.0009765625
        %v6269 = vmul.f32 %v5885, 0.0009765625
        %v6270 = vmul.f32 %v5894, 0.0009765625
        %v6271 = vmul.f32 %v5903, 0.0009765625
        %v6272 = vmul.f32 %v5912, 0.0009765625
        %v6273 = vmul.f32 %v5921, 0.0009765625
        %v6274 = vmul.f32 %v5930, 0.0009765625
        %v6275 = vmul.f32 %v5939, 0.0009765625
        %v6276 = vmul.f32 %v5948, 0.0009765625
        %v6277 = vmul.f32 %v5957, 0.0009765625
        %v6278 = vmul.f32 %v5966, 0.0009765625
        %v6279 = vmul.f32 %v5975, 0.0009765625
        %v6280 = vmul.f32 %v5984, 0.0009765625
        %v6281 = vmul.f32 %v5993, 0.0009765625
        %v6282 = vmul.f32 %v6002, 0.0009765625
        %v6283 = vmul.f32 %v6011, 0.0009765625
        %v6284 = vmul.f32 %v6020, 0.0009765625
        %v6285 = vmul.f32 %v6029, 0.0009765625
        %v6286 = vmul.f32 %v6038, 0.0009765625
        %v6287 = vmul.f32 %v6047, 0.0009765625
        %v6288 = vmul.f32 %v6056, 0.0009765625
        %v6289 = vmul.f32 %v6065, 0.0009765625
        %v6290 = vmul.f32 %v6074, 0.0009765625
        %v6291 = vmul.f32 %v6083, 0.0009765625
        %v6292 = vmul.f32 %v6092, 0.0009765625
        %v6293 = vmul.f32 %v6101, 0.0009765625
        %v6294 = vmul.f32 %v6110, 0.0009765625
        %v6295 = vmul.f32 %v6119, 0.0009765625
        %v6296 = vmul.f32 %v6128, 0.0009765625
        %v6297 = vmul.f32 %v6137, 0.0009765625
        %v6298 = vmul.f32 %v6146, 0.0009765625
        %v6299 = vmul.f32 %v6155, 0.0009765625
        %v6300 = vmul.f32 %v6164, 0.0009765625
        %v6301 = vmul.f32 %v6173, 0.0009765625
        %v6302 = vmul.f32 %v6182, 0.0009765625
        %v6303 = vmul.f32 %v6191, 0.0009765625
        %v6304 = vmul.f32 %v6200, 0.0009765625
        %v6305 = vmul.f32 %v6209, 0.0009765625
        %v6306 = vmul.f32 %v6218, 0.0009765625
        %v6307 = vmul.f32 %v6227, 0.0009765625
        %v6308 = vmul.f32 %v6236, 0.0009765625
        %v6309 = vmul.f32 %v6245, 0.0009765625
        %v6310 = vmul.f32 %v4289, %v4289
        %v6311 = vmul.f32 %v4291, %v4291
        %v6312 = vmul.f32 %v4642, %v4642
        %v6313 = vmul.f32 %v4644, %v4644
        %v6314 = vmul.f32 %v4995, %v4995
        %v6315 = vmul.f32 %v4997, %v4997
        %v6316 = vmul.f32 %v5348, %v5348
        %v6317 = vmul.f32 %v5350, %v5350
        %v6318 = vmul.f32 %v4293, %v4293
        %v6319 = vmul.f32 %v4295, %v4295
        %v6320 = vmul.f32 %v4646, %v4646
        %v6321 = vmul.f32 %v4648, %v4648
        %v6322 = vmul.f32 %v4999, %v4999
        %v6323 = vmul.f32 %v5001, %v5001
        %v6324 = vmul.f32 %v5352, %v5352
        %v6325 = vmul.f32 %v5354, %v5354
        %v6326 = vmul.f32 %v4299, %v4299
        %v6327 = vmul.f32 %v4301, %v4301
        %v6328 = vmul.f32 %v4652, %v4652
        %v6329 = vmul.f32 %v4654, %v4654
        %v6330 = vmul.f32 %v5005, %v5005
        %v6331 = vmul.f32 %v5007, %v5007
        %v6332 = vmul.f32 %v5358, %v5358
        %v6333 = vmul.f32 %v5360, %v5360
        %v6334 = vmul.f32 %v4303, %v4303
        %v6335 = vmul.f32 %v4305, %v4305
        %v6336 = vmul.f32 %v4656, %v4656
        %v6337 = vmul.f32 %v4658, %v4658
        %v6338 = vmul.f32 %v5009, %v5009
        %v6339 = vmul.f32 %v5011, %v5011
        %v6340 = vmul.f32 %v5362, %v5362
        %v6341 = vmul.f32 %v5364, %v5364
        %v6342 = vmul.f32 %v4309, %v4309
        %v6343 = vmul.f32 %v4311, %v4311
        %v6344 = vmul.f32 %v4662, %v4662
        %v6345 = vmul.f32 %v4664, %v4664
        %v6346 = vmul.f32 %v5015, %v5015
        %v6347 = vmul.f32 %v5017, %v5017
        %v6348 = vmul.f32 %v5368, %v5368
        %v6349 = vmul.f32 %v5370, %v5370
        %v6350 = vmul.f32 %v4313, %v4313
        %v6351 = vmul.f32 %v4315, %v4315
        %v6352 = vmul.f32 %v4666, %v4666
        %v6353 = vmul.f32 %v4668, %v4668
        %v6354 = vmul.f32 %v5019, %v5019
        %v6355 = vmul.f32 %v5021, %v5021
        %v6356 = vmul.f32 %v5372, %v5372
        %v6357 = vmul.f32 %v5374, %v5374
        %v6358 = vmul.f32 %v4319, %v4319
        %v6359 = vmul.f32 %v4321, %v4321
        %v6360 = vmul.f32 %v4672, %v4672
        %v6361 = vmul.f32 %v4674, %v4674
        %v6362 = vmul.f32 %v5025, %v5025
        %v6363 = vmul.f32 %v5027, %v5027
        %v6364 = vmul.f32 %v5378, %v5378
        %v6365 = vmul.f32 %v5380, %v5380
        %v6366 = vmul.f32 %v4323, %v4323
        %v6367 = vmul.f32 %v4325, %v4325
        %v6368 = vmul.f32 %v4676, %v4676
        %v6369 = vmul.f32 %v4678, %v4678
        %v6370 = vmul.f32 %v5029, %v5029
        %v6371 = vmul.f32 %v5031, %v5031
        %v6372 = vmul.f32 %v5382, %v5382
        %v6373 = vmul.f32 %v5384, %v5384
        %v6374 = vmul.f32 %v4329, %v4329
        %v6375 = vmul.f32 %v4331, %v4331
        %v6376 = vmul.f32 %v4682, %v4682
        %v6377 = vmul.f32 %v4684, %v4684
        %v6378 = vmul.f32 %v5035, %v5035
        %v6379 = vmul.f32 %v5037, %v5037
        %v6380 = vmul.f32 %v5388, %v5388
        %v6381 = vmul.f32 %v5390, %v5390
        %v6382 = vmul.f32 %v4333, %v4333
        %v6383 = vmul.f32 %v4335, %v4335
        %v6384 = vmul.f32 %v4686, %v4686
        %v6385 = vmul.f32 %v4688, %v4688
        %v6386 = vmul.f32 %v5039, %v5039
        %v6387 = vmul.f32 %v5041, %v5041
        %v6388 = vmul.f32 %v5392, %v5392
        %v6389 = vmul.f32 %v5394, %v5394
        %v6390 = vmul.f32 %v4339, %v4339
        %v6391 = vmul.f32 %v4341, %v4341
        %v6392 = vmul.f32 %v4692, %v4692
        %v6393 = vmul.f32 %v4694, %v4694
        %v6394 = vmul.f32 %v5045, %v5045
        %v6395 = vmul.f32 %v5047, %v5047
        %v6396 = vmul.f32 %v5398, %v5398
        %v6397 = vmul.f32 %v5400, %v5400
        %v6398 = vmul.f32 %v4343, %v4343
        %v6399 = vmul.f32 %v4345, %v4345
        %v6400 = vmul.f32 %v4696, %v4696
        %v6401 = vmul.f32 %v4698, %v4698
        %v6402 = vmul.f32 %v5049, %v5049
        %v6403 = vmul.f32 %v5051, %v5051
        %v6404 = vmul.f32 %v5402, %v5402
        %v6405 = vmul.f32 %v5404, %v5404
        %v6406 = vmul.f32 %v4349, %v4349
        %v6407 = vmul.f32 %v4351, %v4351
        %v6408 = vmul.f32 %v4702, %v4702
        %v6409 = vmul.f32 %v4704, %v4704
        %v6410 = vmul.f32 %v5055, %v5055
        %v6411 = vmul.f32 %v5057, %v5057
        %v6412 = vmul.f32 %v5408, %v5408
        %v6413 = vmul.f32 %v5410, %v5410
        %v6414 = vmul.f32 %v4353, %v4353
        %v6415 = vmul.f32 %v4355, %v4355
        %v6416 = vmul.f32 %v4706, %v4706
        %v6417 = vmul.f32 %v4708, %v4708
        %v6418 = vmul.f32 %v5059, %v5059
        %v6419 = vmul.f32 %v5061, %v5061
        %v6420 = vmul.f32 %v5412, %v5412
        %v6421 = vmul.f32 %v5414, %v5414
        %v6422 = vmul.f32 %v4359, %v4359
        %v6423 = vmul.f32 %v4361, %v4361
        %v6424 = vmul.f32 %v4712, %v4712
        %v6425 = vmul.f32 %v4714, %v4714
        %v6426 = vmul.f32 %v5065, %v5065
        %v6427 = vmul.f32 %v5067, %v5067
        %v6428 = vmul.f32 %v5418, %v5418
        %v6429 = vmul.f32 %v5420, %v5420
        %v6430 = vmul.f32 %v4363, %v4363
        %v6431 = vmul.f32 %v4365, %v4365
        %v6432 = vmul.f32 %v4716, %v4716
        %v6433 = vmul.f32 %v4718, %v4718
        %v6434 = vmul.f32 %v5069, %v5069
        %v6435 = vmul.f32 %v5071, %v5071
        %v6436 = vmul.f32 %v5422, %v5422
        %v6437 = vmul.f32 %v5424, %v5424
        %v6438 = vmul.f32 %v4369, %v4369
        %v6439 = vmul.f32 %v4371, %v4371
        %v6440 = vmul.f32 %v4722, %v4722
        %v6441 = vmul.f32 %v4724, %v4724
        %v6442 = vmul.f32 %v5075, %v5075
        %v6443 = vmul.f32 %v5077, %v5077
        %v6444 = vmul.f32 %v5428, %v5428
        %v6445 = vmul.f32 %v5430, %v5430
        %v6446 = vmul.f32 %v4373, %v4373
        %v6447 = vmul.f32 %v4375, %v4375
        %v6448 = vmul.f32 %v4726, %v4726
        %v6449 = vmul.f32 %v4728, %v4728
        %v6450 = vmul.f32 %v5079, %v5079
        %v6451 = vmul.f32 %v5081, %v5081
        %v6452 = vmul.f32 %v5432, %v5432
        %v6453 = vmul.f32 %v5434, %v5434
        %v6454 = vmul.f32 %v4379, %v4379
        %v6455 = vmul.f32 %v4381, %v4381
        %v6456 = vmul.f32 %v4732, %v4732
        %v6457 = vmul.f32 %v4734, %v4734
        %v6458 = vmul.f32 %v5085, %v5085
        %v6459 = vmul.f32 %v5087, %v5087
        %v6460 = vmul.f32 %v5438, %v5438
        %v6461 = vmul.f32 %v5440, %v5440
        %v6462 = vmul.f32 %v4383, %v4383
        %v6463 = vmul.f32 %v4385, %v4385
        %v6464 = vmul.f32 %v4736, %v4736
        %v6465 = vmul.f32 %v4738, %v4738
        %v6466 = vmul.f32 %v5089, %v5089
        %v6467 = vmul.f32 %v5091, %v5091
        %v6468 = vmul.f32 %v5442, %v5442
        %v6469 = vmul.f32 %v5444, %v5444
        %v6470 = vmul.f32 %v4389, %v4389
        %v6471 = vmul.f32 %v4391, %v4391
        %v6472 = vmul.f32 %v4742, %v4742
        %v6473 = vmul.f32 %v4744, %v4744
        %v6474 = vmul.f32 %v5095, %v5095
        %v6475 = vmul.f32 %v5097, %v5097
        %v6476 = vmul.f32 %v5448, %v5448
        %v6477 = vmul.f32 %v5450, %v5450
        %v6478 = vmul.f32 %v4393, %v4393
        %v6479 = vmul.f32 %v4395, %v4395
        %v6480 = vmul.f32 %v4746, %v4746
        %v6481 = vmul.f32 %v4748, %v4748
        %v6482 = vmul.f32 %v5099, %v5099
        %v6483 = vmul.f32 %v5101, %v5101
        %v6484 = vmul.f32 %v5452, %v5452
        %v6485 = vmul.f32 %v5454, %v5454
        %v6486 = vmul.f32 %v4399, %v4399
        %v6487 = vmul.f32 %v4401, %v4401
        %v6488 = vmul.f32 %v4752, %v4752
        %v6489 = vmul.f32 %v4754, %v4754
        %v6490 = vmul.f32 %v5105, %v5105
        %v6491 = vmul.f32 %v5107, %v5107
        %v6492 = vmul.f32 %v5458, %v5458
        %v6493 = vmul.f32 %v5460, %v5460
        %v6494 = vmul.f32 %v4403, %v4403
        %v6495 = vmul.f32 %v4405, %v4405
        %v6496 = vmul.f32 %v4756, %v4756
        %v6497 = vmul.f32 %v4758, %v4758
        %v6498 = vmul.f32 %v5109, %v5109
        %v6499 = vmul.f32 %v5111, %v5111
        %v6500 = vmul.f32 %v5462, %v5462
        %v6501 = vmul.f32 %v5464, %v5464
        %v6502 = vmul.f32 %v4409, %v4409
        %v6503 = vmul.f32 %v4411, %v4411
        %v6504 = vmul.f32 %v4762, %v4762
        %v6505 = vmul.f32 %v4764, %v4764
        %v6506 = vmul.f32 %v5115, %v5115
        %v6507 = vmul.f32 %v5117, %v5117
        %v6508 = vmul.f32 %v5468, %v5468
        %v6509 = vmul.f32 %v5470, %v5470
        %v6510 = vmul.f32 %v4413, %v4413
        %v6511 = vmul.f32 %v4415, %v4415
        %v6512 = vmul.f32 %v4766, %v4766
        %v6513 = vmul.f32 %v4768, %v4768
        %v6514 = vmul.f32 %v5119, %v5119
        %v6515 = vmul.f32 %v5121, %v5121
        %v6516 = vmul.f32 %v5472, %v5472
        %v6517 = vmul.f32 %v5474, %v5474
        %v6518 = vmul.f32 %v4419, %v4419
        %v6519 = vmul.f32 %v4421, %v4421
        %v6520 = vmul.f32 %v4772, %v4772
        %v6521 = vmul.f32 %v4774, %v4774
        %v6522 = vmul.f32 %v5125, %v5125
        %v6523 = vmul.f32 %v5127, %v5127
        %v6524 = vmul.f32 %v5478, %v5478
        %v6525 = vmul.f32 %v5480, %v5480
        %v6526 = vmul.f32 %v4423, %v4423
        %v6527 = vmul.f32 %v4425, %v4425
        %v6528 = vmul.f32 %v4776, %v4776
        %v6529 = vmul.f32 %v4778, %v4778
        %v6530 = vmul.f32 %v5129, %v5129
        %v6531 = vmul.f32 %v5131, %v5131
        %v6532 = vmul.f32 %v5482, %v5482
        %v6533 = vmul.f32 %v5484, %v5484
        %v6534 = vmul.f32 %v4429, %v4429
        %v6535 = vmul.f32 %v4431, %v4431
        %v6536 = vmul.f32 %v4782, %v4782
        %v6537 = vmul.f32 %v4784, %v4784
        %v6538 = vmul.f32 %v5135, %v5135
        %v6539 = vmul.f32 %v5137, %v5137
        %v6540 = vmul.f32 %v5488, %v5488
        %v6541 = vmul.f32 %v5490, %v5490
        %v6542 = vmul.f32 %v4433, %v4433
        %v6543 = vmul.f32 %v4435, %v4435
        %v6544 = vmul.f32 %v4786, %v4786
        %v6545 = vmul.f32 %v4788, %v4788
        %v6546 = vmul.f32 %v5139, %v5139
        %v6547 = vmul.f32 %v5141, %v5141
        %v6548 = vmul.f32 %v5492, %v5492
        %v6549 = vmul.f32 %v5494, %v5494
        %v6550 = vmul.f32 %v4439, %v4439
        %v6551 = vmul.f32 %v4441, %v4441
        %v6552 = vmul.f32 %v4792, %v4792
        %v6553 = vmul.f32 %v4794, %v4794
        %v6554 = vmul.f32 %v5145, %v5145
        %v6555 = vmul.f32 %v5147, %v5147
        %v6556 = vmul.f32 %v5498, %v5498
        %v6557 = vmul.f32 %v5500, %v5500
        %v6558 = vmul.f32 %v4443, %v4443
        %v6559 = vmul.f32 %v4445, %v4445
        %v6560 = vmul.f32 %v4796, %v4796
        %v6561 = vmul.f32 %v4798, %v4798
        %v6562 = vmul.f32 %v5149, %v5149
        %v6563 = vmul.f32 %v5151, %v5151
        %v6564 = vmul.f32 %v5502, %v5502
        %v6565 = vmul.f32 %v5504, %v5504
        %v6566 = vmul.f32 %v4449, %v4449
        %v6567 = vmul.f32 %v4451, %v4451
        %v6568 = vmul.f32 %v4802, %v4802
        %v6569 = vmul.f32 %v4804, %v4804
        %v6570 = vmul.f32 %v5155, %v5155
        %v6571 = vmul.f32 %v5157, %v5157
        %v6572 = vmul.f32 %v5508, %v5508
        %v6573 = vmul.f32 %v5510, %v5510
        %v6574 = vmul.f32 %v4453, %v4453
        %v6575 = vmul.f32 %v4455, %v4455
        %v6576 = vmul.f32 %v4806, %v4806
        %v6577 = vmul.f32 %v4808, %v4808
        %v6578 = vmul.f32 %v5159, %v5159
        %v6579 = vmul.f32 %v5161, %v5161
        %v6580 = vmul.f32 %v5512, %v5512
        %v6581 = vmul.f32 %v5514, %v5514
        %v6582 = vmul.f32 %v4459, %v4459
        %v6583 = vmul.f32 %v4461, %v4461
        %v6584 = vmul.f32 %v4812, %v4812
        %v6585 = vmul.f32 %v4814, %v4814
        %v6586 = vmul.f32 %v5165, %v5165
        %v6587 = vmul.f32 %v5167, %v5167
        %v6588 = vmul.f32 %v5518, %v5518
        %v6589 = vmul.f32 %v5520, %v5520
        %v6590 = vmul.f32 %v4463, %v4463
        %v6591 = vmul.f32 %v4465, %v4465
        %v6592 = vmul.f32 %v4816, %v4816
        %v6593 = vmul.f32 %v4818, %v4818
        %v6594 = vmul.f32 %v5169, %v5169
        %v6595 = vmul.f32 %v5171, %v5171
        %v6596 = vmul.f32 %v5522, %v5522
        %v6597 = vmul.f32 %v5524, %v5524
        %v6598 = vmul.f32 %v4469, %v4469
        %v6599 = vmul.f32 %v4471, %v4471
        %v6600 = vmul.f32 %v4822, %v4822
        %v6601 = vmul.f32 %v4824, %v4824
        %v6602 = vmul.f32 %v5175, %v5175
        %v6603 = vmul.f32 %v5177, %v5177
        %v6604 = vmul.f32 %v5528, %v5528
        %v6605 = vmul.f32 %v5530, %v5530
        %v6606 = vmul.f32 %v4473, %v4473
        %v6607 = vmul.f32 %v4475, %v4475
        %v6608 = vmul.f32 %v4826, %v4826
        %v6609 = vmul.f32 %v4828, %v4828
        %v6610 = vmul.f32 %v5179, %v5179
        %v6611 = vmul.f32 %v5181, %v5181
        %v6612 = vmul.f32 %v5532, %v5532
        %v6613 = vmul.f32 %v5534, %v5534
        %v6614 = vmul.f32 %v4479, %v4479
        %v6615 = vmul.f32 %v4481, %v4481
        %v6616 = vmul.f32 %v4832, %v4832
        %v6617 = vmul.f32 %v4834, %v4834
        %v6618 = vmul.f32 %v5185, %v5185
        %v6619 = vmul.f32 %v5187, %v5187
        %v6620 = vmul.f32 %v5538, %v5538
        %v6621 = vmul.f32 %v5540, %v5540
        %v6622 = vmul.f32 %v4483, %v4483
        %v6623 = vmul.f32 %v4485, %v4485
        %v6624 = vmul.f32 %v4836, %v4836
        %v6625 = vmul.f32 %v4838, %v4838
        %v6626 = vmul.f32 %v5189, %v5189
        %v6627 = vmul.f32 %v5191, %v5191
        %v6628 = vmul.f32 %v5542, %v5542
        %v6629 = vmul.f32 %v5544, %v5544
        %v6630 = vmul.f32 %v4489, %v4489
        %v6631 = vmul.f32 %v4491, %v4491
        %v6632 = vmul.f32 %v4842, %v4842
        %v6633 = vmul.f32 %v4844, %v4844
        %v6634 = vmul.f32 %v5195, %v5195
        %v6635 = vmul.f32 %v5197, %v5197
        %v6636 = vmul.f32 %v5548, %v5548
        %v6637 = vmul.f32 %v5550, %v5550
        %v6638 = vmul.f32 %v4493, %v4493
        %v6639 = vmul.f32 %v4495, %v4495
        %v6640 = vmul.f32 %v4846, %v4846
        %v6641 = vmul.f32 %v4848, %v4848
        %v6642 = vmul.f32 %v5199, %v5199
        %v6643 = vmul.f32 %v5201, %v5201
        %v6644 = vmul.f32 %v5552, %v5552
        %v6645 = vmul.f32 %v5554, %v5554
        %v6646 = vmul.f32 %v4499, %v4499
        %v6647 = vmul.f32 %v4501, %v4501
        %v6648 = vmul.f32 %v4852, %v4852
        %v6649 = vmul.f32 %v4854, %v4854
        %v6650 = vmul.f32 %v5205, %v5205
        %v6651 = vmul.f32 %v5207, %v5207
        %v6652 = vmul.f32 %v5558, %v5558
        %v6653 = vmul.f32 %v5560, %v5560
        %v6654 = vmul.f32 %v4503, %v4503
        %v6655 = vmul.f32 %v4505, %v4505
        %v6656 = vmul.f32 %v4856, %v4856
        %v6657 = vmul.f32 %v4858, %v4858
        %v6658 = vmul.f32 %v5209, %v5209
        %v6659 = vmul.f32 %v5211, %v5211
        %v6660 = vmul.f32 %v5562, %v5562
        %v6661 = vmul.f32 %v5564, %v5564
        %v6662 = vmul.f32 %v4509, %v4509
        %v6663 = vmul.f32 %v4511, %v4511
        %v6664 = vmul.f32 %v4862, %v4862
        %v6665 = vmul.f32 %v4864, %v4864
        %v6666 = vmul.f32 %v5215, %v5215
        %v6667 = vmul.f32 %v5217, %v5217
        %v6668 = vmul.f32 %v5568, %v5568
        %v6669 = vmul.f32 %v5570, %v5570
        %v6670 = vmul.f32 %v4513, %v4513
        %v6671 = vmul.f32 %v4515, %v4515
        %v6672 = vmul.f32 %v4866, %v4866
        %v6673 = vmul.f32 %v4868, %v4868
        %v6674 = vmul.f32 %v5219, %v5219
        %v6675 = vmul.f32 %v5221, %v5221
        %v6676 = vmul.f32 %v5572, %v5572
        %v6677 = vmul.f32 %v5574, %v5574
        %v6678 = vmul.f32 %v4519, %v4519
        %v6679 = vmul.f32 %v4521, %v4521
        %v6680 = vmul.f32 %v4872, %v4872
        %v6681 = vmul.f32 %v4874, %v4874
        %v6682 = vmul.f32 %v5225, %v5225
        %v6683 = vmul.f32 %v5227, %v5227
        %v6684 = vmul.f32 %v5578, %v5578
        %v6685 = vmul.f32 %v5580, %v5580
        %v6686 = vmul.f32 %v4523, %v4523
        %v6687 = vmul.f32 %v4525, %v4525
        %v6688 = vmul.f32 %v4876, %v4876
        %v6689 = vmul.f32 %v4878, %v4878
        %v6690 = vmul.f32 %v5229, %v5229
        %v6691 = vmul.f32 %v5231, %v5231
        %v6692 = vmul.f32 %v5582, %v5582
        %v6693 = vmul.f32 %v5584, %v5584
        %v6694 = vmul.f32 %v4529, %v4529
        %v6695 = vmul.f32 %v4531, %v4531
        %v6696 = vmul.f32 %v4882, %v4882
        %v6697 = vmul.f32 %v4884, %v4884
        %v6698 = vmul.f32 %v5235, %v5235
        %v6699 = vmul.f32 %v5237, %v5237
        %v6700 = vmul.f32 %v5588, %v5588
        %v6701 = vmul.f32 %v5590, %v5590
        %v6702 = vmul.f32 %v4533, %v4533
        %v6703 = vmul.f32 %v4535, %v4535
        %v6704 = vmul.f32 %v4886, %v4886
        %v6705 = vmul.f32 %v4888, %v4888
        %v6706 = vmul.f32 %v5239, %v5239
        %v6707 = vmul.f32 %v5241, %v5241
        %v6708 = vmul.f32 %v5592, %v5592
        %v6709 = vmul.f32 %v5594, %v5594
        %v6710 = vmul.f32 %v4539, %v4539
        %v6711 = vmul.f32 %v4541, %v4541
        %v6712 = vmul.f32 %v4892, %v4892
        %v6713 = vmul.f32 %v4894, %v4894
        %v6714 = vmul.f32 %v5245, %v5245
        %v6715 = vmul.f32 %v5247, %v5247
        %v6716 = vmul.f32 %v5598, %v5598
        %v6717 = vmul.f32 %v5600, %v5600
        %v6718 = vmul.f32 %v4543, %v4543
        %v6719 = vmul.f32 %v4545, %v4545
        %v6720 = vmul.f32 %v4896, %v4896
        %v6721 = vmul.f32 %v4898, %v4898
        %v6722 = vmul.f32 %v5249, %v5249
        %v6723 = vmul.f32 %v5251, %v5251
        %v6724 = vmul.f32 %v5602, %v5602
        %v6725 = vmul.f32 %v5604, %v5604
        %v6726 = vmul.f32 %v4549, %v4549
        %v6727 = vmul.f32 %v4551, %v4551
        %v6728 = vmul.f32 %v4902, %v4902
        %v6729 = vmul.f32 %v4904, %v4904
        %v6730 = vmul.f32 %v5255, %v5255
        %v6731 = vmul.f32 %v5257, %v5257
        %v6732 = vmul.f32 %v5608, %v5608
        %v6733 = vmul.f32 %v5610, %v5610
        %v6734 = vmul.f32 %v4553, %v4553
        %v6735 = vmul.f32 %v4555, %v4555
        %v6736 = vmul.f32 %v4906, %v4906
        %v6737 = vmul.f32 %v4908, %v4908
        %v6738 = vmul.f32 %v5259, %v5259
        %v6739 = vmul.f32 %v5261, %v5261
        %v6740 = vmul.f32 %v5612, %v5612
        %v6741 = vmul.f32 %v5614, %v5614
        %v6742 = vmul.f32 %v4559, %v4559
        %v6743 = vmul.f32 %v4561, %v4561
        %v6744 = vmul.f32 %v4912, %v4912
        %v6745 = vmul.f32 %v4914, %v4914
        %v6746 = vmul.f32 %v5265, %v5265
        %v6747 = vmul.f32 %v5267, %v5267
        %v6748 = vmul.f32 %v5618, %v5618
        %v6749 = vmul.f32 %v5620, %v5620
        %v6750 = vmul.f32 %v4563, %v4563
        %v6751 = vmul.f32 %v4565, %v4565
        %v6752 = vmul.f32 %v4916, %v4916
        %v6753 = vmul.f32 %v4918, %v4918
        %v6754 = vmul.f32 %v5269, %v5269
        %v6755 = vmul.f32 %v5271, %v5271
        %v6756 = vmul.f32 %v5622, %v5622
        %v6757 = vmul.f32 %v5624, %v5624
        %v6758 = vmul.f32 %v4569, %v4569
        %v6759 = vmul.f32 %v4571, %v4571
        %v6760 = vmul.f32 %v4922, %v4922
        %v6761 = vmul.f32 %v4924, %v4924
        %v6762 = vmul.f32 %v5275, %v5275
        %v6763 = vmul.f32 %v5277, %v5277
        %v6764 = vmul.f32 %v5628, %v5628
        %v6765 = vmul.f32 %v5630, %v5630
        %v6766 = vmul.f32 %v4573, %v4573
        %v6767 = vmul.f32 %v4575, %v4575
        %v6768 = vmul.f32 %v4926, %v4926
        %v6769 = vmul.f32 %v4928, %v4928
        %v6770 = vmul.f32 %v5279, %v5279
        %v6771 = vmul.f32 %v5281, %v5281
        %v6772 = vmul.f32 %v5632, %v5632
        %v6773 = vmul.f32 %v5634, %v5634
        %v6774 = vmul.f32 %v4579, %v4579
        %v6775 = vmul.f32 %v4581, %v4581
        %v6776 = vmul.f32 %v4932, %v4932
        %v6777 = vmul.f32 %v4934, %v4934
        %v6778 = vmul.f32 %v5285, %v5285
        %v6779 = vmul.f32 %v5287, %v5287
        %v6780 = vmul.f32 %v5638, %v5638
        %v6781 = vmul.f32 %v5640, %v5640
        %v6782 = vmul.f32 %v4583, %v4583
        %v6783 = vmul.f32 %v4585, %v4585
        %v6784 = vmul.f32 %v4936, %v4936
        %v6785 = vmul.f32 %v4938, %v4938
        %v6786 = vmul.f32 %v5289, %v5289
        %v6787 = vmul.f32 %v5291, %v5291
        %v6788 = vmul.f32 %v5642, %v5642
        %v6789 = vmul.f32 %v5644, %v5644
        %v6790 = vmul.f32 %v4589, %v4589
        %v6791 = vmul.f32 %v4591, %v4591
        %v6792 = vmul.f32 %v4942, %v4942
        %v6793 = vmul.f32 %v4944, %v4944
        %v6794 = vmul.f32 %v5295, %v5295
        %v6795 = vmul.f32 %v5297, %v5297
        %v6796 = vmul.f32 %v5648, %v5648
        %v6797 = vmul.f32 %v5650, %v5650
        %v6798 = vmul.f32 %v4593, %v4593
        %v6799 = vmul.f32 %v4595, %v4595
        %v6800 = vmul.f32 %v4946, %v4946
        %v6801 = vmul.f32 %v4948, %v4948
        %v6802 = vmul.f32 %v5299, %v5299
        %v6803 = vmul.f32 %v5301, %v5301
        %v6804 = vmul.f32 %v5652, %v5652
        %v6805 = vmul.f32 %v5654, %v5654
        %v6806 = vmul.f32 %v4599, %v4599
        %v6807 = vmul.f32 %v4601, %v4601
        %v6808 = vmul.f32 %v4952, %v4952
        %v6809 = vmul.f32 %v4954, %v4954
        %v6810 = vmul.f32 %v5305, %v5305
        %v6811 = vmul.f32 %v5307, %v5307
        %v6812 = vmul.f32 %v5658, %v5658
        %v6813 = vmul.f32 %v5660, %v5660
        %v6814 = vmul.f32 %v4603, %v4603
        %v6815 = vmul.f32 %v4605, %v4605
        %v6816 = vmul.f32 %v4956, %v4956
        %v6817 = vmul.f32 %v4958, %v4958
        %v6818 = vmul.f32 %v5309, %v5309
        %v6819 = vmul.f32 %v5311, %v5311
        %v6820 = vmul.f32 %v5662, %v5662
        %v6821 = vmul.f32 %v5664, %v5664
        %v6822 = vadd.f32 %v6310, %v6311
        %v6823 = vadd.f32 %v6822, %v6312
        %v6824 = vadd.f32 %v6823, %v6313
        %v6825 = vadd.f32 %v6824, %v6314
        %v6826 = vadd.f32 %v6825, %v6315
        %v6827 = vadd.f32 %v6826, %v6316
        %v6828 = vadd.f32 %v6827, %v6317
        %6829 = vadd.xlane.f32.xlu0 %v6828
        %v6830 = vpop.xlane.xlu0 %6829
        %v6831 = vadd.f32 %v6318, %v6319
        %v6832 = vadd.f32 %v6831, %v6320
        %v6833 = vadd.f32 %v6832, %v6321
        %v6834 = vadd.f32 %v6833, %v6322
        %v6835 = vadd.f32 %v6834, %v6323
        %v6836 = vadd.f32 %v6835, %v6324
        %v6837 = vadd.f32 %v6836, %v6325
        %6838 = vadd.xlane.f32.xlu0 %v6837
        %v6839 = vpop.xlane.xlu0 %6838
        %v6840 = vadd.f32 %v6326, %v6327
        %v6841 = vadd.f32 %v6840, %v6328
        %v6842 = vadd.f32 %v6841, %v6329
        %v6843 = vadd.f32 %v6842, %v6330
        %v6844 = vadd.f32 %v6843, %v6331
        %v6845 = vadd.f32 %v6844, %v6332
        %v6846 = vadd.f32 %v6845, %v6333
        %6847 = vadd.xlane.f32.xlu0 %v6846
        %v6848 = vpop.xlane.xlu0 %6847
        %v6849 = vadd.f32 %v6334, %v6335
        %v6850 = vadd.f32 %v6849, %v6336
        %v6851 = vadd.f32 %v6850, %v6337
        %v6852 = vadd.f32 %v6851, %v6338
        %v6853 = vadd.f32 %v6852, %v6339
        %v6854 = vadd.f32 %v6853, %v6340
        %v6855 = vadd.f32 %v6854, %v6341
        %6856 = vadd.xlane.f32.xlu0 %v6855
        %v6857 = vpop.xlane.xlu0 %6856
        %v6858 = vadd.f32 %v6342, %v6343
        %v6859 = vadd.f32 %v6858, %v6344
        %v6860 = vadd.f32 %v6859, %v6345
        %v6861 = vadd.f32 %v6860, %v6346
        %v6862 = vadd.f32 %v6861, %v6347
        %v6863 = vadd.f32 %v6862, %v6348
        %v6864 = vadd.f32 %v6863, %v6349
        %6865 = vadd.xlane.f32.xlu0 %v6864
        %v6866 = vpop.xlane.xlu0 %6865
        %v6867 = vadd.f32 %v6350, %v6351
        %v6868 = vadd.f32 %v6867, %v6352
        %v6869 = vadd.f32 %v6868, %v6353
        %v6870 = vadd.f32 %v6869, %v6354
        %v6871 = vadd.f32 %v6870, %v6355
        %v6872 = vadd.f32 %v6871, %v6356
        %v6873 = vadd.f32 %v6872, %v6357
        %6874 = vadd.xlane.f32.xlu0 %v6873
        %v6875 = vpop.xlane.xlu0 %6874
        %v6876 = vadd.f32 %v6358, %v6359
        %v6877 = vadd.f32 %v6876, %v6360
        %v6878 = vadd.f32 %v6877, %v6361
        %v6879 = vadd.f32 %v6878, %v6362
        %v6880 = vadd.f32 %v6879, %v6363
        %v6881 = vadd.f32 %v6880, %v6364
        %v6882 = vadd.f32 %v6881, %v6365
        %6883 = vadd.xlane.f32.xlu0 %v6882
        %v6884 = vpop.xlane.xlu0 %6883
        %v6885 = vadd.f32 %v6366, %v6367
        %v6886 = vadd.f32 %v6885, %v6368
        %v6887 = vadd.f32 %v6886, %v6369
        %v6888 = vadd.f32 %v6887, %v6370
        %v6889 = vadd.f32 %v6888, %v6371
        %v6890 = vadd.f32 %v6889, %v6372
        %v6891 = vadd.f32 %v6890, %v6373
        %6892 = vadd.xlane.f32.xlu0 %v6891
        %v6893 = vpop.xlane.xlu0 %6892
        %v6894 = vadd.f32 %v6374, %v6375
        %v6895 = vadd.f32 %v6894, %v6376
        %v6896 = vadd.f32 %v6895, %v6377
        %v6897 = vadd.f32 %v6896, %v6378
        %v6898 = vadd.f32 %v6897, %v6379
        %v6899 = vadd.f32 %v6898, %v6380
        %v6900 = vadd.f32 %v6899, %v6381
        %6901 = vadd.xlane.f32.xlu0 %v6900
        %v6902 = vpop.xlane.xlu0 %6901
        %v6903 = vadd.f32 %v6382, %v6383
        %v6904 = vadd.f32 %v6903, %v6384
        %v6905 = vadd.f32 %v6904, %v6385
        %v6906 = vadd.f32 %v6905, %v6386
        %v6907 = vadd.f32 %v6906, %v6387
        %v6908 = vadd.f32 %v6907, %v6388
        %v6909 = vadd.f32 %v6908, %v6389
        %6910 = vadd.xlane.f32.xlu0 %v6909
        %v6911 = vpop.xlane.xlu0 %6910
        %v6912 = vadd.f32 %v6390, %v6391
        %v6913 = vadd.f32 %v6912, %v6392
        %v6914 = vadd.f32 %v6913, %v6393
        %v6915 = vadd.f32 %v6914, %v6394
        %v6916 = vadd.f32 %v6915, %v6395
        %v6917 = vadd.f32 %v6916, %v6396
        %v6918 = vadd.f32 %v6917, %v6397
        %6919 = vadd.xlane.f32.xlu0 %v6918
        %v6920 = vpop.xlane.xlu0 %6919
        %v6921 = vadd.f32 %v6398, %v6399
        %v6922 = vadd.f32 %v6921, %v6400
        %v6923 = vadd.f32 %v6922, %v6401
        %v6924 = vadd.f32 %v6923, %v6402
        %v6925 = vadd.f32 %v6924, %v6403
        %v6926 = vadd.f32 %v6925, %v6404
        %v6927 = vadd.f32 %v6926, %v6405
        %6928 = vadd.xlane.f32.xlu0 %v6927
        %v6929 = vpop.xlane.xlu0 %6928
        %v6930 = vadd.f32 %v6406, %v6407
        %v6931 = vadd.f32 %v6930, %v6408
        %v6932 = vadd.f32 %v6931, %v6409
        %v6933 = vadd.f32 %v6932, %v6410
        %v6934 = vadd.f32 %v6933, %v6411
        %v6935 = vadd.f32 %v6934, %v6412
        %v6936 = vadd.f32 %v6935, %v6413
        %6937 = vadd.xlane.f32.xlu0 %v6936
        %v6938 = vpop.xlane.xlu0 %6937
        %v6939 = vadd.f32 %v6414, %v6415
        %v6940 = vadd.f32 %v6939, %v6416
        %v6941 = vadd.f32 %v6940, %v6417
        %v6942 = vadd.f32 %v6941, %v6418
        %v6943 = vadd.f32 %v6942, %v6419
        %v6944 = vadd.f32 %v6943, %v6420
        %v6945 = vadd.f32 %v6944, %v6421
        %6946 = vadd.xlane.f32.xlu0 %v6945
        %v6947 = vpop.xlane.xlu0 %6946
        %v6948 = vadd.f32 %v6422, %v6423
        %v6949 = vadd.f32 %v6948, %v6424
        %v6950 = vadd.f32 %v6949, %v6425
        %v6951 = vadd.f32 %v6950, %v6426
        %v6952 = vadd.f32 %v6951, %v6427
        %v6953 = vadd.f32 %v6952, %v6428
        %v6954 = vadd.f32 %v6953, %v6429
        %6955 = vadd.xlane.f32.xlu0 %v6954
        %v6956 = vpop.xlane.xlu0 %6955
        %v6957 = vadd.f32 %v6430, %v6431
        %v6958 = vadd.f32 %v6957, %v6432
        %v6959 = vadd.f32 %v6958, %v6433
        %v6960 = vadd.f32 %v6959, %v6434
        %v6961 = vadd.f32 %v6960, %v6435
        %v6962 = vadd.f32 %v6961, %v6436
        %v6963 = vadd.f32 %v6962, %v6437
        %6964 = vadd.xlane.f32.xlu0 %v6963
        %v6965 = vpop.xlane.xlu0 %6964
        %v6966 = vadd.f32 %v6438, %v6439
        %v6967 = vadd.f32 %v6966, %v6440
        %v6968 = vadd.f32 %v6967, %v6441
        %v6969 = vadd.f32 %v6968, %v6442
        %v6970 = vadd.f32 %v6969, %v6443
        %v6971 = vadd.f32 %v6970, %v6444
        %v6972 = vadd.f32 %v6971, %v6445
        %6973 = vadd.xlane.f32.xlu0 %v6972
        %v6974 = vpop.xlane.xlu0 %6973
        %v6975 = vadd.f32 %v6446, %v6447
        %v6976 = vadd.f32 %v6975, %v6448
        %v6977 = vadd.f32 %v6976, %v6449
        %v6978 = vadd.f32 %v6977, %v6450
        %v6979 = vadd.f32 %v6978, %v6451
        %v6980 = vadd.f32 %v6979, %v6452
        %v6981 = vadd.f32 %v6980, %v6453
        %6982 = vadd.xlane.f32.xlu0 %v6981
        %v6983 = vpop.xlane.xlu0 %6982
        %v6984 = vadd.f32 %v6454, %v6455
        %v6985 = vadd.f32 %v6984, %v6456
        %v6986 = vadd.f32 %v6985, %v6457
        %v6987 = vadd.f32 %v6986, %v6458
        %v6988 = vadd.f32 %v6987, %v6459
        %v6989 = vadd.f32 %v6988, %v6460
        %v6990 = vadd.f32 %v6989, %v6461
        %6991 = vadd.xlane.f32.xlu0 %v6990
        %v6992 = vpop.xlane.xlu0 %6991
        %v6993 = vadd.f32 %v6462, %v6463
        %v6994 = vadd.f32 %v6993, %v6464
        %v6995 = vadd.f32 %v6994, %v6465
        %v6996 = vadd.f32 %v6995, %v6466
        %v6997 = vadd.f32 %v6996, %v6467
        %v6998 = vadd.f32 %v6997, %v6468
        %v6999 = vadd.f32 %v6998, %v6469
        %7000 = vadd.xlane.f32.xlu0 %v6999
        %v7001 = vpop.xlane.xlu0 %7000
        %v7002 = vadd.f32 %v6470, %v6471
        %v7003 = vadd.f32 %v7002, %v6472
        %v7004 = vadd.f32 %v7003, %v6473
        %v7005 = vadd.f32 %v7004, %v6474
        %v7006 = vadd.f32 %v7005, %v6475
        %v7007 = vadd.f32 %v7006, %v6476
        %v7008 = vadd.f32 %v7007, %v6477
        %7009 = vadd.xlane.f32.xlu0 %v7008
        %v7010 = vpop.xlane.xlu0 %7009
        %v7011 = vadd.f32 %v6478, %v6479
        %v7012 = vadd.f32 %v7011, %v6480
        %v7013 = vadd.f32 %v7012, %v6481
        %v7014 = vadd.f32 %v7013, %v6482
        %v7015 = vadd.f32 %v7014, %v6483
        %v7016 = vadd.f32 %v7015, %v6484
        %v7017 = vadd.f32 %v7016, %v6485
        %7018 = vadd.xlane.f32.xlu0 %v7017
        %v7019 = vpop.xlane.xlu0 %7018
        %v7020 = vadd.f32 %v6486, %v6487
        %v7021 = vadd.f32 %v7020, %v6488
        %v7022 = vadd.f32 %v7021, %v6489
        %v7023 = vadd.f32 %v7022, %v6490
        %v7024 = vadd.f32 %v7023, %v6491
        %v7025 = vadd.f32 %v7024, %v6492
        %v7026 = vadd.f32 %v7025, %v6493
        %7027 = vadd.xlane.f32.xlu0 %v7026
        %v7028 = vpop.xlane.xlu0 %7027
        %v7029 = vadd.f32 %v6494, %v6495
        %v7030 = vadd.f32 %v7029, %v6496
        %v7031 = vadd.f32 %v7030, %v6497
        %v7032 = vadd.f32 %v7031, %v6498
        %v7033 = vadd.f32 %v7032, %v6499
        %v7034 = vadd.f32 %v7033, %v6500
        %v7035 = vadd.f32 %v7034, %v6501
        %7036 = vadd.xlane.f32.xlu0 %v7035
        %v7037 = vpop.xlane.xlu0 %7036
        %v7038 = vadd.f32 %v6502, %v6503
        %v7039 = vadd.f32 %v7038, %v6504
        %v7040 = vadd.f32 %v7039, %v6505
        %v7041 = vadd.f32 %v7040, %v6506
        %v7042 = vadd.f32 %v7041, %v6507
        %v7043 = vadd.f32 %v7042, %v6508
        %v7044 = vadd.f32 %v7043, %v6509
        %7045 = vadd.xlane.f32.xlu0 %v7044
        %v7046 = vpop.xlane.xlu0 %7045
        %v7047 = vadd.f32 %v6510, %v6511
        %v7048 = vadd.f32 %v7047, %v6512
        %v7049 = vadd.f32 %v7048, %v6513
        %v7050 = vadd.f32 %v7049, %v6514
        %v7051 = vadd.f32 %v7050, %v6515
        %v7052 = vadd.f32 %v7051, %v6516
        %v7053 = vadd.f32 %v7052, %v6517
        %7054 = vadd.xlane.f32.xlu0 %v7053
        %v7055 = vpop.xlane.xlu0 %7054
        %v7056 = vadd.f32 %v6518, %v6519
        %v7057 = vadd.f32 %v7056, %v6520
        %v7058 = vadd.f32 %v7057, %v6521
        %v7059 = vadd.f32 %v7058, %v6522
        %v7060 = vadd.f32 %v7059, %v6523
        %v7061 = vadd.f32 %v7060, %v6524
        %v7062 = vadd.f32 %v7061, %v6525
        %7063 = vadd.xlane.f32.xlu0 %v7062
        %v7064 = vpop.xlane.xlu0 %7063
        %v7065 = vadd.f32 %v6526, %v6527
        %v7066 = vadd.f32 %v7065, %v6528
        %v7067 = vadd.f32 %v7066, %v6529
        %v7068 = vadd.f32 %v7067, %v6530
        %v7069 = vadd.f32 %v7068, %v6531
        %v7070 = vadd.f32 %v7069, %v6532
        %v7071 = vadd.f32 %v7070, %v6533
        %7072 = vadd.xlane.f32.xlu0 %v7071
        %v7073 = vpop.xlane.xlu0 %7072
        %v7074 = vadd.f32 %v6534, %v6535
        %v7075 = vadd.f32 %v7074, %v6536
        %v7076 = vadd.f32 %v7075, %v6537
        %v7077 = vadd.f32 %v7076, %v6538
        %v7078 = vadd.f32 %v7077, %v6539
        %v7079 = vadd.f32 %v7078, %v6540
        %v7080 = vadd.f32 %v7079, %v6541
        %7081 = vadd.xlane.f32.xlu0 %v7080
        %v7082 = vpop.xlane.xlu0 %7081
        %v7083 = vadd.f32 %v6542, %v6543
        %v7084 = vadd.f32 %v7083, %v6544
        %v7085 = vadd.f32 %v7084, %v6545
        %v7086 = vadd.f32 %v7085, %v6546
        %v7087 = vadd.f32 %v7086, %v6547
        %v7088 = vadd.f32 %v7087, %v6548
        %v7089 = vadd.f32 %v7088, %v6549
        %7090 = vadd.xlane.f32.xlu0 %v7089
        %v7091 = vpop.xlane.xlu0 %7090
        %v7092 = vadd.f32 %v6550, %v6551
        %v7093 = vadd.f32 %v7092, %v6552
        %v7094 = vadd.f32 %v7093, %v6553
        %v7095 = vadd.f32 %v7094, %v6554
        %v7096 = vadd.f32 %v7095, %v6555
        %v7097 = vadd.f32 %v7096, %v6556
        %v7098 = vadd.f32 %v7097, %v6557
        %7099 = vadd.xlane.f32.xlu0 %v7098
        %v7100 = vpop.xlane.xlu0 %7099
        %v7101 = vadd.f32 %v6558, %v6559
        %v7102 = vadd.f32 %v7101, %v6560
        %v7103 = vadd.f32 %v7102, %v6561
        %v7104 = vadd.f32 %v7103, %v6562
        %v7105 = vadd.f32 %v7104, %v6563
        %v7106 = vadd.f32 %v7105, %v6564
        %v7107 = vadd.f32 %v7106, %v6565
        %7108 = vadd.xlane.f32.xlu0 %v7107
        %v7109 = vpop.xlane.xlu0 %7108
        %v7110 = vadd.f32 %v6566, %v6567
        %v7111 = vadd.f32 %v7110, %v6568
        %v7112 = vadd.f32 %v7111, %v6569
        %v7113 = vadd.f32 %v7112, %v6570
        %v7114 = vadd.f32 %v7113, %v6571
        %v7115 = vadd.f32 %v7114, %v6572
        %v7116 = vadd.f32 %v7115, %v6573
        %7117 = vadd.xlane.f32.xlu0 %v7116
        %v7118 = vpop.xlane.xlu0 %7117
        %v7119 = vadd.f32 %v6574, %v6575
        %v7120 = vadd.f32 %v7119, %v6576
        %v7121 = vadd.f32 %v7120, %v6577
        %v7122 = vadd.f32 %v7121, %v6578
        %v7123 = vadd.f32 %v7122, %v6579
        %v7124 = vadd.f32 %v7123, %v6580
        %v7125 = vadd.f32 %v7124, %v6581
        %7126 = vadd.xlane.f32.xlu0 %v7125
        %v7127 = vpop.xlane.xlu0 %7126
        %v7128 = vadd.f32 %v6582, %v6583
        %v7129 = vadd.f32 %v7128, %v6584
        %v7130 = vadd.f32 %v7129, %v6585
        %v7131 = vadd.f32 %v7130, %v6586
        %v7132 = vadd.f32 %v7131, %v6587
        %v7133 = vadd.f32 %v7132, %v6588
        %v7134 = vadd.f32 %v7133, %v6589
        %7135 = vadd.xlane.f32.xlu0 %v7134
        %v7136 = vpop.xlane.xlu0 %7135
        %v7137 = vadd.f32 %v6590, %v6591
        %v7138 = vadd.f32 %v7137, %v6592
        %v7139 = vadd.f32 %v7138, %v6593
        %v7140 = vadd.f32 %v7139, %v6594
        %v7141 = vadd.f32 %v7140, %v6595
        %v7142 = vadd.f32 %v7141, %v6596
        %v7143 = vadd.f32 %v7142, %v6597
        %7144 = vadd.xlane.f32.xlu0 %v7143
        %v7145 = vpop.xlane.xlu0 %7144
        %v7146 = vadd.f32 %v6598, %v6599
        %v7147 = vadd.f32 %v7146, %v6600
        %v7148 = vadd.f32 %v7147, %v6601
        %v7149 = vadd.f32 %v7148, %v6602
        %v7150 = vadd.f32 %v7149, %v6603
        %v7151 = vadd.f32 %v7150, %v6604
        %v7152 = vadd.f32 %v7151, %v6605
        %7153 = vadd.xlane.f32.xlu0 %v7152
        %v7154 = vpop.xlane.xlu0 %7153
        %v7155 = vadd.f32 %v6606, %v6607
        %v7156 = vadd.f32 %v7155, %v6608
        %v7157 = vadd.f32 %v7156, %v6609
        %v7158 = vadd.f32 %v7157, %v6610
        %v7159 = vadd.f32 %v7158, %v6611
        %v7160 = vadd.f32 %v7159, %v6612
        %v7161 = vadd.f32 %v7160, %v6613
        %7162 = vadd.xlane.f32.xlu0 %v7161
        %v7163 = vpop.xlane.xlu0 %7162
        %v7164 = vadd.f32 %v6614, %v6615
        %v7165 = vadd.f32 %v7164, %v6616
        %v7166 = vadd.f32 %v7165, %v6617
        %v7167 = vadd.f32 %v7166, %v6618
        %v7168 = vadd.f32 %v7167, %v6619
        %v7169 = vadd.f32 %v7168, %v6620
        %v7170 = vadd.f32 %v7169, %v6621
        %7171 = vadd.xlane.f32.xlu0 %v7170
        %v7172 = vpop.xlane.xlu0 %7171
        %v7173 = vadd.f32 %v6622, %v6623
        %v7174 = vadd.f32 %v7173, %v6624
        %v7175 = vadd.f32 %v7174, %v6625
        %v7176 = vadd.f32 %v7175, %v6626
        %v7177 = vadd.f32 %v7176, %v6627
        %v7178 = vadd.f32 %v7177, %v6628
        %v7179 = vadd.f32 %v7178, %v6629
        %7180 = vadd.xlane.f32.xlu0 %v7179
        %v7181 = vpop.xlane.xlu0 %7180
        %v7182 = vadd.f32 %v6630, %v6631
        %v7183 = vadd.f32 %v7182, %v6632
        %v7184 = vadd.f32 %v7183, %v6633
        %v7185 = vadd.f32 %v7184, %v6634
        %v7186 = vadd.f32 %v7185, %v6635
        %v7187 = vadd.f32 %v7186, %v6636
        %v7188 = vadd.f32 %v7187, %v6637
        %7189 = vadd.xlane.f32.xlu0 %v7188
        %v7190 = vpop.xlane.xlu0 %7189
        %v7191 = vadd.f32 %v6638, %v6639
        %v7192 = vadd.f32 %v7191, %v6640
        %v7193 = vadd.f32 %v7192, %v6641
        %v7194 = vadd.f32 %v7193, %v6642
        %v7195 = vadd.f32 %v7194, %v6643
        %v7196 = vadd.f32 %v7195, %v6644
        %v7197 = vadd.f32 %v7196, %v6645
        %7198 = vadd.xlane.f32.xlu0 %v7197
        %v7199 = vpop.xlane.xlu0 %7198
        %v7200 = vadd.f32 %v6646, %v6647
        %v7201 = vadd.f32 %v7200, %v6648
        %v7202 = vadd.f32 %v7201, %v6649
        %v7203 = vadd.f32 %v7202, %v6650
        %v7204 = vadd.f32 %v7203, %v6651
        %v7205 = vadd.f32 %v7204, %v6652
        %v7206 = vadd.f32 %v7205, %v6653
        %7207 = vadd.xlane.f32.xlu0 %v7206
        %v7208 = vpop.xlane.xlu0 %7207
        %v7209 = vadd.f32 %v6654, %v6655
        %v7210 = vadd.f32 %v7209, %v6656
        %v7211 = vadd.f32 %v7210, %v6657
        %v7212 = vadd.f32 %v7211, %v6658
        %v7213 = vadd.f32 %v7212, %v6659
        %v7214 = vadd.f32 %v7213, %v6660
        %v7215 = vadd.f32 %v7214, %v6661
        %7216 = vadd.xlane.f32.xlu0 %v7215
        %v7217 = vpop.xlane.xlu0 %7216
        %v7218 = vadd.f32 %v6662, %v6663
        %v7219 = vadd.f32 %v7218, %v6664
        %v7220 = vadd.f32 %v7219, %v6665
        %v7221 = vadd.f32 %v7220, %v6666
        %v7222 = vadd.f32 %v7221, %v6667
        %v7223 = vadd.f32 %v7222, %v6668
        %v7224 = vadd.f32 %v7223, %v6669
        %7225 = vadd.xlane.f32.xlu0 %v7224
        %v7226 = vpop.xlane.xlu0 %7225
        %v7227 = vadd.f32 %v6670, %v6671
        %v7228 = vadd.f32 %v7227, %v6672
        %v7229 = vadd.f32 %v7228, %v6673
        %v7230 = vadd.f32 %v7229, %v6674
        %v7231 = vadd.f32 %v7230, %v6675
        %v7232 = vadd.f32 %v7231, %v6676
        %v7233 = vadd.f32 %v7232, %v6677
        %7234 = vadd.xlane.f32.xlu0 %v7233
        %v7235 = vpop.xlane.xlu0 %7234
        %v7236 = vadd.f32 %v6678, %v6679
        %v7237 = vadd.f32 %v7236, %v6680
        %v7238 = vadd.f32 %v7237, %v6681
        %v7239 = vadd.f32 %v7238, %v6682
        %v7240 = vadd.f32 %v7239, %v6683
        %v7241 = vadd.f32 %v7240, %v6684
        %v7242 = vadd.f32 %v7241, %v6685
        %7243 = vadd.xlane.f32.xlu0 %v7242
        %v7244 = vpop.xlane.xlu0 %7243
        %v7245 = vadd.f32 %v6686, %v6687
        %v7246 = vadd.f32 %v7245, %v6688
        %v7247 = vadd.f32 %v7246, %v6689
        %v7248 = vadd.f32 %v7247, %v6690
        %v7249 = vadd.f32 %v7248, %v6691
        %v7250 = vadd.f32 %v7249, %v6692
        %v7251 = vadd.f32 %v7250, %v6693
        %7252 = vadd.xlane.f32.xlu0 %v7251
        %v7253 = vpop.xlane.xlu0 %7252
        %v7254 = vadd.f32 %v6694, %v6695
        %v7255 = vadd.f32 %v7254, %v6696
        %v7256 = vadd.f32 %v7255, %v6697
        %v7257 = vadd.f32 %v7256, %v6698
        %v7258 = vadd.f32 %v7257, %v6699
        %v7259 = vadd.f32 %v7258, %v6700
        %v7260 = vadd.f32 %v7259, %v6701
        %7261 = vadd.xlane.f32.xlu0 %v7260
        %v7262 = vpop.xlane.xlu0 %7261
        %v7263 = vadd.f32 %v6702, %v6703
        %v7264 = vadd.f32 %v7263, %v6704
        %v7265 = vadd.f32 %v7264, %v6705
        %v7266 = vadd.f32 %v7265, %v6706
        %v7267 = vadd.f32 %v7266, %v6707
        %v7268 = vadd.f32 %v7267, %v6708
        %v7269 = vadd.f32 %v7268, %v6709
        %7270 = vadd.xlane.f32.xlu0 %v7269
        %v7271 = vpop.xlane.xlu0 %7270
        %v7272 = vadd.f32 %v6710, %v6711
        %v7273 = vadd.f32 %v7272, %v6712
        %v7274 = vadd.f32 %v7273, %v6713
        %v7275 = vadd.f32 %v7274, %v6714
        %v7276 = vadd.f32 %v7275, %v6715
        %v7277 = vadd.f32 %v7276, %v6716
        %v7278 = vadd.f32 %v7277, %v6717
        %7279 = vadd.xlane.f32.xlu0 %v7278
        %v7280 = vpop.xlane.xlu0 %7279
        %v7281 = vadd.f32 %v6718, %v6719
        %v7282 = vadd.f32 %v7281, %v6720
        %v7283 = vadd.f32 %v7282, %v6721
        %v7284 = vadd.f32 %v7283, %v6722
        %v7285 = vadd.f32 %v7284, %v6723
        %v7286 = vadd.f32 %v7285, %v6724
        %v7287 = vadd.f32 %v7286, %v6725
        %7288 = vadd.xlane.f32.xlu0 %v7287
        %v7289 = vpop.xlane.xlu0 %7288
        %v7290 = vadd.f32 %v6726, %v6727
        %v7291 = vadd.f32 %v7290, %v6728
        %v7292 = vadd.f32 %v7291, %v6729
        %v7293 = vadd.f32 %v7292, %v6730
        %v7294 = vadd.f32 %v7293, %v6731
        %v7295 = vadd.f32 %v7294, %v6732
        %v7296 = vadd.f32 %v7295, %v6733
        %7297 = vadd.xlane.f32.xlu0 %v7296
        %v7298 = vpop.xlane.xlu0 %7297
        %v7299 = vadd.f32 %v6734, %v6735
        %v7300 = vadd.f32 %v7299, %v6736
        %v7301 = vadd.f32 %v7300, %v6737
        %v7302 = vadd.f32 %v7301, %v6738
        %v7303 = vadd.f32 %v7302, %v6739
        %v7304 = vadd.f32 %v7303, %v6740
        %v7305 = vadd.f32 %v7304, %v6741
        %7306 = vadd.xlane.f32.xlu0 %v7305
        %v7307 = vpop.xlane.xlu0 %7306
        %v7308 = vadd.f32 %v6742, %v6743
        %v7309 = vadd.f32 %v7308, %v6744
        %v7310 = vadd.f32 %v7309, %v6745
        %v7311 = vadd.f32 %v7310, %v6746
        %v7312 = vadd.f32 %v7311, %v6747
        %v7313 = vadd.f32 %v7312, %v6748
        %v7314 = vadd.f32 %v7313, %v6749
        %7315 = vadd.xlane.f32.xlu0 %v7314
        %v7316 = vpop.xlane.xlu0 %7315
        %v7317 = vadd.f32 %v6750, %v6751
        %v7318 = vadd.f32 %v7317, %v6752
        %v7319 = vadd.f32 %v7318, %v6753
        %v7320 = vadd.f32 %v7319, %v6754
        %v7321 = vadd.f32 %v7320, %v6755
        %v7322 = vadd.f32 %v7321, %v6756
        %v7323 = vadd.f32 %v7322, %v6757
        %7324 = vadd.xlane.f32.xlu0 %v7323
        %v7325 = vpop.xlane.xlu0 %7324
        %v7326 = vadd.f32 %v6758, %v6759
        %v7327 = vadd.f32 %v7326, %v6760
        %v7328 = vadd.f32 %v7327, %v6761
        %v7329 = vadd.f32 %v7328, %v6762
        %v7330 = vadd.f32 %v7329, %v6763
        %v7331 = vadd.f32 %v7330, %v6764
        %v7332 = vadd.f32 %v7331, %v6765
        %7333 = vadd.xlane.f32.xlu0 %v7332
        %v7334 = vpop.xlane.xlu0 %7333
        %v7335 = vadd.f32 %v6766, %v6767
        %v7336 = vadd.f32 %v7335, %v6768
        %v7337 = vadd.f32 %v7336, %v6769
        %v7338 = vadd.f32 %v7337, %v6770
        %v7339 = vadd.f32 %v7338, %v6771
        %v7340 = vadd.f32 %v7339, %v6772
        %v7341 = vadd.f32 %v7340, %v6773
        %7342 = vadd.xlane.f32.xlu0 %v7341
        %v7343 = vpop.xlane.xlu0 %7342
        %v7344 = vadd.f32 %v6774, %v6775
        %v7345 = vadd.f32 %v7344, %v6776
        %v7346 = vadd.f32 %v7345, %v6777
        %v7347 = vadd.f32 %v7346, %v6778
        %v7348 = vadd.f32 %v7347, %v6779
        %v7349 = vadd.f32 %v7348, %v6780
        %v7350 = vadd.f32 %v7349, %v6781
        %7351 = vadd.xlane.f32.xlu0 %v7350
        %v7352 = vpop.xlane.xlu0 %7351
        %v7353 = vadd.f32 %v6782, %v6783
        %v7354 = vadd.f32 %v7353, %v6784
        %v7355 = vadd.f32 %v7354, %v6785
        %v7356 = vadd.f32 %v7355, %v6786
        %v7357 = vadd.f32 %v7356, %v6787
        %v7358 = vadd.f32 %v7357, %v6788
        %v7359 = vadd.f32 %v7358, %v6789
        %7360 = vadd.xlane.f32.xlu0 %v7359
        %v7361 = vpop.xlane.xlu0 %7360
        %v7362 = vadd.f32 %v6790, %v6791
        %v7363 = vadd.f32 %v7362, %v6792
        %v7364 = vadd.f32 %v7363, %v6793
        %v7365 = vadd.f32 %v7364, %v6794
        %v7366 = vadd.f32 %v7365, %v6795
        %v7367 = vadd.f32 %v7366, %v6796
        %v7368 = vadd.f32 %v7367, %v6797
        %7369 = vadd.xlane.f32.xlu0 %v7368
        %v7370 = vpop.xlane.xlu0 %7369
        %v7371 = vadd.f32 %v6798, %v6799
        %v7372 = vadd.f32 %v7371, %v6800
        %v7373 = vadd.f32 %v7372, %v6801
        %v7374 = vadd.f32 %v7373, %v6802
        %v7375 = vadd.f32 %v7374, %v6803
        %v7376 = vadd.f32 %v7375, %v6804
        %v7377 = vadd.f32 %v7376, %v6805
        %7378 = vadd.xlane.f32.xlu0 %v7377
        %v7379 = vpop.xlane.xlu0 %7378
        %v7380 = vadd.f32 %v6806, %v6807
        %v7381 = vadd.f32 %v7380, %v6808
        %v7382 = vadd.f32 %v7381, %v6809
        %v7383 = vadd.f32 %v7382, %v6810
        %v7384 = vadd.f32 %v7383, %v6811
        %v7385 = vadd.f32 %v7384, %v6812
        %v7386 = vadd.f32 %v7385, %v6813
        %7387 = vadd.xlane.f32.xlu0 %v7386
        %v7388 = vpop.xlane.xlu0 %7387
        %v7389 = vadd.f32 %v6814, %v6815
        %v7390 = vadd.f32 %v7389, %v6816
        %v7391 = vadd.f32 %v7390, %v6817
        %v7392 = vadd.f32 %v7391, %v6818
        %v7393 = vadd.f32 %v7392, %v6819
        %v7394 = vadd.f32 %v7393, %v6820
        %v7395 = vadd.f32 %v7394, %v6821
        %7396 = vadd.xlane.f32.xlu0 %v7395
        %v7397 = vpop.xlane.xlu0 %7396
        %v7398 = vmul.f32 %v6830, 0.0009765625
        %v7399 = vmul.f32 %v6839, 0.0009765625
        %v7400 = vmul.f32 %v6848, 0.0009765625
        %v7401 = vmul.f32 %v6857, 0.0009765625
        %v7402 = vmul.f32 %v6866, 0.0009765625
        %v7403 = vmul.f32 %v6875, 0.0009765625
        %v7404 = vmul.f32 %v6884, 0.0009765625
        %v7405 = vmul.f32 %v6893, 0.0009765625
        %v7406 = vmul.f32 %v6902, 0.0009765625
        %v7407 = vmul.f32 %v6911, 0.0009765625
        %v7408 = vmul.f32 %v6920, 0.0009765625
        %v7409 = vmul.f32 %v6929, 0.0009765625
        %v7410 = vmul.f32 %v6938, 0.0009765625
        %v7411 = vmul.f32 %v6947, 0.0009765625
        %v7412 = vmul.f32 %v6956, 0.0009765625
        %v7413 = vmul.f32 %v6965, 0.0009765625
        %v7414 = vmul.f32 %v6974, 0.0009765625
        %v7415 = vmul.f32 %v6983, 0.0009765625
        %v7416 = vmul.f32 %v6992, 0.0009765625
        %v7417 = vmul.f32 %v7001, 0.0009765625
        %v7418 = vmul.f32 %v7010, 0.0009765625
        %v7419 = vmul.f32 %v7019, 0.0009765625
        %v7420 = vmul.f32 %v7028, 0.0009765625
        %v7421 = vmul.f32 %v7037, 0.0009765625
        %v7422 = vmul.f32 %v7046, 0.0009765625
        %v7423 = vmul.f32 %v7055, 0.0009765625
        %v7424 = vmul.f32 %v7064, 0.0009765625
        %v7425 = vmul.f32 %v7073, 0.0009765625
        %v7426 = vmul.f32 %v7082, 0.0009765625
        %v7427 = vmul.f32 %v7091, 0.0009765625
        %v7428 = vmul.f32 %v7100, 0.0009765625
        %v7429 = vmul.f32 %v7109, 0.0009765625
        %v7430 = vmul.f32 %v7118, 0.0009765625
        %v7431 = vmul.f32 %v7127, 0.0009765625
        %v7432 = vmul.f32 %v7136, 0.0009765625
        %v7433 = vmul.f32 %v7145, 0.0009765625
        %v7434 = vmul.f32 %v7154, 0.0009765625
        %v7435 = vmul.f32 %v7163, 0.0009765625
        %v7436 = vmul.f32 %v7172, 0.0009765625
        %v7437 = vmul.f32 %v7181, 0.0009765625
        %v7438 = vmul.f32 %v7190, 0.0009765625
        %v7439 = vmul.f32 %v7199, 0.0009765625
        %v7440 = vmul.f32 %v7208, 0.0009765625
        %v7441 = vmul.f32 %v7217, 0.0009765625
        %v7442 = vmul.f32 %v7226, 0.0009765625
        %v7443 = vmul.f32 %v7235, 0.0009765625
        %v7444 = vmul.f32 %v7244, 0.0009765625
        %v7445 = vmul.f32 %v7253, 0.0009765625
        %v7446 = vmul.f32 %v7262, 0.0009765625
        %v7447 = vmul.f32 %v7271, 0.0009765625
        %v7448 = vmul.f32 %v7280, 0.0009765625
        %v7449 = vmul.f32 %v7289, 0.0009765625
        %v7450 = vmul.f32 %v7298, 0.0009765625
        %v7451 = vmul.f32 %v7307, 0.0009765625
        %v7452 = vmul.f32 %v7316, 0.0009765625
        %v7453 = vmul.f32 %v7325, 0.0009765625
        %v7454 = vmul.f32 %v7334, 0.0009765625
        %v7455 = vmul.f32 %v7343, 0.0009765625
        %v7456 = vmul.f32 %v7352, 0.0009765625
        %v7457 = vmul.f32 %v7361, 0.0009765625
        %v7458 = vmul.f32 %v7370, 0.0009765625
        %v7459 = vmul.f32 %v7379, 0.0009765625
        %v7460 = vmul.f32 %v7388, 0.0009765625
        %v7461 = vmul.f32 %v7397, 0.0009765625
        %v7462 = vmul.f32 %v6246, %v6246
        %v7463 = vmul.f32 %v6247, %v6247
        %v7464 = vmul.f32 %v6248, %v6248
        %v7465 = vmul.f32 %v6249, %v6249
        %v7466 = vmul.f32 %v6250, %v6250
        %v7467 = vmul.f32 %v6251, %v6251
        %v7468 = vmul.f32 %v6252, %v6252
        %v7469 = vmul.f32 %v6253, %v6253
        %v7470 = vmul.f32 %v6254, %v6254
        %v7471 = vmul.f32 %v6255, %v6255
        %v7472 = vmul.f32 %v6256, %v6256
        %v7473 = vmul.f32 %v6257, %v6257
        %v7474 = vmul.f32 %v6258, %v6258
        %v7475 = vmul.f32 %v6259, %v6259
        %v7476 = vmul.f32 %v6260, %v6260
        %v7477 = vmul.f32 %v6261, %v6261
        %v7478 = vmul.f32 %v6262, %v6262
        %v7479 = vmul.f32 %v6263, %v6263
        %v7480 = vmul.f32 %v6264, %v6264
        %v7481 = vmul.f32 %v6265, %v6265
        %v7482 = vmul.f32 %v6266, %v6266
        %v7483 = vmul.f32 %v6267, %v6267
        %v7484 = vmul.f32 %v6268, %v6268
        %v7485 = vmul.f32 %v6269, %v6269
        %v7486 = vmul.f32 %v6270, %v6270
        %v7487 = vmul.f32 %v6271, %v6271
        %v7488 = vmul.f32 %v6272, %v6272
        %v7489 = vmul.f32 %v6273, %v6273
        %v7490 = vmul.f32 %v6274, %v6274
        %v7491 = vmul.f32 %v6275, %v6275
        %v7492 = vmul.f32 %v6276, %v6276
        %v7493 = vmul.f32 %v6277, %v6277
        %v7494 = vmul.f32 %v6278, %v6278
        %v7495 = vmul.f32 %v6279, %v6279
        %v7496 = vmul.f32 %v6280, %v6280
        %v7497 = vmul.f32 %v6281, %v6281
        %v7498 = vmul.f32 %v6282, %v6282
        %v7499 = vmul.f32 %v6283, %v6283
        %v7500 = vmul.f32 %v6284, %v6284
        %v7501 = vmul.f32 %v6285, %v6285
        %v7502 = vmul.f32 %v6286, %v6286
        %v7503 = vmul.f32 %v6287, %v6287
        %v7504 = vmul.f32 %v6288, %v6288
        %v7505 = vmul.f32 %v6289, %v6289
        %v7506 = vmul.f32 %v6290, %v6290
        %v7507 = vmul.f32 %v6291, %v6291
        %v7508 = vmul.f32 %v6292, %v6292
        %v7509 = vmul.f32 %v6293, %v6293
        %v7510 = vmul.f32 %v6294, %v6294
        %v7511 = vmul.f32 %v6295, %v6295
        %v7512 = vmul.f32 %v6296, %v6296
        %v7513 = vmul.f32 %v6297, %v6297
        %v7514 = vmul.f32 %v6298, %v6298
        %v7515 = vmul.f32 %v6299, %v6299
        %v7516 = vmul.f32 %v6300, %v6300
        %v7517 = vmul.f32 %v6301, %v6301
        %v7518 = vmul.f32 %v6302, %v6302
        %v7519 = vmul.f32 %v6303, %v6303
        %v7520 = vmul.f32 %v6304, %v6304
        %v7521 = vmul.f32 %v6305, %v6305
        %v7522 = vmul.f32 %v6306, %v6306
        %v7523 = vmul.f32 %v6307, %v6307
        %v7524 = vmul.f32 %v6308, %v6308
        %v7525 = vmul.f32 %v6309, %v6309
        %v7526 = vsub.f32 %v7398, %v7462
        %v7527 = vsub.f32 %v7399, %v7463
        %v7528 = vsub.f32 %v7400, %v7464
        %v7529 = vsub.f32 %v7401, %v7465
        %v7530 = vsub.f32 %v7402, %v7466
        %v7531 = vsub.f32 %v7403, %v7467
        %v7532 = vsub.f32 %v7404, %v7468
        %v7533 = vsub.f32 %v7405, %v7469
        %v7534 = vsub.f32 %v7406, %v7470
        %v7535 = vsub.f32 %v7407, %v7471
        %v7536 = vsub.f32 %v7408, %v7472
        %v7537 = vsub.f32 %v7409, %v7473
        %v7538 = vsub.f32 %v7410, %v7474
        %v7539 = vsub.f32 %v7411, %v7475
        %v7540 = vsub.f32 %v7412, %v7476
        %v7541 = vsub.f32 %v7413, %v7477
        %v7542 = vsub.f32 %v7414, %v7478
        %v7543 = vsub.f32 %v7415, %v7479
        %v7544 = vsub.f32 %v7416, %v7480
        %v7545 = vsub.f32 %v7417, %v7481
        %v7546 = vsub.f32 %v7418, %v7482
        %v7547 = vsub.f32 %v7419, %v7483
        %v7548 = vsub.f32 %v7420, %v7484
        %v7549 = vsub.f32 %v7421, %v7485
        %v7550 = vsub.f32 %v7422, %v7486
        %v7551 = vsub.f32 %v7423, %v7487
        %v7552 = vsub.f32 %v7424, %v7488
        %v7553 = vsub.f32 %v7425, %v7489
        %v7554 = vsub.f32 %v7426, %v7490
        %v7555 = vsub.f32 %v7427, %v7491
        %v7556 = vsub.f32 %v7428, %v7492
        %v7557 = vsub.f32 %v7429, %v7493
        %v7558 = vsub.f32 %v7430, %v7494
        %v7559 = vsub.f32 %v7431, %v7495
        %v7560 = vsub.f32 %v7432, %v7496
        %v7561 = vsub.f32 %v7433, %v7497
        %v7562 = vsub.f32 %v7434, %v7498
        %v7563 = vsub.f32 %v7435, %v7499
        %v7564 = vsub.f32 %v7436, %v7500
        %v7565 = vsub.f32 %v7437, %v7501
        %v7566 = vsub.f32 %v7438, %v7502
        %v7567 = vsub.f32 %v7439, %v7503
        %v7568 = vsub.f32 %v7440, %v7504
        %v7569 = vsub.f32 %v7441, %v7505
        %v7570 = vsub.f32 %v7442, %v7506
        %v7571 = vsub.f32 %v7443, %v7507
        %v7572 = vsub.f32 %v7444, %v7508
        %v7573 = vsub.f32 %v7445, %v7509
        %v7574 = vsub.f32 %v7446, %v7510
        %v7575 = vsub.f32 %v7447, %v7511
        %v7576 = vsub.f32 %v7448, %v7512
        %v7577 = vsub.f32 %v7449, %v7513
        %v7578 = vsub.f32 %v7450, %v7514
        %v7579 = vsub.f32 %v7451, %v7515
        %v7580 = vsub.f32 %v7452, %v7516
        %v7581 = vsub.f32 %v7453, %v7517
        %v7582 = vsub.f32 %v7454, %v7518
        %v7583 = vsub.f32 %v7455, %v7519
        %v7584 = vsub.f32 %v7456, %v7520
        %v7585 = vsub.f32 %v7457, %v7521
        %v7586 = vsub.f32 %v7458, %v7522
        %v7587 = vsub.f32 %v7459, %v7523
        %v7588 = vsub.f32 %v7460, %v7524
        %v7589 = vsub.f32 %v7461, %v7525
        %v7590 = vsub.f32 %v4289, %v6246
        %v7591 = vsub.f32 %v4291, %v6246
        %v7592 = vsub.f32 %v4642, %v6246
        %v7593 = vsub.f32 %v4644, %v6246
        %v7594 = vsub.f32 %v4995, %v6246
        %v7595 = vsub.f32 %v4997, %v6246
        %v7596 = vsub.f32 %v5348, %v6246
        %v7597 = vsub.f32 %v5350, %v6246
        %v7598 = vsub.f32 %v4293, %v6247
        %v7599 = vsub.f32 %v4295, %v6247
        %v7600 = vsub.f32 %v4646, %v6247
        %v7601 = vsub.f32 %v4648, %v6247
        %v7602 = vsub.f32 %v4999, %v6247
        %v7603 = vsub.f32 %v5001, %v6247
        %v7604 = vsub.f32 %v5352, %v6247
        %v7605 = vsub.f32 %v5354, %v6247
        %v7606 = vsub.f32 %v4299, %v6248
        %v7607 = vsub.f32 %v4301, %v6248
        %v7608 = vsub.f32 %v4652, %v6248
        %v7609 = vsub.f32 %v4654, %v6248
        %v7610 = vsub.f32 %v5005, %v6248
        %v7611 = vsub.f32 %v5007, %v6248
        %v7612 = vsub.f32 %v5358, %v6248
        %v7613 = vsub.f32 %v5360, %v6248
        %v7614 = vsub.f32 %v4303, %v6249
        %v7615 = vsub.f32 %v4305, %v6249
        %v7616 = vsub.f32 %v4656, %v6249
        %v7617 = vsub.f32 %v4658, %v6249
        %v7618 = vsub.f32 %v5009, %v6249
        %v7619 = vsub.f32 %v5011, %v6249
        %v7620 = vsub.f32 %v5362, %v6249
        %v7621 = vsub.f32 %v5364, %v6249
        %v7622 = vsub.f32 %v4309, %v6250
        %v7623 = vsub.f32 %v4311, %v6250
        %v7624 = vsub.f32 %v4662, %v6250
        %v7625 = vsub.f32 %v4664, %v6250
        %v7626 = vsub.f32 %v5015, %v6250
        %v7627 = vsub.f32 %v5017, %v6250
        %v7628 = vsub.f32 %v5368, %v6250
        %v7629 = vsub.f32 %v5370, %v6250
        %v7630 = vsub.f32 %v4313, %v6251
        %v7631 = vsub.f32 %v4315, %v6251
        %v7632 = vsub.f32 %v4666, %v6251
        %v7633 = vsub.f32 %v4668, %v6251
        %v7634 = vsub.f32 %v5019, %v6251
        %v7635 = vsub.f32 %v5021, %v6251
        %v7636 = vsub.f32 %v5372, %v6251
        %v7637 = vsub.f32 %v5374, %v6251
        %v7638 = vsub.f32 %v4319, %v6252
        %v7639 = vsub.f32 %v4321, %v6252
        %v7640 = vsub.f32 %v4672, %v6252
        %v7641 = vsub.f32 %v4674, %v6252
        %v7642 = vsub.f32 %v5025, %v6252
        %v7643 = vsub.f32 %v5027, %v6252
        %v7644 = vsub.f32 %v5378, %v6252
        %v7645 = vsub.f32 %v5380, %v6252
        %v7646 = vsub.f32 %v4323, %v6253
        %v7647 = vsub.f32 %v4325, %v6253
        %v7648 = vsub.f32 %v4676, %v6253
        %v7649 = vsub.f32 %v4678, %v6253
        %v7650 = vsub.f32 %v5029, %v6253
        %v7651 = vsub.f32 %v5031, %v6253
        %v7652 = vsub.f32 %v5382, %v6253
        %v7653 = vsub.f32 %v5384, %v6253
        %v7654 = vsub.f32 %v4329, %v6254
        %v7655 = vsub.f32 %v4331, %v6254
        %v7656 = vsub.f32 %v4682, %v6254
        %v7657 = vsub.f32 %v4684, %v6254
        %v7658 = vsub.f32 %v5035, %v6254
        %v7659 = vsub.f32 %v5037, %v6254
        %v7660 = vsub.f32 %v5388, %v6254
        %v7661 = vsub.f32 %v5390, %v6254
        %v7662 = vsub.f32 %v4333, %v6255
        %v7663 = vsub.f32 %v4335, %v6255
        %v7664 = vsub.f32 %v4686, %v6255
        %v7665 = vsub.f32 %v4688, %v6255
        %v7666 = vsub.f32 %v5039, %v6255
        %v7667 = vsub.f32 %v5041, %v6255
        %v7668 = vsub.f32 %v5392, %v6255
        %v7669 = vsub.f32 %v5394, %v6255
        %v7670 = vsub.f32 %v4339, %v6256
        %v7671 = vsub.f32 %v4341, %v6256
        %v7672 = vsub.f32 %v4692, %v6256
        %v7673 = vsub.f32 %v4694, %v6256
        %v7674 = vsub.f32 %v5045, %v6256
        %v7675 = vsub.f32 %v5047, %v6256
        %v7676 = vsub.f32 %v5398, %v6256
        %v7677 = vsub.f32 %v5400, %v6256
        %v7678 = vsub.f32 %v4343, %v6257
        %v7679 = vsub.f32 %v4345, %v6257
        %v7680 = vsub.f32 %v4696, %v6257
        %v7681 = vsub.f32 %v4698, %v6257
        %v7682 = vsub.f32 %v5049, %v6257
        %v7683 = vsub.f32 %v5051, %v6257
        %v7684 = vsub.f32 %v5402, %v6257
        %v7685 = vsub.f32 %v5404, %v6257
        %v7686 = vsub.f32 %v4349, %v6258
        %v7687 = vsub.f32 %v4351, %v6258
        %v7688 = vsub.f32 %v4702, %v6258
        %v7689 = vsub.f32 %v4704, %v6258
        %v7690 = vsub.f32 %v5055, %v6258
        %v7691 = vsub.f32 %v5057, %v6258
        %v7692 = vsub.f32 %v5408, %v6258
        %v7693 = vsub.f32 %v5410, %v6258
        %v7694 = vsub.f32 %v4353, %v6259
        %v7695 = vsub.f32 %v4355, %v6259
        %v7696 = vsub.f32 %v4706, %v6259
        %v7697 = vsub.f32 %v4708, %v6259
        %v7698 = vsub.f32 %v5059, %v6259
        %v7699 = vsub.f32 %v5061, %v6259
        %v7700 = vsub.f32 %v5412, %v6259
        %v7701 = vsub.f32 %v5414, %v6259
        %v7702 = vsub.f32 %v4359, %v6260
        %v7703 = vsub.f32 %v4361, %v6260
        %v7704 = vsub.f32 %v4712, %v6260
        %v7705 = vsub.f32 %v4714, %v6260
        %v7706 = vsub.f32 %v5065, %v6260
        %v7707 = vsub.f32 %v5067, %v6260
        %v7708 = vsub.f32 %v5418, %v6260
        %v7709 = vsub.f32 %v5420, %v6260
        %v7710 = vsub.f32 %v4363, %v6261
        %v7711 = vsub.f32 %v4365, %v6261
        %v7712 = vsub.f32 %v4716, %v6261
        %v7713 = vsub.f32 %v4718, %v6261
        %v7714 = vsub.f32 %v5069, %v6261
        %v7715 = vsub.f32 %v5071, %v6261
        %v7716 = vsub.f32 %v5422, %v6261
        %v7717 = vsub.f32 %v5424, %v6261
        %v7718 = vsub.f32 %v4369, %v6262
        %v7719 = vsub.f32 %v4371, %v6262
        %v7720 = vsub.f32 %v4722, %v6262
        %v7721 = vsub.f32 %v4724, %v6262
        %v7722 = vsub.f32 %v5075, %v6262
        %v7723 = vsub.f32 %v5077, %v6262
        %v7724 = vsub.f32 %v5428, %v6262
        %v7725 = vsub.f32 %v5430, %v6262
        %v7726 = vsub.f32 %v4373, %v6263
        %v7727 = vsub.f32 %v4375, %v6263
        %v7728 = vsub.f32 %v4726, %v6263
        %v7729 = vsub.f32 %v4728, %v6263
        %v7730 = vsub.f32 %v5079, %v6263
        %v7731 = vsub.f32 %v5081, %v6263
        %v7732 = vsub.f32 %v5432, %v6263
        %v7733 = vsub.f32 %v5434, %v6263
        %v7734 = vsub.f32 %v4379, %v6264
        %v7735 = vsub.f32 %v4381, %v6264
        %v7736 = vsub.f32 %v4732, %v6264
        %v7737 = vsub.f32 %v4734, %v6264
        %v7738 = vsub.f32 %v5085, %v6264
        %v7739 = vsub.f32 %v5087, %v6264
        %v7740 = vsub.f32 %v5438, %v6264
        %v7741 = vsub.f32 %v5440, %v6264
        %v7742 = vsub.f32 %v4383, %v6265
        %v7743 = vsub.f32 %v4385, %v6265
        %v7744 = vsub.f32 %v4736, %v6265
        %v7745 = vsub.f32 %v4738, %v6265
        %v7746 = vsub.f32 %v5089, %v6265
        %v7747 = vsub.f32 %v5091, %v6265
        %v7748 = vsub.f32 %v5442, %v6265
        %v7749 = vsub.f32 %v5444, %v6265
        %v7750 = vsub.f32 %v4389, %v6266
        %v7751 = vsub.f32 %v4391, %v6266
        %v7752 = vsub.f32 %v4742, %v6266
        %v7753 = vsub.f32 %v4744, %v6266
        %v7754 = vsub.f32 %v5095, %v6266
        %v7755 = vsub.f32 %v5097, %v6266
        %v7756 = vsub.f32 %v5448, %v6266
        %v7757 = vsub.f32 %v5450, %v6266
        %v7758 = vsub.f32 %v4393, %v6267
        %v7759 = vsub.f32 %v4395, %v6267
        %v7760 = vsub.f32 %v4746, %v6267
        %v7761 = vsub.f32 %v4748, %v6267
        %v7762 = vsub.f32 %v5099, %v6267
        %v7763 = vsub.f32 %v5101, %v6267
        %v7764 = vsub.f32 %v5452, %v6267
        %v7765 = vsub.f32 %v5454, %v6267
        %v7766 = vsub.f32 %v4399, %v6268
        %v7767 = vsub.f32 %v4401, %v6268
        %v7768 = vsub.f32 %v4752, %v6268
        %v7769 = vsub.f32 %v4754, %v6268
        %v7770 = vsub.f32 %v5105, %v6268
        %v7771 = vsub.f32 %v5107, %v6268
        %v7772 = vsub.f32 %v5458, %v6268
        %v7773 = vsub.f32 %v5460, %v6268
        %v7774 = vsub.f32 %v4403, %v6269
        %v7775 = vsub.f32 %v4405, %v6269
        %v7776 = vsub.f32 %v4756, %v6269
        %v7777 = vsub.f32 %v4758, %v6269
        %v7778 = vsub.f32 %v5109, %v6269
        %v7779 = vsub.f32 %v5111, %v6269
        %v7780 = vsub.f32 %v5462, %v6269
        %v7781 = vsub.f32 %v5464, %v6269
        %v7782 = vsub.f32 %v4409, %v6270
        %v7783 = vsub.f32 %v4411, %v6270
        %v7784 = vsub.f32 %v4762, %v6270
        %v7785 = vsub.f32 %v4764, %v6270
        %v7786 = vsub.f32 %v5115, %v6270
        %v7787 = vsub.f32 %v5117, %v6270
        %v7788 = vsub.f32 %v5468, %v6270
        %v7789 = vsub.f32 %v5470, %v6270
        %v7790 = vsub.f32 %v4413, %v6271
        %v7791 = vsub.f32 %v4415, %v6271
        %v7792 = vsub.f32 %v4766, %v6271
        %v7793 = vsub.f32 %v4768, %v6271
        %v7794 = vsub.f32 %v5119, %v6271
        %v7795 = vsub.f32 %v5121, %v6271
        %v7796 = vsub.f32 %v5472, %v6271
        %v7797 = vsub.f32 %v5474, %v6271
        %v7798 = vsub.f32 %v4419, %v6272
        %v7799 = vsub.f32 %v4421, %v6272
        %v7800 = vsub.f32 %v4772, %v6272
        %v7801 = vsub.f32 %v4774, %v6272
        %v7802 = vsub.f32 %v5125, %v6272
        %v7803 = vsub.f32 %v5127, %v6272
        %v7804 = vsub.f32 %v5478, %v6272
        %v7805 = vsub.f32 %v5480, %v6272
        %v7806 = vsub.f32 %v4423, %v6273
        %v7807 = vsub.f32 %v4425, %v6273
        %v7808 = vsub.f32 %v4776, %v6273
        %v7809 = vsub.f32 %v4778, %v6273
        %v7810 = vsub.f32 %v5129, %v6273
        %v7811 = vsub.f32 %v5131, %v6273
        %v7812 = vsub.f32 %v5482, %v6273
        %v7813 = vsub.f32 %v5484, %v6273
        %v7814 = vsub.f32 %v4429, %v6274
        %v7815 = vsub.f32 %v4431, %v6274
        %v7816 = vsub.f32 %v4782, %v6274
        %v7817 = vsub.f32 %v4784, %v6274
        %v7818 = vsub.f32 %v5135, %v6274
        %v7819 = vsub.f32 %v5137, %v6274
        %v7820 = vsub.f32 %v5488, %v6274
        %v7821 = vsub.f32 %v5490, %v6274
        %v7822 = vsub.f32 %v4433, %v6275
        %v7823 = vsub.f32 %v4435, %v6275
        %v7824 = vsub.f32 %v4786, %v6275
        %v7825 = vsub.f32 %v4788, %v6275
        %v7826 = vsub.f32 %v5139, %v6275
        %v7827 = vsub.f32 %v5141, %v6275
        %v7828 = vsub.f32 %v5492, %v6275
        %v7829 = vsub.f32 %v5494, %v6275
        %v7830 = vsub.f32 %v4439, %v6276
        %v7831 = vsub.f32 %v4441, %v6276
        %v7832 = vsub.f32 %v4792, %v6276
        %v7833 = vsub.f32 %v4794, %v6276
        %v7834 = vsub.f32 %v5145, %v6276
        %v7835 = vsub.f32 %v5147, %v6276
        %v7836 = vsub.f32 %v5498, %v6276
        %v7837 = vsub.f32 %v5500, %v6276
        %v7838 = vsub.f32 %v4443, %v6277
        %v7839 = vsub.f32 %v4445, %v6277
        %v7840 = vsub.f32 %v4796, %v6277
        %v7841 = vsub.f32 %v4798, %v6277
        %v7842 = vsub.f32 %v5149, %v6277
        %v7843 = vsub.f32 %v5151, %v6277
        %v7844 = vsub.f32 %v5502, %v6277
        %v7845 = vsub.f32 %v5504, %v6277
        %v7846 = vsub.f32 %v4449, %v6278
        %v7847 = vsub.f32 %v4451, %v6278
        %v7848 = vsub.f32 %v4802, %v6278
        %v7849 = vsub.f32 %v4804, %v6278
        %v7850 = vsub.f32 %v5155, %v6278
        %v7851 = vsub.f32 %v5157, %v6278
        %v7852 = vsub.f32 %v5508, %v6278
        %v7853 = vsub.f32 %v5510, %v6278
        %v7854 = vsub.f32 %v4453, %v6279
        %v7855 = vsub.f32 %v4455, %v6279
        %v7856 = vsub.f32 %v4806, %v6279
        %v7857 = vsub.f32 %v4808, %v6279
        %v7858 = vsub.f32 %v5159, %v6279
        %v7859 = vsub.f32 %v5161, %v6279
        %v7860 = vsub.f32 %v5512, %v6279
        %v7861 = vsub.f32 %v5514, %v6279
        %v7862 = vsub.f32 %v4459, %v6280
        %v7863 = vsub.f32 %v4461, %v6280
        %v7864 = vsub.f32 %v4812, %v6280
        %v7865 = vsub.f32 %v4814, %v6280
        %v7866 = vsub.f32 %v5165, %v6280
        %v7867 = vsub.f32 %v5167, %v6280
        %v7868 = vsub.f32 %v5518, %v6280
        %v7869 = vsub.f32 %v5520, %v6280
        %v7870 = vsub.f32 %v4463, %v6281
        %v7871 = vsub.f32 %v4465, %v6281
        %v7872 = vsub.f32 %v4816, %v6281
        %v7873 = vsub.f32 %v4818, %v6281
        %v7874 = vsub.f32 %v5169, %v6281
        %v7875 = vsub.f32 %v5171, %v6281
        %v7876 = vsub.f32 %v5522, %v6281
        %v7877 = vsub.f32 %v5524, %v6281
        %v7878 = vsub.f32 %v4469, %v6282
        %v7879 = vsub.f32 %v4471, %v6282
        %v7880 = vsub.f32 %v4822, %v6282
        %v7881 = vsub.f32 %v4824, %v6282
        %v7882 = vsub.f32 %v5175, %v6282
        %v7883 = vsub.f32 %v5177, %v6282
        %v7884 = vsub.f32 %v5528, %v6282
        %v7885 = vsub.f32 %v5530, %v6282
        %v7886 = vsub.f32 %v4473, %v6283
        %v7887 = vsub.f32 %v4475, %v6283
        %v7888 = vsub.f32 %v4826, %v6283
        %v7889 = vsub.f32 %v4828, %v6283
        %v7890 = vsub.f32 %v5179, %v6283
        %v7891 = vsub.f32 %v5181, %v6283
        %v7892 = vsub.f32 %v5532, %v6283
        %v7893 = vsub.f32 %v5534, %v6283
        %v7894 = vsub.f32 %v4479, %v6284
        %v7895 = vsub.f32 %v4481, %v6284
        %v7896 = vsub.f32 %v4832, %v6284
        %v7897 = vsub.f32 %v4834, %v6284
        %v7898 = vsub.f32 %v5185, %v6284
        %v7899 = vsub.f32 %v5187, %v6284
        %v7900 = vsub.f32 %v5538, %v6284
        %v7901 = vsub.f32 %v5540, %v6284
        %v7902 = vsub.f32 %v4483, %v6285
        %v7903 = vsub.f32 %v4485, %v6285
        %v7904 = vsub.f32 %v4836, %v6285
        %v7905 = vsub.f32 %v4838, %v6285
        %v7906 = vsub.f32 %v5189, %v6285
        %v7907 = vsub.f32 %v5191, %v6285
        %v7908 = vsub.f32 %v5542, %v6285
        %v7909 = vsub.f32 %v5544, %v6285
        %v7910 = vsub.f32 %v4489, %v6286
        %v7911 = vsub.f32 %v4491, %v6286
        %v7912 = vsub.f32 %v4842, %v6286
        %v7913 = vsub.f32 %v4844, %v6286
        %v7914 = vsub.f32 %v5195, %v6286
        %v7915 = vsub.f32 %v5197, %v6286
        %v7916 = vsub.f32 %v5548, %v6286
        %v7917 = vsub.f32 %v5550, %v6286
        %v7918 = vsub.f32 %v4493, %v6287
        %v7919 = vsub.f32 %v4495, %v6287
        %v7920 = vsub.f32 %v4846, %v6287
        %v7921 = vsub.f32 %v4848, %v6287
        %v7922 = vsub.f32 %v5199, %v6287
        %v7923 = vsub.f32 %v5201, %v6287
        %v7924 = vsub.f32 %v5552, %v6287
        %v7925 = vsub.f32 %v5554, %v6287
        %v7926 = vsub.f32 %v4499, %v6288
        %v7927 = vsub.f32 %v4501, %v6288
        %v7928 = vsub.f32 %v4852, %v6288
        %v7929 = vsub.f32 %v4854, %v6288
        %v7930 = vsub.f32 %v5205, %v6288
        %v7931 = vsub.f32 %v5207, %v6288
        %v7932 = vsub.f32 %v5558, %v6288
        %v7933 = vsub.f32 %v5560, %v6288
        %v7934 = vsub.f32 %v4503, %v6289
        %v7935 = vsub.f32 %v4505, %v6289
        %v7936 = vsub.f32 %v4856, %v6289
        %v7937 = vsub.f32 %v4858, %v6289
        %v7938 = vsub.f32 %v5209, %v6289
        %v7939 = vsub.f32 %v5211, %v6289
        %v7940 = vsub.f32 %v5562, %v6289
        %v7941 = vsub.f32 %v5564, %v6289
        %v7942 = vsub.f32 %v4509, %v6290
        %v7943 = vsub.f32 %v4511, %v6290
        %v7944 = vsub.f32 %v4862, %v6290
        %v7945 = vsub.f32 %v4864, %v6290
        %v7946 = vsub.f32 %v5215, %v6290
        %v7947 = vsub.f32 %v5217, %v6290
        %v7948 = vsub.f32 %v5568, %v6290
        %v7949 = vsub.f32 %v5570, %v6290
        %v7950 = vsub.f32 %v4513, %v6291
        %v7951 = vsub.f32 %v4515, %v6291
        %v7952 = vsub.f32 %v4866, %v6291
        %v7953 = vsub.f32 %v4868, %v6291
        %v7954 = vsub.f32 %v5219, %v6291
        %v7955 = vsub.f32 %v5221, %v6291
        %v7956 = vsub.f32 %v5572, %v6291
        %v7957 = vsub.f32 %v5574, %v6291
        %v7958 = vsub.f32 %v4519, %v6292
        %v7959 = vsub.f32 %v4521, %v6292
        %v7960 = vsub.f32 %v4872, %v6292
        %v7961 = vsub.f32 %v4874, %v6292
        %v7962 = vsub.f32 %v5225, %v6292
        %v7963 = vsub.f32 %v5227, %v6292
        %v7964 = vsub.f32 %v5578, %v6292
        %v7965 = vsub.f32 %v5580, %v6292
        %v7966 = vsub.f32 %v4523, %v6293
        %v7967 = vsub.f32 %v4525, %v6293
        %v7968 = vsub.f32 %v4876, %v6293
        %v7969 = vsub.f32 %v4878, %v6293
        %v7970 = vsub.f32 %v5229, %v6293
        %v7971 = vsub.f32 %v5231, %v6293
        %v7972 = vsub.f32 %v5582, %v6293
        %v7973 = vsub.f32 %v5584, %v6293
        %v7974 = vsub.f32 %v4529, %v6294
        %v7975 = vsub.f32 %v4531, %v6294
        %v7976 = vsub.f32 %v4882, %v6294
        %v7977 = vsub.f32 %v4884, %v6294
        %v7978 = vsub.f32 %v5235, %v6294
        %v7979 = vsub.f32 %v5237, %v6294
        %v7980 = vsub.f32 %v5588, %v6294
        %v7981 = vsub.f32 %v5590, %v6294
        %v7982 = vsub.f32 %v4533, %v6295
        %v7983 = vsub.f32 %v4535, %v6295
        %v7984 = vsub.f32 %v4886, %v6295
        %v7985 = vsub.f32 %v4888, %v6295
        %v7986 = vsub.f32 %v5239, %v6295
        %v7987 = vsub.f32 %v5241, %v6295
        %v7988 = vsub.f32 %v5592, %v6295
        %v7989 = vsub.f32 %v5594, %v6295
        %v7990 = vsub.f32 %v4539, %v6296
        %v7991 = vsub.f32 %v4541, %v6296
        %v7992 = vsub.f32 %v4892, %v6296
        %v7993 = vsub.f32 %v4894, %v6296
        %v7994 = vsub.f32 %v5245, %v6296
        %v7995 = vsub.f32 %v5247, %v6296
        %v7996 = vsub.f32 %v5598, %v6296
        %v7997 = vsub.f32 %v5600, %v6296
        %v7998 = vsub.f32 %v4543, %v6297
        %v7999 = vsub.f32 %v4545, %v6297
        %v8000 = vsub.f32 %v4896, %v6297
        %v8001 = vsub.f32 %v4898, %v6297
        %v8002 = vsub.f32 %v5249, %v6297
        %v8003 = vsub.f32 %v5251, %v6297
        %v8004 = vsub.f32 %v5602, %v6297
        %v8005 = vsub.f32 %v5604, %v6297
        %v8006 = vsub.f32 %v4549, %v6298
        %v8007 = vsub.f32 %v4551, %v6298
        %v8008 = vsub.f32 %v4902, %v6298
        %v8009 = vsub.f32 %v4904, %v6298
        %v8010 = vsub.f32 %v5255, %v6298
        %v8011 = vsub.f32 %v5257, %v6298
        %v8012 = vsub.f32 %v5608, %v6298
        %v8013 = vsub.f32 %v5610, %v6298
        %v8014 = vsub.f32 %v4553, %v6299
        %v8015 = vsub.f32 %v4555, %v6299
        %v8016 = vsub.f32 %v4906, %v6299
        %v8017 = vsub.f32 %v4908, %v6299
        %v8018 = vsub.f32 %v5259, %v6299
        %v8019 = vsub.f32 %v5261, %v6299
        %v8020 = vsub.f32 %v5612, %v6299
        %v8021 = vsub.f32 %v5614, %v6299
        %v8022 = vsub.f32 %v4559, %v6300
        %v8023 = vsub.f32 %v4561, %v6300
        %v8024 = vsub.f32 %v4912, %v6300
        %v8025 = vsub.f32 %v4914, %v6300
        %v8026 = vsub.f32 %v5265, %v6300
        %v8027 = vsub.f32 %v5267, %v6300
        %v8028 = vsub.f32 %v5618, %v6300
        %v8029 = vsub.f32 %v5620, %v6300
        %v8030 = vsub.f32 %v4563, %v6301
        %v8031 = vsub.f32 %v4565, %v6301
        %v8032 = vsub.f32 %v4916, %v6301
        %v8033 = vsub.f32 %v4918, %v6301
        %v8034 = vsub.f32 %v5269, %v6301
        %v8035 = vsub.f32 %v5271, %v6301
        %v8036 = vsub.f32 %v5622, %v6301
        %v8037 = vsub.f32 %v5624, %v6301
        %v8038 = vsub.f32 %v4569, %v6302
        %v8039 = vsub.f32 %v4571, %v6302
        %v8040 = vsub.f32 %v4922, %v6302
        %v8041 = vsub.f32 %v4924, %v6302
        %v8042 = vsub.f32 %v5275, %v6302
        %v8043 = vsub.f32 %v5277, %v6302
        %v8044 = vsub.f32 %v5628, %v6302
        %v8045 = vsub.f32 %v5630, %v6302
        %v8046 = vsub.f32 %v4573, %v6303
        %v8047 = vsub.f32 %v4575, %v6303
        %v8048 = vsub.f32 %v4926, %v6303
        %v8049 = vsub.f32 %v4928, %v6303
        %v8050 = vsub.f32 %v5279, %v6303
        %v8051 = vsub.f32 %v5281, %v6303
        %v8052 = vsub.f32 %v5632, %v6303
        %v8053 = vsub.f32 %v5634, %v6303
        %v8054 = vsub.f32 %v4579, %v6304
        %v8055 = vsub.f32 %v4581, %v6304
        %v8056 = vsub.f32 %v4932, %v6304
        %v8057 = vsub.f32 %v4934, %v6304
        %v8058 = vsub.f32 %v5285, %v6304
        %v8059 = vsub.f32 %v5287, %v6304
        %v8060 = vsub.f32 %v5638, %v6304
        %v8061 = vsub.f32 %v5640, %v6304
        %v8062 = vsub.f32 %v4583, %v6305
        %v8063 = vsub.f32 %v4585, %v6305
        %v8064 = vsub.f32 %v4936, %v6305
        %v8065 = vsub.f32 %v4938, %v6305
        %v8066 = vsub.f32 %v5289, %v6305
        %v8067 = vsub.f32 %v5291, %v6305
        %v8068 = vsub.f32 %v5642, %v6305
        %v8069 = vsub.f32 %v5644, %v6305
        %v8070 = vsub.f32 %v4589, %v6306
        %v8071 = vsub.f32 %v4591, %v6306
        %v8072 = vsub.f32 %v4942, %v6306
        %v8073 = vsub.f32 %v4944, %v6306
        %v8074 = vsub.f32 %v5295, %v6306
        %v8075 = vsub.f32 %v5297, %v6306
        %v8076 = vsub.f32 %v5648, %v6306
        %v8077 = vsub.f32 %v5650, %v6306
        %v8078 = vsub.f32 %v4593, %v6307
        %v8079 = vsub.f32 %v4595, %v6307
        %v8080 = vsub.f32 %v4946, %v6307
        %v8081 = vsub.f32 %v4948, %v6307
        %v8082 = vsub.f32 %v5299, %v6307
        %v8083 = vsub.f32 %v5301, %v6307
        %v8084 = vsub.f32 %v5652, %v6307
        %v8085 = vsub.f32 %v5654, %v6307
        %v8086 = vsub.f32 %v4599, %v6308
        %v8087 = vsub.f32 %v4601, %v6308
        %v8088 = vsub.f32 %v4952, %v6308
        %v8089 = vsub.f32 %v4954, %v6308
        %v8090 = vsub.f32 %v5305, %v6308
        %v8091 = vsub.f32 %v5307, %v6308
        %v8092 = vsub.f32 %v5658, %v6308
        %v8093 = vsub.f32 %v5660, %v6308
        %v8094 = vsub.f32 %v4603, %v6309
        %v8095 = vsub.f32 %v4605, %v6309
        %v8096 = vsub.f32 %v4956, %v6309
        %v8097 = vsub.f32 %v4958, %v6309
        %v8098 = vsub.f32 %v5309, %v6309
        %v8099 = vsub.f32 %v5311, %v6309
        %v8100 = vsub.f32 %v5662, %v6309
        %v8101 = vsub.f32 %v5664, %v6309
        %v8102 = vadd.f32 %v7526, 1e-05
        %v8103 = vadd.f32 %v7527, 1e-05
        %v8104 = vadd.f32 %v7528, 1e-05
        %v8105 = vadd.f32 %v7529, 1e-05
        %v8106 = vadd.f32 %v7530, 1e-05
        %v8107 = vadd.f32 %v7531, 1e-05
        %v8108 = vadd.f32 %v7532, 1e-05
        %v8109 = vadd.f32 %v7533, 1e-05
        %v8110 = vadd.f32 %v7534, 1e-05
        %v8111 = vadd.f32 %v7535, 1e-05
        %v8112 = vadd.f32 %v7536, 1e-05
        %v8113 = vadd.f32 %v7537, 1e-05
        %v8114 = vadd.f32 %v7538, 1e-05
        %v8115 = vadd.f32 %v7539, 1e-05
        %v8116 = vadd.f32 %v7540, 1e-05
        %v8117 = vadd.f32 %v7541, 1e-05
        %v8118 = vadd.f32 %v7542, 1e-05
        %v8119 = vadd.f32 %v7543, 1e-05
        %v8120 = vadd.f32 %v7544, 1e-05
        %v8121 = vadd.f32 %v7545, 1e-05
        %v8122 = vadd.f32 %v7546, 1e-05
        %v8123 = vadd.f32 %v7547, 1e-05
        %v8124 = vadd.f32 %v7548, 1e-05
        %v8125 = vadd.f32 %v7549, 1e-05
        %v8126 = vadd.f32 %v7550, 1e-05
        %v8127 = vadd.f32 %v7551, 1e-05
        %v8128 = vadd.f32 %v7552, 1e-05
        %v8129 = vadd.f32 %v7553, 1e-05
        %v8130 = vadd.f32 %v7554, 1e-05
        %v8131 = vadd.f32 %v7555, 1e-05
        %v8132 = vadd.f32 %v7556, 1e-05
        %v8133 = vadd.f32 %v7557, 1e-05
        %v8134 = vadd.f32 %v7558, 1e-05
        %v8135 = vadd.f32 %v7559, 1e-05
        %v8136 = vadd.f32 %v7560, 1e-05
        %v8137 = vadd.f32 %v7561, 1e-05
        %v8138 = vadd.f32 %v7562, 1e-05
        %v8139 = vadd.f32 %v7563, 1e-05
        %v8140 = vadd.f32 %v7564, 1e-05
        %v8141 = vadd.f32 %v7565, 1e-05
        %v8142 = vadd.f32 %v7566, 1e-05
        %v8143 = vadd.f32 %v7567, 1e-05
        %v8144 = vadd.f32 %v7568, 1e-05
        %v8145 = vadd.f32 %v7569, 1e-05
        %v8146 = vadd.f32 %v7570, 1e-05
        %v8147 = vadd.f32 %v7571, 1e-05
        %v8148 = vadd.f32 %v7572, 1e-05
        %v8149 = vadd.f32 %v7573, 1e-05
        %v8150 = vadd.f32 %v7574, 1e-05
        %v8151 = vadd.f32 %v7575, 1e-05
        %v8152 = vadd.f32 %v7576, 1e-05
        %v8153 = vadd.f32 %v7577, 1e-05
        %v8154 = vadd.f32 %v7578, 1e-05
        %v8155 = vadd.f32 %v7579, 1e-05
        %v8156 = vadd.f32 %v7580, 1e-05
        %v8157 = vadd.f32 %v7581, 1e-05
        %v8158 = vadd.f32 %v7582, 1e-05
        %v8159 = vadd.f32 %v7583, 1e-05
        %v8160 = vadd.f32 %v7584, 1e-05
        %v8161 = vadd.f32 %v7585, 1e-05
        %v8162 = vadd.f32 %v7586, 1e-05
        %v8163 = vadd.f32 %v7587, 1e-05
        %v8164 = vadd.f32 %v7588, 1e-05
        %v8165 = vadd.f32 %v7589, 1e-05
        %v8166 = vrsqrt.pop %v8102
        %v8167 = vrsqrt.pop %v8103
        %v8168 = vrsqrt.pop %v8104
        %v8169 = vrsqrt.pop %v8105
        %v8170 = vrsqrt.pop %v8106
        %v8171 = vrsqrt.pop %v8107
        %v8172 = vrsqrt.pop %v8108
        %v8173 = vrsqrt.pop %v8109
        %v8174 = vrsqrt.pop %v8110
        %v8175 = vrsqrt.pop %v8111
        %v8176 = vrsqrt.pop %v8112
        %v8177 = vrsqrt.pop %v8113
        %v8178 = vrsqrt.pop %v8114
        %v8179 = vrsqrt.pop %v8115
        %v8180 = vrsqrt.pop %v8116
        %v8181 = vrsqrt.pop %v8117
        %v8182 = vrsqrt.pop %v8118
        %v8183 = vrsqrt.pop %v8119
        %v8184 = vrsqrt.pop %v8120
        %v8185 = vrsqrt.pop %v8121
        %v8186 = vrsqrt.pop %v8122
        %v8187 = vrsqrt.pop %v8123
        %v8188 = vrsqrt.pop %v8124
        %v8189 = vrsqrt.pop %v8125
        %v8190 = vrsqrt.pop %v8126
        %v8191 = vrsqrt.pop %v8127
        %v8192 = vrsqrt.pop %v8128
        %v8193 = vrsqrt.pop %v8129
        %v8194 = vrsqrt.pop %v8130
        %v8195 = vrsqrt.pop %v8131
        %v8196 = vrsqrt.pop %v8132
        %v8197 = vrsqrt.pop %v8133
        %v8198 = vrsqrt.pop %v8134
        %v8199 = vrsqrt.pop %v8135
        %v8200 = vrsqrt.pop %v8136
        %v8201 = vrsqrt.pop %v8137
        %v8202 = vrsqrt.pop %v8138
        %v8203 = vrsqrt.pop %v8139
        %v8204 = vrsqrt.pop %v8140
        %v8205 = vrsqrt.pop %v8141
        %v8206 = vrsqrt.pop %v8142
        %v8207 = vrsqrt.pop %v8143
        %v8208 = vrsqrt.pop %v8144
        %v8209 = vrsqrt.pop %v8145
        %v8210 = vrsqrt.pop %v8146
        %v8211 = vrsqrt.pop %v8147
        %v8212 = vrsqrt.pop %v8148
        %v8213 = vrsqrt.pop %v8149
        %v8214 = vrsqrt.pop %v8150
        %v8215 = vrsqrt.pop %v8151
        %v8216 = vrsqrt.pop %v8152
        %v8217 = vrsqrt.pop %v8153
        %v8218 = vrsqrt.pop %v8154
        %v8219 = vrsqrt.pop %v8155
        %v8220 = vrsqrt.pop %v8156
        %v8221 = vrsqrt.pop %v8157
        %v8222 = vrsqrt.pop %v8158
        %v8223 = vrsqrt.pop %v8159
        %v8224 = vrsqrt.pop %v8160
        %v8225 = vrsqrt.pop %v8161
        %v8226 = vrsqrt.pop %v8162
        %v8227 = vrsqrt.pop %v8163
        %v8228 = vrsqrt.pop %v8164
        %v8229 = vrsqrt.pop %v8165
        %v8230 = vmul.f32 %v7590, %v8166
        %v8231 = vmul.f32 %v7591, %v8166
        %v8232 = vmul.f32 %v7592, %v8166
        %v8233 = vmul.f32 %v7593, %v8166
        %v8234 = vmul.f32 %v7594, %v8166
        %v8235 = vmul.f32 %v7595, %v8166
        %v8236 = vmul.f32 %v7596, %v8166
        %v8237 = vmul.f32 %v7597, %v8166
        %v8238 = vmul.f32 %v7598, %v8167
        %v8239 = vmul.f32 %v7599, %v8167
        %v8240 = vmul.f32 %v7600, %v8167
        %v8241 = vmul.f32 %v7601, %v8167
        %v8242 = vmul.f32 %v7602, %v8167
        %v8243 = vmul.f32 %v7603, %v8167
        %v8244 = vmul.f32 %v7604, %v8167
        %v8245 = vmul.f32 %v7605, %v8167
        %v8246 = vmul.f32 %v7606, %v8168
        %v8247 = vmul.f32 %v7607, %v8168
        %v8248 = vmul.f32 %v7608, %v8168
        %v8249 = vmul.f32 %v7609, %v8168
        %v8250 = vmul.f32 %v7610, %v8168
        %v8251 = vmul.f32 %v7611, %v8168
        %v8252 = vmul.f32 %v7612, %v8168
        %v8253 = vmul.f32 %v7613, %v8168
        %v8254 = vmul.f32 %v7614, %v8169
        %v8255 = vmul.f32 %v7615, %v8169
        %v8256 = vmul.f32 %v7616, %v8169
        %v8257 = vmul.f32 %v7617, %v8169
        %v8258 = vmul.f32 %v7618, %v8169
        %v8259 = vmul.f32 %v7619, %v8169
        %v8260 = vmul.f32 %v7620, %v8169
        %v8261 = vmul.f32 %v7621, %v8169
        %v8262 = vmul.f32 %v7622, %v8170
        %v8263 = vmul.f32 %v7623, %v8170
        %v8264 = vmul.f32 %v7624, %v8170
        %v8265 = vmul.f32 %v7625, %v8170
        %v8266 = vmul.f32 %v7626, %v8170
        %v8267 = vmul.f32 %v7627, %v8170
        %v8268 = vmul.f32 %v7628, %v8170
        %v8269 = vmul.f32 %v7629, %v8170
        %v8270 = vmul.f32 %v7630, %v8171
        %v8271 = vmul.f32 %v7631, %v8171
        %v8272 = vmul.f32 %v7632, %v8171
        %v8273 = vmul.f32 %v7633, %v8171
        %v8274 = vmul.f32 %v7634, %v8171
        %v8275 = vmul.f32 %v7635, %v8171
        %v8276 = vmul.f32 %v7636, %v8171
        %v8277 = vmul.f32 %v7637, %v8171
        %v8278 = vmul.f32 %v7638, %v8172
        %v8279 = vmul.f32 %v7639, %v8172
        %v8280 = vmul.f32 %v7640, %v8172
        %v8281 = vmul.f32 %v7641, %v8172
        %v8282 = vmul.f32 %v7642, %v8172
        %v8283 = vmul.f32 %v7643, %v8172
        %v8284 = vmul.f32 %v7644, %v8172
        %v8285 = vmul.f32 %v7645, %v8172
        %v8286 = vmul.f32 %v7646, %v8173
        %v8287 = vmul.f32 %v7647, %v8173
        %v8288 = vmul.f32 %v7648, %v8173
        %v8289 = vmul.f32 %v7649, %v8173
        %v8290 = vmul.f32 %v7650, %v8173
        %v8291 = vmul.f32 %v7651, %v8173
        %v8292 = vmul.f32 %v7652, %v8173
        %v8293 = vmul.f32 %v7653, %v8173
        %v8294 = vmul.f32 %v7654, %v8174
        %v8295 = vmul.f32 %v7655, %v8174
        %v8296 = vmul.f32 %v7656, %v8174
        %v8297 = vmul.f32 %v7657, %v8174
        %v8298 = vmul.f32 %v7658, %v8174
        %v8299 = vmul.f32 %v7659, %v8174
        %v8300 = vmul.f32 %v7660, %v8174
        %v8301 = vmul.f32 %v7661, %v8174
        %v8302 = vmul.f32 %v7662, %v8175
        %v8303 = vmul.f32 %v7663, %v8175
        %v8304 = vmul.f32 %v7664, %v8175
        %v8305 = vmul.f32 %v7665, %v8175
        %v8306 = vmul.f32 %v7666, %v8175
        %v8307 = vmul.f32 %v7667, %v8175
        %v8308 = vmul.f32 %v7668, %v8175
        %v8309 = vmul.f32 %v7669, %v8175
        %v8310 = vmul.f32 %v7670, %v8176
        %v8311 = vmul.f32 %v7671, %v8176
        %v8312 = vmul.f32 %v7672, %v8176
        %v8313 = vmul.f32 %v7673, %v8176
        %v8314 = vmul.f32 %v7674, %v8176
        %v8315 = vmul.f32 %v7675, %v8176
        %v8316 = vmul.f32 %v7676, %v8176
        %v8317 = vmul.f32 %v7677, %v8176
        %v8318 = vmul.f32 %v7678, %v8177
        %v8319 = vmul.f32 %v7679, %v8177
        %v8320 = vmul.f32 %v7680, %v8177
        %v8321 = vmul.f32 %v7681, %v8177
        %v8322 = vmul.f32 %v7682, %v8177
        %v8323 = vmul.f32 %v7683, %v8177
        %v8324 = vmul.f32 %v7684, %v8177
        %v8325 = vmul.f32 %v7685, %v8177
        %v8326 = vmul.f32 %v7686, %v8178
        %v8327 = vmul.f32 %v7687, %v8178
        %v8328 = vmul.f32 %v7688, %v8178
        %v8329 = vmul.f32 %v7689, %v8178
        %v8330 = vmul.f32 %v7690, %v8178
        %v8331 = vmul.f32 %v7691, %v8178
        %v8332 = vmul.f32 %v7692, %v8178
        %v8333 = vmul.f32 %v7693, %v8178
        %v8334 = vmul.f32 %v7694, %v8179
        %v8335 = vmul.f32 %v7695, %v8179
        %v8336 = vmul.f32 %v7696, %v8179
        %v8337 = vmul.f32 %v7697, %v8179
        %v8338 = vmul.f32 %v7698, %v8179
        %v8339 = vmul.f32 %v7699, %v8179
        %v8340 = vmul.f32 %v7700, %v8179
        %v8341 = vmul.f32 %v7701, %v8179
        %v8342 = vmul.f32 %v7702, %v8180
        %v8343 = vmul.f32 %v7703, %v8180
        %v8344 = vmul.f32 %v7704, %v8180
        %v8345 = vmul.f32 %v7705, %v8180
        %v8346 = vmul.f32 %v7706, %v8180
        %v8347 = vmul.f32 %v7707, %v8180
        %v8348 = vmul.f32 %v7708, %v8180
        %v8349 = vmul.f32 %v7709, %v8180
        %v8350 = vmul.f32 %v7710, %v8181
        %v8351 = vmul.f32 %v7711, %v8181
        %v8352 = vmul.f32 %v7712, %v8181
        %v8353 = vmul.f32 %v7713, %v8181
        %v8354 = vmul.f32 %v7714, %v8181
        %v8355 = vmul.f32 %v7715, %v8181
        %v8356 = vmul.f32 %v7716, %v8181
        %v8357 = vmul.f32 %v7717, %v8181
        %v8358 = vmul.f32 %v7718, %v8182
        %v8359 = vmul.f32 %v7719, %v8182
        %v8360 = vmul.f32 %v7720, %v8182
        %v8361 = vmul.f32 %v7721, %v8182
        %v8362 = vmul.f32 %v7722, %v8182
        %v8363 = vmul.f32 %v7723, %v8182
        %v8364 = vmul.f32 %v7724, %v8182
        %v8365 = vmul.f32 %v7725, %v8182
        %v8366 = vmul.f32 %v7726, %v8183
        %v8367 = vmul.f32 %v7727, %v8183
        %v8368 = vmul.f32 %v7728, %v8183
        %v8369 = vmul.f32 %v7729, %v8183
        %v8370 = vmul.f32 %v7730, %v8183
        %v8371 = vmul.f32 %v7731, %v8183
        %v8372 = vmul.f32 %v7732, %v8183
        %v8373 = vmul.f32 %v7733, %v8183
        %v8374 = vmul.f32 %v7734, %v8184
        %v8375 = vmul.f32 %v7735, %v8184
        %v8376 = vmul.f32 %v7736, %v8184
        %v8377 = vmul.f32 %v7737, %v8184
        %v8378 = vmul.f32 %v7738, %v8184
        %v8379 = vmul.f32 %v7739, %v8184
        %v8380 = vmul.f32 %v7740, %v8184
        %v8381 = vmul.f32 %v7741, %v8184
        %v8382 = vmul.f32 %v7742, %v8185
        %v8383 = vmul.f32 %v7743, %v8185
        %v8384 = vmul.f32 %v7744, %v8185
        %v8385 = vmul.f32 %v7745, %v8185
        %v8386 = vmul.f32 %v7746, %v8185
        %v8387 = vmul.f32 %v7747, %v8185
        %v8388 = vmul.f32 %v7748, %v8185
        %v8389 = vmul.f32 %v7749, %v8185
        %v8390 = vmul.f32 %v7750, %v8186
        %v8391 = vmul.f32 %v7751, %v8186
        %v8392 = vmul.f32 %v7752, %v8186
        %v8393 = vmul.f32 %v7753, %v8186
        %v8394 = vmul.f32 %v7754, %v8186
        %v8395 = vmul.f32 %v7755, %v8186
        %v8396 = vmul.f32 %v7756, %v8186
        %v8397 = vmul.f32 %v7757, %v8186
        %v8398 = vmul.f32 %v7758, %v8187
        %v8399 = vmul.f32 %v7759, %v8187
        %v8400 = vmul.f32 %v7760, %v8187
        %v8401 = vmul.f32 %v7761, %v8187
        %v8402 = vmul.f32 %v7762, %v8187
        %v8403 = vmul.f32 %v7763, %v8187
        %v8404 = vmul.f32 %v7764, %v8187
        %v8405 = vmul.f32 %v7765, %v8187
        %v8406 = vmul.f32 %v7766, %v8188
        %v8407 = vmul.f32 %v7767, %v8188
        %v8408 = vmul.f32 %v7768, %v8188
        %v8409 = vmul.f32 %v7769, %v8188
        %v8410 = vmul.f32 %v7770, %v8188
        %v8411 = vmul.f32 %v7771, %v8188
        %v8412 = vmul.f32 %v7772, %v8188
        %v8413 = vmul.f32 %v7773, %v8188
        %v8414 = vmul.f32 %v7774, %v8189
        %v8415 = vmul.f32 %v7775, %v8189
        %v8416 = vmul.f32 %v7776, %v8189
        %v8417 = vmul.f32 %v7777, %v8189
        %v8418 = vmul.f32 %v7778, %v8189
        %v8419 = vmul.f32 %v7779, %v8189
        %v8420 = vmul.f32 %v7780, %v8189
        %v8421 = vmul.f32 %v7781, %v8189
        %v8422 = vmul.f32 %v7782, %v8190
        %v8423 = vmul.f32 %v7783, %v8190
        %v8424 = vmul.f32 %v7784, %v8190
        %v8425 = vmul.f32 %v7785, %v8190
        %v8426 = vmul.f32 %v7786, %v8190
        %v8427 = vmul.f32 %v7787, %v8190
        %v8428 = vmul.f32 %v7788, %v8190
        %v8429 = vmul.f32 %v7789, %v8190
        %v8430 = vmul.f32 %v7790, %v8191
        %v8431 = vmul.f32 %v7791, %v8191
        %v8432 = vmul.f32 %v7792, %v8191
        %v8433 = vmul.f32 %v7793, %v8191
        %v8434 = vmul.f32 %v7794, %v8191
        %v8435 = vmul.f32 %v7795, %v8191
        %v8436 = vmul.f32 %v7796, %v8191
        %v8437 = vmul.f32 %v7797, %v8191
        %v8438 = vmul.f32 %v7798, %v8192
        %v8439 = vmul.f32 %v7799, %v8192
        %v8440 = vmul.f32 %v7800, %v8192
        %v8441 = vmul.f32 %v7801, %v8192
        %v8442 = vmul.f32 %v7802, %v8192
        %v8443 = vmul.f32 %v7803, %v8192
        %v8444 = vmul.f32 %v7804, %v8192
        %v8445 = vmul.f32 %v7805, %v8192
        %v8446 = vmul.f32 %v7806, %v8193
        %v8447 = vmul.f32 %v7807, %v8193
        %v8448 = vmul.f32 %v7808, %v8193
        %v8449 = vmul.f32 %v7809, %v8193
        %v8450 = vmul.f32 %v7810, %v8193
        %v8451 = vmul.f32 %v7811, %v8193
        %v8452 = vmul.f32 %v7812, %v8193
        %v8453 = vmul.f32 %v7813, %v8193
        %v8454 = vmul.f32 %v7814, %v8194
        %v8455 = vmul.f32 %v7815, %v8194
        %v8456 = vmul.f32 %v7816, %v8194
        %v8457 = vmul.f32 %v7817, %v8194
        %v8458 = vmul.f32 %v7818, %v8194
        %v8459 = vmul.f32 %v7819, %v8194
        %v8460 = vmul.f32 %v7820, %v8194
        %v8461 = vmul.f32 %v7821, %v8194
        %v8462 = vmul.f32 %v7822, %v8195
        %v8463 = vmul.f32 %v7823, %v8195
        %v8464 = vmul.f32 %v7824, %v8195
        %v8465 = vmul.f32 %v7825, %v8195
        %v8466 = vmul.f32 %v7826, %v8195
        %v8467 = vmul.f32 %v7827, %v8195
        %v8468 = vmul.f32 %v7828, %v8195
        %v8469 = vmul.f32 %v7829, %v8195
        %v8470 = vmul.f32 %v7830, %v8196
        %v8471 = vmul.f32 %v7831, %v8196
        %v8472 = vmul.f32 %v7832, %v8196
        %v8473 = vmul.f32 %v7833, %v8196
        %v8474 = vmul.f32 %v7834, %v8196
        %v8475 = vmul.f32 %v7835, %v8196
        %v8476 = vmul.f32 %v7836, %v8196
        %v8477 = vmul.f32 %v7837, %v8196
        %v8478 = vmul.f32 %v7838, %v8197
        %v8479 = vmul.f32 %v7839, %v8197
        %v8480 = vmul.f32 %v7840, %v8197
        %v8481 = vmul.f32 %v7841, %v8197
        %v8482 = vmul.f32 %v7842, %v8197
        %v8483 = vmul.f32 %v7843, %v8197
        %v8484 = vmul.f32 %v7844, %v8197
        %v8485 = vmul.f32 %v7845, %v8197
        %v8486 = vmul.f32 %v7846, %v8198
        %v8487 = vmul.f32 %v7847, %v8198
        %v8488 = vmul.f32 %v7848, %v8198
        %v8489 = vmul.f32 %v7849, %v8198
        %v8490 = vmul.f32 %v7850, %v8198
        %v8491 = vmul.f32 %v7851, %v8198
        %v8492 = vmul.f32 %v7852, %v8198
        %v8493 = vmul.f32 %v7853, %v8198
        %v8494 = vmul.f32 %v7854, %v8199
        %v8495 = vmul.f32 %v7855, %v8199
        %v8496 = vmul.f32 %v7856, %v8199
        %v8497 = vmul.f32 %v7857, %v8199
        %v8498 = vmul.f32 %v7858, %v8199
        %v8499 = vmul.f32 %v7859, %v8199
        %v8500 = vmul.f32 %v7860, %v8199
        %v8501 = vmul.f32 %v7861, %v8199
        %v8502 = vmul.f32 %v7862, %v8200
        %v8503 = vmul.f32 %v7863, %v8200
        %v8504 = vmul.f32 %v7864, %v8200
        %v8505 = vmul.f32 %v7865, %v8200
        %v8506 = vmul.f32 %v7866, %v8200
        %v8507 = vmul.f32 %v7867, %v8200
        %v8508 = vmul.f32 %v7868, %v8200
        %v8509 = vmul.f32 %v7869, %v8200
        %v8510 = vmul.f32 %v7870, %v8201
        %v8511 = vmul.f32 %v7871, %v8201
        %v8512 = vmul.f32 %v7872, %v8201
        %v8513 = vmul.f32 %v7873, %v8201
        %v8514 = vmul.f32 %v7874, %v8201
        %v8515 = vmul.f32 %v7875, %v8201
        %v8516 = vmul.f32 %v7876, %v8201
        %v8517 = vmul.f32 %v7877, %v8201
        %v8518 = vmul.f32 %v7878, %v8202
        %v8519 = vmul.f32 %v7879, %v8202
        %v8520 = vmul.f32 %v7880, %v8202
        %v8521 = vmul.f32 %v7881, %v8202
        %v8522 = vmul.f32 %v7882, %v8202
        %v8523 = vmul.f32 %v7883, %v8202
        %v8524 = vmul.f32 %v7884, %v8202
        %v8525 = vmul.f32 %v7885, %v8202
        %v8526 = vmul.f32 %v7886, %v8203
        %v8527 = vmul.f32 %v7887, %v8203
        %v8528 = vmul.f32 %v7888, %v8203
        %v8529 = vmul.f32 %v7889, %v8203
        %v8530 = vmul.f32 %v7890, %v8203
        %v8531 = vmul.f32 %v7891, %v8203
        %v8532 = vmul.f32 %v7892, %v8203
        %v8533 = vmul.f32 %v7893, %v8203
        %v8534 = vmul.f32 %v7894, %v8204
        %v8535 = vmul.f32 %v7895, %v8204
        %v8536 = vmul.f32 %v7896, %v8204
        %v8537 = vmul.f32 %v7897, %v8204
        %v8538 = vmul.f32 %v7898, %v8204
        %v8539 = vmul.f32 %v7899, %v8204
        %v8540 = vmul.f32 %v7900, %v8204
        %v8541 = vmul.f32 %v7901, %v8204
        %v8542 = vmul.f32 %v7902, %v8205
        %v8543 = vmul.f32 %v7903, %v8205
        %v8544 = vmul.f32 %v7904, %v8205
        %v8545 = vmul.f32 %v7905, %v8205
        %v8546 = vmul.f32 %v7906, %v8205
        %v8547 = vmul.f32 %v7907, %v8205
        %v8548 = vmul.f32 %v7908, %v8205
        %v8549 = vmul.f32 %v7909, %v8205
        %v8550 = vmul.f32 %v7910, %v8206
        %v8551 = vmul.f32 %v7911, %v8206
        %v8552 = vmul.f32 %v7912, %v8206
        %v8553 = vmul.f32 %v7913, %v8206
        %v8554 = vmul.f32 %v7914, %v8206
        %v8555 = vmul.f32 %v7915, %v8206
        %v8556 = vmul.f32 %v7916, %v8206
        %v8557 = vmul.f32 %v7917, %v8206
        %v8558 = vmul.f32 %v7918, %v8207
        %v8559 = vmul.f32 %v7919, %v8207
        %v8560 = vmul.f32 %v7920, %v8207
        %v8561 = vmul.f32 %v7921, %v8207
        %v8562 = vmul.f32 %v7922, %v8207
        %v8563 = vmul.f32 %v7923, %v8207
        %v8564 = vmul.f32 %v7924, %v8207
        %v8565 = vmul.f32 %v7925, %v8207
        %v8566 = vmul.f32 %v7926, %v8208
        %v8567 = vmul.f32 %v7927, %v8208
        %v8568 = vmul.f32 %v7928, %v8208
        %v8569 = vmul.f32 %v7929, %v8208
        %v8570 = vmul.f32 %v7930, %v8208
        %v8571 = vmul.f32 %v7931, %v8208
        %v8572 = vmul.f32 %v7932, %v8208
        %v8573 = vmul.f32 %v7933, %v8208
        %v8574 = vmul.f32 %v7934, %v8209
        %v8575 = vmul.f32 %v7935, %v8209
        %v8576 = vmul.f32 %v7936, %v8209
        %v8577 = vmul.f32 %v7937, %v8209
        %v8578 = vmul.f32 %v7938, %v8209
        %v8579 = vmul.f32 %v7939, %v8209
        %v8580 = vmul.f32 %v7940, %v8209
        %v8581 = vmul.f32 %v7941, %v8209
        %v8582 = vmul.f32 %v7942, %v8210
        %v8583 = vmul.f32 %v7943, %v8210
        %v8584 = vmul.f32 %v7944, %v8210
        %v8585 = vmul.f32 %v7945, %v8210
        %v8586 = vmul.f32 %v7946, %v8210
        %v8587 = vmul.f32 %v7947, %v8210
        %v8588 = vmul.f32 %v7948, %v8210
        %v8589 = vmul.f32 %v7949, %v8210
        %v8590 = vmul.f32 %v7950, %v8211
        %v8591 = vmul.f32 %v7951, %v8211
        %v8592 = vmul.f32 %v7952, %v8211
        %v8593 = vmul.f32 %v7953, %v8211
        %v8594 = vmul.f32 %v7954, %v8211
        %v8595 = vmul.f32 %v7955, %v8211
        %v8596 = vmul.f32 %v7956, %v8211
        %v8597 = vmul.f32 %v7957, %v8211
        %v8598 = vmul.f32 %v7958, %v8212
        %v8599 = vmul.f32 %v7959, %v8212
        %v8600 = vmul.f32 %v7960, %v8212
        %v8601 = vmul.f32 %v7961, %v8212
        %v8602 = vmul.f32 %v7962, %v8212
        %v8603 = vmul.f32 %v7963, %v8212
        %v8604 = vmul.f32 %v7964, %v8212
        %v8605 = vmul.f32 %v7965, %v8212
        %v8606 = vmul.f32 %v7966, %v8213
        %v8607 = vmul.f32 %v7967, %v8213
        %v8608 = vmul.f32 %v7968, %v8213
        %v8609 = vmul.f32 %v7969, %v8213
        %v8610 = vmul.f32 %v7970, %v8213
        %v8611 = vmul.f32 %v7971, %v8213
        %v8612 = vmul.f32 %v7972, %v8213
        %v8613 = vmul.f32 %v7973, %v8213
        %v8614 = vmul.f32 %v7974, %v8214
        %v8615 = vmul.f32 %v7975, %v8214
        %v8616 = vmul.f32 %v7976, %v8214
        %v8617 = vmul.f32 %v7977, %v8214
        %v8618 = vmul.f32 %v7978, %v8214
        %v8619 = vmul.f32 %v7979, %v8214
        %v8620 = vmul.f32 %v7980, %v8214
        %v8621 = vmul.f32 %v7981, %v8214
        %v8622 = vmul.f32 %v7982, %v8215
        %v8623 = vmul.f32 %v7983, %v8215
        %v8624 = vmul.f32 %v7984, %v8215
        %v8625 = vmul.f32 %v7985, %v8215
        %v8626 = vmul.f32 %v7986, %v8215
        %v8627 = vmul.f32 %v7987, %v8215
        %v8628 = vmul.f32 %v7988, %v8215
        %v8629 = vmul.f32 %v7989, %v8215
        %v8630 = vmul.f32 %v7990, %v8216
        %v8631 = vmul.f32 %v7991, %v8216
        %v8632 = vmul.f32 %v7992, %v8216
        %v8633 = vmul.f32 %v7993, %v8216
        %v8634 = vmul.f32 %v7994, %v8216
        %v8635 = vmul.f32 %v7995, %v8216
        %v8636 = vmul.f32 %v7996, %v8216
        %v8637 = vmul.f32 %v7997, %v8216
        %v8638 = vmul.f32 %v7998, %v8217
        %v8639 = vmul.f32 %v7999, %v8217
        %v8640 = vmul.f32 %v8000, %v8217
        %v8641 = vmul.f32 %v8001, %v8217
        %v8642 = vmul.f32 %v8002, %v8217
        %v8643 = vmul.f32 %v8003, %v8217
        %v8644 = vmul.f32 %v8004, %v8217
        %v8645 = vmul.f32 %v8005, %v8217
        %v8646 = vmul.f32 %v8006, %v8218
        %v8647 = vmul.f32 %v8007, %v8218
        %v8648 = vmul.f32 %v8008, %v8218
        %v8649 = vmul.f32 %v8009, %v8218
        %v8650 = vmul.f32 %v8010, %v8218
        %v8651 = vmul.f32 %v8011, %v8218
        %v8652 = vmul.f32 %v8012, %v8218
        %v8653 = vmul.f32 %v8013, %v8218
        %v8654 = vmul.f32 %v8014, %v8219
        %v8655 = vmul.f32 %v8015, %v8219
        %v8656 = vmul.f32 %v8016, %v8219
        %v8657 = vmul.f32 %v8017, %v8219
        %v8658 = vmul.f32 %v8018, %v8219
        %v8659 = vmul.f32 %v8019, %v8219
        %v8660 = vmul.f32 %v8020, %v8219
        %v8661 = vmul.f32 %v8021, %v8219
        %v8662 = vmul.f32 %v8022, %v8220
        %v8663 = vmul.f32 %v8023, %v8220
        %v8664 = vmul.f32 %v8024, %v8220
        %v8665 = vmul.f32 %v8025, %v8220
        %v8666 = vmul.f32 %v8026, %v8220
        %v8667 = vmul.f32 %v8027, %v8220
        %v8668 = vmul.f32 %v8028, %v8220
        %v8669 = vmul.f32 %v8029, %v8220
        %v8670 = vmul.f32 %v8030, %v8221
        %v8671 = vmul.f32 %v8031, %v8221
        %v8672 = vmul.f32 %v8032, %v8221
        %v8673 = vmul.f32 %v8033, %v8221
        %v8674 = vmul.f32 %v8034, %v8221
        %v8675 = vmul.f32 %v8035, %v8221
        %v8676 = vmul.f32 %v8036, %v8221
        %v8677 = vmul.f32 %v8037, %v8221
        %v8678 = vmul.f32 %v8038, %v8222
        %v8679 = vmul.f32 %v8039, %v8222
        %v8680 = vmul.f32 %v8040, %v8222
        %v8681 = vmul.f32 %v8041, %v8222
        %v8682 = vmul.f32 %v8042, %v8222
        %v8683 = vmul.f32 %v8043, %v8222
        %v8684 = vmul.f32 %v8044, %v8222
        %v8685 = vmul.f32 %v8045, %v8222
        %v8686 = vmul.f32 %v8046, %v8223
        %v8687 = vmul.f32 %v8047, %v8223
        %v8688 = vmul.f32 %v8048, %v8223
        %v8689 = vmul.f32 %v8049, %v8223
        %v8690 = vmul.f32 %v8050, %v8223
        %v8691 = vmul.f32 %v8051, %v8223
        %v8692 = vmul.f32 %v8052, %v8223
        %v8693 = vmul.f32 %v8053, %v8223
        %v8694 = vmul.f32 %v8054, %v8224
        %v8695 = vmul.f32 %v8055, %v8224
        %v8696 = vmul.f32 %v8056, %v8224
        %v8697 = vmul.f32 %v8057, %v8224
        %v8698 = vmul.f32 %v8058, %v8224
        %v8699 = vmul.f32 %v8059, %v8224
        %v8700 = vmul.f32 %v8060, %v8224
        %v8701 = vmul.f32 %v8061, %v8224
        %v8702 = vmul.f32 %v8062, %v8225
        %v8703 = vmul.f32 %v8063, %v8225
        %v8704 = vmul.f32 %v8064, %v8225
        %v8705 = vmul.f32 %v8065, %v8225
        %v8706 = vmul.f32 %v8066, %v8225
        %v8707 = vmul.f32 %v8067, %v8225
        %v8708 = vmul.f32 %v8068, %v8225
        %v8709 = vmul.f32 %v8069, %v8225
        %v8710 = vmul.f32 %v8070, %v8226
        %v8711 = vmul.f32 %v8071, %v8226
        %v8712 = vmul.f32 %v8072, %v8226
        %v8713 = vmul.f32 %v8073, %v8226
        %v8714 = vmul.f32 %v8074, %v8226
        %v8715 = vmul.f32 %v8075, %v8226
        %v8716 = vmul.f32 %v8076, %v8226
        %v8717 = vmul.f32 %v8077, %v8226
        %v8718 = vmul.f32 %v8078, %v8227
        %v8719 = vmul.f32 %v8079, %v8227
        %v8720 = vmul.f32 %v8080, %v8227
        %v8721 = vmul.f32 %v8081, %v8227
        %v8722 = vmul.f32 %v8082, %v8227
        %v8723 = vmul.f32 %v8083, %v8227
        %v8724 = vmul.f32 %v8084, %v8227
        %v8725 = vmul.f32 %v8085, %v8227
        %v8726 = vmul.f32 %v8086, %v8228
        %v8727 = vmul.f32 %v8087, %v8228
        %v8728 = vmul.f32 %v8088, %v8228
        %v8729 = vmul.f32 %v8089, %v8228
        %v8730 = vmul.f32 %v8090, %v8228
        %v8731 = vmul.f32 %v8091, %v8228
        %v8732 = vmul.f32 %v8092, %v8228
        %v8733 = vmul.f32 %v8093, %v8228
        %v8734 = vmul.f32 %v8094, %v8229
        %v8735 = vmul.f32 %v8095, %v8229
        %v8736 = vmul.f32 %v8096, %v8229
        %v8737 = vmul.f32 %v8097, %v8229
        %v8738 = vmul.f32 %v8098, %v8229
        %v8739 = vmul.f32 %v8099, %v8229
        %v8740 = vmul.f32 %v8100, %v8229
        %v8741 = vmul.f32 %v8101, %v8229
        %v8743 = vlaneseq
        %v8744 = vshrl.u32 %v8743, 7
        %v8745 = vsub.s32 0, %v8744
        %v8746 = vrot.slane %v5667, %v8745
        %v8747 = vlaneseq
        %v8748 = vshrl.u32 %v8747, 7
        %v8749 = vsub.s32 1, %v8748
        %v8750 = vrot.slane %v5667, %v8749
        %v8751 = vlaneseq
        %v8752 = vshrl.u32 %v8751, 7
        %v8753 = vsub.s32 2, %v8752
        %v8754 = vrot.slane %v5667, %v8753
        %v8755 = vlaneseq
        %v8756 = vshrl.u32 %v8755, 7
        %v8757 = vsub.s32 3, %v8756
        %v8758 = vrot.slane %v5667, %v8757
        %v8759 = vlaneseq
        %v8760 = vshrl.u32 %v8759, 7
        %v8761 = vsub.s32 4, %v8760
        %v8762 = vrot.slane %v5667, %v8761
        %v8763 = vlaneseq
        %v8764 = vshrl.u32 %v8763, 7
        %v8765 = vsub.s32 5, %v8764
        %v8766 = vrot.slane %v5667, %v8765
        %v8767 = vlaneseq
        %v8768 = vshrl.u32 %v8767, 7
        %v8769 = vsub.s32 6, %v8768
        %v8770 = vrot.slane %v5667, %v8769
        %v8771 = vlaneseq
        %v8772 = vshrl.u32 %v8771, 7
        %v8773 = vsub.s32 7, %v8772
        %v8774 = vrot.slane %v5667, %v8773
        %v8783 = vmul.f32 %v8230, %v8746
        %v8784 = vmul.f32 %v8231, %v8750
        %v8785 = vmul.f32 %v8232, %v8754
        %v8786 = vmul.f32 %v8233, %v8758
        %v8787 = vmul.f32 %v8234, %v8762
        %v8788 = vmul.f32 %v8235, %v8766
        %v8789 = vmul.f32 %v8236, %v8770
        %v8790 = vmul.f32 %v8237, %v8774
        %v8791 = vmul.f32 %v8238, %v8746
        %v8792 = vmul.f32 %v8239, %v8750
        %v8793 = vmul.f32 %v8240, %v8754
        %v8794 = vmul.f32 %v8241, %v8758
        %v8795 = vmul.f32 %v8242, %v8762
        %v8796 = vmul.f32 %v8243, %v8766
        %v8797 = vmul.f32 %v8244, %v8770
        %v8798 = vmul.f32 %v8245, %v8774
        %v8799 = vmul.f32 %v8246, %v8746
        %v8800 = vmul.f32 %v8247, %v8750
        %v8801 = vmul.f32 %v8248, %v8754
        %v8802 = vmul.f32 %v8249, %v8758
        %v8803 = vmul.f32 %v8250, %v8762
        %v8804 = vmul.f32 %v8251, %v8766
        %v8805 = vmul.f32 %v8252, %v8770
        %v8806 = vmul.f32 %v8253, %v8774
        %v8807 = vmul.f32 %v8254, %v8746
        %v8808 = vmul.f32 %v8255, %v8750
        %v8809 = vmul.f32 %v8256, %v8754
        %v8810 = vmul.f32 %v8257, %v8758
        %v8811 = vmul.f32 %v8258, %v8762
        %v8812 = vmul.f32 %v8259, %v8766
        %v8813 = vmul.f32 %v8260, %v8770
        %v8814 = vmul.f32 %v8261, %v8774
        %v8815 = vmul.f32 %v8262, %v8746
        %v8816 = vmul.f32 %v8263, %v8750
        %v8817 = vmul.f32 %v8264, %v8754
        %v8818 = vmul.f32 %v8265, %v8758
        %v8819 = vmul.f32 %v8266, %v8762
        %v8820 = vmul.f32 %v8267, %v8766
        %v8821 = vmul.f32 %v8268, %v8770
        %v8822 = vmul.f32 %v8269, %v8774
        %v8823 = vmul.f32 %v8270, %v8746
        %v8824 = vmul.f32 %v8271, %v8750
        %v8825 = vmul.f32 %v8272, %v8754
        %v8826 = vmul.f32 %v8273, %v8758
        %v8827 = vmul.f32 %v8274, %v8762
        %v8828 = vmul.f32 %v8275, %v8766
        %v8829 = vmul.f32 %v8276, %v8770
        %v8830 = vmul.f32 %v8277, %v8774
        %v8831 = vmul.f32 %v8278, %v8746
        %v8832 = vmul.f32 %v8279, %v8750
        %v8833 = vmul.f32 %v8280, %v8754
        %v8834 = vmul.f32 %v8281, %v8758
        %v8835 = vmul.f32 %v8282, %v8762
        %v8836 = vmul.f32 %v8283, %v8766
        %v8837 = vmul.f32 %v8284, %v8770
        %v8838 = vmul.f32 %v8285, %v8774
        %v8839 = vmul.f32 %v8286, %v8746
        %v8840 = vmul.f32 %v8287, %v8750
        %v8841 = vmul.f32 %v8288, %v8754
        %v8842 = vmul.f32 %v8289, %v8758
        %v8843 = vmul.f32 %v8290, %v8762
        %v8844 = vmul.f32 %v8291, %v8766
        %v8845 = vmul.f32 %v8292, %v8770
        %v8846 = vmul.f32 %v8293, %v8774
        %v8847 = vmul.f32 %v8294, %v8746
        %v8848 = vmul.f32 %v8295, %v8750
        %v8849 = vmul.f32 %v8296, %v8754
        %v8850 = vmul.f32 %v8297, %v8758
        %v8851 = vmul.f32 %v8298, %v8762
        %v8852 = vmul.f32 %v8299, %v8766
        %v8853 = vmul.f32 %v8300, %v8770
        %v8854 = vmul.f32 %v8301, %v8774
        %v8855 = vmul.f32 %v8302, %v8746
        %v8856 = vmul.f32 %v8303, %v8750
        %v8857 = vmul.f32 %v8304, %v8754
        %v8858 = vmul.f32 %v8305, %v8758
        %v8859 = vmul.f32 %v8306, %v8762
        %v8860 = vmul.f32 %v8307, %v8766
        %v8861 = vmul.f32 %v8308, %v8770
        %v8862 = vmul.f32 %v8309, %v8774
        %v8863 = vmul.f32 %v8310, %v8746
        %v8864 = vmul.f32 %v8311, %v8750
        %v8865 = vmul.f32 %v8312, %v8754
        %v8866 = vmul.f32 %v8313, %v8758
        %v8867 = vmul.f32 %v8314, %v8762
        %v8868 = vmul.f32 %v8315, %v8766
        %v8869 = vmul.f32 %v8316, %v8770
        %v8870 = vmul.f32 %v8317, %v8774
        %v8871 = vmul.f32 %v8318, %v8746
        %v8872 = vmul.f32 %v8319, %v8750
        %v8873 = vmul.f32 %v8320, %v8754
        %v8874 = vmul.f32 %v8321, %v8758
        %v8875 = vmul.f32 %v8322, %v8762
        %v8876 = vmul.f32 %v8323, %v8766
        %v8877 = vmul.f32 %v8324, %v8770
        %v8878 = vmul.f32 %v8325, %v8774
        %v8879 = vmul.f32 %v8326, %v8746
        %v8880 = vmul.f32 %v8327, %v8750
        %v8881 = vmul.f32 %v8328, %v8754
        %v8882 = vmul.f32 %v8329, %v8758
        %v8883 = vmul.f32 %v8330, %v8762
        %v8884 = vmul.f32 %v8331, %v8766
        %v8885 = vmul.f32 %v8332, %v8770
        %v8886 = vmul.f32 %v8333, %v8774
        %v8887 = vmul.f32 %v8334, %v8746
        %v8888 = vmul.f32 %v8335, %v8750
        %v8889 = vmul.f32 %v8336, %v8754
        %v8890 = vmul.f32 %v8337, %v8758
        %v8891 = vmul.f32 %v8338, %v8762
        %v8892 = vmul.f32 %v8339, %v8766
        %v8893 = vmul.f32 %v8340, %v8770
        %v8894 = vmul.f32 %v8341, %v8774
        %v8895 = vmul.f32 %v8342, %v8746
        %v8896 = vmul.f32 %v8343, %v8750
        %v8897 = vmul.f32 %v8344, %v8754
        %v8898 = vmul.f32 %v8345, %v8758
        %v8899 = vmul.f32 %v8346, %v8762
        %v8900 = vmul.f32 %v8347, %v8766
        %v8901 = vmul.f32 %v8348, %v8770
        %v8902 = vmul.f32 %v8349, %v8774
        %v8903 = vmul.f32 %v8350, %v8746
        %v8904 = vmul.f32 %v8351, %v8750
        %v8905 = vmul.f32 %v8352, %v8754
        %v8906 = vmul.f32 %v8353, %v8758
        %v8907 = vmul.f32 %v8354, %v8762
        %v8908 = vmul.f32 %v8355, %v8766
        %v8909 = vmul.f32 %v8356, %v8770
        %v8910 = vmul.f32 %v8357, %v8774
        %v8911 = vmul.f32 %v8358, %v8746
        %v8912 = vmul.f32 %v8359, %v8750
        %v8913 = vmul.f32 %v8360, %v8754
        %v8914 = vmul.f32 %v8361, %v8758
        %v8915 = vmul.f32 %v8362, %v8762
        %v8916 = vmul.f32 %v8363, %v8766
        %v8917 = vmul.f32 %v8364, %v8770
        %v8918 = vmul.f32 %v8365, %v8774
        %v8919 = vmul.f32 %v8366, %v8746
        %v8920 = vmul.f32 %v8367, %v8750
        %v8921 = vmul.f32 %v8368, %v8754
        %v8922 = vmul.f32 %v8369, %v8758
        %v8923 = vmul.f32 %v8370, %v8762
        %v8924 = vmul.f32 %v8371, %v8766
        %v8925 = vmul.f32 %v8372, %v8770
        %v8926 = vmul.f32 %v8373, %v8774
        %v8927 = vmul.f32 %v8374, %v8746
        %v8928 = vmul.f32 %v8375, %v8750
        %v8929 = vmul.f32 %v8376, %v8754
        %v8930 = vmul.f32 %v8377, %v8758
        %v8931 = vmul.f32 %v8378, %v8762
        %v8932 = vmul.f32 %v8379, %v8766
        %v8933 = vmul.f32 %v8380, %v8770
        %v8934 = vmul.f32 %v8381, %v8774
        %v8935 = vmul.f32 %v8382, %v8746
        %v8936 = vmul.f32 %v8383, %v8750
        %v8937 = vmul.f32 %v8384, %v8754
        %v8938 = vmul.f32 %v8385, %v8758
        %v8939 = vmul.f32 %v8386, %v8762
        %v8940 = vmul.f32 %v8387, %v8766
        %v8941 = vmul.f32 %v8388, %v8770
        %v8942 = vmul.f32 %v8389, %v8774
        %v8943 = vmul.f32 %v8390, %v8746
        %v8944 = vmul.f32 %v8391, %v8750
        %v8945 = vmul.f32 %v8392, %v8754
        %v8946 = vmul.f32 %v8393, %v8758
        %v8947 = vmul.f32 %v8394, %v8762
        %v8948 = vmul.f32 %v8395, %v8766
        %v8949 = vmul.f32 %v8396, %v8770
        %v8950 = vmul.f32 %v8397, %v8774
        %v8951 = vmul.f32 %v8398, %v8746
        %v8952 = vmul.f32 %v8399, %v8750
        %v8953 = vmul.f32 %v8400, %v8754
        %v8954 = vmul.f32 %v8401, %v8758
        %v8955 = vmul.f32 %v8402, %v8762
        %v8956 = vmul.f32 %v8403, %v8766
        %v8957 = vmul.f32 %v8404, %v8770
        %v8958 = vmul.f32 %v8405, %v8774
        %v8959 = vmul.f32 %v8406, %v8746
        %v8960 = vmul.f32 %v8407, %v8750
        %v8961 = vmul.f32 %v8408, %v8754
        %v8962 = vmul.f32 %v8409, %v8758
        %v8963 = vmul.f32 %v8410, %v8762
        %v8964 = vmul.f32 %v8411, %v8766
        %v8965 = vmul.f32 %v8412, %v8770
        %v8966 = vmul.f32 %v8413, %v8774
        %v8967 = vmul.f32 %v8414, %v8746
        %v8968 = vmul.f32 %v8415, %v8750
        %v8969 = vmul.f32 %v8416, %v8754
        %v8970 = vmul.f32 %v8417, %v8758
        %v8971 = vmul.f32 %v8418, %v8762
        %v8972 = vmul.f32 %v8419, %v8766
        %v8973 = vmul.f32 %v8420, %v8770
        %v8974 = vmul.f32 %v8421, %v8774
        %v8975 = vmul.f32 %v8422, %v8746
        %v8976 = vmul.f32 %v8423, %v8750
        %v8977 = vmul.f32 %v8424, %v8754
        %v8978 = vmul.f32 %v8425, %v8758
        %v8979 = vmul.f32 %v8426, %v8762
        %v8980 = vmul.f32 %v8427, %v8766
        %v8981 = vmul.f32 %v8428, %v8770
        %v8982 = vmul.f32 %v8429, %v8774
        %v8983 = vmul.f32 %v8430, %v8746
        %v8984 = vmul.f32 %v8431, %v8750
        %v8985 = vmul.f32 %v8432, %v8754
        %v8986 = vmul.f32 %v8433, %v8758
        %v8987 = vmul.f32 %v8434, %v8762
        %v8988 = vmul.f32 %v8435, %v8766
        %v8989 = vmul.f32 %v8436, %v8770
        %v8990 = vmul.f32 %v8437, %v8774
        %v8991 = vmul.f32 %v8438, %v8746
        %v8992 = vmul.f32 %v8439, %v8750
        %v8993 = vmul.f32 %v8440, %v8754
        %v8994 = vmul.f32 %v8441, %v8758
        %v8995 = vmul.f32 %v8442, %v8762
        %v8996 = vmul.f32 %v8443, %v8766
        %v8997 = vmul.f32 %v8444, %v8770
        %v8998 = vmul.f32 %v8445, %v8774
        %v8999 = vmul.f32 %v8446, %v8746
        %v9000 = vmul.f32 %v8447, %v8750
        %v9001 = vmul.f32 %v8448, %v8754
        %v9002 = vmul.f32 %v8449, %v8758
        %v9003 = vmul.f32 %v8450, %v8762
        %v9004 = vmul.f32 %v8451, %v8766
        %v9005 = vmul.f32 %v8452, %v8770
        %v9006 = vmul.f32 %v8453, %v8774
        %v9007 = vmul.f32 %v8454, %v8746
        %v9008 = vmul.f32 %v8455, %v8750
        %v9009 = vmul.f32 %v8456, %v8754
        %v9010 = vmul.f32 %v8457, %v8758
        %v9011 = vmul.f32 %v8458, %v8762
        %v9012 = vmul.f32 %v8459, %v8766
        %v9013 = vmul.f32 %v8460, %v8770
        %v9014 = vmul.f32 %v8461, %v8774
        %v9015 = vmul.f32 %v8462, %v8746
        %v9016 = vmul.f32 %v8463, %v8750
        %v9017 = vmul.f32 %v8464, %v8754
        %v9018 = vmul.f32 %v8465, %v8758
        %v9019 = vmul.f32 %v8466, %v8762
        %v9020 = vmul.f32 %v8467, %v8766
        %v9021 = vmul.f32 %v8468, %v8770
        %v9022 = vmul.f32 %v8469, %v8774
        %v9023 = vmul.f32 %v8470, %v8746
        %v9024 = vmul.f32 %v8471, %v8750
        %v9025 = vmul.f32 %v8472, %v8754
        %v9026 = vmul.f32 %v8473, %v8758
        %v9027 = vmul.f32 %v8474, %v8762
        %v9028 = vmul.f32 %v8475, %v8766
        %v9029 = vmul.f32 %v8476, %v8770
        %v9030 = vmul.f32 %v8477, %v8774
        %v9031 = vmul.f32 %v8478, %v8746
        %v9032 = vmul.f32 %v8479, %v8750
        %v9033 = vmul.f32 %v8480, %v8754
        %v9034 = vmul.f32 %v8481, %v8758
        %v9035 = vmul.f32 %v8482, %v8762
        %v9036 = vmul.f32 %v8483, %v8766
        %v9037 = vmul.f32 %v8484, %v8770
        %v9038 = vmul.f32 %v8485, %v8774
        %v9039 = vmul.f32 %v8486, %v8746
        %v9040 = vmul.f32 %v8487, %v8750
        %v9041 = vmul.f32 %v8488, %v8754
        %v9042 = vmul.f32 %v8489, %v8758
        %v9043 = vmul.f32 %v8490, %v8762
        %v9044 = vmul.f32 %v8491, %v8766
        %v9045 = vmul.f32 %v8492, %v8770
        %v9046 = vmul.f32 %v8493, %v8774
        %v9047 = vmul.f32 %v8494, %v8746
        %v9048 = vmul.f32 %v8495, %v8750
        %v9049 = vmul.f32 %v8496, %v8754
        %v9050 = vmul.f32 %v8497, %v8758
        %v9051 = vmul.f32 %v8498, %v8762
        %v9052 = vmul.f32 %v8499, %v8766
        %v9053 = vmul.f32 %v8500, %v8770
        %v9054 = vmul.f32 %v8501, %v8774
        %v9055 = vmul.f32 %v8502, %v8746
        %v9056 = vmul.f32 %v8503, %v8750
        %v9057 = vmul.f32 %v8504, %v8754
        %v9058 = vmul.f32 %v8505, %v8758
        %v9059 = vmul.f32 %v8506, %v8762
        %v9060 = vmul.f32 %v8507, %v8766
        %v9061 = vmul.f32 %v8508, %v8770
        %v9062 = vmul.f32 %v8509, %v8774
        %v9063 = vmul.f32 %v8510, %v8746
        %v9064 = vmul.f32 %v8511, %v8750
        %v9065 = vmul.f32 %v8512, %v8754
        %v9066 = vmul.f32 %v8513, %v8758
        %v9067 = vmul.f32 %v8514, %v8762
        %v9068 = vmul.f32 %v8515, %v8766
        %v9069 = vmul.f32 %v8516, %v8770
        %v9070 = vmul.f32 %v8517, %v8774
        %v9071 = vmul.f32 %v8518, %v8746
        %v9072 = vmul.f32 %v8519, %v8750
        %v9073 = vmul.f32 %v8520, %v8754
        %v9074 = vmul.f32 %v8521, %v8758
        %v9075 = vmul.f32 %v8522, %v8762
        %v9076 = vmul.f32 %v8523, %v8766
        %v9077 = vmul.f32 %v8524, %v8770
        %v9078 = vmul.f32 %v8525, %v8774
        %v9079 = vmul.f32 %v8526, %v8746
        %v9080 = vmul.f32 %v8527, %v8750
        %v9081 = vmul.f32 %v8528, %v8754
        %v9082 = vmul.f32 %v8529, %v8758
        %v9083 = vmul.f32 %v8530, %v8762
        %v9084 = vmul.f32 %v8531, %v8766
        %v9085 = vmul.f32 %v8532, %v8770
        %v9086 = vmul.f32 %v8533, %v8774
        %v9087 = vmul.f32 %v8534, %v8746
        %v9088 = vmul.f32 %v8535, %v8750
        %v9089 = vmul.f32 %v8536, %v8754
        %v9090 = vmul.f32 %v8537, %v8758
        %v9091 = vmul.f32 %v8538, %v8762
        %v9092 = vmul.f32 %v8539, %v8766
        %v9093 = vmul.f32 %v8540, %v8770
        %v9094 = vmul.f32 %v8541, %v8774
        %v9095 = vmul.f32 %v8542, %v8746
        %v9096 = vmul.f32 %v8543, %v8750
        %v9097 = vmul.f32 %v8544, %v8754
        %v9098 = vmul.f32 %v8545, %v8758
        %v9099 = vmul.f32 %v8546, %v8762
        %v9100 = vmul.f32 %v8547, %v8766
        %v9101 = vmul.f32 %v8548, %v8770
        %v9102 = vmul.f32 %v8549, %v8774
        %v9103 = vmul.f32 %v8550, %v8746
        %v9104 = vmul.f32 %v8551, %v8750
        %v9105 = vmul.f32 %v8552, %v8754
        %v9106 = vmul.f32 %v8553, %v8758
        %v9107 = vmul.f32 %v8554, %v8762
        %v9108 = vmul.f32 %v8555, %v8766
        %v9109 = vmul.f32 %v8556, %v8770
        %v9110 = vmul.f32 %v8557, %v8774
        %v9111 = vmul.f32 %v8558, %v8746
        %v9112 = vmul.f32 %v8559, %v8750
        %v9113 = vmul.f32 %v8560, %v8754
        %v9114 = vmul.f32 %v8561, %v8758
        %v9115 = vmul.f32 %v8562, %v8762
        %v9116 = vmul.f32 %v8563, %v8766
        %v9117 = vmul.f32 %v8564, %v8770
        %v9118 = vmul.f32 %v8565, %v8774
        %v9119 = vmul.f32 %v8566, %v8746
        %v9120 = vmul.f32 %v8567, %v8750
        %v9121 = vmul.f32 %v8568, %v8754
        %v9122 = vmul.f32 %v8569, %v8758
        %v9123 = vmul.f32 %v8570, %v8762
        %v9124 = vmul.f32 %v8571, %v8766
        %v9125 = vmul.f32 %v8572, %v8770
        %v9126 = vmul.f32 %v8573, %v8774
        %v9127 = vmul.f32 %v8574, %v8746
        %v9128 = vmul.f32 %v8575, %v8750
        %v9129 = vmul.f32 %v8576, %v8754
        %v9130 = vmul.f32 %v8577, %v8758
        %v9131 = vmul.f32 %v8578, %v8762
        %v9132 = vmul.f32 %v8579, %v8766
        %v9133 = vmul.f32 %v8580, %v8770
        %v9134 = vmul.f32 %v8581, %v8774
        %v9135 = vmul.f32 %v8582, %v8746
        %v9136 = vmul.f32 %v8583, %v8750
        %v9137 = vmul.f32 %v8584, %v8754
        %v9138 = vmul.f32 %v8585, %v8758
        %v9139 = vmul.f32 %v8586, %v8762
        %v9140 = vmul.f32 %v8587, %v8766
        %v9141 = vmul.f32 %v8588, %v8770
        %v9142 = vmul.f32 %v8589, %v8774
        %v9143 = vmul.f32 %v8590, %v8746
        %v9144 = vmul.f32 %v8591, %v8750
        %v9145 = vmul.f32 %v8592, %v8754
        %v9146 = vmul.f32 %v8593, %v8758
        %v9147 = vmul.f32 %v8594, %v8762
        %v9148 = vmul.f32 %v8595, %v8766
        %v9149 = vmul.f32 %v8596, %v8770
        %v9150 = vmul.f32 %v8597, %v8774
        %v9151 = vmul.f32 %v8598, %v8746
        %v9152 = vmul.f32 %v8599, %v8750
        %v9153 = vmul.f32 %v8600, %v8754
        %v9154 = vmul.f32 %v8601, %v8758
        %v9155 = vmul.f32 %v8602, %v8762
        %v9156 = vmul.f32 %v8603, %v8766
        %v9157 = vmul.f32 %v8604, %v8770
        %v9158 = vmul.f32 %v8605, %v8774
        %v9159 = vmul.f32 %v8606, %v8746
        %v9160 = vmul.f32 %v8607, %v8750
        %v9161 = vmul.f32 %v8608, %v8754
        %v9162 = vmul.f32 %v8609, %v8758
        %v9163 = vmul.f32 %v8610, %v8762
        %v9164 = vmul.f32 %v8611, %v8766
        %v9165 = vmul.f32 %v8612, %v8770
        %v9166 = vmul.f32 %v8613, %v8774
        %v9167 = vmul.f32 %v8614, %v8746
        %v9168 = vmul.f32 %v8615, %v8750
        %v9169 = vmul.f32 %v8616, %v8754
        %v9170 = vmul.f32 %v8617, %v8758
        %v9171 = vmul.f32 %v8618, %v8762
        %v9172 = vmul.f32 %v8619, %v8766
        %v9173 = vmul.f32 %v8620, %v8770
        %v9174 = vmul.f32 %v8621, %v8774
        %v9175 = vmul.f32 %v8622, %v8746
        %v9176 = vmul.f32 %v8623, %v8750
        %v9177 = vmul.f32 %v8624, %v8754
        %v9178 = vmul.f32 %v8625, %v8758
        %v9179 = vmul.f32 %v8626, %v8762
        %v9180 = vmul.f32 %v8627, %v8766
        %v9181 = vmul.f32 %v8628, %v8770
        %v9182 = vmul.f32 %v8629, %v8774
        %v9183 = vmul.f32 %v8630, %v8746
        %v9184 = vmul.f32 %v8631, %v8750
        %v9185 = vmul.f32 %v8632, %v8754
        %v9186 = vmul.f32 %v8633, %v8758
        %v9187 = vmul.f32 %v8634, %v8762
        %v9188 = vmul.f32 %v8635, %v8766
        %v9189 = vmul.f32 %v8636, %v8770
        %v9190 = vmul.f32 %v8637, %v8774
        %v9191 = vmul.f32 %v8638, %v8746
        %v9192 = vmul.f32 %v8639, %v8750
        %v9193 = vmul.f32 %v8640, %v8754
        %v9194 = vmul.f32 %v8641, %v8758
        %v9195 = vmul.f32 %v8642, %v8762
        %v9196 = vmul.f32 %v8643, %v8766
        %v9197 = vmul.f32 %v8644, %v8770
        %v9198 = vmul.f32 %v8645, %v8774
        %v9199 = vmul.f32 %v8646, %v8746
        %v9200 = vmul.f32 %v8647, %v8750
        %v9201 = vmul.f32 %v8648, %v8754
        %v9202 = vmul.f32 %v8649, %v8758
        %v9203 = vmul.f32 %v8650, %v8762
        %v9204 = vmul.f32 %v8651, %v8766
        %v9205 = vmul.f32 %v8652, %v8770
        %v9206 = vmul.f32 %v8653, %v8774
        %v9207 = vmul.f32 %v8654, %v8746
        %v9208 = vmul.f32 %v8655, %v8750
        %v9209 = vmul.f32 %v8656, %v8754
        %v9210 = vmul.f32 %v8657, %v8758
        %v9211 = vmul.f32 %v8658, %v8762
        %v9212 = vmul.f32 %v8659, %v8766
        %v9213 = vmul.f32 %v8660, %v8770
        %v9214 = vmul.f32 %v8661, %v8774
        %v9215 = vmul.f32 %v8662, %v8746
        %v9216 = vmul.f32 %v8663, %v8750
        %v9217 = vmul.f32 %v8664, %v8754
        %v9218 = vmul.f32 %v8665, %v8758
        %v9219 = vmul.f32 %v8666, %v8762
        %v9220 = vmul.f32 %v8667, %v8766
        %v9221 = vmul.f32 %v8668, %v8770
        %v9222 = vmul.f32 %v8669, %v8774
        %v9223 = vmul.f32 %v8670, %v8746
        %v9224 = vmul.f32 %v8671, %v8750
        %v9225 = vmul.f32 %v8672, %v8754
        %v9226 = vmul.f32 %v8673, %v8758
        %v9227 = vmul.f32 %v8674, %v8762
        %v9228 = vmul.f32 %v8675, %v8766
        %v9229 = vmul.f32 %v8676, %v8770
        %v9230 = vmul.f32 %v8677, %v8774
        %v9231 = vmul.f32 %v8678, %v8746
        %v9232 = vmul.f32 %v8679, %v8750
        %v9233 = vmul.f32 %v8680, %v8754
        %v9234 = vmul.f32 %v8681, %v8758
        %v9235 = vmul.f32 %v8682, %v8762
        %v9236 = vmul.f32 %v8683, %v8766
        %v9237 = vmul.f32 %v8684, %v8770
        %v9238 = vmul.f32 %v8685, %v8774
        %v9239 = vmul.f32 %v8686, %v8746
        %v9240 = vmul.f32 %v8687, %v8750
        %v9241 = vmul.f32 %v8688, %v8754
        %v9242 = vmul.f32 %v8689, %v8758
        %v9243 = vmul.f32 %v8690, %v8762
        %v9244 = vmul.f32 %v8691, %v8766
        %v9245 = vmul.f32 %v8692, %v8770
        %v9246 = vmul.f32 %v8693, %v8774
        %v9247 = vmul.f32 %v8694, %v8746
        %v9248 = vmul.f32 %v8695, %v8750
        %v9249 = vmul.f32 %v8696, %v8754
        %v9250 = vmul.f32 %v8697, %v8758
        %v9251 = vmul.f32 %v8698, %v8762
        %v9252 = vmul.f32 %v8699, %v8766
        %v9253 = vmul.f32 %v8700, %v8770
        %v9254 = vmul.f32 %v8701, %v8774
        %v9255 = vmul.f32 %v8702, %v8746
        %v9256 = vmul.f32 %v8703, %v8750
        %v9257 = vmul.f32 %v8704, %v8754
        %v9258 = vmul.f32 %v8705, %v8758
        %v9259 = vmul.f32 %v8706, %v8762
        %v9260 = vmul.f32 %v8707, %v8766
        %v9261 = vmul.f32 %v8708, %v8770
        %v9262 = vmul.f32 %v8709, %v8774
        %v9263 = vmul.f32 %v8710, %v8746
        %v9264 = vmul.f32 %v8711, %v8750
        %v9265 = vmul.f32 %v8712, %v8754
        %v9266 = vmul.f32 %v8713, %v8758
        %v9267 = vmul.f32 %v8714, %v8762
        %v9268 = vmul.f32 %v8715, %v8766
        %v9269 = vmul.f32 %v8716, %v8770
        %v9270 = vmul.f32 %v8717, %v8774
        %v9271 = vmul.f32 %v8718, %v8746
        %v9272 = vmul.f32 %v8719, %v8750
        %v9273 = vmul.f32 %v8720, %v8754
        %v9274 = vmul.f32 %v8721, %v8758
        %v9275 = vmul.f32 %v8722, %v8762
        %v9276 = vmul.f32 %v8723, %v8766
        %v9277 = vmul.f32 %v8724, %v8770
        %v9278 = vmul.f32 %v8725, %v8774
        %v9279 = vmul.f32 %v8726, %v8746
        %v9280 = vmul.f32 %v8727, %v8750
        %v9281 = vmul.f32 %v8728, %v8754
        %v9282 = vmul.f32 %v8729, %v8758
        %v9283 = vmul.f32 %v8730, %v8762
        %v9284 = vmul.f32 %v8731, %v8766
        %v9285 = vmul.f32 %v8732, %v8770
        %v9286 = vmul.f32 %v8733, %v8774
        %v9287 = vmul.f32 %v8734, %v8746
        %v9288 = vmul.f32 %v8735, %v8750
        %v9289 = vmul.f32 %v8736, %v8754
        %v9290 = vmul.f32 %v8737, %v8758
        %v9291 = vmul.f32 %v8738, %v8762
        %v9292 = vmul.f32 %v8739, %v8766
        %v9293 = vmul.f32 %v8740, %v8770
        %v9294 = vmul.f32 %v8741, %v8774
        %v9296 = vlaneseq
        %v9297 = vshrl.u32 %v9296, 7
        %v9298 = vsub.s32 0, %v9297
        %v9299 = vrot.slane %v5669, %v9298
        %v9300 = vlaneseq
        %v9301 = vshrl.u32 %v9300, 7
        %v9302 = vsub.s32 1, %v9301
        %v9303 = vrot.slane %v5669, %v9302
        %v9304 = vlaneseq
        %v9305 = vshrl.u32 %v9304, 7
        %v9306 = vsub.s32 2, %v9305
        %v9307 = vrot.slane %v5669, %v9306
        %v9308 = vlaneseq
        %v9309 = vshrl.u32 %v9308, 7
        %v9310 = vsub.s32 3, %v9309
        %v9311 = vrot.slane %v5669, %v9310
        %v9312 = vlaneseq
        %v9313 = vshrl.u32 %v9312, 7
        %v9314 = vsub.s32 4, %v9313
        %v9315 = vrot.slane %v5669, %v9314
        %v9316 = vlaneseq
        %v9317 = vshrl.u32 %v9316, 7
        %v9318 = vsub.s32 5, %v9317
        %v9319 = vrot.slane %v5669, %v9318
        %v9320 = vlaneseq
        %v9321 = vshrl.u32 %v9320, 7
        %v9322 = vsub.s32 6, %v9321
        %v9323 = vrot.slane %v5669, %v9322
        %v9324 = vlaneseq
        %v9325 = vshrl.u32 %v9324, 7
        %v9326 = vsub.s32 7, %v9325
        %v9327 = vrot.slane %v5669, %v9326
        %v9336 = vadd.f32 %v8783, %v9299
        %v9337 = vadd.f32 %v8784, %v9303
        %v9338 = vadd.f32 %v8785, %v9307
        %v9339 = vadd.f32 %v8786, %v9311
        %v9340 = vadd.f32 %v8787, %v9315
        %v9341 = vadd.f32 %v8788, %v9319
        %v9342 = vadd.f32 %v8789, %v9323
        %v9343 = vadd.f32 %v8790, %v9327
        %v9344 = vadd.f32 %v8791, %v9299
        %v9345 = vadd.f32 %v8792, %v9303
        %v9346 = vadd.f32 %v8793, %v9307
        %v9347 = vadd.f32 %v8794, %v9311
        %v9348 = vadd.f32 %v8795, %v9315
        %v9349 = vadd.f32 %v8796, %v9319
        %v9350 = vadd.f32 %v8797, %v9323
        %v9351 = vadd.f32 %v8798, %v9327
        %v9352 = vadd.f32 %v8799, %v9299
        %v9353 = vadd.f32 %v8800, %v9303
        %v9354 = vadd.f32 %v8801, %v9307
        %v9355 = vadd.f32 %v8802, %v9311
        %v9356 = vadd.f32 %v8803, %v9315
        %v9357 = vadd.f32 %v8804, %v9319
        %v9358 = vadd.f32 %v8805, %v9323
        %v9359 = vadd.f32 %v8806, %v9327
        %v9360 = vadd.f32 %v8807, %v9299
        %v9361 = vadd.f32 %v8808, %v9303
        %v9362 = vadd.f32 %v8809, %v9307
        %v9363 = vadd.f32 %v8810, %v9311
        %v9364 = vadd.f32 %v8811, %v9315
        %v9365 = vadd.f32 %v8812, %v9319
        %v9366 = vadd.f32 %v8813, %v9323
        %v9367 = vadd.f32 %v8814, %v9327
        %v9368 = vadd.f32 %v8815, %v9299
        %v9369 = vadd.f32 %v8816, %v9303
        %v9370 = vadd.f32 %v8817, %v9307
        %v9371 = vadd.f32 %v8818, %v9311
        %v9372 = vadd.f32 %v8819, %v9315
        %v9373 = vadd.f32 %v8820, %v9319
        %v9374 = vadd.f32 %v8821, %v9323
        %v9375 = vadd.f32 %v8822, %v9327
        %v9376 = vadd.f32 %v8823, %v9299
        %v9377 = vadd.f32 %v8824, %v9303
        %v9378 = vadd.f32 %v8825, %v9307
        %v9379 = vadd.f32 %v8826, %v9311
        %v9380 = vadd.f32 %v8827, %v9315
        %v9381 = vadd.f32 %v8828, %v9319
        %v9382 = vadd.f32 %v8829, %v9323
        %v9383 = vadd.f32 %v8830, %v9327
        %v9384 = vadd.f32 %v8831, %v9299
        %v9385 = vadd.f32 %v8832, %v9303
        %v9386 = vadd.f32 %v8833, %v9307
        %v9387 = vadd.f32 %v8834, %v9311
        %v9388 = vadd.f32 %v8835, %v9315
        %v9389 = vadd.f32 %v8836, %v9319
        %v9390 = vadd.f32 %v8837, %v9323
        %v9391 = vadd.f32 %v8838, %v9327
        %v9392 = vadd.f32 %v8839, %v9299
        %v9393 = vadd.f32 %v8840, %v9303
        %v9394 = vadd.f32 %v8841, %v9307
        %v9395 = vadd.f32 %v8842, %v9311
        %v9396 = vadd.f32 %v8843, %v9315
        %v9397 = vadd.f32 %v8844, %v9319
        %v9398 = vadd.f32 %v8845, %v9323
        %v9399 = vadd.f32 %v8846, %v9327
        %v9400 = vadd.f32 %v8847, %v9299
        %v9401 = vadd.f32 %v8848, %v9303
        %v9402 = vadd.f32 %v8849, %v9307
        %v9403 = vadd.f32 %v8850, %v9311
        %v9404 = vadd.f32 %v8851, %v9315
        %v9405 = vadd.f32 %v8852, %v9319
        %v9406 = vadd.f32 %v8853, %v9323
        %v9407 = vadd.f32 %v8854, %v9327
        %v9408 = vadd.f32 %v8855, %v9299
        %v9409 = vadd.f32 %v8856, %v9303
        %v9410 = vadd.f32 %v8857, %v9307
        %v9411 = vadd.f32 %v8858, %v9311
        %v9412 = vadd.f32 %v8859, %v9315
        %v9413 = vadd.f32 %v8860, %v9319
        %v9414 = vadd.f32 %v8861, %v9323
        %v9415 = vadd.f32 %v8862, %v9327
        %v9416 = vadd.f32 %v8863, %v9299
        %v9417 = vadd.f32 %v8864, %v9303
        %v9418 = vadd.f32 %v8865, %v9307
        %v9419 = vadd.f32 %v8866, %v9311
        %v9420 = vadd.f32 %v8867, %v9315
        %v9421 = vadd.f32 %v8868, %v9319
        %v9422 = vadd.f32 %v8869, %v9323
        %v9423 = vadd.f32 %v8870, %v9327
        %v9424 = vadd.f32 %v8871, %v9299
        %v9425 = vadd.f32 %v8872, %v9303
        %v9426 = vadd.f32 %v8873, %v9307
        %v9427 = vadd.f32 %v8874, %v9311
        %v9428 = vadd.f32 %v8875, %v9315
        %v9429 = vadd.f32 %v8876, %v9319
        %v9430 = vadd.f32 %v8877, %v9323
        %v9431 = vadd.f32 %v8878, %v9327
        %v9432 = vadd.f32 %v8879, %v9299
        %v9433 = vadd.f32 %v8880, %v9303
        %v9434 = vadd.f32 %v8881, %v9307
        %v9435 = vadd.f32 %v8882, %v9311
        %v9436 = vadd.f32 %v8883, %v9315
        %v9437 = vadd.f32 %v8884, %v9319
        %v9438 = vadd.f32 %v8885, %v9323
        %v9439 = vadd.f32 %v8886, %v9327
        %v9440 = vadd.f32 %v8887, %v9299
        %v9441 = vadd.f32 %v8888, %v9303
        %v9442 = vadd.f32 %v8889, %v9307
        %v9443 = vadd.f32 %v8890, %v9311
        %v9444 = vadd.f32 %v8891, %v9315
        %v9445 = vadd.f32 %v8892, %v9319
        %v9446 = vadd.f32 %v8893, %v9323
        %v9447 = vadd.f32 %v8894, %v9327
        %v9448 = vadd.f32 %v8895, %v9299
        %v9449 = vadd.f32 %v8896, %v9303
        %v9450 = vadd.f32 %v8897, %v9307
        %v9451 = vadd.f32 %v8898, %v9311
        %v9452 = vadd.f32 %v8899, %v9315
        %v9453 = vadd.f32 %v8900, %v9319
        %v9454 = vadd.f32 %v8901, %v9323
        %v9455 = vadd.f32 %v8902, %v9327
        %v9456 = vadd.f32 %v8903, %v9299
        %v9457 = vadd.f32 %v8904, %v9303
        %v9458 = vadd.f32 %v8905, %v9307
        %v9459 = vadd.f32 %v8906, %v9311
        %v9460 = vadd.f32 %v8907, %v9315
        %v9461 = vadd.f32 %v8908, %v9319
        %v9462 = vadd.f32 %v8909, %v9323
        %v9463 = vadd.f32 %v8910, %v9327
        %v9464 = vadd.f32 %v8911, %v9299
        %v9465 = vadd.f32 %v8912, %v9303
        %v9466 = vadd.f32 %v8913, %v9307
        %v9467 = vadd.f32 %v8914, %v9311
        %v9468 = vadd.f32 %v8915, %v9315
        %v9469 = vadd.f32 %v8916, %v9319
        %v9470 = vadd.f32 %v8917, %v9323
        %v9471 = vadd.f32 %v8918, %v9327
        %v9472 = vadd.f32 %v8919, %v9299
        %v9473 = vadd.f32 %v8920, %v9303
        %v9474 = vadd.f32 %v8921, %v9307
        %v9475 = vadd.f32 %v8922, %v9311
        %v9476 = vadd.f32 %v8923, %v9315
        %v9477 = vadd.f32 %v8924, %v9319
        %v9478 = vadd.f32 %v8925, %v9323
        %v9479 = vadd.f32 %v8926, %v9327
        %v9480 = vadd.f32 %v8927, %v9299
        %v9481 = vadd.f32 %v8928, %v9303
        %v9482 = vadd.f32 %v8929, %v9307
        %v9483 = vadd.f32 %v8930, %v9311
        %v9484 = vadd.f32 %v8931, %v9315
        %v9485 = vadd.f32 %v8932, %v9319
        %v9486 = vadd.f32 %v8933, %v9323
        %v9487 = vadd.f32 %v8934, %v9327
        %v9488 = vadd.f32 %v8935, %v9299
        %v9489 = vadd.f32 %v8936, %v9303
        %v9490 = vadd.f32 %v8937, %v9307
        %v9491 = vadd.f32 %v8938, %v9311
        %v9492 = vadd.f32 %v8939, %v9315
        %v9493 = vadd.f32 %v8940, %v9319
        %v9494 = vadd.f32 %v8941, %v9323
        %v9495 = vadd.f32 %v8942, %v9327
        %v9496 = vadd.f32 %v8943, %v9299
        %v9497 = vadd.f32 %v8944, %v9303
        %v9498 = vadd.f32 %v8945, %v9307
        %v9499 = vadd.f32 %v8946, %v9311
        %v9500 = vadd.f32 %v8947, %v9315
        %v9501 = vadd.f32 %v8948, %v9319
        %v9502 = vadd.f32 %v8949, %v9323
        %v9503 = vadd.f32 %v8950, %v9327
        %v9504 = vadd.f32 %v8951, %v9299
        %v9505 = vadd.f32 %v8952, %v9303
        %v9506 = vadd.f32 %v8953, %v9307
        %v9507 = vadd.f32 %v8954, %v9311
        %v9508 = vadd.f32 %v8955, %v9315
        %v9509 = vadd.f32 %v8956, %v9319
        %v9510 = vadd.f32 %v8957, %v9323
        %v9511 = vadd.f32 %v8958, %v9327
        %v9512 = vadd.f32 %v8959, %v9299
        %v9513 = vadd.f32 %v8960, %v9303
        %v9514 = vadd.f32 %v8961, %v9307
        %v9515 = vadd.f32 %v8962, %v9311
        %v9516 = vadd.f32 %v8963, %v9315
        %v9517 = vadd.f32 %v8964, %v9319
        %v9518 = vadd.f32 %v8965, %v9323
        %v9519 = vadd.f32 %v8966, %v9327
        %v9520 = vadd.f32 %v8967, %v9299
        %v9521 = vadd.f32 %v8968, %v9303
        %v9522 = vadd.f32 %v8969, %v9307
        %v9523 = vadd.f32 %v8970, %v9311
        %v9524 = vadd.f32 %v8971, %v9315
        %v9525 = vadd.f32 %v8972, %v9319
        %v9526 = vadd.f32 %v8973, %v9323
        %v9527 = vadd.f32 %v8974, %v9327
        %v9528 = vadd.f32 %v8975, %v9299
        %v9529 = vadd.f32 %v8976, %v9303
        %v9530 = vadd.f32 %v8977, %v9307
        %v9531 = vadd.f32 %v8978, %v9311
        %v9532 = vadd.f32 %v8979, %v9315
        %v9533 = vadd.f32 %v8980, %v9319
        %v9534 = vadd.f32 %v8981, %v9323
        %v9535 = vadd.f32 %v8982, %v9327
        %v9536 = vadd.f32 %v8983, %v9299
        %v9537 = vadd.f32 %v8984, %v9303
        %v9538 = vadd.f32 %v8985, %v9307
        %v9539 = vadd.f32 %v8986, %v9311
        %v9540 = vadd.f32 %v8987, %v9315
        %v9541 = vadd.f32 %v8988, %v9319
        %v9542 = vadd.f32 %v8989, %v9323
        %v9543 = vadd.f32 %v8990, %v9327
        %v9544 = vadd.f32 %v8991, %v9299
        %v9545 = vadd.f32 %v8992, %v9303
        %v9546 = vadd.f32 %v8993, %v9307
        %v9547 = vadd.f32 %v8994, %v9311
        %v9548 = vadd.f32 %v8995, %v9315
        %v9549 = vadd.f32 %v8996, %v9319
        %v9550 = vadd.f32 %v8997, %v9323
        %v9551 = vadd.f32 %v8998, %v9327
        %v9552 = vadd.f32 %v8999, %v9299
        %v9553 = vadd.f32 %v9000, %v9303
        %v9554 = vadd.f32 %v9001, %v9307
        %v9555 = vadd.f32 %v9002, %v9311
        %v9556 = vadd.f32 %v9003, %v9315
        %v9557 = vadd.f32 %v9004, %v9319
        %v9558 = vadd.f32 %v9005, %v9323
        %v9559 = vadd.f32 %v9006, %v9327
        %v9560 = vadd.f32 %v9007, %v9299
        %v9561 = vadd.f32 %v9008, %v9303
        %v9562 = vadd.f32 %v9009, %v9307
        %v9563 = vadd.f32 %v9010, %v9311
        %v9564 = vadd.f32 %v9011, %v9315
        %v9565 = vadd.f32 %v9012, %v9319
        %v9566 = vadd.f32 %v9013, %v9323
        %v9567 = vadd.f32 %v9014, %v9327
        %v9568 = vadd.f32 %v9015, %v9299
        %v9569 = vadd.f32 %v9016, %v9303
        %v9570 = vadd.f32 %v9017, %v9307
        %v9571 = vadd.f32 %v9018, %v9311
        %v9572 = vadd.f32 %v9019, %v9315
        %v9573 = vadd.f32 %v9020, %v9319
        %v9574 = vadd.f32 %v9021, %v9323
        %v9575 = vadd.f32 %v9022, %v9327
        %v9576 = vadd.f32 %v9023, %v9299
        %v9577 = vadd.f32 %v9024, %v9303
        %v9578 = vadd.f32 %v9025, %v9307
        %v9579 = vadd.f32 %v9026, %v9311
        %v9580 = vadd.f32 %v9027, %v9315
        %v9581 = vadd.f32 %v9028, %v9319
        %v9582 = vadd.f32 %v9029, %v9323
        %v9583 = vadd.f32 %v9030, %v9327
        %v9584 = vadd.f32 %v9031, %v9299
        %v9585 = vadd.f32 %v9032, %v9303
        %v9586 = vadd.f32 %v9033, %v9307
        %v9587 = vadd.f32 %v9034, %v9311
        %v9588 = vadd.f32 %v9035, %v9315
        %v9589 = vadd.f32 %v9036, %v9319
        %v9590 = vadd.f32 %v9037, %v9323
        %v9591 = vadd.f32 %v9038, %v9327
        %v9592 = vadd.f32 %v9039, %v9299
        %v9593 = vadd.f32 %v9040, %v9303
        %v9594 = vadd.f32 %v9041, %v9307
        %v9595 = vadd.f32 %v9042, %v9311
        %v9596 = vadd.f32 %v9043, %v9315
        %v9597 = vadd.f32 %v9044, %v9319
        %v9598 = vadd.f32 %v9045, %v9323
        %v9599 = vadd.f32 %v9046, %v9327
        %v9600 = vadd.f32 %v9047, %v9299
        %v9601 = vadd.f32 %v9048, %v9303
        %v9602 = vadd.f32 %v9049, %v9307
        %v9603 = vadd.f32 %v9050, %v9311
        %v9604 = vadd.f32 %v9051, %v9315
        %v9605 = vadd.f32 %v9052, %v9319
        %v9606 = vadd.f32 %v9053, %v9323
        %v9607 = vadd.f32 %v9054, %v9327
        %v9608 = vadd.f32 %v9055, %v9299
        %v9609 = vadd.f32 %v9056, %v9303
        %v9610 = vadd.f32 %v9057, %v9307
        %v9611 = vadd.f32 %v9058, %v9311
        %v9612 = vadd.f32 %v9059, %v9315
        %v9613 = vadd.f32 %v9060, %v9319
        %v9614 = vadd.f32 %v9061, %v9323
        %v9615 = vadd.f32 %v9062, %v9327
        %v9616 = vadd.f32 %v9063, %v9299
        %v9617 = vadd.f32 %v9064, %v9303
        %v9618 = vadd.f32 %v9065, %v9307
        %v9619 = vadd.f32 %v9066, %v9311
        %v9620 = vadd.f32 %v9067, %v9315
        %v9621 = vadd.f32 %v9068, %v9319
        %v9622 = vadd.f32 %v9069, %v9323
        %v9623 = vadd.f32 %v9070, %v9327
        %v9624 = vadd.f32 %v9071, %v9299
        %v9625 = vadd.f32 %v9072, %v9303
        %v9626 = vadd.f32 %v9073, %v9307
        %v9627 = vadd.f32 %v9074, %v9311
        %v9628 = vadd.f32 %v9075, %v9315
        %v9629 = vadd.f32 %v9076, %v9319
        %v9630 = vadd.f32 %v9077, %v9323
        %v9631 = vadd.f32 %v9078, %v9327
        %v9632 = vadd.f32 %v9079, %v9299
        %v9633 = vadd.f32 %v9080, %v9303
        %v9634 = vadd.f32 %v9081, %v9307
        %v9635 = vadd.f32 %v9082, %v9311
        %v9636 = vadd.f32 %v9083, %v9315
        %v9637 = vadd.f32 %v9084, %v9319
        %v9638 = vadd.f32 %v9085, %v9323
        %v9639 = vadd.f32 %v9086, %v9327
        %v9640 = vadd.f32 %v9087, %v9299
        %v9641 = vadd.f32 %v9088, %v9303
        %v9642 = vadd.f32 %v9089, %v9307
        %v9643 = vadd.f32 %v9090, %v9311
        %v9644 = vadd.f32 %v9091, %v9315
        %v9645 = vadd.f32 %v9092, %v9319
        %v9646 = vadd.f32 %v9093, %v9323
        %v9647 = vadd.f32 %v9094, %v9327
        %v9648 = vadd.f32 %v9095, %v9299
        %v9649 = vadd.f32 %v9096, %v9303
        %v9650 = vadd.f32 %v9097, %v9307
        %v9651 = vadd.f32 %v9098, %v9311
        %v9652 = vadd.f32 %v9099, %v9315
        %v9653 = vadd.f32 %v9100, %v9319
        %v9654 = vadd.f32 %v9101, %v9323
        %v9655 = vadd.f32 %v9102, %v9327
        %v9656 = vadd.f32 %v9103, %v9299
        %v9657 = vadd.f32 %v9104, %v9303
        %v9658 = vadd.f32 %v9105, %v9307
        %v9659 = vadd.f32 %v9106, %v9311
        %v9660 = vadd.f32 %v9107, %v9315
        %v9661 = vadd.f32 %v9108, %v9319
        %v9662 = vadd.f32 %v9109, %v9323
        %v9663 = vadd.f32 %v9110, %v9327
        %v9664 = vadd.f32 %v9111, %v9299
        %v9665 = vadd.f32 %v9112, %v9303
        %v9666 = vadd.f32 %v9113, %v9307
        %v9667 = vadd.f32 %v9114, %v9311
        %v9668 = vadd.f32 %v9115, %v9315
        %v9669 = vadd.f32 %v9116, %v9319
        %v9670 = vadd.f32 %v9117, %v9323
        %v9671 = vadd.f32 %v9118, %v9327
        %v9672 = vadd.f32 %v9119, %v9299
        %v9673 = vadd.f32 %v9120, %v9303
        %v9674 = vadd.f32 %v9121, %v9307
        %v9675 = vadd.f32 %v9122, %v9311
        %v9676 = vadd.f32 %v9123, %v9315
        %v9677 = vadd.f32 %v9124, %v9319
        %v9678 = vadd.f32 %v9125, %v9323
        %v9679 = vadd.f32 %v9126, %v9327
        %v9680 = vadd.f32 %v9127, %v9299
        %v9681 = vadd.f32 %v9128, %v9303
        %v9682 = vadd.f32 %v9129, %v9307
        %v9683 = vadd.f32 %v9130, %v9311
        %v9684 = vadd.f32 %v9131, %v9315
        %v9685 = vadd.f32 %v9132, %v9319
        %v9686 = vadd.f32 %v9133, %v9323
        %v9687 = vadd.f32 %v9134, %v9327
        %v9688 = vadd.f32 %v9135, %v9299
        %v9689 = vadd.f32 %v9136, %v9303
        %v9690 = vadd.f32 %v9137, %v9307
        %v9691 = vadd.f32 %v9138, %v9311
        %v9692 = vadd.f32 %v9139, %v9315
        %v9693 = vadd.f32 %v9140, %v9319
        %v9694 = vadd.f32 %v9141, %v9323
        %v9695 = vadd.f32 %v9142, %v9327
        %v9696 = vadd.f32 %v9143, %v9299
        %v9697 = vadd.f32 %v9144, %v9303
        %v9698 = vadd.f32 %v9145, %v9307
        %v9699 = vadd.f32 %v9146, %v9311
        %v9700 = vadd.f32 %v9147, %v9315
        %v9701 = vadd.f32 %v9148, %v9319
        %v9702 = vadd.f32 %v9149, %v9323
        %v9703 = vadd.f32 %v9150, %v9327
        %v9704 = vadd.f32 %v9151, %v9299
        %v9705 = vadd.f32 %v9152, %v9303
        %v9706 = vadd.f32 %v9153, %v9307
        %v9707 = vadd.f32 %v9154, %v9311
        %v9708 = vadd.f32 %v9155, %v9315
        %v9709 = vadd.f32 %v9156, %v9319
        %v9710 = vadd.f32 %v9157, %v9323
        %v9711 = vadd.f32 %v9158, %v9327
        %v9712 = vadd.f32 %v9159, %v9299
        %v9713 = vadd.f32 %v9160, %v9303
        %v9714 = vadd.f32 %v9161, %v9307
        %v9715 = vadd.f32 %v9162, %v9311
        %v9716 = vadd.f32 %v9163, %v9315
        %v9717 = vadd.f32 %v9164, %v9319
        %v9718 = vadd.f32 %v9165, %v9323
        %v9719 = vadd.f32 %v9166, %v9327
        %v9720 = vadd.f32 %v9167, %v9299
        %v9721 = vadd.f32 %v9168, %v9303
        %v9722 = vadd.f32 %v9169, %v9307
        %v9723 = vadd.f32 %v9170, %v9311
        %v9724 = vadd.f32 %v9171, %v9315
        %v9725 = vadd.f32 %v9172, %v9319
        %v9726 = vadd.f32 %v9173, %v9323
        %v9727 = vadd.f32 %v9174, %v9327
        %v9728 = vadd.f32 %v9175, %v9299
        %v9729 = vadd.f32 %v9176, %v9303
        %v9730 = vadd.f32 %v9177, %v9307
        %v9731 = vadd.f32 %v9178, %v9311
        %v9732 = vadd.f32 %v9179, %v9315
        %v9733 = vadd.f32 %v9180, %v9319
        %v9734 = vadd.f32 %v9181, %v9323
        %v9735 = vadd.f32 %v9182, %v9327
        %v9736 = vadd.f32 %v9183, %v9299
        %v9737 = vadd.f32 %v9184, %v9303
        %v9738 = vadd.f32 %v9185, %v9307
        %v9739 = vadd.f32 %v9186, %v9311
        %v9740 = vadd.f32 %v9187, %v9315
        %v9741 = vadd.f32 %v9188, %v9319
        %v9742 = vadd.f32 %v9189, %v9323
        %v9743 = vadd.f32 %v9190, %v9327
        %v9744 = vadd.f32 %v9191, %v9299
        %v9745 = vadd.f32 %v9192, %v9303
        %v9746 = vadd.f32 %v9193, %v9307
        %v9747 = vadd.f32 %v9194, %v9311
        %v9748 = vadd.f32 %v9195, %v9315
        %v9749 = vadd.f32 %v9196, %v9319
        %v9750 = vadd.f32 %v9197, %v9323
        %v9751 = vadd.f32 %v9198, %v9327
        %v9752 = vadd.f32 %v9199, %v9299
        %v9753 = vadd.f32 %v9200, %v9303
        %v9754 = vadd.f32 %v9201, %v9307
        %v9755 = vadd.f32 %v9202, %v9311
        %v9756 = vadd.f32 %v9203, %v9315
        %v9757 = vadd.f32 %v9204, %v9319
        %v9758 = vadd.f32 %v9205, %v9323
        %v9759 = vadd.f32 %v9206, %v9327
        %v9760 = vadd.f32 %v9207, %v9299
        %v9761 = vadd.f32 %v9208, %v9303
        %v9762 = vadd.f32 %v9209, %v9307
        %v9763 = vadd.f32 %v9210, %v9311
        %v9764 = vadd.f32 %v9211, %v9315
        %v9765 = vadd.f32 %v9212, %v9319
        %v9766 = vadd.f32 %v9213, %v9323
        %v9767 = vadd.f32 %v9214, %v9327
        %v9768 = vadd.f32 %v9215, %v9299
        %v9769 = vadd.f32 %v9216, %v9303
        %v9770 = vadd.f32 %v9217, %v9307
        %v9771 = vadd.f32 %v9218, %v9311
        %v9772 = vadd.f32 %v9219, %v9315
        %v9773 = vadd.f32 %v9220, %v9319
        %v9774 = vadd.f32 %v9221, %v9323
        %v9775 = vadd.f32 %v9222, %v9327
        %v9776 = vadd.f32 %v9223, %v9299
        %v9777 = vadd.f32 %v9224, %v9303
        %v9778 = vadd.f32 %v9225, %v9307
        %v9779 = vadd.f32 %v9226, %v9311
        %v9780 = vadd.f32 %v9227, %v9315
        %v9781 = vadd.f32 %v9228, %v9319
        %v9782 = vadd.f32 %v9229, %v9323
        %v9783 = vadd.f32 %v9230, %v9327
        %v9784 = vadd.f32 %v9231, %v9299
        %v9785 = vadd.f32 %v9232, %v9303
        %v9786 = vadd.f32 %v9233, %v9307
        %v9787 = vadd.f32 %v9234, %v9311
        %v9788 = vadd.f32 %v9235, %v9315
        %v9789 = vadd.f32 %v9236, %v9319
        %v9790 = vadd.f32 %v9237, %v9323
        %v9791 = vadd.f32 %v9238, %v9327
        %v9792 = vadd.f32 %v9239, %v9299
        %v9793 = vadd.f32 %v9240, %v9303
        %v9794 = vadd.f32 %v9241, %v9307
        %v9795 = vadd.f32 %v9242, %v9311
        %v9796 = vadd.f32 %v9243, %v9315
        %v9797 = vadd.f32 %v9244, %v9319
        %v9798 = vadd.f32 %v9245, %v9323
        %v9799 = vadd.f32 %v9246, %v9327
        %v9800 = vadd.f32 %v9247, %v9299
        %v9801 = vadd.f32 %v9248, %v9303
        %v9802 = vadd.f32 %v9249, %v9307
        %v9803 = vadd.f32 %v9250, %v9311
        %v9804 = vadd.f32 %v9251, %v9315
        %v9805 = vadd.f32 %v9252, %v9319
        %v9806 = vadd.f32 %v9253, %v9323
        %v9807 = vadd.f32 %v9254, %v9327
        %v9808 = vadd.f32 %v9255, %v9299
        %v9809 = vadd.f32 %v9256, %v9303
        %v9810 = vadd.f32 %v9257, %v9307
        %v9811 = vadd.f32 %v9258, %v9311
        %v9812 = vadd.f32 %v9259, %v9315
        %v9813 = vadd.f32 %v9260, %v9319
        %v9814 = vadd.f32 %v9261, %v9323
        %v9815 = vadd.f32 %v9262, %v9327
        %v9816 = vadd.f32 %v9263, %v9299
        %v9817 = vadd.f32 %v9264, %v9303
        %v9818 = vadd.f32 %v9265, %v9307
        %v9819 = vadd.f32 %v9266, %v9311
        %v9820 = vadd.f32 %v9267, %v9315
        %v9821 = vadd.f32 %v9268, %v9319
        %v9822 = vadd.f32 %v9269, %v9323
        %v9823 = vadd.f32 %v9270, %v9327
        %v9824 = vadd.f32 %v9271, %v9299
        %v9825 = vadd.f32 %v9272, %v9303
        %v9826 = vadd.f32 %v9273, %v9307
        %v9827 = vadd.f32 %v9274, %v9311
        %v9828 = vadd.f32 %v9275, %v9315
        %v9829 = vadd.f32 %v9276, %v9319
        %v9830 = vadd.f32 %v9277, %v9323
        %v9831 = vadd.f32 %v9278, %v9327
        %v9832 = vadd.f32 %v9279, %v9299
        %v9833 = vadd.f32 %v9280, %v9303
        %v9834 = vadd.f32 %v9281, %v9307
        %v9835 = vadd.f32 %v9282, %v9311
        %v9836 = vadd.f32 %v9283, %v9315
        %v9837 = vadd.f32 %v9284, %v9319
        %v9838 = vadd.f32 %v9285, %v9323
        %v9839 = vadd.f32 %v9286, %v9327
        %v9840 = vadd.f32 %v9287, %v9299
        %v9841 = vadd.f32 %v9288, %v9303
        %v9842 = vadd.f32 %v9289, %v9307
        %v9843 = vadd.f32 %v9290, %v9311
        %v9844 = vadd.f32 %v9291, %v9315
        %v9845 = vadd.f32 %v9292, %v9319
        %v9846 = vadd.f32 %v9293, %v9323
        %v9847 = vadd.f32 %v9294, %v9327
        %v9848 = vmax.f32 %v9336, 0.0
        %v9849 = vmax.f32 %v9337, 0.0
        %v9850 = vmax.f32 %v9338, 0.0
        %v9851 = vmax.f32 %v9339, 0.0
        %v9852 = vmax.f32 %v9340, 0.0
        %v9853 = vmax.f32 %v9341, 0.0
        %v9854 = vmax.f32 %v9342, 0.0
        %v9855 = vmax.f32 %v9343, 0.0
        %v9856 = vmax.f32 %v9344, 0.0
        %v9857 = vmax.f32 %v9345, 0.0
        %v9858 = vmax.f32 %v9346, 0.0
        %v9859 = vmax.f32 %v9347, 0.0
        %v9860 = vmax.f32 %v9348, 0.0
        %v9861 = vmax.f32 %v9349, 0.0
        %v9862 = vmax.f32 %v9350, 0.0
        %v9863 = vmax.f32 %v9351, 0.0
        %v9864 = vmax.f32 %v9352, 0.0
        %v9865 = vmax.f32 %v9353, 0.0
        %v9866 = vmax.f32 %v9354, 0.0
        %v9867 = vmax.f32 %v9355, 0.0
        %v9868 = vmax.f32 %v9356, 0.0
        %v9869 = vmax.f32 %v9357, 0.0
        %v9870 = vmax.f32 %v9358, 0.0
        %v9871 = vmax.f32 %v9359, 0.0
        %v9872 = vmax.f32 %v9360, 0.0
        %v9873 = vmax.f32 %v9361, 0.0
        %v9874 = vmax.f32 %v9362, 0.0
        %v9875 = vmax.f32 %v9363, 0.0
        %v9876 = vmax.f32 %v9364, 0.0
        %v9877 = vmax.f32 %v9365, 0.0
        %v9878 = vmax.f32 %v9366, 0.0
        %v9879 = vmax.f32 %v9367, 0.0
        %v9880 = vmax.f32 %v9368, 0.0
        %v9881 = vmax.f32 %v9369, 0.0
        %v9882 = vmax.f32 %v9370, 0.0
        %v9883 = vmax.f32 %v9371, 0.0
        %v9884 = vmax.f32 %v9372, 0.0
        %v9885 = vmax.f32 %v9373, 0.0
        %v9886 = vmax.f32 %v9374, 0.0
        %v9887 = vmax.f32 %v9375, 0.0
        %v9888 = vmax.f32 %v9376, 0.0
        %v9889 = vmax.f32 %v9377, 0.0
        %v9890 = vmax.f32 %v9378, 0.0
        %v9891 = vmax.f32 %v9379, 0.0
        %v9892 = vmax.f32 %v9380, 0.0
        %v9893 = vmax.f32 %v9381, 0.0
        %v9894 = vmax.f32 %v9382, 0.0
        %v9895 = vmax.f32 %v9383, 0.0
        %v9896 = vmax.f32 %v9384, 0.0
        %v9897 = vmax.f32 %v9385, 0.0
        %v9898 = vmax.f32 %v9386, 0.0
        %v9899 = vmax.f32 %v9387, 0.0
        %v9900 = vmax.f32 %v9388, 0.0
        %v9901 = vmax.f32 %v9389, 0.0
        %v9902 = vmax.f32 %v9390, 0.0
        %v9903 = vmax.f32 %v9391, 0.0
        %v9904 = vmax.f32 %v9392, 0.0
        %v9905 = vmax.f32 %v9393, 0.0
        %v9906 = vmax.f32 %v9394, 0.0
        %v9907 = vmax.f32 %v9395, 0.0
        %v9908 = vmax.f32 %v9396, 0.0
        %v9909 = vmax.f32 %v9397, 0.0
        %v9910 = vmax.f32 %v9398, 0.0
        %v9911 = vmax.f32 %v9399, 0.0
        %v9912 = vmax.f32 %v9400, 0.0
        %v9913 = vmax.f32 %v9401, 0.0
        %v9914 = vmax.f32 %v9402, 0.0
        %v9915 = vmax.f32 %v9403, 0.0
        %v9916 = vmax.f32 %v9404, 0.0
        %v9917 = vmax.f32 %v9405, 0.0
        %v9918 = vmax.f32 %v9406, 0.0
        %v9919 = vmax.f32 %v9407, 0.0
        %v9920 = vmax.f32 %v9408, 0.0
        %v9921 = vmax.f32 %v9409, 0.0
        %v9922 = vmax.f32 %v9410, 0.0
        %v9923 = vmax.f32 %v9411, 0.0
        %v9924 = vmax.f32 %v9412, 0.0
        %v9925 = vmax.f32 %v9413, 0.0
        %v9926 = vmax.f32 %v9414, 0.0
        %v9927 = vmax.f32 %v9415, 0.0
        %v9928 = vmax.f32 %v9416, 0.0
        %v9929 = vmax.f32 %v9417, 0.0
        %v9930 = vmax.f32 %v9418, 0.0
        %v9931 = vmax.f32 %v9419, 0.0
        %v9932 = vmax.f32 %v9420, 0.0
        %v9933 = vmax.f32 %v9421, 0.0
        %v9934 = vmax.f32 %v9422, 0.0
        %v9935 = vmax.f32 %v9423, 0.0
        %v9936 = vmax.f32 %v9424, 0.0
        %v9937 = vmax.f32 %v9425, 0.0
        %v9938 = vmax.f32 %v9426, 0.0
        %v9939 = vmax.f32 %v9427, 0.0
        %v9940 = vmax.f32 %v9428, 0.0
        %v9941 = vmax.f32 %v9429, 0.0
        %v9942 = vmax.f32 %v9430, 0.0
        %v9943 = vmax.f32 %v9431, 0.0
        %v9944 = vmax.f32 %v9432, 0.0
        %v9945 = vmax.f32 %v9433, 0.0
        %v9946 = vmax.f32 %v9434, 0.0
        %v9947 = vmax.f32 %v9435, 0.0
        %v9948 = vmax.f32 %v9436, 0.0
        %v9949 = vmax.f32 %v9437, 0.0
        %v9950 = vmax.f32 %v9438, 0.0
        %v9951 = vmax.f32 %v9439, 0.0
        %v9952 = vmax.f32 %v9440, 0.0
        %v9953 = vmax.f32 %v9441, 0.0
        %v9954 = vmax.f32 %v9442, 0.0
        %v9955 = vmax.f32 %v9443, 0.0
        %v9956 = vmax.f32 %v9444, 0.0
        %v9957 = vmax.f32 %v9445, 0.0
        %v9958 = vmax.f32 %v9446, 0.0
        %v9959 = vmax.f32 %v9447, 0.0
        %v9960 = vmax.f32 %v9448, 0.0
        %v9961 = vmax.f32 %v9449, 0.0
        %v9962 = vmax.f32 %v9450, 0.0
        %v9963 = vmax.f32 %v9451, 0.0
        %v9964 = vmax.f32 %v9452, 0.0
        %v9965 = vmax.f32 %v9453, 0.0
        %v9966 = vmax.f32 %v9454, 0.0
        %v9967 = vmax.f32 %v9455, 0.0
        %v9968 = vmax.f32 %v9456, 0.0
        %v9969 = vmax.f32 %v9457, 0.0
        %v9970 = vmax.f32 %v9458, 0.0
        %v9971 = vmax.f32 %v9459, 0.0
        %v9972 = vmax.f32 %v9460, 0.0
        %v9973 = vmax.f32 %v9461, 0.0
        %v9974 = vmax.f32 %v9462, 0.0
        %v9975 = vmax.f32 %v9463, 0.0
        %v9976 = vmax.f32 %v9464, 0.0
        %v9977 = vmax.f32 %v9465, 0.0
        %v9978 = vmax.f32 %v9466, 0.0
        %v9979 = vmax.f32 %v9467, 0.0
        %v9980 = vmax.f32 %v9468, 0.0
        %v9981 = vmax.f32 %v9469, 0.0
        %v9982 = vmax.f32 %v9470, 0.0
        %v9983 = vmax.f32 %v9471, 0.0
        %v9984 = vmax.f32 %v9472, 0.0
        %v9985 = vmax.f32 %v9473, 0.0
        %v9986 = vmax.f32 %v9474, 0.0
        %v9987 = vmax.f32 %v9475, 0.0
        %v9988 = vmax.f32 %v9476, 0.0
        %v9989 = vmax.f32 %v9477, 0.0
        %v9990 = vmax.f32 %v9478, 0.0
        %v9991 = vmax.f32 %v9479, 0.0
        %v9992 = vmax.f32 %v9480, 0.0
        %v9993 = vmax.f32 %v9481, 0.0
        %v9994 = vmax.f32 %v9482, 0.0
        %v9995 = vmax.f32 %v9483, 0.0
        %v9996 = vmax.f32 %v9484, 0.0
        %v9997 = vmax.f32 %v9485, 0.0
        %v9998 = vmax.f32 %v9486, 0.0
        %v9999 = vmax.f32 %v9487, 0.0
        %v10000 = vmax.f32 %v9488, 0.0
        %v10001 = vmax.f32 %v9489, 0.0
        %v10002 = vmax.f32 %v9490, 0.0
        %v10003 = vmax.f32 %v9491, 0.0
        %v10004 = vmax.f32 %v9492, 0.0
        %v10005 = vmax.f32 %v9493, 0.0
        %v10006 = vmax.f32 %v9494, 0.0
        %v10007 = vmax.f32 %v9495, 0.0
        %v10008 = vmax.f32 %v9496, 0.0
        %v10009 = vmax.f32 %v9497, 0.0
        %v10010 = vmax.f32 %v9498, 0.0
        %v10011 = vmax.f32 %v9499, 0.0
        %v10012 = vmax.f32 %v9500, 0.0
        %v10013 = vmax.f32 %v9501, 0.0
        %v10014 = vmax.f32 %v9502, 0.0
        %v10015 = vmax.f32 %v9503, 0.0
        %v10016 = vmax.f32 %v9504, 0.0
        %v10017 = vmax.f32 %v9505, 0.0
        %v10018 = vmax.f32 %v9506, 0.0
        %v10019 = vmax.f32 %v9507, 0.0
        %v10020 = vmax.f32 %v9508, 0.0
        %v10021 = vmax.f32 %v9509, 0.0
        %v10022 = vmax.f32 %v9510, 0.0
        %v10023 = vmax.f32 %v9511, 0.0
        %v10024 = vmax.f32 %v9512, 0.0
        %v10025 = vmax.f32 %v9513, 0.0
        %v10026 = vmax.f32 %v9514, 0.0
        %v10027 = vmax.f32 %v9515, 0.0
        %v10028 = vmax.f32 %v9516, 0.0
        %v10029 = vmax.f32 %v9517, 0.0
        %v10030 = vmax.f32 %v9518, 0.0
        %v10031 = vmax.f32 %v9519, 0.0
        %v10032 = vmax.f32 %v9520, 0.0
        %v10033 = vmax.f32 %v9521, 0.0
        %v10034 = vmax.f32 %v9522, 0.0
        %v10035 = vmax.f32 %v9523, 0.0
        %v10036 = vmax.f32 %v9524, 0.0
        %v10037 = vmax.f32 %v9525, 0.0
        %v10038 = vmax.f32 %v9526, 0.0
        %v10039 = vmax.f32 %v9527, 0.0
        %v10040 = vmax.f32 %v9528, 0.0
        %v10041 = vmax.f32 %v9529, 0.0
        %v10042 = vmax.f32 %v9530, 0.0
        %v10043 = vmax.f32 %v9531, 0.0
        %v10044 = vmax.f32 %v9532, 0.0
        %v10045 = vmax.f32 %v9533, 0.0
        %v10046 = vmax.f32 %v9534, 0.0
        %v10047 = vmax.f32 %v9535, 0.0
        %v10048 = vmax.f32 %v9536, 0.0
        %v10049 = vmax.f32 %v9537, 0.0
        %v10050 = vmax.f32 %v9538, 0.0
        %v10051 = vmax.f32 %v9539, 0.0
        %v10052 = vmax.f32 %v9540, 0.0
        %v10053 = vmax.f32 %v9541, 0.0
        %v10054 = vmax.f32 %v9542, 0.0
        %v10055 = vmax.f32 %v9543, 0.0
        %v10056 = vmax.f32 %v9544, 0.0
        %v10057 = vmax.f32 %v9545, 0.0
        %v10058 = vmax.f32 %v9546, 0.0
        %v10059 = vmax.f32 %v9547, 0.0
        %v10060 = vmax.f32 %v9548, 0.0
        %v10061 = vmax.f32 %v9549, 0.0
        %v10062 = vmax.f32 %v9550, 0.0
        %v10063 = vmax.f32 %v9551, 0.0
        %v10064 = vmax.f32 %v9552, 0.0
        %v10065 = vmax.f32 %v9553, 0.0
        %v10066 = vmax.f32 %v9554, 0.0
        %v10067 = vmax.f32 %v9555, 0.0
        %v10068 = vmax.f32 %v9556, 0.0
        %v10069 = vmax.f32 %v9557, 0.0
        %v10070 = vmax.f32 %v9558, 0.0
        %v10071 = vmax.f32 %v9559, 0.0
        %v10072 = vmax.f32 %v9560, 0.0
        %v10073 = vmax.f32 %v9561, 0.0
        %v10074 = vmax.f32 %v9562, 0.0
        %v10075 = vmax.f32 %v9563, 0.0
        %v10076 = vmax.f32 %v9564, 0.0
        %v10077 = vmax.f32 %v9565, 0.0
        %v10078 = vmax.f32 %v9566, 0.0
        %v10079 = vmax.f32 %v9567, 0.0
        %v10080 = vmax.f32 %v9568, 0.0
        %v10081 = vmax.f32 %v9569, 0.0
        %v10082 = vmax.f32 %v9570, 0.0
        %v10083 = vmax.f32 %v9571, 0.0
        %v10084 = vmax.f32 %v9572, 0.0
        %v10085 = vmax.f32 %v9573, 0.0
        %v10086 = vmax.f32 %v9574, 0.0
        %v10087 = vmax.f32 %v9575, 0.0
        %v10088 = vmax.f32 %v9576, 0.0
        %v10089 = vmax.f32 %v9577, 0.0
        %v10090 = vmax.f32 %v9578, 0.0
        %v10091 = vmax.f32 %v9579, 0.0
        %v10092 = vmax.f32 %v9580, 0.0
        %v10093 = vmax.f32 %v9581, 0.0
        %v10094 = vmax.f32 %v9582, 0.0
        %v10095 = vmax.f32 %v9583, 0.0
        %v10096 = vmax.f32 %v9584, 0.0
        %v10097 = vmax.f32 %v9585, 0.0
        %v10098 = vmax.f32 %v9586, 0.0
        %v10099 = vmax.f32 %v9587, 0.0
        %v10100 = vmax.f32 %v9588, 0.0
        %v10101 = vmax.f32 %v9589, 0.0
        %v10102 = vmax.f32 %v9590, 0.0
        %v10103 = vmax.f32 %v9591, 0.0
        %v10104 = vmax.f32 %v9592, 0.0
        %v10105 = vmax.f32 %v9593, 0.0
        %v10106 = vmax.f32 %v9594, 0.0
        %v10107 = vmax.f32 %v9595, 0.0
        %v10108 = vmax.f32 %v9596, 0.0
        %v10109 = vmax.f32 %v9597, 0.0
        %v10110 = vmax.f32 %v9598, 0.0
        %v10111 = vmax.f32 %v9599, 0.0
        %v10112 = vmax.f32 %v9600, 0.0
        %v10113 = vmax.f32 %v9601, 0.0
        %v10114 = vmax.f32 %v9602, 0.0
        %v10115 = vmax.f32 %v9603, 0.0
        %v10116 = vmax.f32 %v9604, 0.0
        %v10117 = vmax.f32 %v9605, 0.0
        %v10118 = vmax.f32 %v9606, 0.0
        %v10119 = vmax.f32 %v9607, 0.0
        %v10120 = vmax.f32 %v9608, 0.0
        %v10121 = vmax.f32 %v9609, 0.0
        %v10122 = vmax.f32 %v9610, 0.0
        %v10123 = vmax.f32 %v9611, 0.0
        %v10124 = vmax.f32 %v9612, 0.0
        %v10125 = vmax.f32 %v9613, 0.0
        %v10126 = vmax.f32 %v9614, 0.0
        %v10127 = vmax.f32 %v9615, 0.0
        %v10128 = vmax.f32 %v9616, 0.0
        %v10129 = vmax.f32 %v9617, 0.0
        %v10130 = vmax.f32 %v9618, 0.0
        %v10131 = vmax.f32 %v9619, 0.0
        %v10132 = vmax.f32 %v9620, 0.0
        %v10133 = vmax.f32 %v9621, 0.0
        %v10134 = vmax.f32 %v9622, 0.0
        %v10135 = vmax.f32 %v9623, 0.0
        %v10136 = vmax.f32 %v9624, 0.0
        %v10137 = vmax.f32 %v9625, 0.0
        %v10138 = vmax.f32 %v9626, 0.0
        %v10139 = vmax.f32 %v9627, 0.0
        %v10140 = vmax.f32 %v9628, 0.0
        %v10141 = vmax.f32 %v9629, 0.0
        %v10142 = vmax.f32 %v9630, 0.0
        %v10143 = vmax.f32 %v9631, 0.0
        %v10144 = vmax.f32 %v9632, 0.0
        %v10145 = vmax.f32 %v9633, 0.0
        %v10146 = vmax.f32 %v9634, 0.0
        %v10147 = vmax.f32 %v9635, 0.0
        %v10148 = vmax.f32 %v9636, 0.0
        %v10149 = vmax.f32 %v9637, 0.0
        %v10150 = vmax.f32 %v9638, 0.0
        %v10151 = vmax.f32 %v9639, 0.0
        %v10152 = vmax.f32 %v9640, 0.0
        %v10153 = vmax.f32 %v9641, 0.0
        %v10154 = vmax.f32 %v9642, 0.0
        %v10155 = vmax.f32 %v9643, 0.0
        %v10156 = vmax.f32 %v9644, 0.0
        %v10157 = vmax.f32 %v9645, 0.0
        %v10158 = vmax.f32 %v9646, 0.0
        %v10159 = vmax.f32 %v9647, 0.0
        %v10160 = vmax.f32 %v9648, 0.0
        %v10161 = vmax.f32 %v9649, 0.0
        %v10162 = vmax.f32 %v9650, 0.0
        %v10163 = vmax.f32 %v9651, 0.0
        %v10164 = vmax.f32 %v9652, 0.0
        %v10165 = vmax.f32 %v9653, 0.0
        %v10166 = vmax.f32 %v9654, 0.0
        %v10167 = vmax.f32 %v9655, 0.0
        %v10168 = vmax.f32 %v9656, 0.0
        %v10169 = vmax.f32 %v9657, 0.0
        %v10170 = vmax.f32 %v9658, 0.0
        %v10171 = vmax.f32 %v9659, 0.0
        %v10172 = vmax.f32 %v9660, 0.0
        %v10173 = vmax.f32 %v9661, 0.0
        %v10174 = vmax.f32 %v9662, 0.0
        %v10175 = vmax.f32 %v9663, 0.0
        %v10176 = vmax.f32 %v9664, 0.0
        %v10177 = vmax.f32 %v9665, 0.0
        %v10178 = vmax.f32 %v9666, 0.0
        %v10179 = vmax.f32 %v9667, 0.0
        %v10180 = vmax.f32 %v9668, 0.0
        %v10181 = vmax.f32 %v9669, 0.0
        %v10182 = vmax.f32 %v9670, 0.0
        %v10183 = vmax.f32 %v9671, 0.0
        %v10184 = vmax.f32 %v9672, 0.0
        %v10185 = vmax.f32 %v9673, 0.0
        %v10186 = vmax.f32 %v9674, 0.0
        %v10187 = vmax.f32 %v9675, 0.0
        %v10188 = vmax.f32 %v9676, 0.0
        %v10189 = vmax.f32 %v9677, 0.0
        %v10190 = vmax.f32 %v9678, 0.0
        %v10191 = vmax.f32 %v9679, 0.0
        %v10192 = vmax.f32 %v9680, 0.0
        %v10193 = vmax.f32 %v9681, 0.0
        %v10194 = vmax.f32 %v9682, 0.0
        %v10195 = vmax.f32 %v9683, 0.0
        %v10196 = vmax.f32 %v9684, 0.0
        %v10197 = vmax.f32 %v9685, 0.0
        %v10198 = vmax.f32 %v9686, 0.0
        %v10199 = vmax.f32 %v9687, 0.0
        %v10200 = vmax.f32 %v9688, 0.0
        %v10201 = vmax.f32 %v9689, 0.0
        %v10202 = vmax.f32 %v9690, 0.0
        %v10203 = vmax.f32 %v9691, 0.0
        %v10204 = vmax.f32 %v9692, 0.0
        %v10205 = vmax.f32 %v9693, 0.0
        %v10206 = vmax.f32 %v9694, 0.0
        %v10207 = vmax.f32 %v9695, 0.0
        %v10208 = vmax.f32 %v9696, 0.0
        %v10209 = vmax.f32 %v9697, 0.0
        %v10210 = vmax.f32 %v9698, 0.0
        %v10211 = vmax.f32 %v9699, 0.0
        %v10212 = vmax.f32 %v9700, 0.0
        %v10213 = vmax.f32 %v9701, 0.0
        %v10214 = vmax.f32 %v9702, 0.0
        %v10215 = vmax.f32 %v9703, 0.0
        %v10216 = vmax.f32 %v9704, 0.0
        %v10217 = vmax.f32 %v9705, 0.0
        %v10218 = vmax.f32 %v9706, 0.0
        %v10219 = vmax.f32 %v9707, 0.0
        %v10220 = vmax.f32 %v9708, 0.0
        %v10221 = vmax.f32 %v9709, 0.0
        %v10222 = vmax.f32 %v9710, 0.0
        %v10223 = vmax.f32 %v9711, 0.0
        %v10224 = vmax.f32 %v9712, 0.0
        %v10225 = vmax.f32 %v9713, 0.0
        %v10226 = vmax.f32 %v9714, 0.0
        %v10227 = vmax.f32 %v9715, 0.0
        %v10228 = vmax.f32 %v9716, 0.0
        %v10229 = vmax.f32 %v9717, 0.0
        %v10230 = vmax.f32 %v9718, 0.0
        %v10231 = vmax.f32 %v9719, 0.0
        %v10232 = vmax.f32 %v9720, 0.0
        %v10233 = vmax.f32 %v9721, 0.0
        %v10234 = vmax.f32 %v9722, 0.0
        %v10235 = vmax.f32 %v9723, 0.0
        %v10236 = vmax.f32 %v9724, 0.0
        %v10237 = vmax.f32 %v9725, 0.0
        %v10238 = vmax.f32 %v9726, 0.0
        %v10239 = vmax.f32 %v9727, 0.0
        %v10240 = vmax.f32 %v9728, 0.0
        %v10241 = vmax.f32 %v9729, 0.0
        %v10242 = vmax.f32 %v9730, 0.0
        %v10243 = vmax.f32 %v9731, 0.0
        %v10244 = vmax.f32 %v9732, 0.0
        %v10245 = vmax.f32 %v9733, 0.0
        %v10246 = vmax.f32 %v9734, 0.0
        %v10247 = vmax.f32 %v9735, 0.0
        %v10248 = vmax.f32 %v9736, 0.0
        %v10249 = vmax.f32 %v9737, 0.0
        %v10250 = vmax.f32 %v9738, 0.0
        %v10251 = vmax.f32 %v9739, 0.0
        %v10252 = vmax.f32 %v9740, 0.0
        %v10253 = vmax.f32 %v9741, 0.0
        %v10254 = vmax.f32 %v9742, 0.0
        %v10255 = vmax.f32 %v9743, 0.0
        %v10256 = vmax.f32 %v9744, 0.0
        %v10257 = vmax.f32 %v9745, 0.0
        %v10258 = vmax.f32 %v9746, 0.0
        %v10259 = vmax.f32 %v9747, 0.0
        %v10260 = vmax.f32 %v9748, 0.0
        %v10261 = vmax.f32 %v9749, 0.0
        %v10262 = vmax.f32 %v9750, 0.0
        %v10263 = vmax.f32 %v9751, 0.0
        %v10264 = vmax.f32 %v9752, 0.0
        %v10265 = vmax.f32 %v9753, 0.0
        %v10266 = vmax.f32 %v9754, 0.0
        %v10267 = vmax.f32 %v9755, 0.0
        %v10268 = vmax.f32 %v9756, 0.0
        %v10269 = vmax.f32 %v9757, 0.0
        %v10270 = vmax.f32 %v9758, 0.0
        %v10271 = vmax.f32 %v9759, 0.0
        %v10272 = vmax.f32 %v9760, 0.0
        %v10273 = vmax.f32 %v9761, 0.0
        %v10274 = vmax.f32 %v9762, 0.0
        %v10275 = vmax.f32 %v9763, 0.0
        %v10276 = vmax.f32 %v9764, 0.0
        %v10277 = vmax.f32 %v9765, 0.0
        %v10278 = vmax.f32 %v9766, 0.0
        %v10279 = vmax.f32 %v9767, 0.0
        %v10280 = vmax.f32 %v9768, 0.0
        %v10281 = vmax.f32 %v9769, 0.0
        %v10282 = vmax.f32 %v9770, 0.0
        %v10283 = vmax.f32 %v9771, 0.0
        %v10284 = vmax.f32 %v9772, 0.0
        %v10285 = vmax.f32 %v9773, 0.0
        %v10286 = vmax.f32 %v9774, 0.0
        %v10287 = vmax.f32 %v9775, 0.0
        %v10288 = vmax.f32 %v9776, 0.0
        %v10289 = vmax.f32 %v9777, 0.0
        %v10290 = vmax.f32 %v9778, 0.0
        %v10291 = vmax.f32 %v9779, 0.0
        %v10292 = vmax.f32 %v9780, 0.0
        %v10293 = vmax.f32 %v9781, 0.0
        %v10294 = vmax.f32 %v9782, 0.0
        %v10295 = vmax.f32 %v9783, 0.0
        %v10296 = vmax.f32 %v9784, 0.0
        %v10297 = vmax.f32 %v9785, 0.0
        %v10298 = vmax.f32 %v9786, 0.0
        %v10299 = vmax.f32 %v9787, 0.0
        %v10300 = vmax.f32 %v9788, 0.0
        %v10301 = vmax.f32 %v9789, 0.0
        %v10302 = vmax.f32 %v9790, 0.0
        %v10303 = vmax.f32 %v9791, 0.0
        %v10304 = vmax.f32 %v9792, 0.0
        %v10305 = vmax.f32 %v9793, 0.0
        %v10306 = vmax.f32 %v9794, 0.0
        %v10307 = vmax.f32 %v9795, 0.0
        %v10308 = vmax.f32 %v9796, 0.0
        %v10309 = vmax.f32 %v9797, 0.0
        %v10310 = vmax.f32 %v9798, 0.0
        %v10311 = vmax.f32 %v9799, 0.0
        %v10312 = vmax.f32 %v9800, 0.0
        %v10313 = vmax.f32 %v9801, 0.0
        %v10314 = vmax.f32 %v9802, 0.0
        %v10315 = vmax.f32 %v9803, 0.0
        %v10316 = vmax.f32 %v9804, 0.0
        %v10317 = vmax.f32 %v9805, 0.0
        %v10318 = vmax.f32 %v9806, 0.0
        %v10319 = vmax.f32 %v9807, 0.0
        %v10320 = vmax.f32 %v9808, 0.0
        %v10321 = vmax.f32 %v9809, 0.0
        %v10322 = vmax.f32 %v9810, 0.0
        %v10323 = vmax.f32 %v9811, 0.0
        %v10324 = vmax.f32 %v9812, 0.0
        %v10325 = vmax.f32 %v9813, 0.0
        %v10326 = vmax.f32 %v9814, 0.0
        %v10327 = vmax.f32 %v9815, 0.0
        %v10328 = vmax.f32 %v9816, 0.0
        %v10329 = vmax.f32 %v9817, 0.0
        %v10330 = vmax.f32 %v9818, 0.0
        %v10331 = vmax.f32 %v9819, 0.0
        %v10332 = vmax.f32 %v9820, 0.0
        %v10333 = vmax.f32 %v9821, 0.0
        %v10334 = vmax.f32 %v9822, 0.0
        %v10335 = vmax.f32 %v9823, 0.0
        %v10336 = vmax.f32 %v9824, 0.0
        %v10337 = vmax.f32 %v9825, 0.0
        %v10338 = vmax.f32 %v9826, 0.0
        %v10339 = vmax.f32 %v9827, 0.0
        %v10340 = vmax.f32 %v9828, 0.0
        %v10341 = vmax.f32 %v9829, 0.0
        %v10342 = vmax.f32 %v9830, 0.0
        %v10343 = vmax.f32 %v9831, 0.0
        %v10344 = vmax.f32 %v9832, 0.0
        %v10345 = vmax.f32 %v9833, 0.0
        %v10346 = vmax.f32 %v9834, 0.0
        %v10347 = vmax.f32 %v9835, 0.0
        %v10348 = vmax.f32 %v9836, 0.0
        %v10349 = vmax.f32 %v9837, 0.0
        %v10350 = vmax.f32 %v9838, 0.0
        %v10351 = vmax.f32 %v9839, 0.0
        %v10352 = vmax.f32 %v9840, 0.0
        %v10353 = vmax.f32 %v9841, 0.0
        %v10354 = vmax.f32 %v9842, 0.0
        %v10355 = vmax.f32 %v9843, 0.0
        %v10356 = vmax.f32 %v9844, 0.0
        %v10357 = vmax.f32 %v9845, 0.0
        %v10358 = vmax.f32 %v9846, 0.0
        %v10359 = vmax.f32 %v9847, 0.0
        %v10360 = vsel %vm586, %v9848, -inf
        %v10361 = vsel %vm586, %v9849, -inf
        %v10362 = vsel %vm586, %v9850, -inf
        %v10363 = vsel %vm586, %v9851, -inf
        %v10364 = vsel %vm586, %v9852, -inf
        %v10365 = vsel %vm586, %v9853, -inf
        %v10366 = vsel %vm586, %v9854, -inf
        %v10367 = vsel %vm586, %v9855, -inf
        %v10368 = vsel %vm587, %v9856, -inf
        %v10369 = vsel %vm587, %v9857, -inf
        %v10370 = vsel %vm587, %v9858, -inf
        %v10371 = vsel %vm587, %v9859, -inf
        %v10372 = vsel %vm587, %v9860, -inf
        %v10373 = vsel %vm587, %v9861, -inf
        %v10374 = vsel %vm587, %v9862, -inf
        %v10375 = vsel %vm587, %v9863, -inf
        %v10376 = vsel %vm588, %v9864, -inf
        %v10377 = vsel %vm588, %v9865, -inf
        %v10378 = vsel %vm588, %v9866, -inf
        %v10379 = vsel %vm588, %v9867, -inf
        %v10380 = vsel %vm588, %v9868, -inf
        %v10381 = vsel %vm588, %v9869, -inf
        %v10382 = vsel %vm588, %v9870, -inf
        %v10383 = vsel %vm588, %v9871, -inf
        %v10384 = vsel %vm589, %v9872, -inf
        %v10385 = vsel %vm589, %v9873, -inf
        %v10386 = vsel %vm589, %v9874, -inf
        %v10387 = vsel %vm589, %v9875, -inf
        %v10388 = vsel %vm589, %v9876, -inf
        %v10389 = vsel %vm589, %v9877, -inf
        %v10390 = vsel %vm589, %v9878, -inf
        %v10391 = vsel %vm589, %v9879, -inf
        %v10392 = vsel %vm590, %v9880, -inf
        %v10393 = vsel %vm590, %v9881, -inf
        %v10394 = vsel %vm590, %v9882, -inf
        %v10395 = vsel %vm590, %v9883, -inf
        %v10396 = vsel %vm590, %v9884, -inf
        %v10397 = vsel %vm590, %v9885, -inf
        %v10398 = vsel %vm590, %v9886, -inf
        %v10399 = vsel %vm590, %v9887, -inf
        %v10400 = vsel %vm591, %v9888, -inf
        %v10401 = vsel %vm591, %v9889, -inf
        %v10402 = vsel %vm591, %v9890, -inf
        %v10403 = vsel %vm591, %v9891, -inf
        %v10404 = vsel %vm591, %v9892, -inf
        %v10405 = vsel %vm591, %v9893, -inf
        %v10406 = vsel %vm591, %v9894, -inf
        %v10407 = vsel %vm591, %v9895, -inf
        %v10408 = vsel %vm592, %v9896, -inf
        %v10409 = vsel %vm592, %v9897, -inf
        %v10410 = vsel %vm592, %v9898, -inf
        %v10411 = vsel %vm592, %v9899, -inf
        %v10412 = vsel %vm592, %v9900, -inf
        %v10413 = vsel %vm592, %v9901, -inf
        %v10414 = vsel %vm592, %v9902, -inf
        %v10415 = vsel %vm592, %v9903, -inf
        %v10416 = vsel %vm593, %v9904, -inf
        %v10417 = vsel %vm593, %v9905, -inf
        %v10418 = vsel %vm593, %v9906, -inf
        %v10419 = vsel %vm593, %v9907, -inf
        %v10420 = vsel %vm593, %v9908, -inf
        %v10421 = vsel %vm593, %v9909, -inf
        %v10422 = vsel %vm593, %v9910, -inf
        %v10423 = vsel %vm593, %v9911, -inf
        %v10424 = vsel %vm594, %v9912, -inf
        %v10425 = vsel %vm594, %v9913, -inf
        %v10426 = vsel %vm594, %v9914, -inf
        %v10427 = vsel %vm594, %v9915, -inf
        %v10428 = vsel %vm594, %v9916, -inf
        %v10429 = vsel %vm594, %v9917, -inf
        %v10430 = vsel %vm594, %v9918, -inf
        %v10431 = vsel %vm594, %v9919, -inf
        %v10432 = vsel %vm595, %v9920, -inf
        %v10433 = vsel %vm595, %v9921, -inf
        %v10434 = vsel %vm595, %v9922, -inf
        %v10435 = vsel %vm595, %v9923, -inf
        %v10436 = vsel %vm595, %v9924, -inf
        %v10437 = vsel %vm595, %v9925, -inf
        %v10438 = vsel %vm595, %v9926, -inf
        %v10439 = vsel %vm595, %v9927, -inf
        %v10440 = vsel %vm596, %v9928, -inf
        %v10441 = vsel %vm596, %v9929, -inf
        %v10442 = vsel %vm596, %v9930, -inf
        %v10443 = vsel %vm596, %v9931, -inf
        %v10444 = vsel %vm596, %v9932, -inf
        %v10445 = vsel %vm596, %v9933, -inf
        %v10446 = vsel %vm596, %v9934, -inf
        %v10447 = vsel %vm596, %v9935, -inf
        %v10448 = vsel %vm597, %v9936, -inf
        %v10449 = vsel %vm597, %v9937, -inf
        %v10450 = vsel %vm597, %v9938, -inf
        %v10451 = vsel %vm597, %v9939, -inf
        %v10452 = vsel %vm597, %v9940, -inf
        %v10453 = vsel %vm597, %v9941, -inf
        %v10454 = vsel %vm597, %v9942, -inf
        %v10455 = vsel %vm597, %v9943, -inf
        %v10456 = vsel %vm598, %v9944, -inf
        %v10457 = vsel %vm598, %v9945, -inf
        %v10458 = vsel %vm598, %v9946, -inf
        %v10459 = vsel %vm598, %v9947, -inf
        %v10460 = vsel %vm598, %v9948, -inf
        %v10461 = vsel %vm598, %v9949, -inf
        %v10462 = vsel %vm598, %v9950, -inf
        %v10463 = vsel %vm598, %v9951, -inf
        %v10464 = vsel %vm599, %v9952, -inf
        %v10465 = vsel %vm599, %v9953, -inf
        %v10466 = vsel %vm599, %v9954, -inf
        %v10467 = vsel %vm599, %v9955, -inf
        %v10468 = vsel %vm599, %v9956, -inf
        %v10469 = vsel %vm599, %v9957, -inf
        %v10470 = vsel %vm599, %v9958, -inf
        %v10471 = vsel %vm599, %v9959, -inf
        %v10472 = vsel %vm600, %v9960, -inf
        %v10473 = vsel %vm600, %v9961, -inf
        %v10474 = vsel %vm600, %v9962, -inf
        %v10475 = vsel %vm600, %v9963, -inf
        %v10476 = vsel %vm600, %v9964, -inf
        %v10477 = vsel %vm600, %v9965, -inf
        %v10478 = vsel %vm600, %v9966, -inf
        %v10479 = vsel %vm600, %v9967, -inf
        %v10480 = vsel %vm601, %v9968, -inf
        %v10481 = vsel %vm601, %v9969, -inf
        %v10482 = vsel %vm601, %v9970, -inf
        %v10483 = vsel %vm601, %v9971, -inf
        %v10484 = vsel %vm601, %v9972, -inf
        %v10485 = vsel %vm601, %v9973, -inf
        %v10486 = vsel %vm601, %v9974, -inf
        %v10487 = vsel %vm601, %v9975, -inf
        %v10488 = vsel %vm602, %v9976, -inf
        %v10489 = vsel %vm602, %v9977, -inf
        %v10490 = vsel %vm602, %v9978, -inf
        %v10491 = vsel %vm602, %v9979, -inf
        %v10492 = vsel %vm602, %v9980, -inf
        %v10493 = vsel %vm602, %v9981, -inf
        %v10494 = vsel %vm602, %v9982, -inf
        %v10495 = vsel %vm602, %v9983, -inf
        %v10496 = vsel %vm603, %v9984, -inf
        %v10497 = vsel %vm603, %v9985, -inf
        %v10498 = vsel %vm603, %v9986, -inf
        %v10499 = vsel %vm603, %v9987, -inf
        %v10500 = vsel %vm603, %v9988, -inf
        %v10501 = vsel %vm603, %v9989, -inf
        %v10502 = vsel %vm603, %v9990, -inf
        %v10503 = vsel %vm603, %v9991, -inf
        %v10504 = vsel %vm604, %v9992, -inf
        %v10505 = vsel %vm604, %v9993, -inf
        %v10506 = vsel %vm604, %v9994, -inf
        %v10507 = vsel %vm604, %v9995, -inf
        %v10508 = vsel %vm604, %v9996, -inf
        %v10509 = vsel %vm604, %v9997, -inf
        %v10510 = vsel %vm604, %v9998, -inf
        %v10511 = vsel %vm604, %v9999, -inf
        %v10512 = vsel %vm605, %v10000, -inf
        %v10513 = vsel %vm605, %v10001, -inf
        %v10514 = vsel %vm605, %v10002, -inf
        %v10515 = vsel %vm605, %v10003, -inf
        %v10516 = vsel %vm605, %v10004, -inf
        %v10517 = vsel %vm605, %v10005, -inf
        %v10518 = vsel %vm605, %v10006, -inf
        %v10519 = vsel %vm605, %v10007, -inf
        %v10520 = vsel %vm606, %v10008, -inf
        %v10521 = vsel %vm606, %v10009, -inf
        %v10522 = vsel %vm606, %v10010, -inf
        %v10523 = vsel %vm606, %v10011, -inf
        %v10524 = vsel %vm606, %v10012, -inf
        %v10525 = vsel %vm606, %v10013, -inf
        %v10526 = vsel %vm606, %v10014, -inf
        %v10527 = vsel %vm606, %v10015, -inf
        %v10528 = vsel %vm607, %v10016, -inf
        %v10529 = vsel %vm607, %v10017, -inf
        %v10530 = vsel %vm607, %v10018, -inf
        %v10531 = vsel %vm607, %v10019, -inf
        %v10532 = vsel %vm607, %v10020, -inf
        %v10533 = vsel %vm607, %v10021, -inf
        %v10534 = vsel %vm607, %v10022, -inf
        %v10535 = vsel %vm607, %v10023, -inf
        %v10536 = vsel %vm608, %v10024, -inf
        %v10537 = vsel %vm608, %v10025, -inf
        %v10538 = vsel %vm608, %v10026, -inf
        %v10539 = vsel %vm608, %v10027, -inf
        %v10540 = vsel %vm608, %v10028, -inf
        %v10541 = vsel %vm608, %v10029, -inf
        %v10542 = vsel %vm608, %v10030, -inf
        %v10543 = vsel %vm608, %v10031, -inf
        %v10544 = vsel %vm609, %v10032, -inf
        %v10545 = vsel %vm609, %v10033, -inf
        %v10546 = vsel %vm609, %v10034, -inf
        %v10547 = vsel %vm609, %v10035, -inf
        %v10548 = vsel %vm609, %v10036, -inf
        %v10549 = vsel %vm609, %v10037, -inf
        %v10550 = vsel %vm609, %v10038, -inf
        %v10551 = vsel %vm609, %v10039, -inf
        %v10552 = vsel %vm610, %v10040, -inf
        %v10553 = vsel %vm610, %v10041, -inf
        %v10554 = vsel %vm610, %v10042, -inf
        %v10555 = vsel %vm610, %v10043, -inf
        %v10556 = vsel %vm610, %v10044, -inf
        %v10557 = vsel %vm610, %v10045, -inf
        %v10558 = vsel %vm610, %v10046, -inf
        %v10559 = vsel %vm610, %v10047, -inf
        %v10560 = vsel %vm611, %v10048, -inf
        %v10561 = vsel %vm611, %v10049, -inf
        %v10562 = vsel %vm611, %v10050, -inf
        %v10563 = vsel %vm611, %v10051, -inf
        %v10564 = vsel %vm611, %v10052, -inf
        %v10565 = vsel %vm611, %v10053, -inf
        %v10566 = vsel %vm611, %v10054, -inf
        %v10567 = vsel %vm611, %v10055, -inf
        %v10568 = vsel %vm612, %v10056, -inf
        %v10569 = vsel %vm612, %v10057, -inf
        %v10570 = vsel %vm612, %v10058, -inf
        %v10571 = vsel %vm612, %v10059, -inf
        %v10572 = vsel %vm612, %v10060, -inf
        %v10573 = vsel %vm612, %v10061, -inf
        %v10574 = vsel %vm612, %v10062, -inf
        %v10575 = vsel %vm612, %v10063, -inf
        %v10576 = vsel %vm613, %v10064, -inf
        %v10577 = vsel %vm613, %v10065, -inf
        %v10578 = vsel %vm613, %v10066, -inf
        %v10579 = vsel %vm613, %v10067, -inf
        %v10580 = vsel %vm613, %v10068, -inf
        %v10581 = vsel %vm613, %v10069, -inf
        %v10582 = vsel %vm613, %v10070, -inf
        %v10583 = vsel %vm613, %v10071, -inf
        %v10584 = vsel %vm614, %v10072, -inf
        %v10585 = vsel %vm614, %v10073, -inf
        %v10586 = vsel %vm614, %v10074, -inf
        %v10587 = vsel %vm614, %v10075, -inf
        %v10588 = vsel %vm614, %v10076, -inf
        %v10589 = vsel %vm614, %v10077, -inf
        %v10590 = vsel %vm614, %v10078, -inf
        %v10591 = vsel %vm614, %v10079, -inf
        %v10592 = vsel %vm615, %v10080, -inf
        %v10593 = vsel %vm615, %v10081, -inf
        %v10594 = vsel %vm615, %v10082, -inf
        %v10595 = vsel %vm615, %v10083, -inf
        %v10596 = vsel %vm615, %v10084, -inf
        %v10597 = vsel %vm615, %v10085, -inf
        %v10598 = vsel %vm615, %v10086, -inf
        %v10599 = vsel %vm615, %v10087, -inf
        %v10600 = vsel %vm616, %v10088, -inf
        %v10601 = vsel %vm616, %v10089, -inf
        %v10602 = vsel %vm616, %v10090, -inf
        %v10603 = vsel %vm616, %v10091, -inf
        %v10604 = vsel %vm616, %v10092, -inf
        %v10605 = vsel %vm616, %v10093, -inf
        %v10606 = vsel %vm616, %v10094, -inf
        %v10607 = vsel %vm616, %v10095, -inf
        %v10608 = vsel %vm617, %v10096, -inf
        %v10609 = vsel %vm617, %v10097, -inf
        %v10610 = vsel %vm617, %v10098, -inf
        %v10611 = vsel %vm617, %v10099, -inf
        %v10612 = vsel %vm617, %v10100, -inf
        %v10613 = vsel %vm617, %v10101, -inf
        %v10614 = vsel %vm617, %v10102, -inf
        %v10615 = vsel %vm617, %v10103, -inf
        %v10616 = vsel %vm618, %v10104, -inf
        %v10617 = vsel %vm618, %v10105, -inf
        %v10618 = vsel %vm618, %v10106, -inf
        %v10619 = vsel %vm618, %v10107, -inf
        %v10620 = vsel %vm618, %v10108, -inf
        %v10621 = vsel %vm618, %v10109, -inf
        %v10622 = vsel %vm618, %v10110, -inf
        %v10623 = vsel %vm618, %v10111, -inf
        %v10624 = vsel %vm619, %v10112, -inf
        %v10625 = vsel %vm619, %v10113, -inf
        %v10626 = vsel %vm619, %v10114, -inf
        %v10627 = vsel %vm619, %v10115, -inf
        %v10628 = vsel %vm619, %v10116, -inf
        %v10629 = vsel %vm619, %v10117, -inf
        %v10630 = vsel %vm619, %v10118, -inf
        %v10631 = vsel %vm619, %v10119, -inf
        %v10632 = vsel %vm620, %v10120, -inf
        %v10633 = vsel %vm620, %v10121, -inf
        %v10634 = vsel %vm620, %v10122, -inf
        %v10635 = vsel %vm620, %v10123, -inf
        %v10636 = vsel %vm620, %v10124, -inf
        %v10637 = vsel %vm620, %v10125, -inf
        %v10638 = vsel %vm620, %v10126, -inf
        %v10639 = vsel %vm620, %v10127, -inf
        %v10640 = vsel %vm621, %v10128, -inf
        %v10641 = vsel %vm621, %v10129, -inf
        %v10642 = vsel %vm621, %v10130, -inf
        %v10643 = vsel %vm621, %v10131, -inf
        %v10644 = vsel %vm621, %v10132, -inf
        %v10645 = vsel %vm621, %v10133, -inf
        %v10646 = vsel %vm621, %v10134, -inf
        %v10647 = vsel %vm621, %v10135, -inf
        %v10648 = vsel %vm622, %v10136, -inf
        %v10649 = vsel %vm622, %v10137, -inf
        %v10650 = vsel %vm622, %v10138, -inf
        %v10651 = vsel %vm622, %v10139, -inf
        %v10652 = vsel %vm622, %v10140, -inf
        %v10653 = vsel %vm622, %v10141, -inf
        %v10654 = vsel %vm622, %v10142, -inf
        %v10655 = vsel %vm622, %v10143, -inf
        %v10656 = vsel %vm623, %v10144, -inf
        %v10657 = vsel %vm623, %v10145, -inf
        %v10658 = vsel %vm623, %v10146, -inf
        %v10659 = vsel %vm623, %v10147, -inf
        %v10660 = vsel %vm623, %v10148, -inf
        %v10661 = vsel %vm623, %v10149, -inf
        %v10662 = vsel %vm623, %v10150, -inf
        %v10663 = vsel %vm623, %v10151, -inf
        %v10664 = vsel %vm624, %v10152, -inf
        %v10665 = vsel %vm624, %v10153, -inf
        %v10666 = vsel %vm624, %v10154, -inf
        %v10667 = vsel %vm624, %v10155, -inf
        %v10668 = vsel %vm624, %v10156, -inf
        %v10669 = vsel %vm624, %v10157, -inf
        %v10670 = vsel %vm624, %v10158, -inf
        %v10671 = vsel %vm624, %v10159, -inf
        %v10672 = vsel %vm625, %v10160, -inf
        %v10673 = vsel %vm625, %v10161, -inf
        %v10674 = vsel %vm625, %v10162, -inf
        %v10675 = vsel %vm625, %v10163, -inf
        %v10676 = vsel %vm625, %v10164, -inf
        %v10677 = vsel %vm625, %v10165, -inf
        %v10678 = vsel %vm625, %v10166, -inf
        %v10679 = vsel %vm625, %v10167, -inf
        %v10680 = vsel %vm626, %v10168, -inf
        %v10681 = vsel %vm626, %v10169, -inf
        %v10682 = vsel %vm626, %v10170, -inf
        %v10683 = vsel %vm626, %v10171, -inf
        %v10684 = vsel %vm626, %v10172, -inf
        %v10685 = vsel %vm626, %v10173, -inf
        %v10686 = vsel %vm626, %v10174, -inf
        %v10687 = vsel %vm626, %v10175, -inf
        %v10688 = vsel %vm627, %v10176, -inf
        %v10689 = vsel %vm627, %v10177, -inf
        %v10690 = vsel %vm627, %v10178, -inf
        %v10691 = vsel %vm627, %v10179, -inf
        %v10692 = vsel %vm627, %v10180, -inf
        %v10693 = vsel %vm627, %v10181, -inf
        %v10694 = vsel %vm627, %v10182, -inf
        %v10695 = vsel %vm627, %v10183, -inf
        %v10696 = vsel %vm628, %v10184, -inf
        %v10697 = vsel %vm628, %v10185, -inf
        %v10698 = vsel %vm628, %v10186, -inf
        %v10699 = vsel %vm628, %v10187, -inf
        %v10700 = vsel %vm628, %v10188, -inf
        %v10701 = vsel %vm628, %v10189, -inf
        %v10702 = vsel %vm628, %v10190, -inf
        %v10703 = vsel %vm628, %v10191, -inf
        %v10704 = vsel %vm629, %v10192, -inf
        %v10705 = vsel %vm629, %v10193, -inf
        %v10706 = vsel %vm629, %v10194, -inf
        %v10707 = vsel %vm629, %v10195, -inf
        %v10708 = vsel %vm629, %v10196, -inf
        %v10709 = vsel %vm629, %v10197, -inf
        %v10710 = vsel %vm629, %v10198, -inf
        %v10711 = vsel %vm629, %v10199, -inf
        %v10712 = vsel %vm630, %v10200, -inf
        %v10713 = vsel %vm630, %v10201, -inf
        %v10714 = vsel %vm630, %v10202, -inf
        %v10715 = vsel %vm630, %v10203, -inf
        %v10716 = vsel %vm630, %v10204, -inf
        %v10717 = vsel %vm630, %v10205, -inf
        %v10718 = vsel %vm630, %v10206, -inf
        %v10719 = vsel %vm630, %v10207, -inf
        %v10720 = vsel %vm631, %v10208, -inf
        %v10721 = vsel %vm631, %v10209, -inf
        %v10722 = vsel %vm631, %v10210, -inf
        %v10723 = vsel %vm631, %v10211, -inf
        %v10724 = vsel %vm631, %v10212, -inf
        %v10725 = vsel %vm631, %v10213, -inf
        %v10726 = vsel %vm631, %v10214, -inf
        %v10727 = vsel %vm631, %v10215, -inf
        %v10728 = vsel %vm632, %v10216, -inf
        %v10729 = vsel %vm632, %v10217, -inf
        %v10730 = vsel %vm632, %v10218, -inf
        %v10731 = vsel %vm632, %v10219, -inf
        %v10732 = vsel %vm632, %v10220, -inf
        %v10733 = vsel %vm632, %v10221, -inf
        %v10734 = vsel %vm632, %v10222, -inf
        %v10735 = vsel %vm632, %v10223, -inf
        %v10736 = vsel %vm633, %v10224, -inf
        %v10737 = vsel %vm633, %v10225, -inf
        %v10738 = vsel %vm633, %v10226, -inf
        %v10739 = vsel %vm633, %v10227, -inf
        %v10740 = vsel %vm633, %v10228, -inf
        %v10741 = vsel %vm633, %v10229, -inf
        %v10742 = vsel %vm633, %v10230, -inf
        %v10743 = vsel %vm633, %v10231, -inf
        %v10744 = vsel %vm634, %v10232, -inf
        %v10745 = vsel %vm634, %v10233, -inf
        %v10746 = vsel %vm634, %v10234, -inf
        %v10747 = vsel %vm634, %v10235, -inf
        %v10748 = vsel %vm634, %v10236, -inf
        %v10749 = vsel %vm634, %v10237, -inf
        %v10750 = vsel %vm634, %v10238, -inf
        %v10751 = vsel %vm634, %v10239, -inf
        %v10752 = vsel %vm635, %v10240, -inf
        %v10753 = vsel %vm635, %v10241, -inf
        %v10754 = vsel %vm635, %v10242, -inf
        %v10755 = vsel %vm635, %v10243, -inf
        %v10756 = vsel %vm635, %v10244, -inf
        %v10757 = vsel %vm635, %v10245, -inf
        %v10758 = vsel %vm635, %v10246, -inf
        %v10759 = vsel %vm635, %v10247, -inf
        %v10760 = vsel %vm636, %v10248, -inf
        %v10761 = vsel %vm636, %v10249, -inf
        %v10762 = vsel %vm636, %v10250, -inf
        %v10763 = vsel %vm636, %v10251, -inf
        %v10764 = vsel %vm636, %v10252, -inf
        %v10765 = vsel %vm636, %v10253, -inf
        %v10766 = vsel %vm636, %v10254, -inf
        %v10767 = vsel %vm636, %v10255, -inf
        %v10768 = vsel %vm637, %v10256, -inf
        %v10769 = vsel %vm637, %v10257, -inf
        %v10770 = vsel %vm637, %v10258, -inf
        %v10771 = vsel %vm637, %v10259, -inf
        %v10772 = vsel %vm637, %v10260, -inf
        %v10773 = vsel %vm637, %v10261, -inf
        %v10774 = vsel %vm637, %v10262, -inf
        %v10775 = vsel %vm637, %v10263, -inf
        %v10776 = vsel %vm638, %v10264, -inf
        %v10777 = vsel %vm638, %v10265, -inf
        %v10778 = vsel %vm638, %v10266, -inf
        %v10779 = vsel %vm638, %v10267, -inf
        %v10780 = vsel %vm638, %v10268, -inf
        %v10781 = vsel %vm638, %v10269, -inf
        %v10782 = vsel %vm638, %v10270, -inf
        %v10783 = vsel %vm638, %v10271, -inf
        %v10784 = vsel %vm639, %v10272, -inf
        %v10785 = vsel %vm639, %v10273, -inf
        %v10786 = vsel %vm639, %v10274, -inf
        %v10787 = vsel %vm639, %v10275, -inf
        %v10788 = vsel %vm639, %v10276, -inf
        %v10789 = vsel %vm639, %v10277, -inf
        %v10790 = vsel %vm639, %v10278, -inf
        %v10791 = vsel %vm639, %v10279, -inf
        %v10792 = vsel %vm640, %v10280, -inf
        %v10793 = vsel %vm640, %v10281, -inf
        %v10794 = vsel %vm640, %v10282, -inf
        %v10795 = vsel %vm640, %v10283, -inf
        %v10796 = vsel %vm640, %v10284, -inf
        %v10797 = vsel %vm640, %v10285, -inf
        %v10798 = vsel %vm640, %v10286, -inf
        %v10799 = vsel %vm640, %v10287, -inf
        %v10800 = vsel %vm641, %v10288, -inf
        %v10801 = vsel %vm641, %v10289, -inf
        %v10802 = vsel %vm641, %v10290, -inf
        %v10803 = vsel %vm641, %v10291, -inf
        %v10804 = vsel %vm641, %v10292, -inf
        %v10805 = vsel %vm641, %v10293, -inf
        %v10806 = vsel %vm641, %v10294, -inf
        %v10807 = vsel %vm641, %v10295, -inf
        %v10808 = vsel %vm642, %v10296, -inf
        %v10809 = vsel %vm642, %v10297, -inf
        %v10810 = vsel %vm642, %v10298, -inf
        %v10811 = vsel %vm642, %v10299, -inf
        %v10812 = vsel %vm642, %v10300, -inf
        %v10813 = vsel %vm642, %v10301, -inf
        %v10814 = vsel %vm642, %v10302, -inf
        %v10815 = vsel %vm642, %v10303, -inf
        %v10816 = vsel %vm643, %v10304, -inf
        %v10817 = vsel %vm643, %v10305, -inf
        %v10818 = vsel %vm643, %v10306, -inf
        %v10819 = vsel %vm643, %v10307, -inf
        %v10820 = vsel %vm643, %v10308, -inf
        %v10821 = vsel %vm643, %v10309, -inf
        %v10822 = vsel %vm643, %v10310, -inf
        %v10823 = vsel %vm643, %v10311, -inf
        %v10824 = vsel %vm644, %v10312, -inf
        %v10825 = vsel %vm644, %v10313, -inf
        %v10826 = vsel %vm644, %v10314, -inf
        %v10827 = vsel %vm644, %v10315, -inf
        %v10828 = vsel %vm644, %v10316, -inf
        %v10829 = vsel %vm644, %v10317, -inf
        %v10830 = vsel %vm644, %v10318, -inf
        %v10831 = vsel %vm644, %v10319, -inf
        %v10832 = vsel %vm645, %v10320, -inf
        %v10833 = vsel %vm645, %v10321, -inf
        %v10834 = vsel %vm645, %v10322, -inf
        %v10835 = vsel %vm645, %v10323, -inf
        %v10836 = vsel %vm645, %v10324, -inf
        %v10837 = vsel %vm645, %v10325, -inf
        %v10838 = vsel %vm645, %v10326, -inf
        %v10839 = vsel %vm645, %v10327, -inf
        %v10840 = vsel %vm646, %v10328, -inf
        %v10841 = vsel %vm646, %v10329, -inf
        %v10842 = vsel %vm646, %v10330, -inf
        %v10843 = vsel %vm646, %v10331, -inf
        %v10844 = vsel %vm646, %v10332, -inf
        %v10845 = vsel %vm646, %v10333, -inf
        %v10846 = vsel %vm646, %v10334, -inf
        %v10847 = vsel %vm646, %v10335, -inf
        %v10848 = vsel %vm647, %v10336, -inf
        %v10849 = vsel %vm647, %v10337, -inf
        %v10850 = vsel %vm647, %v10338, -inf
        %v10851 = vsel %vm647, %v10339, -inf
        %v10852 = vsel %vm647, %v10340, -inf
        %v10853 = vsel %vm647, %v10341, -inf
        %v10854 = vsel %vm647, %v10342, -inf
        %v10855 = vsel %vm647, %v10343, -inf
        %v10856 = vsel %vm648, %v10344, -inf
        %v10857 = vsel %vm648, %v10345, -inf
        %v10858 = vsel %vm648, %v10346, -inf
        %v10859 = vsel %vm648, %v10347, -inf
        %v10860 = vsel %vm648, %v10348, -inf
        %v10861 = vsel %vm648, %v10349, -inf
        %v10862 = vsel %vm648, %v10350, -inf
        %v10863 = vsel %vm648, %v10351, -inf
        %v10864 = vsel %vm649, %v10352, -inf
        %v10865 = vsel %vm649, %v10353, -inf
        %v10866 = vsel %vm649, %v10354, -inf
        %v10867 = vsel %vm649, %v10355, -inf
        %v10868 = vsel %vm649, %v10356, -inf
        %v10869 = vsel %vm649, %v10357, -inf
        %v10870 = vsel %vm649, %v10358, -inf
        %v10871 = vsel %vm649, %v10359, -inf
        %v10872 = vmax.f32 %v10360, %v10368
        %v10873 = vmax.f32 %v10872, %v10376
        %v10874 = vmax.f32 %v10873, %v10384
        %v10875 = vmax.f32 %v10874, %v10392
        %v10876 = vmax.f32 %v10875, %v10400
        %v10877 = vmax.f32 %v10876, %v10408
        %v10878 = vmax.f32 %v10877, %v10416
        %v10879 = vmax.f32 %v10878, %v10424
        %v10880 = vmax.f32 %v10879, %v10432
        %v10881 = vmax.f32 %v10880, %v10440
        %v10882 = vmax.f32 %v10881, %v10448
        %v10883 = vmax.f32 %v10882, %v10456
        %v10884 = vmax.f32 %v10883, %v10464
        %v10885 = vmax.f32 %v10884, %v10472
        %v10886 = vmax.f32 %v10885, %v10480
        %v10887 = vmax.f32 %v10886, %v10488
        %v10888 = vmax.f32 %v10887, %v10496
        %v10889 = vmax.f32 %v10888, %v10504
        %v10890 = vmax.f32 %v10889, %v10512
        %v10891 = vmax.f32 %v10890, %v10520
        %v10892 = vmax.f32 %v10891, %v10528
        %v10893 = vmax.f32 %v10892, %v10536
        %v10894 = vmax.f32 %v10893, %v10544
        %v10895 = vmax.f32 %v10894, %v10552
        %v10896 = vmax.f32 %v10895, %v10560
        %v10897 = vmax.f32 %v10896, %v10568
        %v10898 = vmax.f32 %v10897, %v10576
        %v10899 = vmax.f32 %v10898, %v10584
        %v10900 = vmax.f32 %v10899, %v10592
        %v10901 = vmax.f32 %v10900, %v10600
        %v10902 = vmax.f32 %v10901, %v10608
        %v10903 = vmax.f32 %v10902, %v10616
        %v10904 = vmax.f32 %v10903, %v10624
        %v10905 = vmax.f32 %v10904, %v10632
        %v10906 = vmax.f32 %v10905, %v10640
        %v10907 = vmax.f32 %v10906, %v10648
        %v10908 = vmax.f32 %v10907, %v10656
        %v10909 = vmax.f32 %v10908, %v10664
        %v10910 = vmax.f32 %v10909, %v10672
        %v10911 = vmax.f32 %v10910, %v10680
        %v10912 = vmax.f32 %v10911, %v10688
        %v10913 = vmax.f32 %v10912, %v10696
        %v10914 = vmax.f32 %v10913, %v10704
        %v10915 = vmax.f32 %v10914, %v10712
        %v10916 = vmax.f32 %v10915, %v10720
        %v10917 = vmax.f32 %v10916, %v10728
        %v10918 = vmax.f32 %v10917, %v10736
        %v10919 = vmax.f32 %v10918, %v10744
        %v10920 = vmax.f32 %v10919, %v10752
        %v10921 = vmax.f32 %v10920, %v10760
        %v10922 = vmax.f32 %v10921, %v10768
        %v10923 = vmax.f32 %v10922, %v10776
        %v10924 = vmax.f32 %v10923, %v10784
        %v10925 = vmax.f32 %v10924, %v10792
        %v10926 = vmax.f32 %v10925, %v10800
        %v10927 = vmax.f32 %v10926, %v10808
        %v10928 = vmax.f32 %v10927, %v10816
        %v10929 = vmax.f32 %v10928, %v10824
        %v10930 = vmax.f32 %v10929, %v10832
        %v10931 = vmax.f32 %v10930, %v10840
        %v10932 = vmax.f32 %v10931, %v10848
        %v10933 = vmax.f32 %v10932, %v10856
        %v10934 = vmax.f32 %v10933, %v10864
        %v10935 = vrot.slane %v10934, 4
        %v10936 = vmax.f32 %v10934, %v10935
        %v10937 = vrot.slane %v10936, 2
        %v10938 = vmax.f32 %v10936, %v10937
        %v10939 = vrot.slane %v10938, 1
        %v10940 = vmax.f32 %v10938, %v10939
        %v10941 = vmax.f32 %v10361, %v10369
        %v10942 = vmax.f32 %v10941, %v10377
        %v10943 = vmax.f32 %v10942, %v10385
        %v10944 = vmax.f32 %v10943, %v10393
        %v10945 = vmax.f32 %v10944, %v10401
        %v10946 = vmax.f32 %v10945, %v10409
        %v10947 = vmax.f32 %v10946, %v10417
        %v10948 = vmax.f32 %v10947, %v10425
        %v10949 = vmax.f32 %v10948, %v10433
        %v10950 = vmax.f32 %v10949, %v10441
        %v10951 = vmax.f32 %v10950, %v10449
        %v10952 = vmax.f32 %v10951, %v10457
        %v10953 = vmax.f32 %v10952, %v10465
        %v10954 = vmax.f32 %v10953, %v10473
        %v10955 = vmax.f32 %v10954, %v10481
        %v10956 = vmax.f32 %v10955, %v10489
        %v10957 = vmax.f32 %v10956, %v10497
        %v10958 = vmax.f32 %v10957, %v10505
        %v10959 = vmax.f32 %v10958, %v10513
        %v10960 = vmax.f32 %v10959, %v10521
        %v10961 = vmax.f32 %v10960, %v10529
        %v10962 = vmax.f32 %v10961, %v10537
        %v10963 = vmax.f32 %v10962, %v10545
        %v10964 = vmax.f32 %v10963, %v10553
        %v10965 = vmax.f32 %v10964, %v10561
        %v10966 = vmax.f32 %v10965, %v10569
        %v10967 = vmax.f32 %v10966, %v10577
        %v10968 = vmax.f32 %v10967, %v10585
        %v10969 = vmax.f32 %v10968, %v10593
        %v10970 = vmax.f32 %v10969, %v10601
        %v10971 = vmax.f32 %v10970, %v10609
        %v10972 = vmax.f32 %v10971, %v10617
        %v10973 = vmax.f32 %v10972, %v10625
        %v10974 = vmax.f32 %v10973, %v10633
        %v10975 = vmax.f32 %v10974, %v10641
        %v10976 = vmax.f32 %v10975, %v10649
        %v10977 = vmax.f32 %v10976, %v10657
        %v10978 = vmax.f32 %v10977, %v10665
        %v10979 = vmax.f32 %v10978, %v10673
        %v10980 = vmax.f32 %v10979, %v10681
        %v10981 = vmax.f32 %v10980, %v10689
        %v10982 = vmax.f32 %v10981, %v10697
        %v10983 = vmax.f32 %v10982, %v10705
        %v10984 = vmax.f32 %v10983, %v10713
        %v10985 = vmax.f32 %v10984, %v10721
        %v10986 = vmax.f32 %v10985, %v10729
        %v10987 = vmax.f32 %v10986, %v10737
        %v10988 = vmax.f32 %v10987, %v10745
        %v10989 = vmax.f32 %v10988, %v10753
        %v10990 = vmax.f32 %v10989, %v10761
        %v10991 = vmax.f32 %v10990, %v10769
        %v10992 = vmax.f32 %v10991, %v10777
        %v10993 = vmax.f32 %v10992, %v10785
        %v10994 = vmax.f32 %v10993, %v10793
        %v10995 = vmax.f32 %v10994, %v10801
        %v10996 = vmax.f32 %v10995, %v10809
        %v10997 = vmax.f32 %v10996, %v10817
        %v10998 = vmax.f32 %v10997, %v10825
        %v10999 = vmax.f32 %v10998, %v10833
        %v11000 = vmax.f32 %v10999, %v10841
        %v11001 = vmax.f32 %v11000, %v10849
        %v11002 = vmax.f32 %v11001, %v10857
        %v11003 = vmax.f32 %v11002, %v10865
        %v11004 = vrot.slane %v11003, 4
        %v11005 = vmax.f32 %v11003, %v11004
        %v11006 = vrot.slane %v11005, 2
        %v11007 = vmax.f32 %v11005, %v11006
        %v11008 = vrot.slane %v11007, 1
        %v11009 = vmax.f32 %v11007, %v11008
        %v11010 = vmax.f32 %v10362, %v10370
        %v11011 = vmax.f32 %v11010, %v10378
        %v11012 = vmax.f32 %v11011, %v10386
        %v11013 = vmax.f32 %v11012, %v10394
        %v11014 = vmax.f32 %v11013, %v10402
        %v11015 = vmax.f32 %v11014, %v10410
        %v11016 = vmax.f32 %v11015, %v10418
        %v11017 = vmax.f32 %v11016, %v10426
        %v11018 = vmax.f32 %v11017, %v10434
        %v11019 = vmax.f32 %v11018, %v10442
        %v11020 = vmax.f32 %v11019, %v10450
        %v11021 = vmax.f32 %v11020, %v10458
        %v11022 = vmax.f32 %v11021, %v10466
        %v11023 = vmax.f32 %v11022, %v10474
        %v11024 = vmax.f32 %v11023, %v10482
        %v11025 = vmax.f32 %v11024, %v10490
        %v11026 = vmax.f32 %v11025, %v10498
        %v11027 = vmax.f32 %v11026, %v10506
        %v11028 = vmax.f32 %v11027, %v10514
        %v11029 = vmax.f32 %v11028, %v10522
        %v11030 = vmax.f32 %v11029, %v10530
        %v11031 = vmax.f32 %v11030, %v10538
        %v11032 = vmax.f32 %v11031, %v10546
        %v11033 = vmax.f32 %v11032, %v10554
        %v11034 = vmax.f32 %v11033, %v10562
        %v11035 = vmax.f32 %v11034, %v10570
        %v11036 = vmax.f32 %v11035, %v10578
        %v11037 = vmax.f32 %v11036, %v10586
        %v11038 = vmax.f32 %v11037, %v10594
        %v11039 = vmax.f32 %v11038, %v10602
        %v11040 = vmax.f32 %v11039, %v10610
        %v11041 = vmax.f32 %v11040, %v10618
        %v11042 = vmax.f32 %v11041, %v10626
        %v11043 = vmax.f32 %v11042, %v10634
        %v11044 = vmax.f32 %v11043, %v10642
        %v11045 = vmax.f32 %v11044, %v10650
        %v11046 = vmax.f32 %v11045, %v10658
        %v11047 = vmax.f32 %v11046, %v10666
        %v11048 = vmax.f32 %v11047, %v10674
        %v11049 = vmax.f32 %v11048, %v10682
        %v11050 = vmax.f32 %v11049, %v10690
        %v11051 = vmax.f32 %v11050, %v10698
        %v11052 = vmax.f32 %v11051, %v10706
        %v11053 = vmax.f32 %v11052, %v10714
        %v11054 = vmax.f32 %v11053, %v10722
        %v11055 = vmax.f32 %v11054, %v10730
        %v11056 = vmax.f32 %v11055, %v10738
        %v11057 = vmax.f32 %v11056, %v10746
        %v11058 = vmax.f32 %v11057, %v10754
        %v11059 = vmax.f32 %v11058, %v10762
        %v11060 = vmax.f32 %v11059, %v10770
        %v11061 = vmax.f32 %v11060, %v10778
        %v11062 = vmax.f32 %v11061, %v10786
        %v11063 = vmax.f32 %v11062, %v10794
        %v11064 = vmax.f32 %v11063, %v10802
        %v11065 = vmax.f32 %v11064, %v10810
        %v11066 = vmax.f32 %v11065, %v10818
        %v11067 = vmax.f32 %v11066, %v10826
        %v11068 = vmax.f32 %v11067, %v10834
        %v11069 = vmax.f32 %v11068, %v10842
        %v11070 = vmax.f32 %v11069, %v10850
        %v11071 = vmax.f32 %v11070, %v10858
        %v11072 = vmax.f32 %v11071, %v10866
        %v11073 = vrot.slane %v11072, 4
        %v11074 = vmax.f32 %v11072, %v11073
        %v11075 = vrot.slane %v11074, 2
        %v11076 = vmax.f32 %v11074, %v11075
        %v11077 = vrot.slane %v11076, 1
        %v11078 = vmax.f32 %v11076, %v11077
        %v11079 = vmax.f32 %v10363, %v10371
        %v11080 = vmax.f32 %v11079, %v10379
        %v11081 = vmax.f32 %v11080, %v10387
        %v11082 = vmax.f32 %v11081, %v10395
        %v11083 = vmax.f32 %v11082, %v10403
        %v11084 = vmax.f32 %v11083, %v10411
        %v11085 = vmax.f32 %v11084, %v10419
        %v11086 = vmax.f32 %v11085, %v10427
        %v11087 = vmax.f32 %v11086, %v10435
        %v11088 = vmax.f32 %v11087, %v10443
        %v11089 = vmax.f32 %v11088, %v10451
        %v11090 = vmax.f32 %v11089, %v10459
        %v11091 = vmax.f32 %v11090, %v10467
        %v11092 = vmax.f32 %v11091, %v10475
        %v11093 = vmax.f32 %v11092, %v10483
        %v11094 = vmax.f32 %v11093, %v10491
        %v11095 = vmax.f32 %v11094, %v10499
        %v11096 = vmax.f32 %v11095, %v10507
        %v11097 = vmax.f32 %v11096, %v10515
        %v11098 = vmax.f32 %v11097, %v10523
        %v11099 = vmax.f32 %v11098, %v10531
        %v11100 = vmax.f32 %v11099, %v10539
        %v11101 = vmax.f32 %v11100, %v10547
        %v11102 = vmax.f32 %v11101, %v10555
        %v11103 = vmax.f32 %v11102, %v10563
        %v11104 = vmax.f32 %v11103, %v10571
        %v11105 = vmax.f32 %v11104, %v10579
        %v11106 = vmax.f32 %v11105, %v10587
        %v11107 = vmax.f32 %v11106, %v10595
        %v11108 = vmax.f32 %v11107, %v10603
        %v11109 = vmax.f32 %v11108, %v10611
        %v11110 = vmax.f32 %v11109, %v10619
        %v11111 = vmax.f32 %v11110, %v10627
        %v11112 = vmax.f32 %v11111, %v10635
        %v11113 = vmax.f32 %v11112, %v10643
        %v11114 = vmax.f32 %v11113, %v10651
        %v11115 = vmax.f32 %v11114, %v10659
        %v11116 = vmax.f32 %v11115, %v10667
        %v11117 = vmax.f32 %v11116, %v10675
        %v11118 = vmax.f32 %v11117, %v10683
        %v11119 = vmax.f32 %v11118, %v10691
        %v11120 = vmax.f32 %v11119, %v10699
        %v11121 = vmax.f32 %v11120, %v10707
        %v11122 = vmax.f32 %v11121, %v10715
        %v11123 = vmax.f32 %v11122, %v10723
        %v11124 = vmax.f32 %v11123, %v10731
        %v11125 = vmax.f32 %v11124, %v10739
        %v11126 = vmax.f32 %v11125, %v10747
        %v11127 = vmax.f32 %v11126, %v10755
        %v11128 = vmax.f32 %v11127, %v10763
        %v11129 = vmax.f32 %v11128, %v10771
        %v11130 = vmax.f32 %v11129, %v10779
        %v11131 = vmax.f32 %v11130, %v10787
        %v11132 = vmax.f32 %v11131, %v10795
        %v11133 = vmax.f32 %v11132, %v10803
        %v11134 = vmax.f32 %v11133, %v10811
        %v11135 = vmax.f32 %v11134, %v10819
        %v11136 = vmax.f32 %v11135, %v10827
        %v11137 = vmax.f32 %v11136, %v10835
        %v11138 = vmax.f32 %v11137, %v10843
        %v11139 = vmax.f32 %v11138, %v10851
        %v11140 = vmax.f32 %v11139, %v10859
        %v11141 = vmax.f32 %v11140, %v10867
        %v11142 = vrot.slane %v11141, 4
        %v11143 = vmax.f32 %v11141, %v11142
        %v11144 = vrot.slane %v11143, 2
        %v11145 = vmax.f32 %v11143, %v11144
        %v11146 = vrot.slane %v11145, 1
        %v11147 = vmax.f32 %v11145, %v11146
        %v11148 = vmax.f32 %v10364, %v10372
        %v11149 = vmax.f32 %v11148, %v10380
        %v11150 = vmax.f32 %v11149, %v10388
        %v11151 = vmax.f32 %v11150, %v10396
        %v11152 = vmax.f32 %v11151, %v10404
        %v11153 = vmax.f32 %v11152, %v10412
        %v11154 = vmax.f32 %v11153, %v10420
        %v11155 = vmax.f32 %v11154, %v10428
        %v11156 = vmax.f32 %v11155, %v10436
        %v11157 = vmax.f32 %v11156, %v10444
        %v11158 = vmax.f32 %v11157, %v10452
        %v11159 = vmax.f32 %v11158, %v10460
        %v11160 = vmax.f32 %v11159, %v10468
        %v11161 = vmax.f32 %v11160, %v10476
        %v11162 = vmax.f32 %v11161, %v10484
        %v11163 = vmax.f32 %v11162, %v10492
        %v11164 = vmax.f32 %v11163, %v10500
        %v11165 = vmax.f32 %v11164, %v10508
        %v11166 = vmax.f32 %v11165, %v10516
        %v11167 = vmax.f32 %v11166, %v10524
        %v11168 = vmax.f32 %v11167, %v10532
        %v11169 = vmax.f32 %v11168, %v10540
        %v11170 = vmax.f32 %v11169, %v10548
        %v11171 = vmax.f32 %v11170, %v10556
        %v11172 = vmax.f32 %v11171, %v10564
        %v11173 = vmax.f32 %v11172, %v10572
        %v11174 = vmax.f32 %v11173, %v10580
        %v11175 = vmax.f32 %v11174, %v10588
        %v11176 = vmax.f32 %v11175, %v10596
        %v11177 = vmax.f32 %v11176, %v10604
        %v11178 = vmax.f32 %v11177, %v10612
        %v11179 = vmax.f32 %v11178, %v10620
        %v11180 = vmax.f32 %v11179, %v10628
        %v11181 = vmax.f32 %v11180, %v10636
        %v11182 = vmax.f32 %v11181, %v10644
        %v11183 = vmax.f32 %v11182, %v10652
        %v11184 = vmax.f32 %v11183, %v10660
        %v11185 = vmax.f32 %v11184, %v10668
        %v11186 = vmax.f32 %v11185, %v10676
        %v11187 = vmax.f32 %v11186, %v10684
        %v11188 = vmax.f32 %v11187, %v10692
        %v11189 = vmax.f32 %v11188, %v10700
        %v11190 = vmax.f32 %v11189, %v10708
        %v11191 = vmax.f32 %v11190, %v10716
        %v11192 = vmax.f32 %v11191, %v10724
        %v11193 = vmax.f32 %v11192, %v10732
        %v11194 = vmax.f32 %v11193, %v10740
        %v11195 = vmax.f32 %v11194, %v10748
        %v11196 = vmax.f32 %v11195, %v10756
        %v11197 = vmax.f32 %v11196, %v10764
        %v11198 = vmax.f32 %v11197, %v10772
        %v11199 = vmax.f32 %v11198, %v10780
        %v11200 = vmax.f32 %v11199, %v10788
        %v11201 = vmax.f32 %v11200, %v10796
        %v11202 = vmax.f32 %v11201, %v10804
        %v11203 = vmax.f32 %v11202, %v10812
        %v11204 = vmax.f32 %v11203, %v10820
        %v11205 = vmax.f32 %v11204, %v10828
        %v11206 = vmax.f32 %v11205, %v10836
        %v11207 = vmax.f32 %v11206, %v10844
        %v11208 = vmax.f32 %v11207, %v10852
        %v11209 = vmax.f32 %v11208, %v10860
        %v11210 = vmax.f32 %v11209, %v10868
        %v11211 = vrot.slane %v11210, 4
        %v11212 = vmax.f32 %v11210, %v11211
        %v11213 = vrot.slane %v11212, 2
        %v11214 = vmax.f32 %v11212, %v11213
        %v11215 = vrot.slane %v11214, 1
        %v11216 = vmax.f32 %v11214, %v11215
        %v11217 = vmax.f32 %v10365, %v10373
        %v11218 = vmax.f32 %v11217, %v10381
        %v11219 = vmax.f32 %v11218, %v10389
        %v11220 = vmax.f32 %v11219, %v10397
        %v11221 = vmax.f32 %v11220, %v10405
        %v11222 = vmax.f32 %v11221, %v10413
        %v11223 = vmax.f32 %v11222, %v10421
        %v11224 = vmax.f32 %v11223, %v10429
        %v11225 = vmax.f32 %v11224, %v10437
        %v11226 = vmax.f32 %v11225, %v10445
        %v11227 = vmax.f32 %v11226, %v10453
        %v11228 = vmax.f32 %v11227, %v10461
        %v11229 = vmax.f32 %v11228, %v10469
        %v11230 = vmax.f32 %v11229, %v10477
        %v11231 = vmax.f32 %v11230, %v10485
        %v11232 = vmax.f32 %v11231, %v10493
        %v11233 = vmax.f32 %v11232, %v10501
        %v11234 = vmax.f32 %v11233, %v10509
        %v11235 = vmax.f32 %v11234, %v10517
        %v11236 = vmax.f32 %v11235, %v10525
        %v11237 = vmax.f32 %v11236, %v10533
        %v11238 = vmax.f32 %v11237, %v10541
        %v11239 = vmax.f32 %v11238, %v10549
        %v11240 = vmax.f32 %v11239, %v10557
        %v11241 = vmax.f32 %v11240, %v10565
        %v11242 = vmax.f32 %v11241, %v10573
        %v11243 = vmax.f32 %v11242, %v10581
        %v11244 = vmax.f32 %v11243, %v10589
        %v11245 = vmax.f32 %v11244, %v10597
        %v11246 = vmax.f32 %v11245, %v10605
        %v11247 = vmax.f32 %v11246, %v10613
        %v11248 = vmax.f32 %v11247, %v10621
        %v11249 = vmax.f32 %v11248, %v10629
        %v11250 = vmax.f32 %v11249, %v10637
        %v11251 = vmax.f32 %v11250, %v10645
        %v11252 = vmax.f32 %v11251, %v10653
        %v11253 = vmax.f32 %v11252, %v10661
        %v11254 = vmax.f32 %v11253, %v10669
        %v11255 = vmax.f32 %v11254, %v10677
        %v11256 = vmax.f32 %v11255, %v10685
        %v11257 = vmax.f32 %v11256, %v10693
        %v11258 = vmax.f32 %v11257, %v10701
        %v11259 = vmax.f32 %v11258, %v10709
        %v11260 = vmax.f32 %v11259, %v10717
        %v11261 = vmax.f32 %v11260, %v10725
        %v11262 = vmax.f32 %v11261, %v10733
        %v11263 = vmax.f32 %v11262, %v10741
        %v11264 = vmax.f32 %v11263, %v10749
        %v11265 = vmax.f32 %v11264, %v10757
        %v11266 = vmax.f32 %v11265, %v10765
        %v11267 = vmax.f32 %v11266, %v10773
        %v11268 = vmax.f32 %v11267, %v10781
        %v11269 = vmax.f32 %v11268, %v10789
        %v11270 = vmax.f32 %v11269, %v10797
        %v11271 = vmax.f32 %v11270, %v10805
        %v11272 = vmax.f32 %v11271, %v10813
        %v11273 = vmax.f32 %v11272, %v10821
        %v11274 = vmax.f32 %v11273, %v10829
        %v11275 = vmax.f32 %v11274, %v10837
        %v11276 = vmax.f32 %v11275, %v10845
        %v11277 = vmax.f32 %v11276, %v10853
        %v11278 = vmax.f32 %v11277, %v10861
        %v11279 = vmax.f32 %v11278, %v10869
        %v11280 = vrot.slane %v11279, 4
        %v11281 = vmax.f32 %v11279, %v11280
        %v11282 = vrot.slane %v11281, 2
        %v11283 = vmax.f32 %v11281, %v11282
        %v11284 = vrot.slane %v11283, 1
        %v11285 = vmax.f32 %v11283, %v11284
        %v11286 = vmax.f32 %v10366, %v10374
        %v11287 = vmax.f32 %v11286, %v10382
        %v11288 = vmax.f32 %v11287, %v10390
        %v11289 = vmax.f32 %v11288, %v10398
        %v11290 = vmax.f32 %v11289, %v10406
        %v11291 = vmax.f32 %v11290, %v10414
        %v11292 = vmax.f32 %v11291, %v10422
        %v11293 = vmax.f32 %v11292, %v10430
        %v11294 = vmax.f32 %v11293, %v10438
        %v11295 = vmax.f32 %v11294, %v10446
        %v11296 = vmax.f32 %v11295, %v10454
        %v11297 = vmax.f32 %v11296, %v10462
        %v11298 = vmax.f32 %v11297, %v10470
        %v11299 = vmax.f32 %v11298, %v10478
        %v11300 = vmax.f32 %v11299, %v10486
        %v11301 = vmax.f32 %v11300, %v10494
        %v11302 = vmax.f32 %v11301, %v10502
        %v11303 = vmax.f32 %v11302, %v10510
        %v11304 = vmax.f32 %v11303, %v10518
        %v11305 = vmax.f32 %v11304, %v10526
        %v11306 = vmax.f32 %v11305, %v10534
        %v11307 = vmax.f32 %v11306, %v10542
        %v11308 = vmax.f32 %v11307, %v10550
        %v11309 = vmax.f32 %v11308, %v10558
        %v11310 = vmax.f32 %v11309, %v10566
        %v11311 = vmax.f32 %v11310, %v10574
        %v11312 = vmax.f32 %v11311, %v10582
        %v11313 = vmax.f32 %v11312, %v10590
        %v11314 = vmax.f32 %v11313, %v10598
        %v11315 = vmax.f32 %v11314, %v10606
        %v11316 = vmax.f32 %v11315, %v10614
        %v11317 = vmax.f32 %v11316, %v10622
        %v11318 = vmax.f32 %v11317, %v10630
        %v11319 = vmax.f32 %v11318, %v10638
        %v11320 = vmax.f32 %v11319, %v10646
        %v11321 = vmax.f32 %v11320, %v10654
        %v11322 = vmax.f32 %v11321, %v10662
        %v11323 = vmax.f32 %v11322, %v10670
        %v11324 = vmax.f32 %v11323, %v10678
        %v11325 = vmax.f32 %v11324, %v10686
        %v11326 = vmax.f32 %v11325, %v10694
        %v11327 = vmax.f32 %v11326, %v10702
        %v11328 = vmax.f32 %v11327, %v10710
        %v11329 = vmax.f32 %v11328, %v10718
        %v11330 = vmax.f32 %v11329, %v10726
        %v11331 = vmax.f32 %v11330, %v10734
        %v11332 = vmax.f32 %v11331, %v10742
        %v11333 = vmax.f32 %v11332, %v10750
        %v11334 = vmax.f32 %v11333, %v10758
        %v11335 = vmax.f32 %v11334, %v10766
        %v11336 = vmax.f32 %v11335, %v10774
        %v11337 = vmax.f32 %v11336, %v10782
        %v11338 = vmax.f32 %v11337, %v10790
        %v11339 = vmax.f32 %v11338, %v10798
        %v11340 = vmax.f32 %v11339, %v10806
        %v11341 = vmax.f32 %v11340, %v10814
        %v11342 = vmax.f32 %v11341, %v10822
        %v11343 = vmax.f32 %v11342, %v10830
        %v11344 = vmax.f32 %v11343, %v10838
        %v11345 = vmax.f32 %v11344, %v10846
        %v11346 = vmax.f32 %v11345, %v10854
        %v11347 = vmax.f32 %v11346, %v10862
        %v11348 = vmax.f32 %v11347, %v10870
        %v11349 = vrot.slane %v11348, 4
        %v11350 = vmax.f32 %v11348, %v11349
        %v11351 = vrot.slane %v11350, 2
        %v11352 = vmax.f32 %v11350, %v11351
        %v11353 = vrot.slane %v11352, 1
        %v11354 = vmax.f32 %v11352, %v11353
        %v11355 = vmax.f32 %v10367, %v10375
        %v11356 = vmax.f32 %v11355, %v10383
        %v11357 = vmax.f32 %v11356, %v10391
        %v11358 = vmax.f32 %v11357, %v10399
        %v11359 = vmax.f32 %v11358, %v10407
        %v11360 = vmax.f32 %v11359, %v10415
        %v11361 = vmax.f32 %v11360, %v10423
        %v11362 = vmax.f32 %v11361, %v10431
        %v11363 = vmax.f32 %v11362, %v10439
        %v11364 = vmax.f32 %v11363, %v10447
        %v11365 = vmax.f32 %v11364, %v10455
        %v11366 = vmax.f32 %v11365, %v10463
        %v11367 = vmax.f32 %v11366, %v10471
        %v11368 = vmax.f32 %v11367, %v10479
        %v11369 = vmax.f32 %v11368, %v10487
        %v11370 = vmax.f32 %v11369, %v10495
        %v11371 = vmax.f32 %v11370, %v10503
        %v11372 = vmax.f32 %v11371, %v10511
        %v11373 = vmax.f32 %v11372, %v10519
        %v11374 = vmax.f32 %v11373, %v10527
        %v11375 = vmax.f32 %v11374, %v10535
        %v11376 = vmax.f32 %v11375, %v10543
        %v11377 = vmax.f32 %v11376, %v10551
        %v11378 = vmax.f32 %v11377, %v10559
        %v11379 = vmax.f32 %v11378, %v10567
        %v11380 = vmax.f32 %v11379, %v10575
        %v11381 = vmax.f32 %v11380, %v10583
        %v11382 = vmax.f32 %v11381, %v10591
        %v11383 = vmax.f32 %v11382, %v10599
        %v11384 = vmax.f32 %v11383, %v10607
        %v11385 = vmax.f32 %v11384, %v10615
        %v11386 = vmax.f32 %v11385, %v10623
        %v11387 = vmax.f32 %v11386, %v10631
        %v11388 = vmax.f32 %v11387, %v10639
        %v11389 = vmax.f32 %v11388, %v10647
        %v11390 = vmax.f32 %v11389, %v10655
        %v11391 = vmax.f32 %v11390, %v10663
        %v11392 = vmax.f32 %v11391, %v10671
        %v11393 = vmax.f32 %v11392, %v10679
        %v11394 = vmax.f32 %v11393, %v10687
        %v11395 = vmax.f32 %v11394, %v10695
        %v11396 = vmax.f32 %v11395, %v10703
        %v11397 = vmax.f32 %v11396, %v10711
        %v11398 = vmax.f32 %v11397, %v10719
        %v11399 = vmax.f32 %v11398, %v10727
        %v11400 = vmax.f32 %v11399, %v10735
        %v11401 = vmax.f32 %v11400, %v10743
        %v11402 = vmax.f32 %v11401, %v10751
        %v11403 = vmax.f32 %v11402, %v10759
        %v11404 = vmax.f32 %v11403, %v10767
        %v11405 = vmax.f32 %v11404, %v10775
        %v11406 = vmax.f32 %v11405, %v10783
        %v11407 = vmax.f32 %v11406, %v10791
        %v11408 = vmax.f32 %v11407, %v10799
        %v11409 = vmax.f32 %v11408, %v10807
        %v11410 = vmax.f32 %v11409, %v10815
        %v11411 = vmax.f32 %v11410, %v10823
        %v11412 = vmax.f32 %v11411, %v10831
        %v11413 = vmax.f32 %v11412, %v10839
        %v11414 = vmax.f32 %v11413, %v10847
        %v11415 = vmax.f32 %v11414, %v10855
        %v11416 = vmax.f32 %v11415, %v10863
        %v11417 = vmax.f32 %v11416, %v10871
        %v11418 = vrot.slane %v11417, 4
        %v11419 = vmax.f32 %v11417, %v11418
        %v11420 = vrot.slane %v11419, 2
        %v11421 = vmax.f32 %v11419, %v11420
        %v11422 = vrot.slane %v11421, 1
        %v11423 = vmax.f32 %v11421, %v11422
        %p11424 = scmp.eq.s32.totalorder %s26, 0
        // Predicated region
        $region49: #{tpu_custom_call.1} parent=47 // pred_check
          %p11425 = pneg %p11424
        $region50: #{tpu_custom_call.1} parent=47 // pred_check_branch
          %11427 = sbr.rel (%p11425) target = $region52
        $region51: #{tpu_custom_call.1} parent=47 // pred_region
          %v11436 = vcombine.low %v10940, %v11009
          %v11437 = vcombine.low %v11078, %v11147
          %v11438 = vcombine.low %v11216, %v11285
          %v11439 = vcombine.low %v11354, %v11423
          %v11441 = vunpack.c.l.s4 1966171168
          %v11442 = vunpack.c.0.s8 %v11441
          %v11443 = vlaneseq
          %v11444 = vshrl.u32 %v11443, 7
          %v11445 = vsub.s32 %v11442, %v11444
          %v11446 = vrot.slane %v11436, %v11445
          %v11448 = vunpack.c.l.s4 1966171168
          %v11449 = vunpack.c.0.s8 %v11448
          %v11450 = vlaneseq
          %v11451 = vshrl.u32 %v11450, 7
          %v11452 = vsub.s32 %v11449, %v11451
          %v11453 = vrot.slane %v11437, %v11452
          %v11455 = vunpack.c.l.s4 1966171168
          %v11456 = vunpack.c.0.s8 %v11455
          %v11457 = vlaneseq
          %v11458 = vshrl.u32 %v11457, 7
          %v11459 = vsub.s32 %v11456, %v11458
          %v11460 = vrot.slane %v11438, %v11459
          %v11462 = vunpack.c.l.s4 1966171168
          %v11463 = vunpack.c.0.s8 %v11462
          %v11464 = vlaneseq
          %v11465 = vshrl.u32 %v11464, 7
          %v11466 = vsub.s32 %v11463, %v11465
          %v11467 = vrot.slane %v11439, %v11466
          %v11468 = vcombine.low %v11446, %v11453
          %v11469 = vcombine.low %v11460, %v11467
          %v11471 = vunpack.c.l.s4 1966171168
          %v11472 = vunpack.c.0.s8 %v11471
          %v11473 = vlaneseq
          %v11474 = vshrl.u32 %v11473, 7
          %v11475 = vsub.s32 %v11472, %v11474
          %v11476 = vrot.slane %v11468, %v11475
          %v11478 = vunpack.c.l.s4 1966171168
          %v11479 = vunpack.c.0.s8 %v11478
          %v11480 = vlaneseq
          %v11481 = vshrl.u32 %v11480, 7
          %v11482 = vsub.s32 %v11479, %v11481
          %v11483 = vrot.slane %v11469, %v11482
          %v11484 = vcombine.low %v11476, %v11483
          %11486 = vst [vmem:[%s306] sm:$0xff] %v11484
        $region52: #{tpu_custom_call.1} parent=47 // pred_fallthru
          _
        %p11487 = scmp.gt.s32.totalorder %s26, 0
        // Predicated region
        $region53: #{tpu_custom_call.1} parent=47 // pred_check
          %p11488 = pneg %p11487
        $region54: #{tpu_custom_call.1} parent=47 // pred_check_branch
          %11490 = sbr.rel (%p11488) target = $region56
        $region55: #{tpu_custom_call.1} parent=47 // pred_region
          %v11491 = vld [vmem:[%s306] sm:$0xff]
          %v11500 = vcombine.low %v10940, %v11009
          %v11501 = vcombine.low %v11078, %v11147
          %v11502 = vcombine.low %v11216, %v11285
          %v11503 = vcombine.low %v11354, %v11423
          %v11505 = vunpack.c.l.s4 1966171168
          %v11506 = vunpack.c.0.s8 %v11505
          %v11507 = vlaneseq
          %v11508 = vshrl.u32 %v11507, 7
          %v11509 = vsub.s32 %v11506, %v11508
          %v11510 = vrot.slane %v11500, %v11509
          %v11512 = vunpack.c.l.s4 1966171168
          %v11513 = vunpack.c.0.s8 %v11512
          %v11514 = vlaneseq
          %v11515 = vshrl.u32 %v11514, 7
          %v11516 = vsub.s32 %v11513, %v11515
          %v11517 = vrot.slane %v11501, %v11516
          %v11519 = vunpack.c.l.s4 1966171168
          %v11520 = vunpack.c.0.s8 %v11519
          %v11521 = vlaneseq
          %v11522 = vshrl.u32 %v11521, 7
          %v11523 = vsub.s32 %v11520, %v11522
          %v11524 = vrot.slane %v11502, %v11523
          %v11526 = vunpack.c.l.s4 1966171168
          %v11527 = vunpack.c.0.s8 %v11526
          %v11528 = vlaneseq
          %v11529 = vshrl.u32 %v11528, 7
          %v11530 = vsub.s32 %v11527, %v11529
          %v11531 = vrot.slane %v11503, %v11530
          %v11532 = vcombine.low %v11510, %v11517
          %v11533 = vcombine.low %v11524, %v11531
          %v11535 = vunpack.c.l.s4 1966171168
          %v11536 = vunpack.c.0.s8 %v11535
          %v11537 = vlaneseq
          %v11538 = vshrl.u32 %v11537, 7
          %v11539 = vsub.s32 %v11536, %v11538
          %v11540 = vrot.slane %v11532, %v11539
          %v11542 = vunpack.c.l.s4 1966171168
          %v11543 = vunpack.c.0.s8 %v11542
          %v11544 = vlaneseq
          %v11545 = vshrl.u32 %v11544, 7
          %v11546 = vsub.s32 %v11543, %v11545
          %v11547 = vrot.slane %v11533, %v11546
          %v11548 = vcombine.low %v11540, %v11547
          %v11550 = vmax.f32 %v11491, %v11548
          %11551 = vst [vmem:[%s306] sm:$0xff] %v11550
        $region56: #{tpu_custom_call.1} parent=47 // pred_fallthru
          _
        %s11552 = sand.u32 %s195, 1
        %s11553 = scalar_lea.sflag [#allocation3], %s11552
        %s11554 = sand.u32 %s195, 1
        %s11555 = smul.addr %s11554, 8
        %s11556 = scalar_lea.vmem [#allocation2], %s11555
        // Predicated region
        $region57: #{tpu_custom_call.1} parent=47 // pred_check
          %p11557 = pneg %p205
        $region58: #{tpu_custom_call.1} parent=47 // pred_check_branch
          %11559 = sbr.rel (%p11557) target = $region60
        $region59: #{tpu_custom_call.1} parent=47 // pred_region
          %s11561 = ssub.s32 128, 128
          %11562 = vsyncadd %s11553, %s11561
          %s11563 = smul.addr %s25, 8
          %s11564 = smul.addr %s11563, 16
          %s11565 = scalar_lea.hbm %s7, %s11564
          %s11567 = sshll.u32 %s11556, 4
          %s11568 = int_to_ptr.vmem [resolvable:$true] %s11567
          %11570 = dma.vmem_to_hbm [thread:$0]  %s11568, 128, %s11565, %s11553
        $region60: #{tpu_custom_call.1} parent=47 // pred_fallthru
          _
      $region48: #{tpu_custom_call.1} parent=5 // pred_fallthru
        _
      %p11571 = scmp.le.s32.totalorder 2, %s16
      // Predicated region
      $region61: #{tpu_custom_call.1} parent=5 // pred_check
        %p11572 = pneg %p11571
      $region62: #{tpu_custom_call.1} parent=5 // pred_check_branch
        %11574 = sbr.rel (%p11572) target = $region64
      $region63: #{tpu_custom_call.1} parent=5 // pred_region
        %s11575 = ssub.s32 %s16, 2
        // Predicated region
        $region65: #{tpu_custom_call.1} parent=63 // pred_check
          %p11576 = pneg %p211
        $region66: #{tpu_custom_call.1} parent=63 // pred_check_branch
          %11578 = sbr.rel (%p11576) target = $region68
        $region67: #{tpu_custom_call.1} parent=63 // pred_region
          %s11579 = sand.u32 %s196, 1
          %s11580 = scalar_lea.sflag [#allocation3], %s11579
          %s11581 = sand.u32 %s196, 1
          %s11582 = smul.addr %s11581, 8
          %s11583 = scalar_lea.vmem [#allocation2], %s11582
          %11584 = dma.done %s11580, 128
        $region68: #{tpu_custom_call.1} parent=63 // pred_fallthru
          _
      $region64: #{tpu_custom_call.1} parent=5 // pred_fallthru
        _
    $region6: #{tpu_custom_call.1} parent=1 // loop_footer
      %s20 = sadd.s32 1, %s16
    $region7: #{tpu_custom_call.1} parent=1 // loop_footer_branch
      %15 = sbr.rel target = $region3
    $region8: #{tpu_custom_call.1} parent=1 // loop_exit
      _
    %11585 = vsyncpa [#allocation3], 1
    %s11586 = scalar_lea.sflag [#allocation3], 1
    %11587 = vsyncpa %s11586, 1

</llo_original>
